<compile_context>
chip_gen: v5e
topology: v5e:2x2
jax: 0.10.0
libtpu: 0.0.40
codegen_flags: <defaults>
</compile_context>

<pallas_src>
import functools
import math

import jax
import jax.numpy as jnp
from jax.experimental import pallas as pl
from jax.experimental.pallas import tpu as pltpu


# ----------------------------------------------------------------------------
# VMEM budget (per-chip)
# ----------------------------------------------------------------------------
def _detect_vmem_limit():
    try:
        cap = int(pltpu.get_tpu_info().vmem_capacity_bytes)
    except Exception:
        cap = 64 * 1024 * 1024          # conservative default (v7x per-core)
    # ~25% headroom for compiler scratch, capped at 96 MiB (v5e/v6e sweet spot)
    return max(32 * 1024 * 1024, min((cap * 3) // 4, 96 * 1024 * 1024))


_VMEM_LIMIT = _detect_vmem_limit()
_LN_EPS = 1e-5


# ----------------------------------------------------------------------------
# Tiling helpers
# ----------------------------------------------------------------------------
def _pick_tile(dim, max_tile, base):
    """Largest multiple of `base` <= max_tile that exactly divides `dim`,
    falling back to the full dim (always a legal block)."""
    if dim <= max_tile:
        return dim
    t = (max_tile // base) * base
    while t >= base:
        if dim % t == 0:
            return t
        t -= base
    return dim


def _layernorm_f32(y, gamma, beta, eps):
    mu = jnp.mean(y, axis=-1, keepdims=True)
    d = y - mu
    var = jnp.mean(d * d, axis=-1, keepdims=True)
    return d * jax.lax.rsqrt(var + eps) * gamma + beta


# ----------------------------------------------------------------------------
# Generic tiled matmul (cnn_conv 1x1 conv, classifier)
# ----------------------------------------------------------------------------
def _matmul_kernel(x_ref, w_ref, b_ref, o_ref, acc_ref, *, activation):
    @pl.when(pl.program_id(2) == 0)
    def _init():
        acc_ref[...] = jnp.zeros_like(acc_ref)

    acc_ref[...] += jnp.dot(x_ref[...], w_ref[...],
                            preferred_element_type=jnp.float32)

    @pl.when(pl.program_id(2) == pl.num_programs(2) - 1)
    def _fini():
        y = acc_ref[...] + b_ref[...]
        if activation == "relu":
            y = jnp.maximum(y, 0.0)
        o_ref[...] = y.astype(o_ref.dtype)


def linear(x, w_bf16, b_row, *, activation=None, out_dtype=jnp.bfloat16):
    """act(x @ w + b).  x: [M,K]; w: [K,N] bf16 (pre-cast); b: [1,N] f32."""
    M, K = x.shape
    N = w_bf16.shape[1]
    if x.dtype != jnp.bfloat16:
        x = x.astype(jnp.bfloat16)

    tm = _pick_tile(M, 512, 16)          # bf16 sublane packing -> base 16
    tk = _pick_tile(K, 1024, 128)
    tn = _pick_tile(N, 512, 128)
    grid = (M // tm, N // tn, K // tk)

    kernel = functools.partial(_matmul_kernel, activation=activation)
    return pl.pallas_call(
        kernel,
        out_shape=jax.ShapeDtypeStruct((M, N), out_dtype),
        grid=grid,
        in_specs=[
            pl.BlockSpec((tm, tk), lambda i, j, k: (i, k)),
            pl.BlockSpec((tk, tn), lambda i, j, k: (k, j)),
            pl.BlockSpec((1, tn), lambda i, j, k: (0, j)),
        ],
        out_specs=pl.BlockSpec((tm, tn), lambda i, j, k: (i, j)),
        scratch_shapes=[pltpu.VMEM((tm, tn), jnp.float32)],
        compiler_params=pltpu.CompilerParams(
            dimension_semantics=("parallel", "parallel", "arbitrary"),
            vmem_limit_bytes=_VMEM_LIMIT),
    )(x, w_bf16, b_row)


# ----------------------------------------------------------------------------
# Fused attention blocks:  QKV proj + SDPA + O proj + residual + LayerNorm
# ----------------------------------------------------------------------------
def _heads_to_scratch(q_all, k_all, v_all, attn_sc, nh, hd, scale, allowed):
    """Per-head attention; each head's [Tq, hd] result is stored directly into
    the VMEM scratch slab at its lane offset (no concat of live partials)."""
    for h in range(nh):
        q = q_all[:, h * hd:(h + 1) * hd]
        k = k_all[:, h * hd:(h + 1) * hd]
        v = v_all[:, h * hd:(h + 1) * hd]
        # q @ k^T without an explicit transpose: contract the last dims.
        s = jax.lax.dot_general(q, k, (((1,), (1,)), ((), ())),
                                preferred_element_type=jnp.float32) * scale
        if allowed is not None:
            s = jnp.where(allowed, s, -1e30)
        s = s - jnp.max(s, axis=-1, keepdims=True)
        p = jnp.exp(s)
        p = p * pl.reciprocal(jnp.sum(p, axis=-1, keepdims=True), approx=True)
        o_h = jnp.dot(p.astype(jnp.bfloat16), v,
                      preferred_element_type=jnp.float32)
        attn_sc[:, h * hd:(h + 1) * hd] = o_h.astype(jnp.bfloat16)


def _self_attn_block_kernel(x_ref, wqkv_ref, bqkv_ref, wo_ref, bo_ref,
                            g_ref, bb_ref, o_ref, attn_sc,
                            *, nh, d, causal, scale, eps):
    x = x_ref[0]                                           # [T, D] bf16
    T = x.shape[0]
    hd = d // nh
    # fused QKV projection on the MXU; weights stay resident in VMEM
    qkv = (jnp.dot(x, wqkv_ref[...], preferred_element_type=jnp.float32)
           + bqkv_ref[...])
    q_all = qkv[:, 0 * d:1 * d].astype(jnp.bfloat16)
    k_all = qkv[:, 1 * d:2 * d].astype(jnp.bfloat16)
    v_all = qkv[:, 2 * d:3 * d].astype(jnp.bfloat16)

    allowed = None
    if causal:                                             # in-kernel mask
        row = jax.lax.broadcasted_iota(jnp.int32, (T, T), 0)
        col = jax.lax.broadcasted_iota(jnp.int32, (T, T), 1)
        allowed = col <= row

    _heads_to_scratch(q_all, k_all, v_all, attn_sc, nh, hd, scale, allowed)

    y = (jnp.dot(attn_sc[...], wo_ref[...], preferred_element_type=jnp.float32)
         + bo_ref[...] + x.astype(jnp.float32))            # residual in f32
    o_ref[0] = _layernorm_f32(y, g_ref[...], bb_ref[...], eps).astype(o_ref.dtype)


def _cross_attn_block_kernel(x_ref, mem_ref, wq_ref, bq_ref, wkv_ref, bkv_ref,
                             wo_ref, bo_ref, g_ref, bb_ref, o_ref, attn_sc,
                             *, nh, d, scale, eps):
    x = x_ref[0]                                           # [Tq, D] bf16
    mem = mem_ref[0]                                       # [Tk, D] bf16
    hd = d // nh
    q_all = (jnp.dot(x, wq_ref[...], preferred_element_type=jnp.float32)
             + bq_ref[...]).astype(jnp.bfloat16)
    kv = (jnp.dot(mem, wkv_ref[...], preferred_element_type=jnp.float32)
          + bkv_ref[...])
    k_all = kv[:, 0 * d:1 * d].astype(jnp.bfloat16)
    v_all = kv[:, 1 * d:2 * d].astype(jnp.bfloat16)

    _heads_to_scratch(q_all, k_all, v_all, attn_sc, nh, hd, scale, None)

    y = (jnp.dot(attn_sc[...], wo_ref[...], preferred_element_type=jnp.float32)
         + bo_ref[...] + x.astype(jnp.float32))
    o_ref[0] = _layernorm_f32(y, g_ref[...], bb_ref[...], eps).astype(o_ref.dtype)


def attn_self_block(x, wqkv, bqkv, wo, bo, gamma, beta, num_heads, causal):
    """x: [B, T, D] bf16 -> LayerNorm(x + SelfAttn(x) W_o + b_o): [B,T,D] bf16."""
    B, T, D = x.shape
    kernel = functools.partial(
        _self_attn_block_kernel, nh=num_heads, d=D, causal=causal,
        scale=1.0 / math.sqrt(D // num_heads), eps=_LN_EPS)
    return pl.pallas_call(
        kernel,
        out_shape=jax.ShapeDtypeStruct((B, T, D), jnp.bfloat16),
        grid=(B,),
        in_specs=[
            pl.BlockSpec((1, T, D), lambda b: (b, 0, 0)),
            pl.BlockSpec((D, 3 * D), lambda b: (0, 0)),
            pl.BlockSpec((1, 3 * D), lambda b: (0, 0)),
            pl.BlockSpec((D, D), lambda b: (0, 0)),
            pl.BlockSpec((1, D), lambda b: (0, 0)),
            pl.BlockSpec((1, D), lambda b: (0, 0)),
            pl.BlockSpec((1, D), lambda b: (0, 0)),
        ],
        out_specs=pl.BlockSpec((1, T, D), lambda b: (b, 0, 0)),
        scratch_shapes=[pltpu.VMEM((T, D), jnp.bfloat16)],
        compiler_params=pltpu.CompilerParams(
            dimension_semantics=("parallel",),
            vmem_limit_bytes=_VMEM_LIMIT),
    )(x, wqkv, bqkv, wo, bo, gamma, beta)


def attn_cross_block(x, memory, wq, bq, wkv, bkv, wo, bo, gamma, beta, num_heads):
    """x: [B, Tq, D], memory: [B, Tk, D] (both bf16) -> [B, Tq, D] bf16."""
    B, Tq, D = x.shape
    Tk = memory.shape[1]
    kernel = functools.partial(
        _cross_attn_block_kernel, nh=num_heads, d=D,
        scale=1.0 / math.sqrt(D // num_heads), eps=_LN_EPS)
    return pl.pallas_call(
        kernel,
        out_shape=jax.ShapeDtypeStruct((B, Tq, D), jnp.bfloat16),
        grid=(B,),
        in_specs=[
            pl.BlockSpec((1, Tq, D), lambda b: (b, 0, 0)),
            pl.BlockSpec((1, Tk, D), lambda b: (b, 0, 0)),
            pl.BlockSpec((D, D), lambda b: (0, 0)),
            pl.BlockSpec((1, D), lambda b: (0, 0)),
            pl.BlockSpec((D, 2 * D), lambda b: (0, 0)),
            pl.BlockSpec((1, 2 * D), lambda b: (0, 0)),
            pl.BlockSpec((D, D), lambda b: (0, 0)),
            pl.BlockSpec((1, D), lambda b: (0, 0)),
            pl.BlockSpec((1, D), lambda b: (0, 0)),
            pl.BlockSpec((1, D), lambda b: (0, 0)),
        ],
        out_specs=pl.BlockSpec((1, Tq, D), lambda b: (b, 0, 0)),
        scratch_shapes=[pltpu.VMEM((Tq, D), jnp.bfloat16)],
        compiler_params=pltpu.CompilerParams(
            dimension_semantics=("parallel",),
            vmem_limit_bytes=_VMEM_LIMIT),
    )(x, memory, wq, bq, wkv, bkv, wo, bo, gamma, beta)


# ----------------------------------------------------------------------------
# Fused feed-forward block:  ReLU(x W1 + b1) W2 + b2 + x  -> LayerNorm
# ----------------------------------------------------------------------------
def _ffn_block_kernel(x_ref, w1_ref, b1_ref, w2_ref, b2_ref, g_ref, bb_ref,
                      o_ref, *, eps):
    x = x_ref[...]                                         # [tm, D] bf16
    h = jnp.dot(x, w1_ref[...], preferred_element_type=jnp.float32) + b1_ref[...]
    h = jnp.maximum(h, 0.0).astype(jnp.bfloat16)           # [tm, FF] stays in VMEM
    y = (jnp.dot(h, w2_ref[...], preferred_element_type=jnp.float32)
         + b2_ref[...] + x.astype(jnp.float32))
    o_ref[...] = _layernorm_f32(y, g_ref[...], bb_ref[...], eps).astype(o_ref.dtype)


def ffn_block(x2d, w1, b1, w2, b2, gamma, beta):
    """x2d: [M, D] bf16 -> [M, D] bf16."""
    M, D = x2d.shape
    FF = w1.shape[1]
    tm = _pick_tile(M, 256, 16)
    kernel = functools.partial(_ffn_block_kernel, eps=_LN_EPS)
    return pl.pallas_call(
        kernel,
        out_shape=jax.ShapeDtypeStruct((M, D), jnp.bfloat16),
        grid=(M // tm,),
        in_specs=[
            pl.BlockSpec((tm, D), lambda i: (i, 0)),
            pl.BlockSpec((D, FF), lambda i: (0, 0)),
            pl.BlockSpec((1, FF), lambda i: (0, 0)),
            pl.BlockSpec((FF, D), lambda i: (0, 0)),
            pl.BlockSpec((1, D), lambda i: (0, 0)),
            pl.BlockSpec((1, D), lambda i: (0, 0)),
            pl.BlockSpec((1, D), lambda i: (0, 0)),
        ],
        out_specs=pl.BlockSpec((tm, D), lambda i: (i, 0)),
        compiler_params=pltpu.CompilerParams(
            dimension_semantics=("parallel",),
            vmem_limit_bytes=_VMEM_LIMIT),
    )(x2d, w1, b1, w2, b2, gamma, beta)


# ----------------------------------------------------------------------------
# Transformer layers (post-norm, ReLU, batch_first) built from fused blocks
# ----------------------------------------------------------------------------
def encoder_layer(x, p, num_heads):
    B, T, D = x.shape
    x = attn_self_block(x, p["sa_w_qkv"], p["sa_b_qkv"], p["sa_w_o"], p["sa_b_o"],
                        p["ln1_g"], p["ln1_b"], num_heads, causal=False)
    y = ffn_block(x.reshape(B * T, D), p["ff_w1"], p["ff_b1"],
                  p["ff_w2"], p["ff_b2"], p["ln2_g"], p["ln2_b"])
    return y.reshape(B, T, D)


def decoder_layer(x, memory, p, num_heads):
    B, T, D = x.shape
    x = attn_self_block(x, p["sa_w_qkv"], p["sa_b_qkv"], p["sa_w_o"], p["sa_b_o"],
                        p["ln1_g"], p["ln1_b"], num_heads, causal=True)
    x = attn_cross_block(x, memory, p["ca_w_q"], p["ca_b_q"],
                         p["ca_w_kv"], p["ca_b_kv"], p["ca_w_o"], p["ca_b_o"],
                         p["ln2_g"], p["ln2_b"], num_heads)
    y = ffn_block(x.reshape(B * T, D), p["ff_w1"], p["ff_b1"],
                  p["ff_w2"], p["ff_b2"], p["ln3_g"], p["ln3_b"])
    return y.reshape(B, T, D)


def sinusoidal_pe(max_len, d):
    """Matches PositionalEncoding buffer construction."""
    position = (jnp.arange(max_len, dtype=jnp.float32).reshape(-1, 1)
                / jnp.power(10000.0, jnp.arange(0, d, 2, dtype=jnp.float32) / d))
    pe = jnp.zeros((max_len, d), jnp.float32)
    pe = pe.at[:, 0::2].set(jnp.sin(position))
    pe = pe.at[:, 1::2].set(jnp.cos(position))
    return pe


# ----------------------------------------------------------------------------
# Full model forward (train mode).  Expects PREPARED params (bf16 weights).
# ----------------------------------------------------------------------------
def ocr_transformer_forward(params, src_feat, target_tokens, config, vocab_size):
    """Returns logits of shape [B*T, vocab_size] (train-mode reshape + fc)."""
    B, C_in, H, W = src_feat.shape
    D = config["embed_size"]
    nh = config["num_heads"]

    # ---- Encoder: cnn_conv (1x1 conv == per-pixel matmul) -> [B, S, D]
    x = jnp.transpose(src_feat, (0, 2, 3, 1)).reshape(B * H * W, C_in)
    x = linear(x, params["cnn_conv_w"], params["cnn_conv_b"],
               out_dtype=jnp.bfloat16).reshape(B, H * W, D)
    S = H * W
    x = x + params["pe"][None, :S, :]          # PositionalEncoding (dropout = id)
    for lp in params["enc_layers"]:
        x = encoder_layer(x, lp, nh)
    memory = x                                 # bf16, reused by all dec layers

    # ---- Decoder: pre-scaled token embedding + PE, in-kernel causal mask
    T = target_tokens.shape[1]
    y = jnp.take(params["tok_embed"], target_tokens, axis=0)
    y = y + params["pe"][None, :T, :]
    for lp in params["dec_layers"]:
        y = decoder_layer(y, memory, lp, nh)

    # ---- train-mode reshape to (B*T, D) then fc (lane-padded at prep) -> logits
    logits = linear(y.reshape(B * T, D), params["fc_w"], params["fc_b"],
                    out_dtype=jnp.float32)
    return logits[:, :vocab_size]


# ----------------------------------------------------------------------------
# Parameter init (f32, shapes from the module __init__) + one-time prep
# ----------------------------------------------------------------------------
def init_params(key, config, vocab_size, c_in):
    D = config["embed_size"]
    FF = 4 * D
    L = config["num_layers"]
    keys = iter(jax.random.split(key, 256))

    def nrm(shape, std=0.02):
        return std * jax.random.normal(next(keys), shape, jnp.float32)

    def enc_layer_params():
        return dict(
            sa_w_qkv=nrm((D, 3 * D)), sa_b_qkv=jnp.zeros((3 * D,), jnp.float32),
            sa_w_o=nrm((D, D)), sa_b_o=jnp.zeros((D,), jnp.float32),
            ln1_g=jnp.ones((D,), jnp.float32), ln1_b=jnp.zeros((D,), jnp.float32),
            ff_w1=nrm((D, FF)), ff_b1=jnp.zeros((FF,), jnp.float32),
            ff_w2=nrm((FF, D)), ff_b2=jnp.zeros((D,), jnp.float32),
            ln2_g=jnp.ones((D,), jnp.float32), ln2_b=jnp.zeros((D,), jnp.float32),
        )

    def dec_layer_params():
        return dict(
            sa_w_qkv=nrm((D, 3 * D)), sa_b_qkv=jnp.zeros((3 * D,), jnp.float32),
            sa_w_o=nrm((D, D)), sa_b_o=jnp.zeros((D,), jnp.float32),
            ca_w_q=nrm((D, D)), ca_b_q=jnp.zeros((D,), jnp.float32),
            ca_w_kv=nrm((D, 2 * D)), ca_b_kv=jnp.zeros((2 * D,), jnp.float32),
            ca_w_o=nrm((D, D)), ca_b_o=jnp.zeros((D,), jnp.float32),
            ln1_g=jnp.ones((D,), jnp.float32), ln1_b=jnp.zeros((D,), jnp.float32),
            ln2_g=jnp.ones((D,), jnp.float32), ln2_b=jnp.zeros((D,), jnp.float32),
            ln3_g=jnp.ones((D,), jnp.float32), ln3_b=jnp.zeros((D,), jnp.float32),
            ff_w1=nrm((D, FF)), ff_b1=jnp.zeros((FF,), jnp.float32),
            ff_w2=nrm((FF, D)), ff_b2=jnp.zeros((D,), jnp.float32),
        )

    return dict(
        cnn_conv_w=nrm((c_in, D)), cnn_conv_b=jnp.zeros((D,), jnp.float32),
        tok_embed=nrm((vocab_size, D), std=1.0),
        pe=sinusoidal_pe(config["max_len"], D),
        enc_layers=[enc_layer_params() for _ in range(L)],
        dec_layers=[dec_layer_params() for _ in range(L)],
        fc_w=nrm((D, vocab_size)), fc_b=jnp.zeros((vocab_size,), jnp.float32),
    )


def prepare_params(raw, config):
    """One-time prep: weights -> bf16, biases/LN -> (1,N) f32 rows, token
    embedding pre-scaled by sqrt(D) and cast to bf16, PE cast to bf16, fc
    weight/bias padded to a 128-lane multiple."""
    D = config["embed_size"]

    def w(x):
        return x.astype(jnp.bfloat16)

    def row(x):
        return x.reshape(1, -1).astype(jnp.float32)

    def prep_common(lp):
        return dict(
            sa_w_qkv=w(lp["sa_w_qkv"]), sa_b_qkv=row(lp["sa_b_qkv"]),
            sa_w_o=w(lp["sa_w_o"]), sa_b_o=row(lp["sa_b_o"]),
            ln1_g=row(lp["ln1_g"]), ln1_b=row(lp["ln1_b"]),
            ln2_g=row(lp["ln2_g"]), ln2_b=row(lp["ln2_b"]),
            ff_w1=w(lp["ff_w1"]), ff_b1=row(lp["ff_b1"]),
            ff_w2=w(lp["ff_w2"]), ff_b2=row(lp["ff_b2"]),
        )

    def prep_dec(lp):
        d = prep_common(lp)
        d.update(
            ca_w_q=w(lp["ca_w_q"]), ca_b_q=row(lp["ca_b_q"]),
            ca_w_kv=w(lp["ca_w_kv"]), ca_b_kv=row(lp["ca_b_kv"]),
            ca_w_o=w(lp["ca_w_o"]), ca_b_o=row(lp["ca_b_o"]),
            ln3_g=row(lp["ln3_g"]), ln3_b=row(lp["ln3_b"]),
        )
        return d

    vocab = raw["fc_w"].shape[1]
    n_pad = ((vocab + 127) // 128) * 128
    fc_w, fc_b = raw["fc_w"], raw["fc_b"]
    if n_pad != vocab:
        fc_w = jnp.pad(fc_w, ((0, 0), (0, n_pad - vocab)))
        fc_b = jnp.pad(fc_b, (0, n_pad - vocab))

    return dict(
        cnn_conv_w=w(raw["cnn_conv_w"]), cnn_conv_b=row(raw["cnn_conv_b"]),
        tok_embed=(raw["tok_embed"] * math.sqrt(D)).astype(jnp.bfloat16),
        pe=raw["pe"].astype(jnp.bfloat16),
        enc_layers=[prep_common(lp) for lp in raw["enc_layers"]],
        dec_layers=[prep_dec(lp) for lp in raw["dec_layers"]],
        fc_w=w(fc_w), fc_b=row(fc_b),
    )


# ----------------------------------------------------------------------------
if __name__ == "__main__":
    config = dict(embed_size=32, num_heads=4, num_layers=2,
                  max_len=100, dropout=0.1, embed_type="position")
    vocab_size = 16
    B, C_in, H, W = 2, 16, 2, 4      # src: backbone feature map (NCHW)
    T = 8                            # target sequence length

    key = jax.random.PRNGKey(0)
    kp, kx, kt = jax.random.split(key, 3)
    raw_params = init_params(kp, config, vocab_size, C_in)
    params = prepare_params(raw_params, config)          # one-time bf16 prep
    src = jax.random.normal(kx, (B, C_in, H, W), jnp.float32)
    tgt = jax.random.randint(kt, (B, T), 0, vocab_size, dtype=jnp.int32)

    fwd = jax.jit(functools.partial(ocr_transformer_forward,
                                    config=config, vocab_size=vocab_size))
    logits = fwd(params, src, tgt)
    logits = jax.block_until_ready(logits)

    assert logits.shape == (B * T, vocab_size), logits.shape
    assert bool(jnp.all(jnp.isfinite(logits)))
    print("KERNEL_OK")
</pallas_src>

<mosaic_0001>
module attributes {stable_mosaic.version = 11 : i64} {
  func.func @_matmul_kernel(%arg0: i32, %arg1: i32, %arg2: i32, %arg3: memref<16x16xbf16, #tpu.memory_space<vmem>>, %arg4: memref<16x32xbf16, #tpu.memory_space<vmem>>, %arg5: memref<1x32xf32, #tpu.memory_space<vmem>>, %arg6: memref<16x32xbf16, #tpu.memory_space<vmem>>, %arg7: memref<16x32xf32, #tpu.memory_space<vmem>>) attributes {dimension_semantics = [#tpu.dimension_semantics<parallel>, #tpu.dimension_semantics<parallel>, #tpu.dimension_semantics<arbitrary>], iteration_bounds = array<i64: 1, 1, 1>, scalar_prefetch = 0 : i64, scratch_operands = 1 : i64, tpu.core_type = #tpu.core_type<tc>, window_params = [{transform_indices = @transform_0, window_bounds = array<i64: 16, 16>}, {transform_indices = @transform_1, window_bounds = array<i64: 16, 32>}, {transform_indices = @transform_2, window_bounds = array<i64: 1, 32>}, {transform_indices = @transform_3, window_bounds = array<i64: 16, 32>}]} {
    %c0_i32 = arith.constant 0 : i32
    %0 = arith.cmpi eq, %arg2, %c0_i32 : i32
    %1 = arith.extui %0 : i1 to i32
    %c0_i32_0 = arith.constant 0 : i32
    %2 = arith.cmpi ne, %1, %c0_i32_0 : i32
    scf.if %2 {
      %cst_10 = arith.constant 0.000000e+00 : f32
      %12 = vector.broadcast %cst_10 : f32 to vector<16x32xf32>
      %c0_11 = arith.constant 0 : index
      %c0_12 = arith.constant 0 : index
      %13 = vector.load %arg7[%c0_11, %c0_12] : memref<16x32xf32, #tpu.memory_space<vmem>>, vector<16x32xf32>
      tpu.vector_store %arg7[%c0_11, %c0_12], %12 {strides = array<i32>} : memref<16x32xf32, #tpu.memory_space<vmem>>, vector<16x32xf32>,
    } else {
    }
    %c0 = arith.constant 0 : index
    %c0_1 = arith.constant 0 : index
    %3 = vector.load %arg7[%c0, %c0_1] : memref<16x32xf32, #tpu.memory_space<vmem>>, vector<16x32xf32>
    %c0_2 = arith.constant 0 : index
    %c0_3 = arith.constant 0 : index
    %4 = vector.load %arg3[%c0_2, %c0_3] : memref<16x16xbf16, #tpu.memory_space<vmem>>, vector<16x16xbf16>
    %c0_4 = arith.constant 0 : index
    %c0_5 = arith.constant 0 : index
    %5 = vector.load %arg4[%c0_4, %c0_5] : memref<16x32xbf16, #tpu.memory_space<vmem>>, vector<16x32xbf16>
    %cst = arith.constant dense<0.000000e+00> : vector<16x32xf32>
    %6 = tpu.matmul %4, %5, %cst {dimension_numbers = #tpu.dot_dimension_numbers<[1], [0], [0], [1], [0, 0, 1, 1], [], []>} : vector<16x16xbf16>, vector<16x32xbf16>, vector<16x32xf32> -> vector<16x32xf32>
    %7 = arith.addf %3, %6 : vector<16x32xf32>
    %c0_6 = arith.constant 0 : index
    %c0_7 = arith.constant 0 : index
    %8 = vector.load %arg7[%c0_6, %c0_7] : memref<16x32xf32, #tpu.memory_space<vmem>>, vector<16x32xf32>
    tpu.vector_store %arg7[%c0_6, %c0_7], %7 {strides = array<i32>} : memref<16x32xf32, #tpu.memory_space<vmem>>, vector<16x32xf32>,
    %c0_i32_8 = arith.constant 0 : i32
    %9 = arith.cmpi eq, %arg2, %c0_i32_8 : i32
    %10 = arith.extui %9 : i1 to i32
    %c0_i32_9 = arith.constant 0 : i32
    %11 = arith.cmpi ne, %10, %c0_i32_9 : i32
    scf.if %11 {
      %c0_10 = arith.constant 0 : index
      %c0_11 = arith.constant 0 : index
      %12 = vector.load %arg7[%c0_10, %c0_11] : memref<16x32xf32, #tpu.memory_space<vmem>>, vector<16x32xf32>
      %c0_12 = arith.constant 0 : index
      %c0_13 = arith.constant 0 : index
      %13 = vector.load %arg5[%c0_12, %c0_13] : memref<1x32xf32, #tpu.memory_space<vmem>>, vector<1x32xf32>
      %14 = vector.broadcast %13 : vector<1x32xf32> to vector<16x32xf32>
      %15 = arith.addf %12, %14 : vector<16x32xf32>
      %16 = arith.truncf %15 : vector<16x32xf32> to vector<16x32xbf16>
      %c0_14 = arith.constant 0 : index
      %c0_15 = arith.constant 0 : index
      %17 = vector.load %arg6[%c0_14, %c0_15] : memref<16x32xbf16, #tpu.memory_space<vmem>>, vector<16x32xbf16>
      tpu.vector_store %arg6[%c0_14, %c0_15], %16 {strides = array<i32>} : memref<16x32xbf16, #tpu.memory_space<vmem>>, vector<16x32xbf16>,
    } else {
    }
    return
  }
  func.func @transform_0(%arg0: i32, %arg1: i32, %arg2: i32) -> (i32, i32) {
    %c0_i32 = arith.constant 0 : i32
    return %arg0, %arg2 : i32, i32
  }
  func.func @transform_1(%arg0: i32, %arg1: i32, %arg2: i32) -> (i32, i32) {
    %c0_i32 = arith.constant 0 : i32
    return %arg2, %arg1 : i32, i32
  }
  func.func @transform_2(%arg0: i32, %arg1: i32, %arg2: i32) -> (i32, i32) {
    %c0_i32 = arith.constant 0 : i32
    %c0_i32_0 = arith.constant 0 : i32
    return %c0_i32, %arg1 : i32, i32
  }
  func.func @transform_3(%arg0: i32, %arg1: i32, %arg2: i32) -> (i32, i32) {
    %c0_i32 = arith.constant 0 : i32
    return %arg0, %arg1 : i32, i32
  }
}

module attributes {stable_mosaic.version = 11 : i64} {
  func.func @_self_attn_block_kernel(%arg0: i32, %arg1: memref<1x8x32xbf16, #tpu.memory_space<vmem>>, %arg2: memref<32x96xbf16, #tpu.memory_space<vmem>>, %arg3: memref<1x96xf32, #tpu.memory_space<vmem>>, %arg4: memref<32x32xbf16, #tpu.memory_space<vmem>>, %arg5: memref<1x32xf32, #tpu.memory_space<vmem>>, %arg6: memref<1x32xf32, #tpu.memory_space<vmem>>, %arg7: memref<1x32xf32, #tpu.memory_space<vmem>>, %arg8: memref<1x8x32xbf16, #tpu.memory_space<vmem>>, %arg9: memref<8x32xbf16, #tpu.memory_space<vmem>>) attributes {dimension_semantics = [#tpu.dimension_semantics<parallel>], iteration_bounds = array<i64: 2>, scalar_prefetch = 0 : i64, scratch_operands = 1 : i64, tpu.core_type = #tpu.core_type<tc>, window_params = [{transform_indices = @transform_0, window_bounds = array<i64: 1, 8, 32>}, {pipeline_mode = #tpu.pipeline_mode<synchronous>, transform_indices = @transform_1, window_bounds = array<i64: 32, 96>}, {pipeline_mode = #tpu.pipeline_mode<synchronous>, transform_indices = @transform_2, window_bounds = array<i64: 1, 96>}, {pipeline_mode = #tpu.pipeline_mode<synchronous>, transform_indices = @transform_3, window_bounds = array<i64: 32, 32>}, {pipeline_mode = #tpu.pipeline_mode<synchronous>, transform_indices = @transform_4, window_bounds = array<i64: 1, 32>}, {pipeline_mode = #tpu.pipeline_mode<synchronous>, transform_indices = @transform_5, window_bounds = array<i64: 1, 32>}, {pipeline_mode = #tpu.pipeline_mode<synchronous>, transform_indices = @transform_6, window_bounds = array<i64: 1, 32>}, {transform_indices = @transform_7, window_bounds = array<i64: 1, 8, 32>}]} {
    %c0 = arith.constant 0 : index
    %c0_0 = arith.constant 0 : index
    %c0_1 = arith.constant 0 : index
    %0 = vector.load %arg1[%c0, %c0_0, %c0_1] : memref<1x8x32xbf16, #tpu.memory_space<vmem>>, vector<1x8x32xbf16>
    %1 = vector.shape_cast %0 : vector<1x8x32xbf16> to vector<8x32xbf16>
    %c0_2 = arith.constant 0 : index
    %c0_3 = arith.constant 0 : index
    %2 = vector.load %arg2[%c0_2, %c0_3] : memref<32x96xbf16, #tpu.memory_space<vmem>>, vector<32x96xbf16>
    %cst = arith.constant dense<0.000000e+00> : vector<8x96xf32>
    %3 = tpu.matmul %1, %2, %cst {dimension_numbers = #tpu.dot_dimension_numbers<[1], [0], [0], [1], [0, 0, 1, 1], [], []>} : vector<8x32xbf16>, vector<32x96xbf16>, vector<8x96xf32> -> vector<8x96xf32>
    %c0_4 = arith.constant 0 : index
    %c0_5 = arith.constant 0 : index
    %4 = vector.load %arg3[%c0_4, %c0_5] : memref<1x96xf32, #tpu.memory_space<vmem>>, vector<1x96xf32>
    %5 = vector.broadcast %4 : vector<1x96xf32> to vector<8x96xf32>
    %6 = arith.addf %3, %5 : vector<8x96xf32>
    %7 = vector.extract_strided_slice %6 {offsets = [0, 0], sizes = [8, 32], strides = [1, 1]} : vector<8x96xf32> to vector<8x32xf32>
    %8 = arith.truncf %7 : vector<8x32xf32> to vector<8x32xbf16>
    %9 = vector.extract_strided_slice %6 {offsets = [0, 32], sizes = [8, 32], strides = [1, 1]} : vector<8x96xf32> to vector<8x32xf32>
    %10 = arith.truncf %9 : vector<8x32xf32> to vector<8x32xbf16>
    %11 = vector.extract_strided_slice %6 {offsets = [0, 64], sizes = [8, 32], strides = [1, 1]} : vector<8x96xf32> to vector<8x32xf32>
    %12 = arith.truncf %11 : vector<8x32xf32> to vector<8x32xbf16>
    %13 = vector.extract_strided_slice %8 {offsets = [0, 0], sizes = [8, 8], strides = [1, 1]} : vector<8x32xbf16> to vector<8x8xbf16>
    %14 = vector.extract_strided_slice %10 {offsets = [0, 0], sizes = [8, 8], strides = [1, 1]} : vector<8x32xbf16> to vector<8x8xbf16>
    %15 = vector.extract_strided_slice %12 {offsets = [0, 0], sizes = [8, 8], strides = [1, 1]} : vector<8x32xbf16> to vector<8x8xbf16>
    %cst_6 = arith.constant dense<0.000000e+00> : vector<8x8xf32>
    %16 = tpu.matmul %13, %14, %cst_6 {dimension_numbers = #tpu.dot_dimension_numbers<[1], [1], [0], [0], [0, 0, 1, 0], [], []>} : vector<8x8xbf16>, vector<8x8xbf16>, vector<8x8xf32> -> vector<8x8xf32>
    %cst_7 = arith.constant 0.353553385 : f32
    %17 = vector.broadcast %cst_7 : f32 to vector<8x8xf32>
    %18 = arith.mulf %16, %17 : vector<8x8xf32>
    %cst_8 = arith.constant dense<0xFF800000> : vector<8xf32>
    %19 = vector.multi_reduction <maximumf>, %18, %cst_8 [1] : vector<8x8xf32> to vector<8xf32>
    %20 = vector.shape_cast %19 : vector<8xf32> to vector<8x1xf32>
    %21 = vector.broadcast %20 : vector<8x1xf32> to vector<8x8xf32>
    %22 = arith.subf %18, %21 : vector<8x8xf32>
    %23 = math.exp %22 : vector<8x8xf32>
    %cst_9 = arith.constant dense<0.000000e+00> : vector<8xf32>
    %24 = vector.multi_reduction <add>, %23, %cst_9 [1] : vector<8x8xf32> to vector<8xf32>
    %25 = vector.shape_cast %24 : vector<8xf32> to vector<8x1xf32>
    %26 = tpu.reciprocal %25 {approx = true} : vector<8x1xf32> -> vector<8x1xf32>
    %27 = vector.broadcast %26 : vector<8x1xf32> to vector<8x8xf32>
    %28 = arith.mulf %23, %27 : vector<8x8xf32>
    %29 = arith.truncf %28 : vector<8x8xf32> to vector<8x8xbf16>
    %cst_10 = arith.constant dense<0.000000e+00> : vector<8x8xf32>
    %30 = tpu.matmul %29, %15, %cst_10 {dimension_numbers = #tpu.dot_dimension_numbers<[1], [0], [0], [1], [0, 0, 1, 1], [], []>} : vector<8x8xbf16>, vector<8x8xbf16>, vector<8x8xf32> -> vector<8x8xf32>
    %31 = arith.truncf %30 : vector<8x8xf32> to vector<8x8xbf16>
    %c0_11 = arith.constant 0 : index
    %c0_12 = arith.constant 0 : index
    %32 = vector.load %arg9[%c0_11, %c0_12] : memref<8x32xbf16, #tpu.memory_space<vmem>>, vector<8x8xbf16>
    tpu.vector_store %arg9[%c0_11, %c0_12], %31 {strides = array<i32>} : memref<8x32xbf16, #tpu.memory_space<vmem>>, vector<8x8xbf16>,
    %33 = vector.extract_strided_slice %8 {offsets = [0, 8], sizes = [8, 8], strides = [1, 1]} : vector<8x32xbf16> to vector<8x8xbf16>
    %34 = vector.extract_strided_slice %10 {offsets = [0, 8], sizes = [8, 8], strides = [1, 1]} : vector<8x32xbf16> to vector<8x8xbf16>
    %35 = vector.extract_strided_slice %12 {offsets = [0, 8], sizes = [8, 8], strides = [1, 1]} : vector<8x32xbf16> to vector<8x8xbf16>
    %cst_13 = arith.constant dense<0.000000e+00> : vector<8x8xf32>
    %36 = tpu.matmul %33, %34, %cst_13 {dimension_numbers = #tpu.dot_dimension_numbers<[1], [1], [0], [0], [0, 0, 1, 0], [], []>} : vector<8x8xbf16>, vector<8x8xbf16>, vector<8x8xf32> -> vector<8x8xf32>
    %cst_14 = arith.constant 0.353553385 : f32
    %37 = vector.broadcast %cst_14 : f32 to vector<8x8xf32>
    %38 = arith.mulf %36, %37 : vector<8x8xf32>
    %cst_15 = arith.constant dense<0xFF800000> : vector<8xf32>
    %39 = vector.multi_reduction <maximumf>, %38, %cst_15 [1] : vector<8x8xf32> to vector<8xf32>
    %40 = vector.shape_cast %39 : vector<8xf32> to vector<8x1xf32>
    %41 = vector.broadcast %40 : vector<8x1xf32> to vector<8x8xf32>
    %42 = arith.subf %38, %41 : vector<8x8xf32>
    %43 = math.exp %42 : vector<8x8xf32>
    %cst_16 = arith.constant dense<0.000000e+00> : vector<8xf32>
    %44 = vector.multi_reduction <add>, %43, %cst_16 [1] : vector<8x8xf32> to vector<8xf32>
    %45 = vector.shape_cast %44 : vector<8xf32> to vector<8x1xf32>
    %46 = tpu.reciprocal %45 {approx = true} : vector<8x1xf32> -> vector<8x1xf32>
    %47 = vector.broadcast %46 : vector<8x1xf32> to vector<8x8xf32>
    %48 = arith.mulf %43, %47 : vector<8x8xf32>
    %49 = arith.truncf %48 : vector<8x8xf32> to vector<8x8xbf16>
    %cst_17 = arith.constant dense<0.000000e+00> : vector<8x8xf32>
    %50 = tpu.matmul %49, %35, %cst_17 {dimension_numbers = #tpu.dot_dimension_numbers<[1], [0], [0], [1], [0, 0, 1, 1], [], []>} : vector<8x8xbf16>, vector<8x8xbf16>, vector<8x8xf32> -> vector<8x8xf32>
    %51 = arith.truncf %50 : vector<8x8xf32> to vector<8x8xbf16>
    %c0_18 = arith.constant 0 : index
    %c8 = arith.constant 8 : index
    %52 = vector.load %arg9[%c0_18, %c8] : memref<8x32xbf16, #tpu.memory_space<vmem>>, vector<8x8xbf16>
    tpu.vector_store %arg9[%c0_18, %c8], %51 {strides = array<i32>} : memref<8x32xbf16, #tpu.memory_space<vmem>>, vector<8x8xbf16>,
    %53 = vector.extract_strided_slice %8 {offsets = [0, 16], sizes = [8, 8], strides = [1, 1]} : vector<8x32xbf16> to vector<8x8xbf16>
    %54 = vector.extract_strided_slice %10 {offsets = [0, 16], sizes = [8, 8], strides = [1, 1]} : vector<8x32xbf16> to vector<8x8xbf16>
    %55 = vector.extract_strided_slice %12 {offsets = [0, 16], sizes = [8, 8], strides = [1, 1]} : vector<8x32xbf16> to vector<8x8xbf16>
    %cst_19 = arith.constant dense<0.000000e+00> : vector<8x8xf32>
    %56 = tpu.matmul %53, %54, %cst_19 {dimension_numbers = #tpu.dot_dimension_numbers<[1], [1], [0], [0], [0, 0, 1, 0], [], []>} : vector<8x8xbf16>, vector<8x8xbf16>, vector<8x8xf32> -> vector<8x8xf32>
    %cst_20 = arith.constant 0.353553385 : f32
    %57 = vector.broadcast %cst_20 : f32 to vector<8x8xf32>
    %58 = arith.mulf %56, %57 : vector<8x8xf32>
    %cst_21 = arith.constant dense<0xFF800000> : vector<8xf32>
    %59 = vector.multi_reduction <maximumf>, %58, %cst_21 [1] : vector<8x8xf32> to vector<8xf32>
    %60 = vector.shape_cast %59 : vector<8xf32> to vector<8x1xf32>
    %61 = vector.broadcast %60 : vector<8x1xf32> to vector<8x8xf32>
    %62 = arith.subf %58, %61 : vector<8x8xf32>
    %63 = math.exp %62 : vector<8x8xf32>
    %cst_22 = arith.constant dense<0.000000e+00> : vector<8xf32>
    %64 = vector.multi_reduction <add>, %63, %cst_22 [1] : vector<8x8xf32> to vector<8xf32>
    %65 = vector.shape_cast %64 : vector<8xf32> to vector<8x1xf32>
    %66 = tpu.reciprocal %65 {approx = true} : vector<8x1xf32> -> vector<8x1xf32>
    %67 = vector.broadcast %66 : vector<8x1xf32> to vector<8x8xf32>
    %68 = arith.mulf %63, %67 : vector<8x8xf32>
    %69 = arith.truncf %68 : vector<8x8xf32> to vector<8x8xbf16>
    %cst_23 = arith.constant dense<0.000000e+00> : vector<8x8xf32>
    %70 = tpu.matmul %69, %55, %cst_23 {dimension_numbers = #tpu.dot_dimension_numbers<[1], [0], [0], [1], [0, 0, 1, 1], [], []>} : vector<8x8xbf16>, vector<8x8xbf16>, vector<8x8xf32> -> vector<8x8xf32>
    %71 = arith.truncf %70 : vector<8x8xf32> to vector<8x8xbf16>
    %c0_24 = arith.constant 0 : index
    %c16 = arith.constant 16 : index
    %72 = vector.load %arg9[%c0_24, %c16] : memref<8x32xbf16, #tpu.memory_space<vmem>>, vector<8x8xbf16>
    tpu.vector_store %arg9[%c0_24, %c16], %71 {strides = array<i32>} : memref<8x32xbf16, #tpu.memory_space<vmem>>, vector<8x8xbf16>,
    %73 = vector.extract_strided_slice %8 {offsets = [0, 24], sizes = [8, 8], strides = [1, 1]} : vector<8x32xbf16> to vector<8x8xbf16>
    %74 = vector.extract_strided_slice %10 {offsets = [0, 24], sizes = [8, 8], strides = [1, 1]} : vector<8x32xbf16> to vector<8x8xbf16>
    %75 = vector.extract_strided_slice %12 {offsets = [0, 24], sizes = [8, 8], strides = [1, 1]} : vector<8x32xbf16> to vector<8x8xbf16>
    %cst_25 = arith.constant dense<0.000000e+00> : vector<8x8xf32>
    %76 = tpu.matmul %73, %74, %cst_25 {dimension_numbers = #tpu.dot_dimension_numbers<[1], [1], [0], [0], [0, 0, 1, 0], [], []>} : vector<8x8xbf16>, vector<8x8xbf16>, vector<8x8xf32> -> vector<8x8xf32>
    %cst_26 = arith.constant 0.353553385 : f32
    %77 = vector.broadcast %cst_26 : f32 to vector<8x8xf32>
    %78 = arith.mulf %76, %77 : vector<8x8xf32>
    %cst_27 = arith.constant dense<0xFF800000> : vector<8xf32>
    %79 = vector.multi_reduction <maximumf>, %78, %cst_27 [1] : vector<8x8xf32> to vector<8xf32>
    %80 = vector.shape_cast %79 : vector<8xf32> to vector<8x1xf32>
    %81 = vector.broadcast %80 : vector<8x1xf32> to vector<8x8xf32>
    %82 = arith.subf %78, %81 : vector<8x8xf32>
    %83 = math.exp %82 : vector<8x8xf32>
    %cst_28 = arith.constant dense<0.000000e+00> : vector<8xf32>
    %84 = vector.multi_reduction <add>, %83, %cst_28 [1] : vector<8x8xf32> to vector<8xf32>
    %85 = vector.shape_cast %84 : vector<8xf32> to vector<8x1xf32>
    %86 = tpu.reciprocal %85 {approx = true} : vector<8x1xf32> -> vector<8x1xf32>
    %87 = vector.broadcast %86 : vector<8x1xf32> to vector<8x8xf32>
    %88 = arith.mulf %83, %87 : vector<8x8xf32>
    %89 = arith.truncf %88 : vector<8x8xf32> to vector<8x8xbf16>
    %cst_29 = arith.constant dense<0.000000e+00> : vector<8x8xf32>
    %90 = tpu.matmul %89, %75, %cst_29 {dimension_numbers = #tpu.dot_dimension_numbers<[1], [0], [0], [1], [0, 0, 1, 1], [], []>} : vector<8x8xbf16>, vector<8x8xbf16>, vector<8x8xf32> -> vector<8x8xf32>
    %91 = arith.truncf %90 : vector<8x8xf32> to vector<8x8xbf16>
    %c0_30 = arith.constant 0 : index
    %c24 = arith.constant 24 : index
    %92 = vector.load %arg9[%c0_30, %c24] : memref<8x32xbf16, #tpu.memory_space<vmem>>, vector<8x8xbf16>
    tpu.vector_store %arg9[%c0_30, %c24], %91 {strides = array<i32>} : memref<8x32xbf16, #tpu.memory_space<vmem>>, vector<8x8xbf16>,
    %c0_31 = arith.constant 0 : index
    %c0_32 = arith.constant 0 : index
    %93 = vector.load %arg9[%c0_31, %c0_32] : memref<8x32xbf16, #tpu.memory_space<vmem>>, vector<8x32xbf16>
    %c0_33 = arith.constant 0 : index
    %c0_34 = arith.constant 0 : index
    %94 = vector.load %arg4[%c0_33, %c0_34] : memref<32x32xbf16, #tpu.memory_space<vmem>>, vector<32x32xbf16>
    %cst_35 = arith.constant dense<0.000000e+00> : vector<8x32xf32>
    %95 = tpu.matmul %93, %94, %cst_35 {dimension_numbers = #tpu.dot_dimension_numbers<[1], [0], [0], [1], [0, 0, 1, 1], [], []>} : vector<8x32xbf16>, vector<32x32xbf16>, vector<8x32xf32> -> vector<8x32xf32>
    %c0_36 = arith.constant 0 : index
    %c0_37 = arith.constant 0 : index
    %96 = vector.load %arg5[%c0_36, %c0_37] : memref<1x32xf32, #tpu.memory_space<vmem>>, vector<1x32xf32>
    %97 = vector.broadcast %96 : vector<1x32xf32> to vector<8x32xf32>
    %98 = arith.addf %95, %97 : vector<8x32xf32>
    %99 = arith.extf %1 : vector<8x32xbf16> to vector<8x32xf32>
    %100 = arith.addf %98, %99 : vector<8x32xf32>
    %c0_38 = arith.constant 0 : index
    %c0_39 = arith.constant 0 : index
    %101 = vector.load %arg6[%c0_38, %c0_39] : memref<1x32xf32, #tpu.memory_space<vmem>>, vector<1x32xf32>
    %c0_40 = arith.constant 0 : index
    %c0_41 = arith.constant 0 : index
    %102 = vector.load %arg7[%c0_40, %c0_41] : memref<1x32xf32, #tpu.memory_space<vmem>>, vector<1x32xf32>
    %cst_42 = arith.constant dense<0.000000e+00> : vector<8xf32>
    %103 = vector.multi_reduction <add>, %100, %cst_42 [1] : vector<8x32xf32> to vector<8xf32>
    %104 = vector.shape_cast %103 : vector<8xf32> to vector<8x1xf32>
    %cst_43 = arith.constant 3.200000e+01 : f32
    %105 = vector.broadcast %cst_43 : f32 to vector<8x1xf32>
    %106 = arith.divf %104, %105 : vector<8x1xf32>
    %107 = vector.broadcast %106 : vector<8x1xf32> to vector<8x32xf32>
    %108 = arith.subf %100, %107 : vector<8x32xf32>
    %109 = arith.mulf %108, %108 : vector<8x32xf32>
    %cst_44 = arith.constant dense<0.000000e+00> : vector<8xf32>
    %110 = vector.multi_reduction <add>, %109, %cst_44 [1] : vector<8x32xf32> to vector<8xf32>
    %111 = vector.shape_cast %110 : vector<8xf32> to vector<8x1xf32>
    %cst_45 = arith.constant 3.200000e+01 : f32
    %112 = vector.broadcast %cst_45 : f32 to vector<8x1xf32>
    %113 = arith.divf %111, %112 : vector<8x1xf32>
    %cst_46 = arith.constant 9.99999974E-6 : f32
    %114 = vector.broadcast %cst_46 : f32 to vector<8x1xf32>
    %115 = arith.addf %113, %114 : vector<8x1xf32>
    %116 = math.rsqrt %115 : vector<8x1xf32>
    %117 = vector.broadcast %116 : vector<8x1xf32> to vector<8x32xf32>
    %118 = arith.mulf %108, %117 : vector<8x32xf32>
    %119 = vector.broadcast %101 : vector<1x32xf32> to vector<8x32xf32>
    %120 = arith.mulf %118, %119 : vector<8x32xf32>
    %121 = vector.broadcast %102 : vector<1x32xf32> to vector<8x32xf32>
    %122 = arith.addf %120, %121 : vector<8x32xf32>
    %123 = arith.truncf %122 : vector<8x32xf32> to vector<8x32xbf16>
    %c0_47 = arith.constant 0 : index
    %c0_48 = arith.constant 0 : index
    %c0_49 = arith.constant 0 : index
    %124 = vector.load %arg8[%c0_47, %c0_48, %c0_49] : memref<1x8x32xbf16, #tpu.memory_space<vmem>>, vector<1x8x32xbf16>
    %125 = vector.shape_cast %124 : vector<1x8x32xbf16> to vector<8x32xbf16>
    %126 = vector.shape_cast %123 : vector<8x32xbf16> to vector<1x8x32xbf16>
    tpu.vector_store %arg8[%c0_47, %c0_48, %c0_49], %126 {strides = array<i32>} : memref<1x8x32xbf16, #tpu.memory_space<vmem>>, vector<1x8x32xbf16>,
    return
  }
  func.func @transform_0(%arg0: i32) -> (i32, i32, i32) {
    %c0_i32 = arith.constant 0 : i32
    %c0_i32_0 = arith.constant 0 : i32
    %c0_i32_1 = arith.constant 0 : i32
    return %arg0, %c0_i32, %c0_i32_0 : i32, i32, i32
  }
  func.func @transform_1(%arg0: i32) -> (i32, i32) {
    %c0_i32 = arith.constant 0 : i32
    %c0_i32_0 = arith.constant 0 : i32
    %c0_i32_1 = arith.constant 0 : i32
    return %c0_i32, %c0_i32_0 : i32, i32
  }
  func.func @transform_2(%arg0: i32) -> (i32, i32) {
    %c0_i32 = arith.constant 0 : i32
    %c0_i32_0 = arith.constant 0 : i32
    %c0_i32_1 = arith.constant 0 : i32
    return %c0_i32, %c0_i32_0 : i32, i32
  }
  func.func @transform_3(%arg0: i32) -> (i32, i32) {
    %c0_i32 = arith.constant 0 : i32
    %c0_i32_0 = arith.constant 0 : i32
    %c0_i32_1 = arith.constant 0 : i32
    return %c0_i32, %c0_i32_0 : i32, i32
  }
  func.func @transform_4(%arg0: i32) -> (i32, i32) {
    %c0_i32 = arith.constant 0 : i32
    %c0_i32_0 = arith.constant 0 : i32
    %c0_i32_1 = arith.constant 0 : i32
    return %c0_i32, %c0_i32_0 : i32, i32
  }
  func.func @transform_5(%arg0: i32) -> (i32, i32) {
    %c0_i32 = arith.constant 0 : i32
    %c0_i32_0 = arith.constant 0 : i32
    %c0_i32_1 = arith.constant 0 : i32
    return %c0_i32, %c0_i32_0 : i32, i32
  }
  func.func @transform_6(%arg0: i32) -> (i32, i32) {
    %c0_i32 = arith.constant 0 : i32
    %c0_i32_0 = arith.constant 0 : i32
    %c0_i32_1 = arith.constant 0 : i32
    return %c0_i32, %c0_i32_0 : i32, i32
  }
  func.func @transform_7(%arg0: i32) -> (i32, i32, i32) {
    %c0_i32 = arith.constant 0 : i32
    %c0_i32_0 = arith.constant 0 : i32
    %c0_i32_1 = arith.constant 0 : i32
    return %arg0, %c0_i32, %c0_i32_0 : i32, i32, i32
  }
}

module attributes {stable_mosaic.version = 11 : i64} {
  func.func @_self_attn_block_kernel(%arg0: i32, %arg1: memref<1x8x32xbf16, #tpu.memory_space<vmem>>, %arg2: memref<32x96xbf16, #tpu.memory_space<vmem>>, %arg3: memref<1x96xf32, #tpu.memory_space<vmem>>, %arg4: memref<32x32xbf16, #tpu.memory_space<vmem>>, %arg5: memref<1x32xf32, #tpu.memory_space<vmem>>, %arg6: memref<1x32xf32, #tpu.memory_space<vmem>>, %arg7: memref<1x32xf32, #tpu.memory_space<vmem>>, %arg8: memref<1x8x32xbf16, #tpu.memory_space<vmem>>, %arg9: memref<8x32xbf16, #tpu.memory_space<vmem>>) attributes {dimension_semantics = [#tpu.dimension_semantics<parallel>], iteration_bounds = array<i64: 2>, scalar_prefetch = 0 : i64, scratch_operands = 1 : i64, tpu.core_type = #tpu.core_type<tc>, window_params = [{transform_indices = @transform_0, window_bounds = array<i64: 1, 8, 32>}, {pipeline_mode = #tpu.pipeline_mode<synchronous>, transform_indices = @transform_1, window_bounds = array<i64: 32, 96>}, {pipeline_mode = #tpu.pipeline_mode<synchronous>, transform_indices = @transform_2, window_bounds = array<i64: 1, 96>}, {pipeline_mode = #tpu.pipeline_mode<synchronous>, transform_indices = @transform_3, window_bounds = array<i64: 32, 32>}, {pipeline_mode = #tpu.pipeline_mode<synchronous>, transform_indices = @transform_4, window_bounds = array<i64: 1, 32>}, {pipeline_mode = #tpu.pipeline_mode<synchronous>, transform_indices = @transform_5, window_bounds = array<i64: 1, 32>}, {pipeline_mode = #tpu.pipeline_mode<synchronous>, transform_indices = @transform_6, window_bounds = array<i64: 1, 32>}, {transform_indices = @transform_7, window_bounds = array<i64: 1, 8, 32>}]} {
    %c0 = arith.constant 0 : index
    %c0_0 = arith.constant 0 : index
    %c0_1 = arith.constant 0 : index
    %0 = vector.load %arg1[%c0, %c0_0, %c0_1] : memref<1x8x32xbf16, #tpu.memory_space<vmem>>, vector<1x8x32xbf16>
    %1 = vector.shape_cast %0 : vector<1x8x32xbf16> to vector<8x32xbf16>
    %c0_2 = arith.constant 0 : index
    %c0_3 = arith.constant 0 : index
    %2 = vector.load %arg2[%c0_2, %c0_3] : memref<32x96xbf16, #tpu.memory_space<vmem>>, vector<32x96xbf16>
    %cst = arith.constant dense<0.000000e+00> : vector<8x96xf32>
    %3 = tpu.matmul %1, %2, %cst {dimension_numbers = #tpu.dot_dimension_numbers<[1], [0], [0], [1], [0, 0, 1, 1], [], []>} : vector<8x32xbf16>, vector<32x96xbf16>, vector<8x96xf32> -> vector<8x96xf32>
    %c0_4 = arith.constant 0 : index
    %c0_5 = arith.constant 0 : index
    %4 = vector.load %arg3[%c0_4, %c0_5] : memref<1x96xf32, #tpu.memory_space<vmem>>, vector<1x96xf32>
    %5 = vector.broadcast %4 : vector<1x96xf32> to vector<8x96xf32>
    %6 = arith.addf %3, %5 : vector<8x96xf32>
    %7 = vector.extract_strided_slice %6 {offsets = [0, 0], sizes = [8, 32], strides = [1, 1]} : vector<8x96xf32> to vector<8x32xf32>
    %8 = arith.truncf %7 : vector<8x32xf32> to vector<8x32xbf16>
    %9 = vector.extract_strided_slice %6 {offsets = [0, 32], sizes = [8, 32], strides = [1, 1]} : vector<8x96xf32> to vector<8x32xf32>
    %10 = arith.truncf %9 : vector<8x32xf32> to vector<8x32xbf16>
    %11 = vector.extract_strided_slice %6 {offsets = [0, 64], sizes = [8, 32], strides = [1, 1]} : vector<8x96xf32> to vector<8x32xf32>
    %12 = arith.truncf %11 : vector<8x32xf32> to vector<8x32xbf16>
    %13 = tpu.iota {dimensions = array<i32: 0>} : vector<8x8xi32>
    %14 = tpu.iota {dimensions = array<i32: 1>} : vector<8x8xi32>
    %15 = arith.cmpi sle, %14, %13 : vector<8x8xi32>
    %16 = vector.extract_strided_slice %8 {offsets = [0, 0], sizes = [8, 8], strides = [1, 1]} : vector<8x32xbf16> to vector<8x8xbf16>
    %17 = vector.extract_strided_slice %10 {offsets = [0, 0], sizes = [8, 8], strides = [1, 1]} : vector<8x32xbf16> to vector<8x8xbf16>
    %18 = vector.extract_strided_slice %12 {offsets = [0, 0], sizes = [8, 8], strides = [1, 1]} : vector<8x32xbf16> to vector<8x8xbf16>
    %cst_6 = arith.constant dense<0.000000e+00> : vector<8x8xf32>
    %19 = tpu.matmul %16, %17, %cst_6 {dimension_numbers = #tpu.dot_dimension_numbers<[1], [1], [0], [0], [0, 0, 1, 0], [], []>} : vector<8x8xbf16>, vector<8x8xbf16>, vector<8x8xf32> -> vector<8x8xf32>
    %cst_7 = arith.constant 0.353553385 : f32
    %20 = vector.broadcast %cst_7 : f32 to vector<8x8xf32>
    %21 = arith.mulf %19, %20 : vector<8x8xf32>
    %cst_8 = arith.constant -1.000000e+30 : f32
    %22 = vector.broadcast %cst_8 : f32 to vector<8x8xf32>
    %23 = arith.select %15, %21, %22 : vector<8x8xi1>, vector<8x8xf32>
    %cst_9 = arith.constant dense<0xFF800000> : vector<8xf32>
    %24 = vector.multi_reduction <maximumf>, %23, %cst_9 [1] : vector<8x8xf32> to vector<8xf32>
    %25 = vector.shape_cast %24 : vector<8xf32> to vector<8x1xf32>
    %26 = vector.broadcast %25 : vector<8x1xf32> to vector<8x8xf32>
    %27 = arith.subf %23, %26 : vector<8x8xf32>
    %28 = math.exp %27 : vector<8x8xf32>
    %cst_10 = arith.constant dense<0.000000e+00> : vector<8xf32>
    %29 = vector.multi_reduction <add>, %28, %cst_10 [1] : vector<8x8xf32> to vector<8xf32>
    %30 = vector.shape_cast %29 : vector<8xf32> to vector<8x1xf32>
    %31 = tpu.reciprocal %30 {approx = true} : vector<8x1xf32> -> vector<8x1xf32>
    %32 = vector.broadcast %31 : vector<8x1xf32> to vector<8x8xf32>
    %33 = arith.mulf %28, %32 : vector<8x8xf32>
    %34 = arith.truncf %33 : vector<8x8xf32> to vector<8x8xbf16>
    %cst_11 = arith.constant dense<0.000000e+00> : vector<8x8xf32>
    %35 = tpu.matmul %34, %18, %cst_11 {dimension_numbers = #tpu.dot_dimension_numbers<[1], [0], [0], [1], [0, 0, 1, 1], [], []>} : vector<8x8xbf16>, vector<8x8xbf16>, vector<8x8xf32> -> vector<8x8xf32>
    %36 = arith.truncf %35 : vector<8x8xf32> to vector<8x8xbf16>
    %c0_12 = arith.constant 0 : index
    %c0_13 = arith.constant 0 : index
    %37 = vector.load %arg9[%c0_12, %c0_13] : memref<8x32xbf16, #tpu.memory_space<vmem>>, vector<8x8xbf16>
    tpu.vector_store %arg9[%c0_12, %c0_13], %36 {strides = array<i32>} : memref<8x32xbf16, #tpu.memory_space<vmem>>, vector<8x8xbf16>,
    %38 = vector.extract_strided_slice %8 {offsets = [0, 8], sizes = [8, 8], strides = [1, 1]} : vector<8x32xbf16> to vector<8x8xbf16>
    %39 = vector.extract_strided_slice %10 {offsets = [0, 8], sizes = [8, 8], strides = [1, 1]} : vector<8x32xbf16> to vector<8x8xbf16>
    %40 = vector.extract_strided_slice %12 {offsets = [0, 8], sizes = [8, 8], strides = [1, 1]} : vector<8x32xbf16> to vector<8x8xbf16>
    %cst_14 = arith.constant dense<0.000000e+00> : vector<8x8xf32>
    %41 = tpu.matmul %38, %39, %cst_14 {dimension_numbers = #tpu.dot_dimension_numbers<[1], [1], [0], [0], [0, 0, 1, 0], [], []>} : vector<8x8xbf16>, vector<8x8xbf16>, vector<8x8xf32> -> vector<8x8xf32>
    %cst_15 = arith.constant 0.353553385 : f32
    %42 = vector.broadcast %cst_15 : f32 to vector<8x8xf32>
    %43 = arith.mulf %41, %42 : vector<8x8xf32>
    %cst_16 = arith.constant -1.000000e+30 : f32
    %44 = vector.broadcast %cst_16 : f32 to vector<8x8xf32>
    %45 = arith.select %15, %43, %44 : vector<8x8xi1>, vector<8x8xf32>
    %cst_17 = arith.constant dense<0xFF800000> : vector<8xf32>
    %46 = vector.multi_reduction <maximumf>, %45, %cst_17 [1] : vector<8x8xf32> to vector<8xf32>
    %47 = vector.shape_cast %46 : vector<8xf32> to vector<8x1xf32>
    %48 = vector.broadcast %47 : vector<8x1xf32> to vector<8x8xf32>
    %49 = arith.subf %45, %48 : vector<8x8xf32>
    %50 = math.exp %49 : vector<8x8xf32>
    %cst_18 = arith.constant dense<0.000000e+00> : vector<8xf32>
    %51 = vector.multi_reduction <add>, %50, %cst_18 [1] : vector<8x8xf32> to vector<8xf32>
    %52 = vector.shape_cast %51 : vector<8xf32> to vector<8x1xf32>
    %53 = tpu.reciprocal %52 {approx = true} : vector<8x1xf32> -> vector<8x1xf32>
    %54 = vector.broadcast %53 : vector<8x1xf32> to vector<8x8xf32>
    %55 = arith.mulf %50, %54 : vector<8x8xf32>
    %56 = arith.truncf %55 : vector<8x8xf32> to vector<8x8xbf16>
    %cst_19 = arith.constant dense<0.000000e+00> : vector<8x8xf32>
    %57 = tpu.matmul %56, %40, %cst_19 {dimension_numbers = #tpu.dot_dimension_numbers<[1], [0], [0], [1], [0, 0, 1, 1], [], []>} : vector<8x8xbf16>, vector<8x8xbf16>, vector<8x8xf32> -> vector<8x8xf32>
    %58 = arith.truncf %57 : vector<8x8xf32> to vector<8x8xbf16>
    %c0_20 = arith.constant 0 : index
    %c8 = arith.constant 8 : index
    %59 = vector.load %arg9[%c0_20, %c8] : memref<8x32xbf16, #tpu.memory_space<vmem>>, vector<8x8xbf16>
    tpu.vector_store %arg9[%c0_20, %c8], %58 {strides = array<i32>} : memref<8x32xbf16, #tpu.memory_space<vmem>>, vector<8x8xbf16>,
    %60 = vector.extract_strided_slice %8 {offsets = [0, 16], sizes = [8, 8], strides = [1, 1]} : vector<8x32xbf16> to vector<8x8xbf16>
    %61 = vector.extract_strided_slice %10 {offsets = [0, 16], sizes = [8, 8], strides = [1, 1]} : vector<8x32xbf16> to vector<8x8xbf16>
    %62 = vector.extract_strided_slice %12 {offsets = [0, 16], sizes = [8, 8], strides = [1, 1]} : vector<8x32xbf16> to vector<8x8xbf16>
    %cst_21 = arith.constant dense<0.000000e+00> : vector<8x8xf32>
    %63 = tpu.matmul %60, %61, %cst_21 {dimension_numbers = #tpu.dot_dimension_numbers<[1], [1], [0], [0], [0, 0, 1, 0], [], []>} : vector<8x8xbf16>, vector<8x8xbf16>, vector<8x8xf32> -> vector<8x8xf32>
    %cst_22 = arith.constant 0.353553385 : f32
    %64 = vector.broadcast %cst_22 : f32 to vector<8x8xf32>
    %65 = arith.mulf %63, %64 : vector<8x8xf32>
    %cst_23 = arith.constant -1.000000e+30 : f32
    %66 = vector.broadcast %cst_23 : f32 to vector<8x8xf32>
    %67 = arith.select %15, %65, %66 : vector<8x8xi1>, vector<8x8xf32>
    %cst_24 = arith.constant dense<0xFF800000> : vector<8xf32>
    %68 = vector.multi_reduction <maximumf>, %67, %cst_24 [1] : vector<8x8xf32> to vector<8xf32>
    %69 = vector.shape_cast %68 : vector<8xf32> to vector<8x1xf32>
    %70 = vector.broadcast %69 : vector<8x1xf32> to vector<8x8xf32>
    %71 = arith.subf %67, %70 : vector<8x8xf32>
    %72 = math.exp %71 : vector<8x8xf32>
    %cst_25 = arith.constant dense<0.000000e+00> : vector<8xf32>
    %73 = vector.multi_reduction <add>, %72, %cst_25 [1] : vector<8x8xf32> to vector<8xf32>
    %74 = vector.shape_cast %73 : vector<8xf32> to vector<8x1xf32>
    %75 = tpu.reciprocal %74 {approx = true} : vector<8x1xf32> -> vector<8x1xf32>
    %76 = vector.broadcast %75 : vector<8x1xf32> to vector<8x8xf32>
    %77 = arith.mulf %72, %76 : vector<8x8xf32>
    %78 = arith.truncf %77 : vector<8x8xf32> to vector<8x8xbf16>
    %cst_26 = arith.constant dense<0.000000e+00> : vector<8x8xf32>
    %79 = tpu.matmul %78, %62, %cst_26 {dimension_numbers = #tpu.dot_dimension_numbers<[1], [0], [0], [1], [0, 0, 1, 1], [], []>} : vector<8x8xbf16>, vector<8x8xbf16>, vector<8x8xf32> -> vector<8x8xf32>
    %80 = arith.truncf %79 : vector<8x8xf32> to vector<8x8xbf16>
    %c0_27 = arith.constant 0 : index
    %c16 = arith.constant 16 : index
    %81 = vector.load %arg9[%c0_27, %c16] : memref<8x32xbf16, #tpu.memory_space<vmem>>, vector<8x8xbf16>
    tpu.vector_store %arg9[%c0_27, %c16], %80 {strides = array<i32>} : memref<8x32xbf16, #tpu.memory_space<vmem>>, vector<8x8xbf16>,
    %82 = vector.extract_strided_slice %8 {offsets = [0, 24], sizes = [8, 8], strides = [1, 1]} : vector<8x32xbf16> to vector<8x8xbf16>
    %83 = vector.extract_strided_slice %10 {offsets = [0, 24], sizes = [8, 8], strides = [1, 1]} : vector<8x32xbf16> to vector<8x8xbf16>
    %84 = vector.extract_strided_slice %12 {offsets = [0, 24], sizes = [8, 8], strides = [1, 1]} : vector<8x32xbf16> to vector<8x8xbf16>
    %cst_28 = arith.constant dense<0.000000e+00> : vector<8x8xf32>
    %85 = tpu.matmul %82, %83, %cst_28 {dimension_numbers = #tpu.dot_dimension_numbers<[1], [1], [0], [0], [0, 0, 1, 0], [], []>} : vector<8x8xbf16>, vector<8x8xbf16>, vector<8x8xf32> -> vector<8x8xf32>
    %cst_29 = arith.constant 0.353553385 : f32
    %86 = vector.broadcast %cst_29 : f32 to vector<8x8xf32>
    %87 = arith.mulf %85, %86 : vector<8x8xf32>
    %cst_30 = arith.constant -1.000000e+30 : f32
    %88 = vector.broadcast %cst_30 : f32 to vector<8x8xf32>
    %89 = arith.select %15, %87, %88 : vector<8x8xi1>, vector<8x8xf32>
    %cst_31 = arith.constant dense<0xFF800000> : vector<8xf32>
    %90 = vector.multi_reduction <maximumf>, %89, %cst_31 [1] : vector<8x8xf32> to vector<8xf32>
    %91 = vector.shape_cast %90 : vector<8xf32> to vector<8x1xf32>
    %92 = vector.broadcast %91 : vector<8x1xf32> to vector<8x8xf32>
    %93 = arith.subf %89, %92 : vector<8x8xf32>
    %94 = math.exp %93 : vector<8x8xf32>
    %cst_32 = arith.constant dense<0.000000e+00> : vector<8xf32>
    %95 = vector.multi_reduction <add>, %94, %cst_32 [1] : vector<8x8xf32> to vector<8xf32>
    %96 = vector.shape_cast %95 : vector<8xf32> to vector<8x1xf32>
    %97 = tpu.reciprocal %96 {approx = true} : vector<8x1xf32> -> vector<8x1xf32>
    %98 = vector.broadcast %97 : vector<8x1xf32> to vector<8x8xf32>
    %99 = arith.mulf %94, %98 : vector<8x8xf32>
    %100 = arith.truncf %99 : vector<8x8xf32> to vector<8x8xbf16>
    %cst_33 = arith.constant dense<0.000000e+00> : vector<8x8xf32>
    %101 = tpu.matmul %100, %84, %cst_33 {dimension_numbers = #tpu.dot_dimension_numbers<[1], [0], [0], [1], [0, 0, 1, 1], [], []>} : vector<8x8xbf16>, vector<8x8xbf16>, vector<8x8xf32> -> vector<8x8xf32>
    %102 = arith.truncf %101 : vector<8x8xf32> to vector<8x8xbf16>
    %c0_34 = arith.constant 0 : index
    %c24 = arith.constant 24 : index
    %103 = vector.load %arg9[%c0_34, %c24] : memref<8x32xbf16, #tpu.memory_space<vmem>>, vector<8x8xbf16>
    tpu.vector_store %arg9[%c0_34, %c24], %102 {strides = array<i32>} : memref<8x32xbf16, #tpu.memory_space<vmem>>, vector<8x8xbf16>,
    %c0_35 = arith.constant 0 : index
    %c0_36 = arith.constant 0 : index
    %104 = vector.load %arg9[%c0_35, %c0_36] : memref<8x32xbf16, #tpu.memory_space<vmem>>, vector<8x32xbf16>
    %c0_37 = arith.constant 0 : index
    %c0_38 = arith.constant 0 : index
    %105 = vector.load %arg4[%c0_37, %c0_38] : memref<32x32xbf16, #tpu.memory_space<vmem>>, vector<32x32xbf16>
    %cst_39 = arith.constant dense<0.000000e+00> : vector<8x32xf32>
    %106 = tpu.matmul %104, %105, %cst_39 {dimension_numbers = #tpu.dot_dimension_numbers<[1], [0], [0], [1], [0, 0, 1, 1], [], []>} : vector<8x32xbf16>, vector<32x32xbf16>, vector<8x32xf32> -> vector<8x32xf32>
    %c0_40 = arith.constant 0 : index
    %c0_41 = arith.constant 0 : index
    %107 = vector.load %arg5[%c0_40, %c0_41] : memref<1x32xf32, #tpu.memory_space<vmem>>, vector<1x32xf32>
    %108 = vector.broadcast %107 : vector<1x32xf32> to vector<8x32xf32>
    %109 = arith.addf %106, %108 : vector<8x32xf32>
    %110 = arith.extf %1 : vector<8x32xbf16> to vector<8x32xf32>
    %111 = arith.addf %109, %110 : vector<8x32xf32>
    %c0_42 = arith.constant 0 : index
    %c0_43 = arith.constant 0 : index
    %112 = vector.load %arg6[%c0_42, %c0_43] : memref<1x32xf32, #tpu.memory_space<vmem>>, vector<1x32xf32>
    %c0_44 = arith.constant 0 : index
    %c0_45 = arith.constant 0 : index
    %113 = vector.load %arg7[%c0_44, %c0_45] : memref<1x32xf32, #tpu.memory_space<vmem>>, vector<1x32xf32>
    %cst_46 = arith.constant dense<0.000000e+00> : vector<8xf32>
    %114 = vector.multi_reduction <add>, %111, %cst_46 [1] : vector<8x32xf32> to vector<8xf32>
    %115 = vector.shape_cast %114 : vector<8xf32> to vector<8x1xf32>
    %cst_47 = arith.constant 3.200000e+01 : f32
    %116 = vector.broadcast %cst_47 : f32 to vector<8x1xf32>
    %117 = arith.divf %115, %116 : vector<8x1xf32>
    %118 = vector.broadcast %117 : vector<8x1xf32> to vector<8x32xf32>
    %119 = arith.subf %111, %118 : vector<8x32xf32>
    %120 = arith.mulf %119, %119 : vector<8x32xf32>
    %cst_48 = arith.constant dense<0.000000e+00> : vector<8xf32>
    %121 = vector.multi_reduction <add>, %120, %cst_48 [1] : vector<8x32xf32> to vector<8xf32>
    %122 = vector.shape_cast %121 : vector<8xf32> to vector<8x1xf32>
    %cst_49 = arith.constant 3.200000e+01 : f32
    %123 = vector.broadcast %cst_49 : f32 to vector<8x1xf32>
    %124 = arith.divf %122, %123 : vector<8x1xf32>
    %cst_50 = arith.constant 9.99999974E-6 : f32
    %125 = vector.broadcast %cst_50 : f32 to vector<8x1xf32>
    %126 = arith.addf %124, %125 : vector<8x1xf32>
    %127 = math.rsqrt %126 : vector<8x1xf32>
    %128 = vector.broadcast %127 : vector<8x1xf32> to vector<8x32xf32>
    %129 = arith.mulf %119, %128 : vector<8x32xf32>
    %130 = vector.broadcast %112 : vector<1x32xf32> to vector<8x32xf32>
    %131 = arith.mulf %129, %130 : vector<8x32xf32>
    %132 = vector.broadcast %113 : vector<1x32xf32> to vector<8x32xf32>
    %133 = arith.addf %131, %132 : vector<8x32xf32>
    %134 = arith.truncf %133 : vector<8x32xf32> to vector<8x32xbf16>
    %c0_51 = arith.constant 0 : index
    %c0_52 = arith.constant 0 : index
    %c0_53 = arith.constant 0 : index
    %135 = vector.load %arg8[%c0_51, %c0_52, %c0_53] : memref<1x8x32xbf16, #tpu.memory_space<vmem>>, vector<1x8x32xbf16>
    %136 = vector.shape_cast %135 : vector<1x8x32xbf16> to vector<8x32xbf16>
    %137 = vector.shape_cast %134 : vector<8x32xbf16> to vector<1x8x32xbf16>
    tpu.vector_store %arg8[%c0_51, %c0_52, %c0_53], %137 {strides = array<i32>} : memref<1x8x32xbf16, #tpu.memory_space<vmem>>, vector<1x8x32xbf16>,
    return
  }
  func.func @transform_0(%arg0: i32) -> (i32, i32, i32) {
    %c0_i32 = arith.constant 0 : i32
    %c0_i32_0 = arith.constant 0 : i32
    %c0_i32_1 = arith.constant 0 : i32
    return %arg0, %c0_i32, %c0_i32_0 : i32, i32, i32
  }
  func.func @transform_1(%arg0: i32) -> (i32, i32) {
    %c0_i32 = arith.constant 0 : i32
    %c0_i32_0 = arith.constant 0 : i32
    %c0_i32_1 = arith.constant 0 : i32
    return %c0_i32, %c0_i32_0 : i32, i32
  }
  func.func @transform_2(%arg0: i32) -> (i32, i32) {
    %c0_i32 = arith.constant 0 : i32
    %c0_i32_0 = arith.constant 0 : i32
    %c0_i32_1 = arith.constant 0 : i32
    return %c0_i32, %c0_i32_0 : i32, i32
  }
  func.func @transform_3(%arg0: i32) -> (i32, i32) {
    %c0_i32 = arith.constant 0 : i32
    %c0_i32_0 = arith.constant 0 : i32
    %c0_i32_1 = arith.constant 0 : i32
    return %c0_i32, %c0_i32_0 : i32, i32
  }
  func.func @transform_4(%arg0: i32) -> (i32, i32) {
    %c0_i32 = arith.constant 0 : i32
    %c0_i32_0 = arith.constant 0 : i32
    %c0_i32_1 = arith.constant 0 : i32
    return %c0_i32, %c0_i32_0 : i32, i32
  }
  func.func @transform_5(%arg0: i32) -> (i32, i32) {
    %c0_i32 = arith.constant 0 : i32
    %c0_i32_0 = arith.constant 0 : i32
    %c0_i32_1 = arith.constant 0 : i32
    return %c0_i32, %c0_i32_0 : i32, i32
  }
  func.func @transform_6(%arg0: i32) -> (i32, i32) {
    %c0_i32 = arith.constant 0 : i32
    %c0_i32_0 = arith.constant 0 : i32
    %c0_i32_1 = arith.constant 0 : i32
    return %c0_i32, %c0_i32_0 : i32, i32
  }
  func.func @transform_7(%arg0: i32) -> (i32, i32, i32) {
    %c0_i32 = arith.constant 0 : i32
    %c0_i32_0 = arith.constant 0 : i32
    %c0_i32_1 = arith.constant 0 : i32
    return %arg0, %c0_i32, %c0_i32_0 : i32, i32, i32
  }
}

module attributes {stable_mosaic.version = 11 : i64} {
  func.func @_ffn_block_kernel(%arg0: i32, %arg1: memref<16x32xbf16, #tpu.memory_space<vmem>>, %arg2: memref<32x128xbf16, #tpu.memory_space<vmem>>, %arg3: memref<1x128xf32, #tpu.memory_space<vmem>>, %arg4: memref<128x32xbf16, #tpu.memory_space<vmem>>, %arg5: memref<1x32xf32, #tpu.memory_space<vmem>>, %arg6: memref<1x32xf32, #tpu.memory_space<vmem>>, %arg7: memref<1x32xf32, #tpu.memory_space<vmem>>, %arg8: memref<16x32xbf16, #tpu.memory_space<vmem>>) attributes {dimension_semantics = [#tpu.dimension_semantics<parallel>], iteration_bounds = array<i64: 1>, scalar_prefetch = 0 : i64, scratch_operands = 0 : i64, tpu.core_type = #tpu.core_type<tc>, window_params = [{transform_indices = @transform_0, window_bounds = array<i64: 16, 32>}, {pipeline_mode = #tpu.pipeline_mode<synchronous>, transform_indices = @transform_1, window_bounds = array<i64: 32, 128>}, {pipeline_mode = #tpu.pipeline_mode<synchronous>, transform_indices = @transform_2, window_bounds = array<i64: 1, 128>}, {pipeline_mode = #tpu.pipeline_mode<synchronous>, transform_indices = @transform_3, window_bounds = array<i64: 128, 32>}, {pipeline_mode = #tpu.pipeline_mode<synchronous>, transform_indices = @transform_4, window_bounds = array<i64: 1, 32>}, {pipeline_mode = #tpu.pipeline_mode<synchronous>, transform_indices = @transform_5, window_bounds = array<i64: 1, 32>}, {pipeline_mode = #tpu.pipeline_mode<synchronous>, transform_indices = @transform_6, window_bounds = array<i64: 1, 32>}, {transform_indices = @transform_7, window_bounds = array<i64: 16, 32>}]} {
    %c0 = arith.constant 0 : index
    %c0_0 = arith.constant 0 : index
    %0 = vector.load %arg1[%c0, %c0_0] : memref<16x32xbf16, #tpu.memory_space<vmem>>, vector<16x32xbf16>
    %c0_1 = arith.constant 0 : index
    %c0_2 = arith.constant 0 : index
    %1 = vector.load %arg2[%c0_1, %c0_2] : memref<32x128xbf16, #tpu.memory_space<vmem>>, vector<32x128xbf16>
    %cst = arith.constant dense<0.000000e+00> : vector<16x128xf32>
    %2 = tpu.matmul %0, %1, %cst {dimension_numbers = #tpu.dot_dimension_numbers<[1], [0], [0], [1], [0, 0, 1, 1], [], []>} : vector<16x32xbf16>, vector<32x128xbf16>, vector<16x128xf32> -> vector<16x128xf32>
    %c0_3 = arith.constant 0 : index
    %c0_4 = arith.constant 0 : index
    %3 = vector.load %arg3[%c0_3, %c0_4] : memref<1x128xf32, #tpu.memory_space<vmem>>, vector<1x128xf32>
    %4 = vector.broadcast %3 : vector<1x128xf32> to vector<16x128xf32>
    %5 = arith.addf %2, %4 : vector<16x128xf32>
    %cst_5 = arith.constant 0.000000e+00 : f32
    %6 = vector.broadcast %cst_5 : f32 to vector<16x128xf32>
    %7 = arith.maximumf %5, %6 : vector<16x128xf32>
    %8 = arith.truncf %7 : vector<16x128xf32> to vector<16x128xbf16>
    %c0_6 = arith.constant 0 : index
    %c0_7 = arith.constant 0 : index
    %9 = vector.load %arg4[%c0_6, %c0_7] : memref<128x32xbf16, #tpu.memory_space<vmem>>, vector<128x32xbf16>
    %cst_8 = arith.constant dense<0.000000e+00> : vector<16x32xf32>
    %10 = tpu.matmul %8, %9, %cst_8 {dimension_numbers = #tpu.dot_dimension_numbers<[1], [0], [0], [1], [0, 0, 1, 1], [], []>} : vector<16x128xbf16>, vector<128x32xbf16>, vector<16x32xf32> -> vector<16x32xf32>
    %c0_9 = arith.constant 0 : index
    %c0_10 = arith.constant 0 : index
    %11 = vector.load %arg5[%c0_9, %c0_10] : memref<1x32xf32, #tpu.memory_space<vmem>>, vector<1x32xf32>
    %12 = vector.broadcast %11 : vector<1x32xf32> to vector<16x32xf32>
    %13 = arith.addf %10, %12 : vector<16x32xf32>
    %14 = arith.extf %0 : vector<16x32xbf16> to vector<16x32xf32>
    %15 = arith.addf %13, %14 : vector<16x32xf32>
    %c0_11 = arith.constant 0 : index
    %c0_12 = arith.constant 0 : index
    %16 = vector.load %arg6[%c0_11, %c0_12] : memref<1x32xf32, #tpu.memory_space<vmem>>, vector<1x32xf32>
    %c0_13 = arith.constant 0 : index
    %c0_14 = arith.constant 0 : index
    %17 = vector.load %arg7[%c0_13, %c0_14] : memref<1x32xf32, #tpu.memory_space<vmem>>, vector<1x32xf32>
    %cst_15 = arith.constant dense<0.000000e+00> : vector<16xf32>
    %18 = vector.multi_reduction <add>, %15, %cst_15 [1] : vector<16x32xf32> to vector<16xf32>
    %19 = vector.shape_cast %18 : vector<16xf32> to vector<16x1xf32>
    %cst_16 = arith.constant 3.200000e+01 : f32
    %20 = vector.broadcast %cst_16 : f32 to vector<16x1xf32>
    %21 = arith.divf %19, %20 : vector<16x1xf32>
    %22 = vector.broadcast %21 : vector<16x1xf32> to vector<16x32xf32>
    %23 = arith.subf %15, %22 : vector<16x32xf32>
    %24 = arith.mulf %23, %23 : vector<16x32xf32>
    %cst_17 = arith.constant dense<0.000000e+00> : vector<16xf32>
    %25 = vector.multi_reduction <add>, %24, %cst_17 [1] : vector<16x32xf32> to vector<16xf32>
    %26 = vector.shape_cast %25 : vector<16xf32> to vector<16x1xf32>
    %cst_18 = arith.constant 3.200000e+01 : f32
    %27 = vector.broadcast %cst_18 : f32 to vector<16x1xf32>
    %28 = arith.divf %26, %27 : vector<16x1xf32>
    %cst_19 = arith.constant 9.99999974E-6 : f32
    %29 = vector.broadcast %cst_19 : f32 to vector<16x1xf32>
    %30 = arith.addf %28, %29 : vector<16x1xf32>
    %31 = math.rsqrt %30 : vector<16x1xf32>
    %32 = vector.broadcast %31 : vector<16x1xf32> to vector<16x32xf32>
    %33 = arith.mulf %23, %32 : vector<16x32xf32>
    %34 = vector.broadcast %16 : vector<1x32xf32> to vector<16x32xf32>
    %35 = arith.mulf %33, %34 : vector<16x32xf32>
    %36 = vector.broadcast %17 : vector<1x32xf32> to vector<16x32xf32>
    %37 = arith.addf %35, %36 : vector<16x32xf32>
    %38 = arith.truncf %37 : vector<16x32xf32> to vector<16x32xbf16>
    %c0_20 = arith.constant 0 : index
    %c0_21 = arith.constant 0 : index
    %39 = vector.load %arg8[%c0_20, %c0_21] : memref<16x32xbf16, #tpu.memory_space<vmem>>, vector<16x32xbf16>
    tpu.vector_store %arg8[%c0_20, %c0_21], %38 {strides = array<i32>} : memref<16x32xbf16, #tpu.memory_space<vmem>>, vector<16x32xbf16>,
    return
  }
  func.func @transform_0(%arg0: i32) -> (i32, i32) {
    %c0_i32 = arith.constant 0 : i32
    %c0_i32_0 = arith.constant 0 : i32
    return %arg0, %c0_i32 : i32, i32
  }
  func.func @transform_1(%arg0: i32) -> (i32, i32) {
    %c0_i32 = arith.constant 0 : i32
    %c0_i32_0 = arith.constant 0 : i32
    %c0_i32_1 = arith.constant 0 : i32
    return %c0_i32, %c0_i32_0 : i32, i32
  }
  func.func @transform_2(%arg0: i32) -> (i32, i32) {
    %c0_i32 = arith.constant 0 : i32
    %c0_i32_0 = arith.constant 0 : i32
    %c0_i32_1 = arith.constant 0 : i32
    return %c0_i32, %c0_i32_0 : i32, i32
  }
  func.func @transform_3(%arg0: i32) -> (i32, i32) {
    %c0_i32 = arith.constant 0 : i32
    %c0_i32_0 = arith.constant 0 : i32
    %c0_i32_1 = arith.constant 0 : i32
    return %c0_i32, %c0_i32_0 : i32, i32
  }
  func.func @transform_4(%arg0: i32) -> (i32, i32) {
    %c0_i32 = arith.constant 0 : i32
    %c0_i32_0 = arith.constant 0 : i32
    %c0_i32_1 = arith.constant 0 : i32
    return %c0_i32, %c0_i32_0 : i32, i32
  }
  func.func @transform_5(%arg0: i32) -> (i32, i32) {
    %c0_i32 = arith.constant 0 : i32
    %c0_i32_0 = arith.constant 0 : i32
    %c0_i32_1 = arith.constant 0 : i32
    return %c0_i32, %c0_i32_0 : i32, i32
  }
  func.func @transform_6(%arg0: i32) -> (i32, i32) {
    %c0_i32 = arith.constant 0 : i32
    %c0_i32_0 = arith.constant 0 : i32
    %c0_i32_1 = arith.constant 0 : i32
    return %c0_i32, %c0_i32_0 : i32, i32
  }
  func.func @transform_7(%arg0: i32) -> (i32, i32) {
    %c0_i32 = arith.constant 0 : i32
    %c0_i32_0 = arith.constant 0 : i32
    return %arg0, %c0_i32 : i32, i32
  }
}

module attributes {stable_mosaic.version = 11 : i64} {
  func.func @_cross_attn_block_kernel(%arg0: i32, %arg1: memref<1x8x32xbf16, #tpu.memory_space<vmem>>, %arg2: memref<1x8x32xbf16, #tpu.memory_space<vmem>>, %arg3: memref<32x32xbf16, #tpu.memory_space<vmem>>, %arg4: memref<1x32xf32, #tpu.memory_space<vmem>>, %arg5: memref<32x64xbf16, #tpu.memory_space<vmem>>, %arg6: memref<1x64xf32, #tpu.memory_space<vmem>>, %arg7: memref<32x32xbf16, #tpu.memory_space<vmem>>, %arg8: memref<1x32xf32, #tpu.memory_space<vmem>>, %arg9: memref<1x32xf32, #tpu.memory_space<vmem>>, %arg10: memref<1x32xf32, #tpu.memory_space<vmem>>, %arg11: memref<1x8x32xbf16, #tpu.memory_space<vmem>>, %arg12: memref<8x32xbf16, #tpu.memory_space<vmem>>) attributes {dimension_semantics = [#tpu.dimension_semantics<parallel>], iteration_bounds = array<i64: 2>, scalar_prefetch = 0 : i64, scratch_operands = 1 : i64, tpu.core_type = #tpu.core_type<tc>, window_params = [{transform_indices = @transform_0, window_bounds = array<i64: 1, 8, 32>}, {transform_indices = @transform_1, window_bounds = array<i64: 1, 8, 32>}, {pipeline_mode = #tpu.pipeline_mode<synchronous>, transform_indices = @transform_2, window_bounds = array<i64: 32, 32>}, {pipeline_mode = #tpu.pipeline_mode<synchronous>, transform_indices = @transform_3, window_bounds = array<i64: 1, 32>}, {pipeline_mode = #tpu.pipeline_mode<synchronous>, transform_indices = @transform_4, window_bounds = array<i64: 32, 64>}, {pipeline_mode = #tpu.pipeline_mode<synchronous>, transform_indices = @transform_5, window_bounds = array<i64: 1, 64>}, {pipeline_mode = #tpu.pipeline_mode<synchronous>, transform_indices = @transform_6, window_bounds = array<i64: 32, 32>}, {pipeline_mode = #tpu.pipeline_mode<synchronous>, transform_indices = @transform_7, window_bounds = array<i64: 1, 32>}, {pipeline_mode = #tpu.pipeline_mode<synchronous>, transform_indices = @transform_8, window_bounds = array<i64: 1, 32>}, {pipeline_mode = #tpu.pipeline_mode<synchronous>, transform_indices = @transform_9, window_bounds = array<i64: 1, 32>}, {transform_indices = @transform_10, window_bounds = array<i64: 1, 8, 32>}]} {
    %c0 = arith.constant 0 : index
    %c0_0 = arith.constant 0 : index
    %c0_1 = arith.constant 0 : index
    %0 = vector.load %arg1[%c0, %c0_0, %c0_1] : memref<1x8x32xbf16, #tpu.memory_space<vmem>>, vector<1x8x32xbf16>
    %1 = vector.shape_cast %0 : vector<1x8x32xbf16> to vector<8x32xbf16>
    %c0_2 = arith.constant 0 : index
    %c0_3 = arith.constant 0 : index
    %c0_4 = arith.constant 0 : index
    %2 = vector.load %arg2[%c0_2, %c0_3, %c0_4] : memref<1x8x32xbf16, #tpu.memory_space<vmem>>, vector<1x8x32xbf16>
    %3 = vector.shape_cast %2 : vector<1x8x32xbf16> to vector<8x32xbf16>
    %c0_5 = arith.constant 0 : index
    %c0_6 = arith.constant 0 : index
    %4 = vector.load %arg3[%c0_5, %c0_6] : memref<32x32xbf16, #tpu.memory_space<vmem>>, vector<32x32xbf16>
    %cst = arith.constant dense<0.000000e+00> : vector<8x32xf32>
    %5 = tpu.matmul %1, %4, %cst {dimension_numbers = #tpu.dot_dimension_numbers<[1], [0], [0], [1], [0, 0, 1, 1], [], []>} : vector<8x32xbf16>, vector<32x32xbf16>, vector<8x32xf32> -> vector<8x32xf32>
    %c0_7 = arith.constant 0 : index
    %c0_8 = arith.constant 0 : index
    %6 = vector.load %arg4[%c0_7, %c0_8] : memref<1x32xf32, #tpu.memory_space<vmem>>, vector<1x32xf32>
    %7 = vector.broadcast %6 : vector<1x32xf32> to vector<8x32xf32>
    %8 = arith.addf %5, %7 : vector<8x32xf32>
    %9 = arith.truncf %8 : vector<8x32xf32> to vector<8x32xbf16>
    %c0_9 = arith.constant 0 : index
    %c0_10 = arith.constant 0 : index
    %10 = vector.load %arg5[%c0_9, %c0_10] : memref<32x64xbf16, #tpu.memory_space<vmem>>, vector<32x64xbf16>
    %cst_11 = arith.constant dense<0.000000e+00> : vector<8x64xf32>
    %11 = tpu.matmul %3, %10, %cst_11 {dimension_numbers = #tpu.dot_dimension_numbers<[1], [0], [0], [1], [0, 0, 1, 1], [], []>} : vector<8x32xbf16>, vector<32x64xbf16>, vector<8x64xf32> -> vector<8x64xf32>
    %c0_12 = arith.constant 0 : index
    %c0_13 = arith.constant 0 : index
    %12 = vector.load %arg6[%c0_12, %c0_13] : memref<1x64xf32, #tpu.memory_space<vmem>>, vector<1x64xf32>
    %13 = vector.broadcast %12 : vector<1x64xf32> to vector<8x64xf32>
    %14 = arith.addf %11, %13 : vector<8x64xf32>
    %15 = vector.extract_strided_slice %14 {offsets = [0, 0], sizes = [8, 32], strides = [1, 1]} : vector<8x64xf32> to vector<8x32xf32>
    %16 = arith.truncf %15 : vector<8x32xf32> to vector<8x32xbf16>
    %17 = vector.extract_strided_slice %14 {offsets = [0, 32], sizes = [8, 32], strides = [1, 1]} : vector<8x64xf32> to vector<8x32xf32>
    %18 = arith.truncf %17 : vector<8x32xf32> to vector<8x32xbf16>
    %19 = vector.extract_strided_slice %9 {offsets = [0, 0], sizes = [8, 8], strides = [1, 1]} : vector<8x32xbf16> to vector<8x8xbf16>
    %20 = vector.extract_strided_slice %16 {offsets = [0, 0], sizes = [8, 8], strides = [1, 1]} : vector<8x32xbf16> to vector<8x8xbf16>
    %21 = vector.extract_strided_slice %18 {offsets = [0, 0], sizes = [8, 8], strides = [1, 1]} : vector<8x32xbf16> to vector<8x8xbf16>
    %cst_14 = arith.constant dense<0.000000e+00> : vector<8x8xf32>
    %22 = tpu.matmul %19, %20, %cst_14 {dimension_numbers = #tpu.dot_dimension_numbers<[1], [1], [0], [0], [0, 0, 1, 0], [], []>} : vector<8x8xbf16>, vector<8x8xbf16>, vector<8x8xf32> -> vector<8x8xf32>
    %cst_15 = arith.constant 0.353553385 : f32
    %23 = vector.broadcast %cst_15 : f32 to vector<8x8xf32>
    %24 = arith.mulf %22, %23 : vector<8x8xf32>
    %cst_16 = arith.constant dense<0xFF800000> : vector<8xf32>
    %25 = vector.multi_reduction <maximumf>, %24, %cst_16 [1] : vector<8x8xf32> to vector<8xf32>
    %26 = vector.shape_cast %25 : vector<8xf32> to vector<8x1xf32>
    %27 = vector.broadcast %26 : vector<8x1xf32> to vector<8x8xf32>
    %28 = arith.subf %24, %27 : vector<8x8xf32>
    %29 = math.exp %28 : vector<8x8xf32>
    %cst_17 = arith.constant dense<0.000000e+00> : vector<8xf32>
    %30 = vector.multi_reduction <add>, %29, %cst_17 [1] : vector<8x8xf32> to vector<8xf32>
    %31 = vector.shape_cast %30 : vector<8xf32> to vector<8x1xf32>
    %32 = tpu.reciprocal %31 {approx = true} : vector<8x1xf32> -> vector<8x1xf32>
    %33 = vector.broadcast %32 : vector<8x1xf32> to vector<8x8xf32>
    %34 = arith.mulf %29, %33 : vector<8x8xf32>
    %35 = arith.truncf %34 : vector<8x8xf32> to vector<8x8xbf16>
    %cst_18 = arith.constant dense<0.000000e+00> : vector<8x8xf32>
    %36 = tpu.matmul %35, %21, %cst_18 {dimension_numbers = #tpu.dot_dimension_numbers<[1], [0], [0], [1], [0, 0, 1, 1], [], []>} : vector<8x8xbf16>, vector<8x8xbf16>, vector<8x8xf32> -> vector<8x8xf32>
    %37 = arith.truncf %36 : vector<8x8xf32> to vector<8x8xbf16>
    %c0_19 = arith.constant 0 : index
    %c0_20 = arith.constant 0 : index
    %38 = vector.load %arg12[%c0_19, %c0_20] : memref<8x32xbf16, #tpu.memory_space<vmem>>, vector<8x8xbf16>
    tpu.vector_store %arg12[%c0_19, %c0_20], %37 {strides = array<i32>} : memref<8x32xbf16, #tpu.memory_space<vmem>>, vector<8x8xbf16>,
    %39 = vector.extract_strided_slice %9 {offsets = [0, 8], sizes = [8, 8], strides = [1, 1]} : vector<8x32xbf16> to vector<8x8xbf16>
    %40 = vector.extract_strided_slice %16 {offsets = [0, 8], sizes = [8, 8], strides = [1, 1]} : vector<8x32xbf16> to vector<8x8xbf16>
    %41 = vector.extract_strided_slice %18 {offsets = [0, 8], sizes = [8, 8], strides = [1, 1]} : vector<8x32xbf16> to vector<8x8xbf16>
    %cst_21 = arith.constant dense<0.000000e+00> : vector<8x8xf32>
    %42 = tpu.matmul %39, %40, %cst_21 {dimension_numbers = #tpu.dot_dimension_numbers<[1], [1], [0], [0], [0, 0, 1, 0], [], []>} : vector<8x8xbf16>, vector<8x8xbf16>, vector<8x8xf32> -> vector<8x8xf32>
    %cst_22 = arith.constant 0.353553385 : f32
    %43 = vector.broadcast %cst_22 : f32 to vector<8x8xf32>
    %44 = arith.mulf %42, %43 : vector<8x8xf32>
    %cst_23 = arith.constant dense<0xFF800000> : vector<8xf32>
    %45 = vector.multi_reduction <maximumf>, %44, %cst_23 [1] : vector<8x8xf32> to vector<8xf32>
    %46 = vector.shape_cast %45 : vector<8xf32> to vector<8x1xf32>
    %47 = vector.broadcast %46 : vector<8x1xf32> to vector<8x8xf32>
    %48 = arith.subf %44, %47 : vector<8x8xf32>
    %49 = math.exp %48 : vector<8x8xf32>
    %cst_24 = arith.constant dense<0.000000e+00> : vector<8xf32>
    %50 = vector.multi_reduction <add>, %49, %cst_24 [1] : vector<8x8xf32> to vector<8xf32>
    %51 = vector.shape_cast %50 : vector<8xf32> to vector<8x1xf32>
    %52 = tpu.reciprocal %51 {approx = true} : vector<8x1xf32> -> vector<8x1xf32>
    %53 = vector.broadcast %52 : vector<8x1xf32> to vector<8x8xf32>
    %54 = arith.mulf %49, %53 : vector<8x8xf32>
    %55 = arith.truncf %54 : vector<8x8xf32> to vector<8x8xbf16>
    %cst_25 = arith.constant dense<0.000000e+00> : vector<8x8xf32>
    %56 = tpu.matmul %55, %41, %cst_25 {dimension_numbers = #tpu.dot_dimension_numbers<[1], [0], [0], [1], [0, 0, 1, 1], [], []>} : vector<8x8xbf16>, vector<8x8xbf16>, vector<8x8xf32> -> vector<8x8xf32>
    %57 = arith.truncf %56 : vector<8x8xf32> to vector<8x8xbf16>
    %c0_26 = arith.constant 0 : index
    %c8 = arith.constant 8 : index
    %58 = vector.load %arg12[%c0_26, %c8] : memref<8x32xbf16, #tpu.memory_space<vmem>>, vector<8x8xbf16>
    tpu.vector_store %arg12[%c0_26, %c8], %57 {strides = array<i32>} : memref<8x32xbf16, #tpu.memory_space<vmem>>, vector<8x8xbf16>,
    %59 = vector.extract_strided_slice %9 {offsets = [0, 16], sizes = [8, 8], strides = [1, 1]} : vector<8x32xbf16> to vector<8x8xbf16>
    %60 = vector.extract_strided_slice %16 {offsets = [0, 16], sizes = [8, 8], strides = [1, 1]} : vector<8x32xbf16> to vector<8x8xbf16>
    %61 = vector.extract_strided_slice %18 {offsets = [0, 16], sizes = [8, 8], strides = [1, 1]} : vector<8x32xbf16> to vector<8x8xbf16>
    %cst_27 = arith.constant dense<0.000000e+00> : vector<8x8xf32>
    %62 = tpu.matmul %59, %60, %cst_27 {dimension_numbers = #tpu.dot_dimension_numbers<[1], [1], [0], [0], [0, 0, 1, 0], [], []>} : vector<8x8xbf16>, vector<8x8xbf16>, vector<8x8xf32> -> vector<8x8xf32>
    %cst_28 = arith.constant 0.353553385 : f32
    %63 = vector.broadcast %cst_28 : f32 to vector<8x8xf32>
    %64 = arith.mulf %62, %63 : vector<8x8xf32>
    %cst_29 = arith.constant dense<0xFF800000> : vector<8xf32>
    %65 = vector.multi_reduction <maximumf>, %64, %cst_29 [1] : vector<8x8xf32> to vector<8xf32>
    %66 = vector.shape_cast %65 : vector<8xf32> to vector<8x1xf32>
    %67 = vector.broadcast %66 : vector<8x1xf32> to vector<8x8xf32>
    %68 = arith.subf %64, %67 : vector<8x8xf32>
    %69 = math.exp %68 : vector<8x8xf32>
    %cst_30 = arith.constant dense<0.000000e+00> : vector<8xf32>
    %70 = vector.multi_reduction <add>, %69, %cst_30 [1] : vector<8x8xf32> to vector<8xf32>
    %71 = vector.shape_cast %70 : vector<8xf32> to vector<8x1xf32>
    %72 = tpu.reciprocal %71 {approx = true} : vector<8x1xf32> -> vector<8x1xf32>
    %73 = vector.broadcast %72 : vector<8x1xf32> to vector<8x8xf32>
    %74 = arith.mulf %69, %73 : vector<8x8xf32>
    %75 = arith.truncf %74 : vector<8x8xf32> to vector<8x8xbf16>
    %cst_31 = arith.constant dense<0.000000e+00> : vector<8x8xf32>
    %76 = tpu.matmul %75, %61, %cst_31 {dimension_numbers = #tpu.dot_dimension_numbers<[1], [0], [0], [1], [0, 0, 1, 1], [], []>} : vector<8x8xbf16>, vector<8x8xbf16>, vector<8x8xf32> -> vector<8x8xf32>
    %77 = arith.truncf %76 : vector<8x8xf32> to vector<8x8xbf16>
    %c0_32 = arith.constant 0 : index
    %c16 = arith.constant 16 : index
    %78 = vector.load %arg12[%c0_32, %c16] : memref<8x32xbf16, #tpu.memory_space<vmem>>, vector<8x8xbf16>
    tpu.vector_store %arg12[%c0_32, %c16], %77 {strides = array<i32>} : memref<8x32xbf16, #tpu.memory_space<vmem>>, vector<8x8xbf16>,
    %79 = vector.extract_strided_slice %9 {offsets = [0, 24], sizes = [8, 8], strides = [1, 1]} : vector<8x32xbf16> to vector<8x8xbf16>
    %80 = vector.extract_strided_slice %16 {offsets = [0, 24], sizes = [8, 8], strides = [1, 1]} : vector<8x32xbf16> to vector<8x8xbf16>
    %81 = vector.extract_strided_slice %18 {offsets = [0, 24], sizes = [8, 8], strides = [1, 1]} : vector<8x32xbf16> to vector<8x8xbf16>
    %cst_33 = arith.constant dense<0.000000e+00> : vector<8x8xf32>
    %82 = tpu.matmul %79, %80, %cst_33 {dimension_numbers = #tpu.dot_dimension_numbers<[1], [1], [0], [0], [0, 0, 1, 0], [], []>} : vector<8x8xbf16>, vector<8x8xbf16>, vector<8x8xf32> -> vector<8x8xf32>
    %cst_34 = arith.constant 0.353553385 : f32
    %83 = vector.broadcast %cst_34 : f32 to vector<8x8xf32>
    %84 = arith.mulf %82, %83 : vector<8x8xf32>
    %cst_35 = arith.constant dense<0xFF800000> : vector<8xf32>
    %85 = vector.multi_reduction <maximumf>, %84, %cst_35 [1] : vector<8x8xf32> to vector<8xf32>
    %86 = vector.shape_cast %85 : vector<8xf32> to vector<8x1xf32>
    %87 = vector.broadcast %86 : vector<8x1xf32> to vector<8x8xf32>
    %88 = arith.subf %84, %87 : vector<8x8xf32>
    %89 = math.exp %88 : vector<8x8xf32>
    %cst_36 = arith.constant dense<0.000000e+00> : vector<8xf32>
    %90 = vector.multi_reduction <add>, %89, %cst_36 [1] : vector<8x8xf32> to vector<8xf32>
    %91 = vector.shape_cast %90 : vector<8xf32> to vector<8x1xf32>
    %92 = tpu.reciprocal %91 {approx = true} : vector<8x1xf32> -> vector<8x1xf32>
    %93 = vector.broadcast %92 : vector<8x1xf32> to vector<8x8xf32>
    %94 = arith.mulf %89, %93 : vector<8x8xf32>
    %95 = arith.truncf %94 : vector<8x8xf32> to vector<8x8xbf16>
    %cst_37 = arith.constant dense<0.000000e+00> : vector<8x8xf32>
    %96 = tpu.matmul %95, %81, %cst_37 {dimension_numbers = #tpu.dot_dimension_numbers<[1], [0], [0], [1], [0, 0, 1, 1], [], []>} : vector<8x8xbf16>, vector<8x8xbf16>, vector<8x8xf32> -> vector<8x8xf32>
    %97 = arith.truncf %96 : vector<8x8xf32> to vector<8x8xbf16>
    %c0_38 = arith.constant 0 : index
    %c24 = arith.constant 24 : index
    %98 = vector.load %arg12[%c0_38, %c24] : memref<8x32xbf16, #tpu.memory_space<vmem>>, vector<8x8xbf16>
    tpu.vector_store %arg12[%c0_38, %c24], %97 {strides = array<i32>} : memref<8x32xbf16, #tpu.memory_space<vmem>>, vector<8x8xbf16>,
    %c0_39 = arith.constant 0 : index
    %c0_40 = arith.constant 0 : index
    %99 = vector.load %arg12[%c0_39, %c0_40] : memref<8x32xbf16, #tpu.memory_space<vmem>>, vector<8x32xbf16>
    %c0_41 = arith.constant 0 : index
    %c0_42 = arith.constant 0 : index
    %100 = vector.load %arg7[%c0_41, %c0_42] : memref<32x32xbf16, #tpu.memory_space<vmem>>, vector<32x32xbf16>
    %cst_43 = arith.constant dense<0.000000e+00> : vector<8x32xf32>
    %101 = tpu.matmul %99, %100, %cst_43 {dimension_numbers = #tpu.dot_dimension_numbers<[1], [0], [0], [1], [0, 0, 1, 1], [], []>} : vector<8x32xbf16>, vector<32x32xbf16>, vector<8x32xf32> -> vector<8x32xf32>
    %c0_44 = arith.constant 0 : index
    %c0_45 = arith.constant 0 : index
    %102 = vector.load %arg8[%c0_44, %c0_45] : memref<1x32xf32, #tpu.memory_space<vmem>>, vector<1x32xf32>
    %103 = vector.broadcast %102 : vector<1x32xf32> to vector<8x32xf32>
    %104 = arith.addf %101, %103 : vector<8x32xf32>
    %105 = arith.extf %1 : vector<8x32xbf16> to vector<8x32xf32>
    %106 = arith.addf %104, %105 : vector<8x32xf32>
    %c0_46 = arith.constant 0 : index
    %c0_47 = arith.constant 0 : index
    %107 = vector.load %arg9[%c0_46, %c0_47] : memref<1x32xf32, #tpu.memory_space<vmem>>, vector<1x32xf32>
    %c0_48 = arith.constant 0 : index
    %c0_49 = arith.constant 0 : index
    %108 = vector.load %arg10[%c0_48, %c0_49] : memref<1x32xf32, #tpu.memory_space<vmem>>, vector<1x32xf32>
    %cst_50 = arith.constant dense<0.000000e+00> : vector<8xf32>
    %109 = vector.multi_reduction <add>, %106, %cst_50 [1] : vector<8x32xf32> to vector<8xf32>
    %110 = vector.shape_cast %109 : vector<8xf32> to vector<8x1xf32>
    %cst_51 = arith.constant 3.200000e+01 : f32
    %111 = vector.broadcast %cst_51 : f32 to vector<8x1xf32>
    %112 = arith.divf %110, %111 : vector<8x1xf32>
    %113 = vector.broadcast %112 : vector<8x1xf32> to vector<8x32xf32>
    %114 = arith.subf %106, %113 : vector<8x32xf32>
    %115 = arith.mulf %114, %114 : vector<8x32xf32>
    %cst_52 = arith.constant dense<0.000000e+00> : vector<8xf32>
    %116 = vector.multi_reduction <add>, %115, %cst_52 [1] : vector<8x32xf32> to vector<8xf32>
    %117 = vector.shape_cast %116 : vector<8xf32> to vector<8x1xf32>
    %cst_53 = arith.constant 3.200000e+01 : f32
    %118 = vector.broadcast %cst_53 : f32 to vector<8x1xf32>
    %119 = arith.divf %117, %118 : vector<8x1xf32>
    %cst_54 = arith.constant 9.99999974E-6 : f32
    %120 = vector.broadcast %cst_54 : f32 to vector<8x1xf32>
    %121 = arith.addf %119, %120 : vector<8x1xf32>
    %122 = math.rsqrt %121 : vector<8x1xf32>
    %123 = vector.broadcast %122 : vector<8x1xf32> to vector<8x32xf32>
    %124 = arith.mulf %114, %123 : vector<8x32xf32>
    %125 = vector.broadcast %107 : vector<1x32xf32> to vector<8x32xf32>
    %126 = arith.mulf %124, %125 : vector<8x32xf32>
    %127 = vector.broadcast %108 : vector<1x32xf32> to vector<8x32xf32>
    %128 = arith.addf %126, %127 : vector<8x32xf32>
    %129 = arith.truncf %128 : vector<8x32xf32> to vector<8x32xbf16>
    %c0_55 = arith.constant 0 : index
    %c0_56 = arith.constant 0 : index
    %c0_57 = arith.constant 0 : index
    %130 = vector.load %arg11[%c0_55, %c0_56, %c0_57] : memref<1x8x32xbf16, #tpu.memory_space<vmem>>, vector<1x8x32xbf16>
    %131 = vector.shape_cast %130 : vector<1x8x32xbf16> to vector<8x32xbf16>
    %132 = vector.shape_cast %129 : vector<8x32xbf16> to vector<1x8x32xbf16>
    tpu.vector_store %arg11[%c0_55, %c0_56, %c0_57], %132 {strides = array<i32>} : memref<1x8x32xbf16, #tpu.memory_space<vmem>>, vector<1x8x32xbf16>,
    return
  }
  func.func @transform_0(%arg0: i32) -> (i32, i32, i32) {
    %c0_i32 = arith.constant 0 : i32
    %c0_i32_0 = arith.constant 0 : i32
    %c0_i32_1 = arith.constant 0 : i32
    return %arg0, %c0_i32, %c0_i32_0 : i32, i32, i32
  }
  func.func @transform_1(%arg0: i32) -> (i32, i32, i32) {
    %c0_i32 = arith.constant 0 : i32
    %c0_i32_0 = arith.constant 0 : i32
    %c0_i32_1 = arith.constant 0 : i32
    return %arg0, %c0_i32, %c0_i32_0 : i32, i32, i32
  }
  func.func @transform_2(%arg0: i32) -> (i32, i32) {
    %c0_i32 = arith.constant 0 : i32
    %c0_i32_0 = arith.constant 0 : i32
    %c0_i32_1 = arith.constant 0 : i32
    return %c0_i32, %c0_i32_0 : i32, i32
  }
  func.func @transform_3(%arg0: i32) -> (i32, i32) {
    %c0_i32 = arith.constant 0 : i32
    %c0_i32_0 = arith.constant 0 : i32
    %c0_i32_1 = arith.constant 0 : i32
    return %c0_i32, %c0_i32_0 : i32, i32
  }
  func.func @transform_4(%arg0: i32) -> (i32, i32) {
    %c0_i32 = arith.constant 0 : i32
    %c0_i32_0 = arith.constant 0 : i32
    %c0_i32_1 = arith.constant 0 : i32
    return %c0_i32, %c0_i32_0 : i32, i32
  }
  func.func @transform_5(%arg0: i32) -> (i32, i32) {
    %c0_i32 = arith.constant 0 : i32
    %c0_i32_0 = arith.constant 0 : i32
    %c0_i32_1 = arith.constant 0 : i32
    return %c0_i32, %c0_i32_0 : i32, i32
  }
  func.func @transform_6(%arg0: i32) -> (i32, i32) {
    %c0_i32 = arith.constant 0 : i32
    %c0_i32_0 = arith.constant 0 : i32
    %c0_i32_1 = arith.constant 0 : i32
    return %c0_i32, %c0_i32_0 : i32, i32
  }
  func.func @transform_7(%arg0: i32) -> (i32, i32) {
    %c0_i32 = arith.constant 0 : i32
    %c0_i32_0 = arith.constant 0 : i32
    %c0_i32_1 = arith.constant 0 : i32
    return %c0_i32, %c0_i32_0 : i32, i32
  }
  func.func @transform_8(%arg0: i32) -> (i32, i32) {
    %c0_i32 = arith.constant 0 : i32
    %c0_i32_0 = arith.constant 0 : i32
    %c0_i32_1 = arith.constant 0 : i32
    return %c0_i32, %c0_i32_0 : i32, i32
  }
  func.func @transform_9(%arg0: i32) -> (i32, i32) {
    %c0_i32 = arith.constant 0 : i32
    %c0_i32_0 = arith.constant 0 : i32
    %c0_i32_1 = arith.constant 0 : i32
    return %c0_i32, %c0_i32_0 : i32, i32
  }
  func.func @transform_10(%arg0: i32) -> (i32, i32, i32) {
    %c0_i32 = arith.constant 0 : i32
    %c0_i32_0 = arith.constant 0 : i32
    %c0_i32_1 = arith.constant 0 : i32
    return %arg0, %c0_i32, %c0_i32_0 : i32, i32, i32
  }
}

module attributes {stable_mosaic.version = 11 : i64} {
  func.func @_self_attn_block_kernel(%arg0: i32, %arg1: memref<1x8x32xbf16, #tpu.memory_space<vmem>>, %arg2: memref<32x96xbf16, #tpu.memory_space<vmem>>, %arg3: memref<1x96xf32, #tpu.memory_space<vmem>>, %arg4: memref<32x32xbf16, #tpu.memory_space<vmem>>, %arg5: memref<1x32xf32, #tpu.memory_space<vmem>>, %arg6: memref<1x32xf32, #tpu.memory_space<vmem>>, %arg7: memref<1x32xf32, #tpu.memory_space<vmem>>, %arg8: memref<1x8x32xbf16, #tpu.memory_space<vmem>>, %arg9: memref<8x32xbf16, #tpu.memory_space<vmem>>) attributes {dimension_semantics = [#tpu.dimension_semantics<parallel>], iteration_bounds = array<i64: 2>, scalar_prefetch = 0 : i64, scratch_operands = 1 : i64, tpu.core_type = #tpu.core_type<tc>, window_params = [{transform_indices = @transform_0, window_bounds = array<i64: 1, 8, 32>}, {pipeline_mode = #tpu.pipeline_mode<synchronous>, transform_indices = @transform_1, window_bounds = array<i64: 32, 96>}, {pipeline_mode = #tpu.pipeline_mode<synchronous>, transform_indices = @transform_2, window_bounds = array<i64: 1, 96>}, {pipeline_mode = #tpu.pipeline_mode<synchronous>, transform_indices = @transform_3, window_bounds = array<i64: 32, 32>}, {pipeline_mode = #tpu.pipeline_mode<synchronous>, transform_indices = @transform_4, window_bounds = array<i64: 1, 32>}, {pipeline_mode = #tpu.pipeline_mode<synchronous>, transform_indices = @transform_5, window_bounds = array<i64: 1, 32>}, {pipeline_mode = #tpu.pipeline_mode<synchronous>, transform_indices = @transform_6, window_bounds = array<i64: 1, 32>}, {transform_indices = @transform_7, window_bounds = array<i64: 1, 8, 32>}]} {
    %c0 = arith.constant 0 : index
    %c0_0 = arith.constant 0 : index
    %c0_1 = arith.constant 0 : index
    %0 = vector.load %arg1[%c0, %c0_0, %c0_1] : memref<1x8x32xbf16, #tpu.memory_space<vmem>>, vector<1x8x32xbf16>
    %1 = vector.shape_cast %0 : vector<1x8x32xbf16> to vector<8x32xbf16>
    %c0_2 = arith.constant 0 : index
    %c0_3 = arith.constant 0 : index
    %2 = vector.load %arg2[%c0_2, %c0_3] : memref<32x96xbf16, #tpu.memory_space<vmem>>, vector<32x96xbf16>
    %cst = arith.constant dense<0.000000e+00> : vector<8x96xf32>
    %3 = tpu.matmul %1, %2, %cst {dimension_numbers = #tpu.dot_dimension_numbers<[1], [0], [0], [1], [0, 0, 1, 1], [], []>} : vector<8x32xbf16>, vector<32x96xbf16>, vector<8x96xf32> -> vector<8x96xf32>
    %c0_4 = arith.constant 0 : index
    %c0_5 = arith.constant 0 : index
    %4 = vector.load %arg3[%c0_4, %c0_5] : memref<1x96xf32, #tpu.memory_space<vmem>>, vector<1x96xf32>
    %5 = vector.broadcast %4 : vector<1x96xf32> to vector<8x96xf32>
    %6 = arith.addf %3, %5 : vector<8x96xf32>
    %7 = vector.extract_strided_slice %6 {offsets = [0, 0], sizes = [8, 32], strides = [1, 1]} : vector<8x96xf32> to vector<8x32xf32>
    %8 = arith.truncf %7 : vector<8x32xf32> to vector<8x32xbf16>
    %9 = vector.extract_strided_slice %6 {offsets = [0, 32], sizes = [8, 32], strides = [1, 1]} : vector<8x96xf32> to vector<8x32xf32>
    %10 = arith.truncf %9 : vector<8x32xf32> to vector<8x32xbf16>
    %11 = vector.extract_strided_slice %6 {offsets = [0, 64], sizes = [8, 32], strides = [1, 1]} : vector<8x96xf32> to vector<8x32xf32>
    %12 = arith.truncf %11 : vector<8x32xf32> to vector<8x32xbf16>
    %13 = tpu.iota {dimensions = array<i32: 0>} : vector<8x8xi32>
    %14 = tpu.iota {dimensions = array<i32: 1>} : vector<8x8xi32>
    %15 = arith.cmpi sle, %14, %13 : vector<8x8xi32>
    %16 = vector.extract_strided_slice %8 {offsets = [0, 0], sizes = [8, 8], strides = [1, 1]} : vector<8x32xbf16> to vector<8x8xbf16>
    %17 = vector.extract_strided_slice %10 {offsets = [0, 0], sizes = [8, 8], strides = [1, 1]} : vector<8x32xbf16> to vector<8x8xbf16>
    %18 = vector.extract_strided_slice %12 {offsets = [0, 0], sizes = [8, 8], strides = [1, 1]} : vector<8x32xbf16> to vector<8x8xbf16>
    %cst_6 = arith.constant dense<0.000000e+00> : vector<8x8xf32>
    %19 = tpu.matmul %16, %17, %cst_6 {dimension_numbers = #tpu.dot_dimension_numbers<[1], [1], [0], [0], [0, 0, 1, 0], [], []>} : vector<8x8xbf16>, vector<8x8xbf16>, vector<8x8xf32> -> vector<8x8xf32>
    %cst_7 = arith.constant 0.353553385 : f32
    %20 = vector.broadcast %cst_7 : f32 to vector<8x8xf32>
    %21 = arith.mulf %19, %20 : vector<8x8xf32>
    %cst_8 = arith.constant -1.000000e+30 : f32
    %22 = vector.broadcast %cst_8 : f32 to vector<8x8xf32>
    %23 = arith.select %15, %21, %22 : vector<8x8xi1>, vector<8x8xf32>
    %cst_9 = arith.constant dense<0xFF800000> : vector<8xf32>
    %24 = vector.multi_reduction <maximumf>, %23, %cst_9 [1] : vector<8x8xf32> to vector<8xf32>
    %25 = vector.shape_cast %24 : vector<8xf32> to vector<8x1xf32>
    %26 = vector.broadcast %25 : vector<8x1xf32> to vector<8x8xf32>
    %27 = arith.subf %23, %26 : vector<8x8xf32>
    %28 = math.exp %27 : vector<8x8xf32>
    %cst_10 = arith.constant dense<0.000000e+00> : vector<8xf32>
    %29 = vector.multi_reduction <add>, %28, %cst_10 [1] : vector<8x8xf32> to vector<8xf32>
    %30 = vector.shape_cast %29 : vector<8xf32> to vector<8x1xf32>
    %31 = tpu.reciprocal %30 {approx = true} : vector<8x1xf32> -> vector<8x1xf32>
    %32 = vector.broadcast %31 : vector<8x1xf32> to vector<8x8xf32>
    %33 = arith.mulf %28, %32 : vector<8x8xf32>
    %34 = arith.truncf %33 : vector<8x8xf32> to vector<8x8xbf16>
    %cst_11 = arith.constant dense<0.000000e+00> : vector<8x8xf32>
    %35 = tpu.matmul %34, %18, %cst_11 {dimension_numbers = #tpu.dot_dimension_numbers<[1], [0], [0], [1], [0, 0, 1, 1], [], []>} : vector<8x8xbf16>, vector<8x8xbf16>, vector<8x8xf32> -> vector<8x8xf32>
    %36 = arith.truncf %35 : vector<8x8xf32> to vector<8x8xbf16>
    %c0_12 = arith.constant 0 : index
    %c0_13 = arith.constant 0 : index
    %37 = vector.load %arg9[%c0_12, %c0_13] : memref<8x32xbf16, #tpu.memory_space<vmem>>, vector<8x8xbf16>
    tpu.vector_store %arg9[%c0_12, %c0_13], %36 {strides = array<i32>} : memref<8x32xbf16, #tpu.memory_space<vmem>>, vector<8x8xbf16>,
    %38 = vector.extract_strided_slice %8 {offsets = [0, 8], sizes = [8, 8], strides = [1, 1]} : vector<8x32xbf16> to vector<8x8xbf16>
    %39 = vector.extract_strided_slice %10 {offsets = [0, 8], sizes = [8, 8], strides = [1, 1]} : vector<8x32xbf16> to vector<8x8xbf16>
    %40 = vector.extract_strided_slice %12 {offsets = [0, 8], sizes = [8, 8], strides = [1, 1]} : vector<8x32xbf16> to vector<8x8xbf16>
    %cst_14 = arith.constant dense<0.000000e+00> : vector<8x8xf32>
    %41 = tpu.matmul %38, %39, %cst_14 {dimension_numbers = #tpu.dot_dimension_numbers<[1], [1], [0], [0], [0, 0, 1, 0], [], []>} : vector<8x8xbf16>, vector<8x8xbf16>, vector<8x8xf32> -> vector<8x8xf32>
    %cst_15 = arith.constant 0.353553385 : f32
    %42 = vector.broadcast %cst_15 : f32 to vector<8x8xf32>
    %43 = arith.mulf %41, %42 : vector<8x8xf32>
    %cst_16 = arith.constant -1.000000e+30 : f32
    %44 = vector.broadcast %cst_16 : f32 to vector<8x8xf32>
    %45 = arith.select %15, %43, %44 : vector<8x8xi1>, vector<8x8xf32>
    %cst_17 = arith.constant dense<0xFF800000> : vector<8xf32>
    %46 = vector.multi_reduction <maximumf>, %45, %cst_17 [1] : vector<8x8xf32> to vector<8xf32>
    %47 = vector.shape_cast %46 : vector<8xf32> to vector<8x1xf32>
    %48 = vector.broadcast %47 : vector<8x1xf32> to vector<8x8xf32>
    %49 = arith.subf %45, %48 : vector<8x8xf32>
    %50 = math.exp %49 : vector<8x8xf32>
    %cst_18 = arith.constant dense<0.000000e+00> : vector<8xf32>
    %51 = vector.multi_reduction <add>, %50, %cst_18 [1] : vector<8x8xf32> to vector<8xf32>
    %52 = vector.shape_cast %51 : vector<8xf32> to vector<8x1xf32>
    %53 = tpu.reciprocal %52 {approx = true} : vector<8x1xf32> -> vector<8x1xf32>
    %54 = vector.broadcast %53 : vector<8x1xf32> to vector<8x8xf32>
    %55 = arith.mulf %50, %54 : vector<8x8xf32>
    %56 = arith.truncf %55 : vector<8x8xf32> to vector<8x8xbf16>
    %cst_19 = arith.constant dense<0.000000e+00> : vector<8x8xf32>
    %57 = tpu.matmul %56, %40, %cst_19 {dimension_numbers = #tpu.dot_dimension_numbers<[1], [0], [0], [1], [0, 0, 1, 1], [], []>} : vector<8x8xbf16>, vector<8x8xbf16>, vector<8x8xf32> -> vector<8x8xf32>
    %58 = arith.truncf %57 : vector<8x8xf32> to vector<8x8xbf16>
    %c0_20 = arith.constant 0 : index
    %c8 = arith.constant 8 : index
    %59 = vector.load %arg9[%c0_20, %c8] : memref<8x32xbf16, #tpu.memory_space<vmem>>, vector<8x8xbf16>
    tpu.vector_store %arg9[%c0_20, %c8], %58 {strides = array<i32>} : memref<8x32xbf16, #tpu.memory_space<vmem>>, vector<8x8xbf16>,
    %60 = vector.extract_strided_slice %8 {offsets = [0, 16], sizes = [8, 8], strides = [1, 1]} : vector<8x32xbf16> to vector<8x8xbf16>
    %61 = vector.extract_strided_slice %10 {offsets = [0, 16], sizes = [8, 8], strides = [1, 1]} : vector<8x32xbf16> to vector<8x8xbf16>
    %62 = vector.extract_strided_slice %12 {offsets = [0, 16], sizes = [8, 8], strides = [1, 1]} : vector<8x32xbf16> to vector<8x8xbf16>
    %cst_21 = arith.constant dense<0.000000e+00> : vector<8x8xf32>
    %63 = tpu.matmul %60, %61, %cst_21 {dimension_numbers = #tpu.dot_dimension_numbers<[1], [1], [0], [0], [0, 0, 1, 0], [], []>} : vector<8x8xbf16>, vector<8x8xbf16>, vector<8x8xf32> -> vector<8x8xf32>
    %cst_22 = arith.constant 0.353553385 : f32
    %64 = vector.broadcast %cst_22 : f32 to vector<8x8xf32>
    %65 = arith.mulf %63, %64 : vector<8x8xf32>
    %cst_23 = arith.constant -1.000000e+30 : f32
    %66 = vector.broadcast %cst_23 : f32 to vector<8x8xf32>
    %67 = arith.select %15, %65, %66 : vector<8x8xi1>, vector<8x8xf32>
    %cst_24 = arith.constant dense<0xFF800000> : vector<8xf32>
    %68 = vector.multi_reduction <maximumf>, %67, %cst_24 [1] : vector<8x8xf32> to vector<8xf32>
    %69 = vector.shape_cast %68 : vector<8xf32> to vector<8x1xf32>
    %70 = vector.broadcast %69 : vector<8x1xf32> to vector<8x8xf32>
    %71 = arith.subf %67, %70 : vector<8x8xf32>
    %72 = math.exp %71 : vector<8x8xf32>
    %cst_25 = arith.constant dense<0.000000e+00> : vector<8xf32>
    %73 = vector.multi_reduction <add>, %72, %cst_25 [1] : vector<8x8xf32> to vector<8xf32>
    %74 = vector.shape_cast %73 : vector<8xf32> to vector<8x1xf32>
    %75 = tpu.reciprocal %74 {approx = true} : vector<8x1xf32> -> vector<8x1xf32>
    %76 = vector.broadcast %75 : vector<8x1xf32> to vector<8x8xf32>
    %77 = arith.mulf %72, %76 : vector<8x8xf32>
    %78 = arith.truncf %77 : vector<8x8xf32> to vector<8x8xbf16>
    %cst_26 = arith.constant dense<0.000000e+00> : vector<8x8xf32>
    %79 = tpu.matmul %78, %62, %cst_26 {dimension_numbers = #tpu.dot_dimension_numbers<[1], [0], [0], [1], [0, 0, 1, 1], [], []>} : vector<8x8xbf16>, vector<8x8xbf16>, vector<8x8xf32> -> vector<8x8xf32>
    %80 = arith.truncf %79 : vector<8x8xf32> to vector<8x8xbf16>
    %c0_27 = arith.constant 0 : index
    %c16 = arith.constant 16 : index
    %81 = vector.load %arg9[%c0_27, %c16] : memref<8x32xbf16, #tpu.memory_space<vmem>>, vector<8x8xbf16>
    tpu.vector_store %arg9[%c0_27, %c16], %80 {strides = array<i32>} : memref<8x32xbf16, #tpu.memory_space<vmem>>, vector<8x8xbf16>,
    %82 = vector.extract_strided_slice %8 {offsets = [0, 24], sizes = [8, 8], strides = [1, 1]} : vector<8x32xbf16> to vector<8x8xbf16>
    %83 = vector.extract_strided_slice %10 {offsets = [0, 24], sizes = [8, 8], strides = [1, 1]} : vector<8x32xbf16> to vector<8x8xbf16>
    %84 = vector.extract_strided_slice %12 {offsets = [0, 24], sizes = [8, 8], strides = [1, 1]} : vector<8x32xbf16> to vector<8x8xbf16>
    %cst_28 = arith.constant dense<0.000000e+00> : vector<8x8xf32>
    %85 = tpu.matmul %82, %83, %cst_28 {dimension_numbers = #tpu.dot_dimension_numbers<[1], [1], [0], [0], [0, 0, 1, 0], [], []>} : vector<8x8xbf16>, vector<8x8xbf16>, vector<8x8xf32> -> vector<8x8xf32>
    %cst_29 = arith.constant 0.353553385 : f32
    %86 = vector.broadcast %cst_29 : f32 to vector<8x8xf32>
    %87 = arith.mulf %85, %86 : vector<8x8xf32>
    %cst_30 = arith.constant -1.000000e+30 : f32
    %88 = vector.broadcast %cst_30 : f32 to vector<8x8xf32>
    %89 = arith.select %15, %87, %88 : vector<8x8xi1>, vector<8x8xf32>
    %cst_31 = arith.constant dense<0xFF800000> : vector<8xf32>
    %90 = vector.multi_reduction <maximumf>, %89, %cst_31 [1] : vector<8x8xf32> to vector<8xf32>
    %91 = vector.shape_cast %90 : vector<8xf32> to vector<8x1xf32>
    %92 = vector.broadcast %91 : vector<8x1xf32> to vector<8x8xf32>
    %93 = arith.subf %89, %92 : vector<8x8xf32>
    %94 = math.exp %93 : vector<8x8xf32>
    %cst_32 = arith.constant dense<0.000000e+00> : vector<8xf32>
    %95 = vector.multi_reduction <add>, %94, %cst_32 [1] : vector<8x8xf32> to vector<8xf32>
    %96 = vector.shape_cast %95 : vector<8xf32> to vector<8x1xf32>
    %97 = tpu.reciprocal %96 {approx = true} : vector<8x1xf32> -> vector<8x1xf32>
    %98 = vector.broadcast %97 : vector<8x1xf32> to vector<8x8xf32>
    %99 = arith.mulf %94, %98 : vector<8x8xf32>
    %100 = arith.truncf %99 : vector<8x8xf32> to vector<8x8xbf16>
    %cst_33 = arith.constant dense<0.000000e+00> : vector<8x8xf32>
    %101 = tpu.matmul %100, %84, %cst_33 {dimension_numbers = #tpu.dot_dimension_numbers<[1], [0], [0], [1], [0, 0, 1, 1], [], []>} : vector<8x8xbf16>, vector<8x8xbf16>, vector<8x8xf32> -> vector<8x8xf32>
    %102 = arith.truncf %101 : vector<8x8xf32> to vector<8x8xbf16>
    %c0_34 = arith.constant 0 : index
    %c24 = arith.constant 24 : index
    %103 = vector.load %arg9[%c0_34, %c24] : memref<8x32xbf16, #tpu.memory_space<vmem>>, vector<8x8xbf16>
    tpu.vector_store %arg9[%c0_34, %c24], %102 {strides = array<i32>} : memref<8x32xbf16, #tpu.memory_space<vmem>>, vector<8x8xbf16>,
    %c0_35 = arith.constant 0 : index
    %c0_36 = arith.constant 0 : index
    %104 = vector.load %arg9[%c0_35, %c0_36] : memref<8x32xbf16, #tpu.memory_space<vmem>>, vector<8x32xbf16>
    %c0_37 = arith.constant 0 : index
    %c0_38 = arith.constant 0 : index
    %105 = vector.load %arg4[%c0_37, %c0_38] : memref<32x32xbf16, #tpu.memory_space<vmem>>, vector<32x32xbf16>
    %cst_39 = arith.constant dense<0.000000e+00> : vector<8x32xf32>
    %106 = tpu.matmul %104, %105, %cst_39 {dimension_numbers = #tpu.dot_dimension_numbers<[1], [0], [0], [1], [0, 0, 1, 1], [], []>} : vector<8x32xbf16>, vector<32x32xbf16>, vector<8x32xf32> -> vector<8x32xf32>
    %c0_40 = arith.constant 0 : index
    %c0_41 = arith.constant 0 : index
    %107 = vector.load %arg5[%c0_40, %c0_41] : memref<1x32xf32, #tpu.memory_space<vmem>>, vector<1x32xf32>
    %108 = vector.broadcast %107 : vector<1x32xf32> to vector<8x32xf32>
    %109 = arith.addf %106, %108 : vector<8x32xf32>
    %110 = arith.extf %1 : vector<8x32xbf16> to vector<8x32xf32>
    %111 = arith.addf %109, %110 : vector<8x32xf32>
    %c0_42 = arith.constant 0 : index
    %c0_43 = arith.constant 0 : index
    %112 = vector.load %arg6[%c0_42, %c0_43] : memref<1x32xf32, #tpu.memory_space<vmem>>, vector<1x32xf32>
    %c0_44 = arith.constant 0 : index
    %c0_45 = arith.constant 0 : index
    %113 = vector.load %arg7[%c0_44, %c0_45] : memref<1x32xf32, #tpu.memory_space<vmem>>, vector<1x32xf32>
    %cst_46 = arith.constant dense<0.000000e+00> : vector<8xf32>
    %114 = vector.multi_reduction <add>, %111, %cst_46 [1] : vector<8x32xf32> to vector<8xf32>
    %115 = vector.shape_cast %114 : vector<8xf32> to vector<8x1xf32>
    %cst_47 = arith.constant 3.200000e+01 : f32
    %116 = vector.broadcast %cst_47 : f32 to vector<8x1xf32>
    %117 = arith.divf %115, %116 : vector<8x1xf32>
    %118 = vector.broadcast %117 : vector<8x1xf32> to vector<8x32xf32>
    %119 = arith.subf %111, %118 : vector<8x32xf32>
    %120 = arith.mulf %119, %119 : vector<8x32xf32>
    %cst_48 = arith.constant dense<0.000000e+00> : vector<8xf32>
    %121 = vector.multi_reduction <add>, %120, %cst_48 [1] : vector<8x32xf32> to vector<8xf32>
    %122 = vector.shape_cast %121 : vector<8xf32> to vector<8x1xf32>
    %cst_49 = arith.constant 3.200000e+01 : f32
    %123 = vector.broadcast %cst_49 : f32 to vector<8x1xf32>
    %124 = arith.divf %122, %123 : vector<8x1xf32>
    %cst_50 = arith.constant 9.99999974E-6 : f32
    %125 = vector.broadcast %cst_50 : f32 to vector<8x1xf32>
    %126 = arith.addf %124, %125 : vector<8x1xf32>
    %127 = math.rsqrt %126 : vector<8x1xf32>
    %128 = vector.broadcast %127 : vector<8x1xf32> to vector<8x32xf32>
    %129 = arith.mulf %119, %128 : vector<8x32xf32>
    %130 = vector.broadcast %112 : vector<1x32xf32> to vector<8x32xf32>
    %131 = arith.mulf %129, %130 : vector<8x32xf32>
    %132 = vector.broadcast %113 : vector<1x32xf32> to vector<8x32xf32>
    %133 = arith.addf %131, %132 : vector<8x32xf32>
    %134 = arith.truncf %133 : vector<8x32xf32> to vector<8x32xbf16>
    %c0_51 = arith.constant 0 : index
    %c0_52 = arith.constant 0 : index
    %c0_53 = arith.constant 0 : index
    %135 = vector.load %arg8[%c0_51, %c0_52, %c0_53] : memref<1x8x32xbf16, #tpu.memory_space<vmem>>, vector<1x8x32xbf16>
    %136 = vector.shape_cast %135 : vector<1x8x32xbf16> to vector<8x32xbf16>
    %137 = vector.shape_cast %134 : vector<8x32xbf16> to vector<1x8x32xbf16>
    tpu.vector_store %arg8[%c0_51, %c0_52, %c0_53], %137 {strides = array<i32>} : memref<1x8x32xbf16, #tpu.memory_space<vmem>>, vector<1x8x32xbf16>,
    return
  }
  func.func @transform_0(%arg0: i32) -> (i32, i32, i32) {
    %c0_i32 = arith.constant 0 : i32
    %c0_i32_0 = arith.constant 0 : i32
    %c0_i32_1 = arith.constant 0 : i32
    return %arg0, %c0_i32, %c0_i32_0 : i32, i32, i32
  }
  func.func @transform_1(%arg0: i32) -> (i32, i32) {
    %c0_i32 = arith.constant 0 : i32
    %c0_i32_0 = arith.constant 0 : i32
    %c0_i32_1 = arith.constant 0 : i32
    return %c0_i32, %c0_i32_0 : i32, i32
  }
  func.func @transform_2(%arg0: i32) -> (i32, i32) {
    %c0_i32 = arith.constant 0 : i32
    %c0_i32_0 = arith.constant 0 : i32
    %c0_i32_1 = arith.constant 0 : i32
    return %c0_i32, %c0_i32_0 : i32, i32
  }
  func.func @transform_3(%arg0: i32) -> (i32, i32) {
    %c0_i32 = arith.constant 0 : i32
    %c0_i32_0 = arith.constant 0 : i32
    %c0_i32_1 = arith.constant 0 : i32
    return %c0_i32, %c0_i32_0 : i32, i32
  }
  func.func @transform_4(%arg0: i32) -> (i32, i32) {
    %c0_i32 = arith.constant 0 : i32
    %c0_i32_0 = arith.constant 0 : i32
    %c0_i32_1 = arith.constant 0 : i32
    return %c0_i32, %c0_i32_0 : i32, i32
  }
  func.func @transform_5(%arg0: i32) -> (i32, i32) {
    %c0_i32 = arith.constant 0 : i32
    %c0_i32_0 = arith.constant 0 : i32
    %c0_i32_1 = arith.constant 0 : i32
    return %c0_i32, %c0_i32_0 : i32, i32
  }
  func.func @transform_6(%arg0: i32) -> (i32, i32) {
    %c0_i32 = arith.constant 0 : i32
    %c0_i32_0 = arith.constant 0 : i32
    %c0_i32_1 = arith.constant 0 : i32
    return %c0_i32, %c0_i32_0 : i32, i32
  }
  func.func @transform_7(%arg0: i32) -> (i32, i32, i32) {
    %c0_i32 = arith.constant 0 : i32
    %c0_i32_0 = arith.constant 0 : i32
    %c0_i32_1 = arith.constant 0 : i32
    return %arg0, %c0_i32, %c0_i32_0 : i32, i32, i32
  }
}

module attributes {stable_mosaic.version = 11 : i64} {
  func.func @_matmul_kernel(%arg0: i32, %arg1: i32, %arg2: i32, %arg3: memref<16x32xbf16, #tpu.memory_space<vmem>>, %arg4: memref<32x128xbf16, #tpu.memory_space<vmem>>, %arg5: memref<1x128xf32, #tpu.memory_space<vmem>>, %arg6: memref<16x128xf32, #tpu.memory_space<vmem>>, %arg7: memref<16x128xf32, #tpu.memory_space<vmem>>) attributes {dimension_semantics = [#tpu.dimension_semantics<parallel>, #tpu.dimension_semantics<parallel>, #tpu.dimension_semantics<arbitrary>], iteration_bounds = array<i64: 1, 1, 1>, scalar_prefetch = 0 : i64, scratch_operands = 1 : i64, tpu.core_type = #tpu.core_type<tc>, window_params = [{transform_indices = @transform_0, window_bounds = array<i64: 16, 32>}, {transform_indices = @transform_1, window_bounds = array<i64: 32, 128>}, {transform_indices = @transform_2, window_bounds = array<i64: 1, 128>}, {transform_indices = @transform_3, window_bounds = array<i64: 16, 128>}]} {
    %c0_i32 = arith.constant 0 : i32
    %0 = arith.cmpi eq, %arg2, %c0_i32 : i32
    %1 = arith.extui %0 : i1 to i32
    %c0_i32_0 = arith.constant 0 : i32
    %2 = arith.cmpi ne, %1, %c0_i32_0 : i32
    scf.if %2 {
      %cst_10 = arith.constant 0.000000e+00 : f32
      %12 = vector.broadcast %cst_10 : f32 to vector<16x128xf32>
      %c0_11 = arith.constant 0 : index
      %c0_12 = arith.constant 0 : index
      %13 = vector.load %arg7[%c0_11, %c0_12] : memref<16x128xf32, #tpu.memory_space<vmem>>, vector<16x128xf32>
      tpu.vector_store %arg7[%c0_11, %c0_12], %12 {strides = array<i32>} : memref<16x128xf32, #tpu.memory_space<vmem>>, vector<16x128xf32>,
    } else {
    }
    %c0 = arith.constant 0 : index
    %c0_1 = arith.constant 0 : index
    %3 = vector.load %arg7[%c0, %c0_1] : memref<16x128xf32, #tpu.memory_space<vmem>>, vector<16x128xf32>
    %c0_2 = arith.constant 0 : index
    %c0_3 = arith.constant 0 : index
    %4 = vector.load %arg3[%c0_2, %c0_3] : memref<16x32xbf16, #tpu.memory_space<vmem>>, vector<16x32xbf16>
    %c0_4 = arith.constant 0 : index
    %c0_5 = arith.constant 0 : index
    %5 = vector.load %arg4[%c0_4, %c0_5] : memref<32x128xbf16, #tpu.memory_space<vmem>>, vector<32x128xbf16>
    %cst = arith.constant dense<0.000000e+00> : vector<16x128xf32>
    %6 = tpu.matmul %4, %5, %cst {dimension_numbers = #tpu.dot_dimension_numbers<[1], [0], [0], [1], [0, 0, 1, 1], [], []>} : vector<16x32xbf16>, vector<32x128xbf16>, vector<16x128xf32> -> vector<16x128xf32>
    %7 = arith.addf %3, %6 : vector<16x128xf32>
    %c0_6 = arith.constant 0 : index
    %c0_7 = arith.constant 0 : index
    %8 = vector.load %arg7[%c0_6, %c0_7] : memref<16x128xf32, #tpu.memory_space<vmem>>, vector<16x128xf32>
    tpu.vector_store %arg7[%c0_6, %c0_7], %7 {strides = array<i32>} : memref<16x128xf32, #tpu.memory_space<vmem>>, vector<16x128xf32>,
    %c0_i32_8 = arith.constant 0 : i32
    %9 = arith.cmpi eq, %arg2, %c0_i32_8 : i32
    %10 = arith.extui %9 : i1 to i32
    %c0_i32_9 = arith.constant 0 : i32
    %11 = arith.cmpi ne, %10, %c0_i32_9 : i32
    scf.if %11 {
      %c0_10 = arith.constant 0 : index
      %c0_11 = arith.constant 0 : index
      %12 = vector.load %arg7[%c0_10, %c0_11] : memref<16x128xf32, #tpu.memory_space<vmem>>, vector<16x128xf32>
      %c0_12 = arith.constant 0 : index
      %c0_13 = arith.constant 0 : index
      %13 = vector.load %arg5[%c0_12, %c0_13] : memref<1x128xf32, #tpu.memory_space<vmem>>, vector<1x128xf32>
      %14 = vector.broadcast %13 : vector<1x128xf32> to vector<16x128xf32>
      %15 = arith.addf %12, %14 : vector<16x128xf32>
      %c0_14 = arith.constant 0 : index
      %c0_15 = arith.constant 0 : index
      %16 = vector.load %arg6[%c0_14, %c0_15] : memref<16x128xf32, #tpu.memory_space<vmem>>, vector<16x128xf32>
      tpu.vector_store %arg6[%c0_14, %c0_15], %15 {strides = array<i32>} : memref<16x128xf32, #tpu.memory_space<vmem>>, vector<16x128xf32>,
    } else {
    }
    return
  }
  func.func @transform_0(%arg0: i32, %arg1: i32, %arg2: i32) -> (i32, i32) {
    %c0_i32 = arith.constant 0 : i32
    return %arg0, %arg2 : i32, i32
  }
  func.func @transform_1(%arg0: i32, %arg1: i32, %arg2: i32) -> (i32, i32) {
    %c0_i32 = arith.constant 0 : i32
    return %arg2, %arg1 : i32, i32
  }
  func.func @transform_2(%arg0: i32, %arg1: i32, %arg2: i32) -> (i32, i32) {
    %c0_i32 = arith.constant 0 : i32
    %c0_i32_0 = arith.constant 0 : i32
    return %c0_i32, %arg1 : i32, i32
  }
  func.func @transform_3(%arg0: i32, %arg1: i32, %arg2: i32) -> (i32, i32) {
    %c0_i32 = arith.constant 0 : i32
    return %arg0, %arg1 : i32, i32
  }
}

module attributes {stable_mosaic.version = 11 : i64} {
  func.func @_cross_attn_block_kernel(%arg0: i32, %arg1: memref<1x8x32xbf16, #tpu.memory_space<vmem>>, %arg2: memref<1x8x32xbf16, #tpu.memory_space<vmem>>, %arg3: memref<32x32xbf16, #tpu.memory_space<vmem>>, %arg4: memref<1x32xf32, #tpu.memory_space<vmem>>, %arg5: memref<32x64xbf16, #tpu.memory_space<vmem>>, %arg6: memref<1x64xf32, #tpu.memory_space<vmem>>, %arg7: memref<32x32xbf16, #tpu.memory_space<vmem>>, %arg8: memref<1x32xf32, #tpu.memory_space<vmem>>, %arg9: memref<1x32xf32, #tpu.memory_space<vmem>>, %arg10: memref<1x32xf32, #tpu.memory_space<vmem>>, %arg11: memref<1x8x32xbf16, #tpu.memory_space<vmem>>, %arg12: memref<8x32xbf16, #tpu.memory_space<vmem>>) attributes {dimension_semantics = [#tpu.dimension_semantics<parallel>], iteration_bounds = array<i64: 2>, scalar_prefetch = 0 : i64, scratch_operands = 1 : i64, tpu.core_type = #tpu.core_type<tc>, window_params = [{transform_indices = @transform_0, window_bounds = array<i64: 1, 8, 32>}, {transform_indices = @transform_1, window_bounds = array<i64: 1, 8, 32>}, {pipeline_mode = #tpu.pipeline_mode<synchronous>, transform_indices = @transform_2, window_bounds = array<i64: 32, 32>}, {pipeline_mode = #tpu.pipeline_mode<synchronous>, transform_indices = @transform_3, window_bounds = array<i64: 1, 32>}, {pipeline_mode = #tpu.pipeline_mode<synchronous>, transform_indices = @transform_4, window_bounds = array<i64: 32, 64>}, {pipeline_mode = #tpu.pipeline_mode<synchronous>, transform_indices = @transform_5, window_bounds = array<i64: 1, 64>}, {pipeline_mode = #tpu.pipeline_mode<synchronous>, transform_indices = @transform_6, window_bounds = array<i64: 32, 32>}, {pipeline_mode = #tpu.pipeline_mode<synchronous>, transform_indices = @transform_7, window_bounds = array<i64: 1, 32>}, {pipeline_mode = #tpu.pipeline_mode<synchronous>, transform_indices = @transform_8, window_bounds = array<i64: 1, 32>}, {pipeline_mode = #tpu.pipeline_mode<synchronous>, transform_indices = @transform_9, window_bounds = array<i64: 1, 32>}, {transform_indices = @transform_10, window_bounds = array<i64: 1, 8, 32>}]} {
    %c0 = arith.constant 0 : index
    %c0_0 = arith.constant 0 : index
    %c0_1 = arith.constant 0 : index
    %0 = vector.load %arg1[%c0, %c0_0, %c0_1] : memref<1x8x32xbf16, #tpu.memory_space<vmem>>, vector<1x8x32xbf16>
    %1 = vector.shape_cast %0 : vector<1x8x32xbf16> to vector<8x32xbf16>
    %c0_2 = arith.constant 0 : index
    %c0_3 = arith.constant 0 : index
    %c0_4 = arith.constant 0 : index
    %2 = vector.load %arg2[%c0_2, %c0_3, %c0_4] : memref<1x8x32xbf16, #tpu.memory_space<vmem>>, vector<1x8x32xbf16>
    %3 = vector.shape_cast %2 : vector<1x8x32xbf16> to vector<8x32xbf16>
    %c0_5 = arith.constant 0 : index
    %c0_6 = arith.constant 0 : index
    %4 = vector.load %arg3[%c0_5, %c0_6] : memref<32x32xbf16, #tpu.memory_space<vmem>>, vector<32x32xbf16>
    %cst = arith.constant dense<0.000000e+00> : vector<8x32xf32>
    %5 = tpu.matmul %1, %4, %cst {dimension_numbers = #tpu.dot_dimension_numbers<[1], [0], [0], [1], [0, 0, 1, 1], [], []>} : vector<8x32xbf16>, vector<32x32xbf16>, vector<8x32xf32> -> vector<8x32xf32>
    %c0_7 = arith.constant 0 : index
    %c0_8 = arith.constant 0 : index
    %6 = vector.load %arg4[%c0_7, %c0_8] : memref<1x32xf32, #tpu.memory_space<vmem>>, vector<1x32xf32>
    %7 = vector.broadcast %6 : vector<1x32xf32> to vector<8x32xf32>
    %8 = arith.addf %5, %7 : vector<8x32xf32>
    %9 = arith.truncf %8 : vector<8x32xf32> to vector<8x32xbf16>
    %c0_9 = arith.constant 0 : index
    %c0_10 = arith.constant 0 : index
    %10 = vector.load %arg5[%c0_9, %c0_10] : memref<32x64xbf16, #tpu.memory_space<vmem>>, vector<32x64xbf16>
    %cst_11 = arith.constant dense<0.000000e+00> : vector<8x64xf32>
    %11 = tpu.matmul %3, %10, %cst_11 {dimension_numbers = #tpu.dot_dimension_numbers<[1], [0], [0], [1], [0, 0, 1, 1], [], []>} : vector<8x32xbf16>, vector<32x64xbf16>, vector<8x64xf32> -> vector<8x64xf32>
    %c0_12 = arith.constant 0 : index
    %c0_13 = arith.constant 0 : index
    %12 = vector.load %arg6[%c0_12, %c0_13] : memref<1x64xf32, #tpu.memory_space<vmem>>, vector<1x64xf32>
    %13 = vector.broadcast %12 : vector<1x64xf32> to vector<8x64xf32>
    %14 = arith.addf %11, %13 : vector<8x64xf32>
    %15 = vector.extract_strided_slice %14 {offsets = [0, 0], sizes = [8, 32], strides = [1, 1]} : vector<8x64xf32> to vector<8x32xf32>
    %16 = arith.truncf %15 : vector<8x32xf32> to vector<8x32xbf16>
    %17 = vector.extract_strided_slice %14 {offsets = [0, 32], sizes = [8, 32], strides = [1, 1]} : vector<8x64xf32> to vector<8x32xf32>
    %18 = arith.truncf %17 : vector<8x32xf32> to vector<8x32xbf16>
    %19 = vector.extract_strided_slice %9 {offsets = [0, 0], sizes = [8, 8], strides = [1, 1]} : vector<8x32xbf16> to vector<8x8xbf16>
    %20 = vector.extract_strided_slice %16 {offsets = [0, 0], sizes = [8, 8], strides = [1, 1]} : vector<8x32xbf16> to vector<8x8xbf16>
    %21 = vector.extract_strided_slice %18 {offsets = [0, 0], sizes = [8, 8], strides = [1, 1]} : vector<8x32xbf16> to vector<8x8xbf16>
    %cst_14 = arith.constant dense<0.000000e+00> : vector<8x8xf32>
    %22 = tpu.matmul %19, %20, %cst_14 {dimension_numbers = #tpu.dot_dimension_numbers<[1], [1], [0], [0], [0, 0, 1, 0], [], []>} : vector<8x8xbf16>, vector<8x8xbf16>, vector<8x8xf32> -> vector<8x8xf32>
    %cst_15 = arith.constant 0.353553385 : f32
    %23 = vector.broadcast %cst_15 : f32 to vector<8x8xf32>
    %24 = arith.mulf %22, %23 : vector<8x8xf32>
    %cst_16 = arith.constant dense<0xFF800000> : vector<8xf32>
    %25 = vector.multi_reduction <maximumf>, %24, %cst_16 [1] : vector<8x8xf32> to vector<8xf32>
    %26 = vector.shape_cast %25 : vector<8xf32> to vector<8x1xf32>
    %27 = vector.broadcast %26 : vector<8x1xf32> to vector<8x8xf32>
    %28 = arith.subf %24, %27 : vector<8x8xf32>
    %29 = math.exp %28 : vector<8x8xf32>
    %cst_17 = arith.constant dense<0.000000e+00> : vector<8xf32>
    %30 = vector.multi_reduction <add>, %29, %cst_17 [1] : vector<8x8xf32> to vector<8xf32>
    %31 = vector.shape_cast %30 : vector<8xf32> to vector<8x1xf32>
    %32 = tpu.reciprocal %31 {approx = true} : vector<8x1xf32> -> vector<8x1xf32>
    %33 = vector.broadcast %32 : vector<8x1xf32> to vector<8x8xf32>
    %34 = arith.mulf %29, %33 : vector<8x8xf32>
    %35 = arith.truncf %34 : vector<8x8xf32> to vector<8x8xbf16>
    %cst_18 = arith.constant dense<0.000000e+00> : vector<8x8xf32>
    %36 = tpu.matmul %35, %21, %cst_18 {dimension_numbers = #tpu.dot_dimension_numbers<[1], [0], [0], [1], [0, 0, 1, 1], [], []>} : vector<8x8xbf16>, vector<8x8xbf16>, vector<8x8xf32> -> vector<8x8xf32>
    %37 = arith.truncf %36 : vector<8x8xf32> to vector<8x8xbf16>
    %c0_19 = arith.constant 0 : index
    %c0_20 = arith.constant 0 : index
    %38 = vector.load %arg12[%c0_19, %c0_20] : memref<8x32xbf16, #tpu.memory_space<vmem>>, vector<8x8xbf16>
    tpu.vector_store %arg12[%c0_19, %c0_20], %37 {strides = array<i32>} : memref<8x32xbf16, #tpu.memory_space<vmem>>, vector<8x8xbf16>,
    %39 = vector.extract_strided_slice %9 {offsets = [0, 8], sizes = [8, 8], strides = [1, 1]} : vector<8x32xbf16> to vector<8x8xbf16>
    %40 = vector.extract_strided_slice %16 {offsets = [0, 8], sizes = [8, 8], strides = [1, 1]} : vector<8x32xbf16> to vector<8x8xbf16>
    %41 = vector.extract_strided_slice %18 {offsets = [0, 8], sizes = [8, 8], strides = [1, 1]} : vector<8x32xbf16> to vector<8x8xbf16>
    %cst_21 = arith.constant dense<0.000000e+00> : vector<8x8xf32>
    %42 = tpu.matmul %39, %40, %cst_21 {dimension_numbers = #tpu.dot_dimension_numbers<[1], [1], [0], [0], [0, 0, 1, 0], [], []>} : vector<8x8xbf16>, vector<8x8xbf16>, vector<8x8xf32> -> vector<8x8xf32>
    %cst_22 = arith.constant 0.353553385 : f32
    %43 = vector.broadcast %cst_22 : f32 to vector<8x8xf32>
    %44 = arith.mulf %42, %43 : vector<8x8xf32>
    %cst_23 = arith.constant dense<0xFF800000> : vector<8xf32>
    %45 = vector.multi_reduction <maximumf>, %44, %cst_23 [1] : vector<8x8xf32> to vector<8xf32>
    %46 = vector.shape_cast %45 : vector<8xf32> to vector<8x1xf32>
    %47 = vector.broadcast %46 : vector<8x1xf32> to vector<8x8xf32>
    %48 = arith.subf %44, %47 : vector<8x8xf32>
    %49 = math.exp %48 : vector<8x8xf32>
    %cst_24 = arith.constant dense<0.000000e+00> : vector<8xf32>
    %50 = vector.multi_reduction <add>, %49, %cst_24 [1] : vector<8x8xf32> to vector<8xf32>
    %51 = vector.shape_cast %50 : vector<8xf32> to vector<8x1xf32>
    %52 = tpu.reciprocal %51 {approx = true} : vector<8x1xf32> -> vector<8x1xf32>
    %53 = vector.broadcast %52 : vector<8x1xf32> to vector<8x8xf32>
    %54 = arith.mulf %49, %53 : vector<8x8xf32>
    %55 = arith.truncf %54 : vector<8x8xf32> to vector<8x8xbf16>
    %cst_25 = arith.constant dense<0.000000e+00> : vector<8x8xf32>
    %56 = tpu.matmul %55, %41, %cst_25 {dimension_numbers = #tpu.dot_dimension_numbers<[1], [0], [0], [1], [0, 0, 1, 1], [], []>} : vector<8x8xbf16>, vector<8x8xbf16>, vector<8x8xf32> -> vector<8x8xf32>
    %57 = arith.truncf %56 : vector<8x8xf32> to vector<8x8xbf16>
    %c0_26 = arith.constant 0 : index
    %c8 = arith.constant 8 : index
    %58 = vector.load %arg12[%c0_26, %c8] : memref<8x32xbf16, #tpu.memory_space<vmem>>, vector<8x8xbf16>
    tpu.vector_store %arg12[%c0_26, %c8], %57 {strides = array<i32>} : memref<8x32xbf16, #tpu.memory_space<vmem>>, vector<8x8xbf16>,
    %59 = vector.extract_strided_slice %9 {offsets = [0, 16], sizes = [8, 8], strides = [1, 1]} : vector<8x32xbf16> to vector<8x8xbf16>
    %60 = vector.extract_strided_slice %16 {offsets = [0, 16], sizes = [8, 8], strides = [1, 1]} : vector<8x32xbf16> to vector<8x8xbf16>
    %61 = vector.extract_strided_slice %18 {offsets = [0, 16], sizes = [8, 8], strides = [1, 1]} : vector<8x32xbf16> to vector<8x8xbf16>
    %cst_27 = arith.constant dense<0.000000e+00> : vector<8x8xf32>
    %62 = tpu.matmul %59, %60, %cst_27 {dimension_numbers = #tpu.dot_dimension_numbers<[1], [1], [0], [0], [0, 0, 1, 0], [], []>} : vector<8x8xbf16>, vector<8x8xbf16>, vector<8x8xf32> -> vector<8x8xf32>
    %cst_28 = arith.constant 0.353553385 : f32
    %63 = vector.broadcast %cst_28 : f32 to vector<8x8xf32>
    %64 = arith.mulf %62, %63 : vector<8x8xf32>
    %cst_29 = arith.constant dense<0xFF800000> : vector<8xf32>
    %65 = vector.multi_reduction <maximumf>, %64, %cst_29 [1] : vector<8x8xf32> to vector<8xf32>
    %66 = vector.shape_cast %65 : vector<8xf32> to vector<8x1xf32>
    %67 = vector.broadcast %66 : vector<8x1xf32> to vector<8x8xf32>
    %68 = arith.subf %64, %67 : vector<8x8xf32>
    %69 = math.exp %68 : vector<8x8xf32>
    %cst_30 = arith.constant dense<0.000000e+00> : vector<8xf32>
    %70 = vector.multi_reduction <add>, %69, %cst_30 [1] : vector<8x8xf32> to vector<8xf32>
    %71 = vector.shape_cast %70 : vector<8xf32> to vector<8x1xf32>
    %72 = tpu.reciprocal %71 {approx = true} : vector<8x1xf32> -> vector<8x1xf32>
    %73 = vector.broadcast %72 : vector<8x1xf32> to vector<8x8xf32>
    %74 = arith.mulf %69, %73 : vector<8x8xf32>
    %75 = arith.truncf %74 : vector<8x8xf32> to vector<8x8xbf16>
    %cst_31 = arith.constant dense<0.000000e+00> : vector<8x8xf32>
    %76 = tpu.matmul %75, %61, %cst_31 {dimension_numbers = #tpu.dot_dimension_numbers<[1], [0], [0], [1], [0, 0, 1, 1], [], []>} : vector<8x8xbf16>, vector<8x8xbf16>, vector<8x8xf32> -> vector<8x8xf32>
    %77 = arith.truncf %76 : vector<8x8xf32> to vector<8x8xbf16>
    %c0_32 = arith.constant 0 : index
    %c16 = arith.constant 16 : index
    %78 = vector.load %arg12[%c0_32, %c16] : memref<8x32xbf16, #tpu.memory_space<vmem>>, vector<8x8xbf16>
    tpu.vector_store %arg12[%c0_32, %c16], %77 {strides = array<i32>} : memref<8x32xbf16, #tpu.memory_space<vmem>>, vector<8x8xbf16>,
    %79 = vector.extract_strided_slice %9 {offsets = [0, 24], sizes = [8, 8], strides = [1, 1]} : vector<8x32xbf16> to vector<8x8xbf16>
    %80 = vector.extract_strided_slice %16 {offsets = [0, 24], sizes = [8, 8], strides = [1, 1]} : vector<8x32xbf16> to vector<8x8xbf16>
    %81 = vector.extract_strided_slice %18 {offsets = [0, 24], sizes = [8, 8], strides = [1, 1]} : vector<8x32xbf16> to vector<8x8xbf16>
    %cst_33 = arith.constant dense<0.000000e+00> : vector<8x8xf32>
    %82 = tpu.matmul %79, %80, %cst_33 {dimension_numbers = #tpu.dot_dimension_numbers<[1], [1], [0], [0], [0, 0, 1, 0], [], []>} : vector<8x8xbf16>, vector<8x8xbf16>, vector<8x8xf32> -> vector<8x8xf32>
    %cst_34 = arith.constant 0.353553385 : f32
    %83 = vector.broadcast %cst_34 : f32 to vector<8x8xf32>
    %84 = arith.mulf %82, %83 : vector<8x8xf32>
    %cst_35 = arith.constant dense<0xFF800000> : vector<8xf32>
    %85 = vector.multi_reduction <maximumf>, %84, %cst_35 [1] : vector<8x8xf32> to vector<8xf32>
    %86 = vector.shape_cast %85 : vector<8xf32> to vector<8x1xf32>
    %87 = vector.broadcast %86 : vector<8x1xf32> to vector<8x8xf32>
    %88 = arith.subf %84, %87 : vector<8x8xf32>
    %89 = math.exp %88 : vector<8x8xf32>
    %cst_36 = arith.constant dense<0.000000e+00> : vector<8xf32>
    %90 = vector.multi_reduction <add>, %89, %cst_36 [1] : vector<8x8xf32> to vector<8xf32>
    %91 = vector.shape_cast %90 : vector<8xf32> to vector<8x1xf32>
    %92 = tpu.reciprocal %91 {approx = true} : vector<8x1xf32> -> vector<8x1xf32>
    %93 = vector.broadcast %92 : vector<8x1xf32> to vector<8x8xf32>
    %94 = arith.mulf %89, %93 : vector<8x8xf32>
    %95 = arith.truncf %94 : vector<8x8xf32> to vector<8x8xbf16>
    %cst_37 = arith.constant dense<0.000000e+00> : vector<8x8xf32>
    %96 = tpu.matmul %95, %81, %cst_37 {dimension_numbers = #tpu.dot_dimension_numbers<[1], [0], [0], [1], [0, 0, 1, 1], [], []>} : vector<8x8xbf16>, vector<8x8xbf16>, vector<8x8xf32> -> vector<8x8xf32>
    %97 = arith.truncf %96 : vector<8x8xf32> to vector<8x8xbf16>
    %c0_38 = arith.constant 0 : index
    %c24 = arith.constant 24 : index
    %98 = vector.load %arg12[%c0_38, %c24] : memref<8x32xbf16, #tpu.memory_space<vmem>>, vector<8x8xbf16>
    tpu.vector_store %arg12[%c0_38, %c24], %97 {strides = array<i32>} : memref<8x32xbf16, #tpu.memory_space<vmem>>, vector<8x8xbf16>,
    %c0_39 = arith.constant 0 : index
    %c0_40 = arith.constant 0 : index
    %99 = vector.load %arg12[%c0_39, %c0_40] : memref<8x32xbf16, #tpu.memory_space<vmem>>, vector<8x32xbf16>
    %c0_41 = arith.constant 0 : index
    %c0_42 = arith.constant 0 : index
    %100 = vector.load %arg7[%c0_41, %c0_42] : memref<32x32xbf16, #tpu.memory_space<vmem>>, vector<32x32xbf16>
    %cst_43 = arith.constant dense<0.000000e+00> : vector<8x32xf32>
    %101 = tpu.matmul %99, %100, %cst_43 {dimension_numbers = #tpu.dot_dimension_numbers<[1], [0], [0], [1], [0, 0, 1, 1], [], []>} : vector<8x32xbf16>, vector<32x32xbf16>, vector<8x32xf32> -> vector<8x32xf32>
    %c0_44 = arith.constant 0 : index
    %c0_45 = arith.constant 0 : index
    %102 = vector.load %arg8[%c0_44, %c0_45] : memref<1x32xf32, #tpu.memory_space<vmem>>, vector<1x32xf32>
    %103 = vector.broadcast %102 : vector<1x32xf32> to vector<8x32xf32>
    %104 = arith.addf %101, %103 : vector<8x32xf32>
    %105 = arith.extf %1 : vector<8x32xbf16> to vector<8x32xf32>
    %106 = arith.addf %104, %105 : vector<8x32xf32>
    %c0_46 = arith.constant 0 : index
    %c0_47 = arith.constant 0 : index
    %107 = vector.load %arg9[%c0_46, %c0_47] : memref<1x32xf32, #tpu.memory_space<vmem>>, vector<1x32xf32>
    %c0_48 = arith.constant 0 : index
    %c0_49 = arith.constant 0 : index
    %108 = vector.load %arg10[%c0_48, %c0_49] : memref<1x32xf32, #tpu.memory_space<vmem>>, vector<1x32xf32>
    %cst_50 = arith.constant dense<0.000000e+00> : vector<8xf32>
    %109 = vector.multi_reduction <add>, %106, %cst_50 [1] : vector<8x32xf32> to vector<8xf32>
    %110 = vector.shape_cast %109 : vector<8xf32> to vector<8x1xf32>
    %cst_51 = arith.constant 3.200000e+01 : f32
    %111 = vector.broadcast %cst_51 : f32 to vector<8x1xf32>
    %112 = arith.divf %110, %111 : vector<8x1xf32>
    %113 = vector.broadcast %112 : vector<8x1xf32> to vector<8x32xf32>
    %114 = arith.subf %106, %113 : vector<8x32xf32>
    %115 = arith.mulf %114, %114 : vector<8x32xf32>
    %cst_52 = arith.constant dense<0.000000e+00> : vector<8xf32>
    %116 = vector.multi_reduction <add>, %115, %cst_52 [1] : vector<8x32xf32> to vector<8xf32>
    %117 = vector.shape_cast %116 : vector<8xf32> to vector<8x1xf32>
    %cst_53 = arith.constant 3.200000e+01 : f32
    %118 = vector.broadcast %cst_53 : f32 to vector<8x1xf32>
    %119 = arith.divf %117, %118 : vector<8x1xf32>
    %cst_54 = arith.constant 9.99999974E-6 : f32
    %120 = vector.broadcast %cst_54 : f32 to vector<8x1xf32>
    %121 = arith.addf %119, %120 : vector<8x1xf32>
    %122 = math.rsqrt %121 : vector<8x1xf32>
    %123 = vector.broadcast %122 : vector<8x1xf32> to vector<8x32xf32>
    %124 = arith.mulf %114, %123 : vector<8x32xf32>
    %125 = vector.broadcast %107 : vector<1x32xf32> to vector<8x32xf32>
    %126 = arith.mulf %124, %125 : vector<8x32xf32>
    %127 = vector.broadcast %108 : vector<1x32xf32> to vector<8x32xf32>
    %128 = arith.addf %126, %127 : vector<8x32xf32>
    %129 = arith.truncf %128 : vector<8x32xf32> to vector<8x32xbf16>
    %c0_55 = arith.constant 0 : index
    %c0_56 = arith.constant 0 : index
    %c0_57 = arith.constant 0 : index
    %130 = vector.load %arg11[%c0_55, %c0_56, %c0_57] : memref<1x8x32xbf16, #tpu.memory_space<vmem>>, vector<1x8x32xbf16>
    %131 = vector.shape_cast %130 : vector<1x8x32xbf16> to vector<8x32xbf16>
    %132 = vector.shape_cast %129 : vector<8x32xbf16> to vector<1x8x32xbf16>
    tpu.vector_store %arg11[%c0_55, %c0_56, %c0_57], %132 {strides = array<i32>} : memref<1x8x32xbf16, #tpu.memory_space<vmem>>, vector<1x8x32xbf16>,
    return
  }
  func.func @transform_0(%arg0: i32) -> (i32, i32, i32) {
    %c0_i32 = arith.constant 0 : i32
    %c0_i32_0 = arith.constant 0 : i32
    %c0_i32_1 = arith.constant 0 : i32
    return %arg0, %c0_i32, %c0_i32_0 : i32, i32, i32
  }
  func.func @transform_1(%arg0: i32) -> (i32, i32, i32) {
    %c0_i32 = arith.constant 0 : i32
    %c0_i32_0 = arith.constant 0 : i32
    %c0_i32_1 = arith.constant 0 : i32
    return %arg0, %c0_i32, %c0_i32_0 : i32, i32, i32
  }
  func.func @transform_2(%arg0: i32) -> (i32, i32) {
    %c0_i32 = arith.constant 0 : i32
    %c0_i32_0 = arith.constant 0 : i32
    %c0_i32_1 = arith.constant 0 : i32
    return %c0_i32, %c0_i32_0 : i32, i32
  }
  func.func @transform_3(%arg0: i32) -> (i32, i32) {
    %c0_i32 = arith.constant 0 : i32
    %c0_i32_0 = arith.constant 0 : i32
    %c0_i32_1 = arith.constant 0 : i32
    return %c0_i32, %c0_i32_0 : i32, i32
  }
  func.func @transform_4(%arg0: i32) -> (i32, i32) {
    %c0_i32 = arith.constant 0 : i32
    %c0_i32_0 = arith.constant 0 : i32
    %c0_i32_1 = arith.constant 0 : i32
    return %c0_i32, %c0_i32_0 : i32, i32
  }
  func.func @transform_5(%arg0: i32) -> (i32, i32) {
    %c0_i32 = arith.constant 0 : i32
    %c0_i32_0 = arith.constant 0 : i32
    %c0_i32_1 = arith.constant 0 : i32
    return %c0_i32, %c0_i32_0 : i32, i32
  }
  func.func @transform_6(%arg0: i32) -> (i32, i32) {
    %c0_i32 = arith.constant 0 : i32
    %c0_i32_0 = arith.constant 0 : i32
    %c0_i32_1 = arith.constant 0 : i32
    return %c0_i32, %c0_i32_0 : i32, i32
  }
  func.func @transform_7(%arg0: i32) -> (i32, i32) {
    %c0_i32 = arith.constant 0 : i32
    %c0_i32_0 = arith.constant 0 : i32
    %c0_i32_1 = arith.constant 0 : i32
    return %c0_i32, %c0_i32_0 : i32, i32
  }
  func.func @transform_8(%arg0: i32) -> (i32, i32) {
    %c0_i32 = arith.constant 0 : i32
    %c0_i32_0 = arith.constant 0 : i32
    %c0_i32_1 = arith.constant 0 : i32
    return %c0_i32, %c0_i32_0 : i32, i32
  }
  func.func @transform_9(%arg0: i32) -> (i32, i32) {
    %c0_i32 = arith.constant 0 : i32
    %c0_i32_0 = arith.constant 0 : i32
    %c0_i32_1 = arith.constant 0 : i32
    return %c0_i32, %c0_i32_0 : i32, i32
  }
  func.func @transform_10(%arg0: i32) -> (i32, i32, i32) {
    %c0_i32 = arith.constant 0 : i32
    %c0_i32_0 = arith.constant 0 : i32
    %c0_i32_1 = arith.constant 0 : i32
    return %arg0, %c0_i32, %c0_i32_0 : i32, i32, i32
  }
}

</mosaic_0001>

<llo_original>
// kernel: ocr_transformer_forward.12
$region0: #{ocr_transformer_forward.12}
  #allocation0 [shape = 'u32[]', space=smem, size = 0x4, offset = 0x4, fixed_abs, tag = 'smem constant byte address 0x4 - core index']
  #allocation1 [shape = 'u32[72,128]{1,0:T(1,128)}', space=vmem, size = 0x9000, scoped, tag = 'internal scratch']
  #allocation2 [shape = 'f32[16,32]{1,0:T(8,128)}', space=vmem, size = 0x2000, scoped, tag = 'scratch operand']
  %s0 = inlined_call_operand.vmem [shape: bf16[16,16], index: 0, kind: input, shape index: {}]
  %s1 = inlined_call_operand.vmem [shape: bf16[16,32], index: 1, kind: input, shape index: {}]
  %s2 = inlined_call_operand.vmem [shape: f32[1,32], index: 2, kind: input, shape index: {}]
  %s3 = inlined_call_operand.vmem [shape: bf16[16,32], index: 3, kind: output, shape index: {}]
  %s4 = sld [smem:[#allocation0]]
  $region30: #{ocr_transformer_forward.12} parent=0
    _
  %s6 = ssub.s32 1, %s4
  %s7 = scalar_select 0, %s6, %s4
  // Predicated region
  $region2: #{ocr_transformer_forward.12} parent=0 // pred_check
    _
  $region3: #{ocr_transformer_forward.12} parent=0 // pred_check_branch
    %9 = sbr.rel (0) target = $region5
  $region4: #{ocr_transformer_forward.12} parent=0 // pred_region
    _
  $region5: #{ocr_transformer_forward.12} parent=0 // pred_fallthru
    _
  // Predicated region
  $region6: #{ocr_transformer_forward.12} parent=0 // pred_check
    _
  $region7: #{ocr_transformer_forward.12} parent=0 // pred_check_branch
    %11 = sbr.rel (0) target = $region9
  $region8: #{ocr_transformer_forward.12} parent=0 // pred_region
    _
  $region9: #{ocr_transformer_forward.12} parent=0 // pred_fallthru
    _
  // Predicated region
  $region10: #{ocr_transformer_forward.12} parent=0 // pred_check
    _
  $region11: #{ocr_transformer_forward.12} parent=0 // pred_check_branch
    %13 = sbr.rel (0) target = $region13
  $region12: #{ocr_transformer_forward.12} parent=0 // pred_region
    _
  $region13: #{ocr_transformer_forward.12} parent=0 // pred_fallthru
    _
  %p15 = scmp.eq.s32.totalorder 0, 0
  // Predicated region
  $region14: #{ocr_transformer_forward.12} parent=0 // pred_check
    %p16 = pneg %p15
  $region15: #{ocr_transformer_forward.12} parent=0 // pred_check_branch
    %18 = sbr.rel (%p16) target = $region17
  $region16: #{ocr_transformer_forward.12} parent=0 // pred_region
    %vm19 = vcmask 261120
    %20 = vst.msk [vmem:[#allocation2] sm:$0xff] %vm19, 0.0
    %21 = vst.msk [vmem:[#allocation2 + $0x8] sm:$0xff] %vm19, 0.0
  $region17: #{ocr_transformer_forward.12} parent=0 // pred_fallthru
    _
  %v22 = vld [vmem:[#allocation2] sm:$0xff]
  %v23 = vld [vmem:[#allocation2 + $0x8] sm:$0xff]
  %v24 = vld [vmem:[%s0] sm:$0xf]
  %v25 = vld [vmem:[%s0 + $0x4] sm:$0xf]
  %v26 = vld [vmem:[%s1] sm:$0xf]
  %v27 = vld [vmem:[%s1 + $0x4] sm:$0xf]
  %v30 = vunpack.c.l.b16 %v24
  %v31 = vunpack.c.l.b16 %v25
  %v32 = vpack.c.b16 %v31, %v30
  %v35 = vunpack.c.l.b16 %v26
  %v36 = vunpack.c.l.b16 %v27
  %v37 = vpack.c.b16 %v36, %v35
  %vm39 = vcmask 130048
  %v41 = vsel %vm39, %v32, 0
  %43 = vmatpush.bf16.msra.mxu0 0
  %44 = vmatpush.bf16.msra.mxu0 0
  %45 = vmatpush.bf16.msra.mxu0 0
  %46 = vmatpush.bf16.msra.mxu0 0
  %47 = vmatpush.bf16.msra.mxu0 0
  %48 = vmatpush.bf16.msra.mxu0 0
  %49 = vmatpush.bf16.msra.mxu0 0
  %50 = vmatpush.bf16.msra.mxu0 %v37
  %51 = vmatmul.bf16.gmra.mxu0 %v41
  %v52 = vpop.f32.mrf.mxu0
  %v53 = vadd.f32 0.0, %v52
  %v54 = vpop.f32.mrf.mxu0
  %v55 = vadd.f32 0.0, %v54
  %56 = vdwg.mxu0
  %v57 = vadd.f32 %v22, %v53
  %v58 = vadd.f32 %v23, %v55
  %vm59 = vcmask 261120
  %60 = vst.msk [vmem:[#allocation2] sm:$0xff] %vm59, %v57
  %61 = vst.msk [vmem:[#allocation2 + $0x8] sm:$0xff] %vm59, %v58
  // Predicated region
  $region18: #{ocr_transformer_forward.12} parent=0 // pred_check
    %p62 = pneg %p15
  $region19: #{ocr_transformer_forward.12} parent=0 // pred_check_branch
    %64 = sbr.rel (%p62) target = $region21
  $region20: #{ocr_transformer_forward.12} parent=0 // pred_region
    %v65 = vld [vmem:[#allocation2] sm:$0xff]
    %v66 = vld [vmem:[#allocation2 + $0x8] sm:$0xff]
    %v67 = vld [vmem:[%s2] sm:$0x1]
    %v69 = vperm.slane %v67, 0
    %v71 = vadd.f32 %v65, %v69
    %v72 = vadd.f32 %v66, %v69
    %v73 = vpack.c.bf16 %v71, %v71
    %v74 = vpack.c.bf16 %v72, %v72
    %vm75 = vcmask 257024
    %76 = vst.msk [vmem:[%s3] sm:$0xf] %vm75, %v73
    %77 = vst.msk [vmem:[%s3 + $0x4] sm:$0xf] %vm75, %v74
  $region21: #{ocr_transformer_forward.12} parent=0 // pred_fallthru
    _
  // Predicated region
  $region22: #{ocr_transformer_forward.12} parent=0 // pred_check
    _
  $region23: #{ocr_transformer_forward.12} parent=0 // pred_check_branch
    %79 = sbr.rel (0) target = $region25
  $region24: #{ocr_transformer_forward.12} parent=0 // pred_region
    _
  $region25: #{ocr_transformer_forward.12} parent=0 // pred_fallthru
    _
  // Predicated region
  $region26: #{ocr_transformer_forward.12} parent=0 // pred_check
    _
  $region27: #{ocr_transformer_forward.12} parent=0 // pred_check_branch
    %81 = sbr.rel (0) target = $region29
  $region28: #{ocr_transformer_forward.12} parent=0 // pred_region
    _
  $region29: #{ocr_transformer_forward.12} parent=0 // pred_fallthru
    _

// kernel: ocr_transformer_forward.13
$region0: #{ocr_transformer_forward.13}
  #allocation0 [shape = 'u32[]', space=smem, size = 0x4, offset = 0x4, fixed_abs, tag = 'smem constant byte address 0x4 - core index']
  #allocation1 [shape = 'u32[72,128]{1,0:T(1,128)}', space=vmem, size = 0x9000, scoped, tag = 'internal scratch']
  #allocation2 [shape = 'bf16[8,32]{1,0:T(8,128)(2,1)}', space=vmem, size = 0x800, scoped, tag = 'scratch operand']
  %s0 = inlined_call_operand.vmem [shape: bf16[2,8,32], index: 0, kind: input, shape index: {}]
  %s1 = inlined_call_operand.vmem [shape: bf16[32,96], index: 1, kind: input, shape index: {}]
  %s2 = inlined_call_operand.vmem [shape: f32[1,96], index: 2, kind: input, shape index: {}]
  %s3 = inlined_call_operand.vmem [shape: bf16[32,32], index: 3, kind: input, shape index: {}]
  %s4 = inlined_call_operand.vmem [shape: f32[1,32], index: 4, kind: input, shape index: {}]
  %s5 = inlined_call_operand.vmem [shape: f32[1,32], index: 5, kind: input, shape index: {}]
  %s6 = inlined_call_operand.vmem [shape: f32[1,32], index: 6, kind: input, shape index: {}]
  %s7 = inlined_call_operand.vmem [shape: bf16[2,8,32], index: 7, kind: output, shape index: {}]
  %s8 = sld [smem:[#allocation0]]
  $region61: #{ocr_transformer_forward.13} parent=0
    _
  %s10 = ssub.s32 1, %s8
  %s11 = scalar_select 0, %s10, %s8
  loop: start=0, step=1, limit=4
  $region2: #{ocr_transformer_forward.13} parent=0 // loop_pre_header
    _
  $region3: #{ocr_transformer_forward.13} parent=0 // loop_header
    %s13 = sphi 0, %s17
    %p14 = scmp.ge.s32.totalorder %s13, 4
    %s23 = sphi 0, %s25
    %s26 = sphi 0, %s23
    %s27 = sphi 0, %s26
    %s43 = sphi 0, %s27
    %s47 = sphi 0, %s47
    %s49 = sphi 0, %s47
    %s50 = sphi 0, %s49
    %s64 = sphi 0, %s50
    %s68 = sphi 0, %s68
    %s70 = sphi 0, %s68
    %s71 = sphi 0, %s70
    %s85 = sphi 0, %s71
    %s89 = sphi 0, %s89
    %s91 = sphi 0, %s89
    %s92 = sphi 0, %s91
    %s106 = sphi 0, %s92
    %s110 = sphi 0, %s110
    %s112 = sphi 0, %s110
    %s113 = sphi 0, %s112
    %s127 = sphi 0, %s113
    %s131 = sphi 0, %s131
    %s133 = sphi 0, %s131
    %s134 = sphi 0, %s133
    %s148 = sphi 0, %s134
    %s152 = sphi 0, %s152
    %s154 = sphi 0, %s152
    %s155 = sphi 0, %s154
    %s169 = sphi 0, %s155
    %s175 = sphi 0, %s177
    %s178 = sphi 0, %s175
    %s179 = sphi 0, %s178
    %s195 = sphi 0, %s179
  $region4: #{ocr_transformer_forward.13} parent=0 // loop_header_branch
    %16 = sbr.rel (%p14) target = $region8
  $region5: #{ocr_transformer_forward.13} parent=0 // loop_body
    %s18 = ssub.s32 %s13, 1
    %s19 = ssub.s32 %s13, 2
    %s20 = sadd.s32 %s13, 1
    %s21 = ssub.s32 %s13, %s20
    %p22 = scmp.eq.s32.totalorder %s21, 0
    %s24 = sadd.s32 %s23, 1
    %s25 = scalar_select %p22, %s23, %s24
    %p28 = pneg %p22
    %p29 = scmp.eq.s32.totalorder %s13, 1
    %p30 = por %p28, %p29
    %p31 = scmp.ne.s32.totalorder %s23, %s26
    %p32 = scmp.eq.s32.totalorder %s13, 0
    %p33 = por %p31, %p32
    %p34 = scmp.ne.s32.totalorder %s23, %s26
    %p35 = scmp.eq.s32.totalorder %s18, 1
    %p36 = por %p34, %p35
    %p37 = scmp.ne.s32.totalorder %s26, %s27
    %p38 = scmp.eq.s32.totalorder %s18, 0
    %p39 = por %p37, %p38
    %p40 = scmp.ne.s32.totalorder %s26, %s27
    %p41 = scmp.eq.s32.totalorder %s19, 1
    %p42 = por %p40, %p41
    %p44 = scmp.ne.s32.totalorder %s27, %s43
    %p45 = scmp.eq.s32.totalorder %s19, 0
    %p46 = por %p44, %p45
    %s48 = sadd.s32 %s47, 1
    %p51 = scmp.eq.s32.totalorder %s13, 1
    %p52 = scmp.ne.s32.totalorder %s47, %s49
    %p53 = scmp.eq.s32.totalorder %s13, 0
    %p54 = por %p52, %p53
    %p55 = scmp.ne.s32.totalorder %s47, %s49
    %p56 = scmp.eq.s32.totalorder %s18, 1
    %p57 = por %p55, %p56
    %p58 = scmp.ne.s32.totalorder %s49, %s50
    %p59 = scmp.eq.s32.totalorder %s18, 0
    %p60 = por %p58, %p59
    %p61 = scmp.ne.s32.totalorder %s49, %s50
    %p62 = scmp.eq.s32.totalorder %s19, 1
    %p63 = por %p61, %p62
    %p65 = scmp.ne.s32.totalorder %s50, %s64
    %p66 = scmp.eq.s32.totalorder %s19, 0
    %p67 = por %p65, %p66
    %s69 = sadd.s32 %s68, 1
    %p72 = scmp.eq.s32.totalorder %s13, 1
    %p73 = scmp.ne.s32.totalorder %s68, %s70
    %p74 = scmp.eq.s32.totalorder %s13, 0
    %p75 = por %p73, %p74
    %p76 = scmp.ne.s32.totalorder %s68, %s70
    %p77 = scmp.eq.s32.totalorder %s18, 1
    %p78 = por %p76, %p77
    %p79 = scmp.ne.s32.totalorder %s70, %s71
    %p80 = scmp.eq.s32.totalorder %s18, 0
    %p81 = por %p79, %p80
    %p82 = scmp.ne.s32.totalorder %s70, %s71
    %p83 = scmp.eq.s32.totalorder %s19, 1
    %p84 = por %p82, %p83
    %p86 = scmp.ne.s32.totalorder %s71, %s85
    %p87 = scmp.eq.s32.totalorder %s19, 0
    %p88 = por %p86, %p87
    %s90 = sadd.s32 %s89, 1
    %p93 = scmp.eq.s32.totalorder %s13, 1
    %p94 = scmp.ne.s32.totalorder %s89, %s91
    %p95 = scmp.eq.s32.totalorder %s13, 0
    %p96 = por %p94, %p95
    %p97 = scmp.ne.s32.totalorder %s89, %s91
    %p98 = scmp.eq.s32.totalorder %s18, 1
    %p99 = por %p97, %p98
    %p100 = scmp.ne.s32.totalorder %s91, %s92
    %p101 = scmp.eq.s32.totalorder %s18, 0
    %p102 = por %p100, %p101
    %p103 = scmp.ne.s32.totalorder %s91, %s92
    %p104 = scmp.eq.s32.totalorder %s19, 1
    %p105 = por %p103, %p104
    %p107 = scmp.ne.s32.totalorder %s92, %s106
    %p108 = scmp.eq.s32.totalorder %s19, 0
    %p109 = por %p107, %p108
    %s111 = sadd.s32 %s110, 1
    %p114 = scmp.eq.s32.totalorder %s13, 1
    %p115 = scmp.ne.s32.totalorder %s110, %s112
    %p116 = scmp.eq.s32.totalorder %s13, 0
    %p117 = por %p115, %p116
    %p118 = scmp.ne.s32.totalorder %s110, %s112
    %p119 = scmp.eq.s32.totalorder %s18, 1
    %p120 = por %p118, %p119
    %p121 = scmp.ne.s32.totalorder %s112, %s113
    %p122 = scmp.eq.s32.totalorder %s18, 0
    %p123 = por %p121, %p122
    %p124 = scmp.ne.s32.totalorder %s112, %s113
    %p125 = scmp.eq.s32.totalorder %s19, 1
    %p126 = por %p124, %p125
    %p128 = scmp.ne.s32.totalorder %s113, %s127
    %p129 = scmp.eq.s32.totalorder %s19, 0
    %p130 = por %p128, %p129
    %s132 = sadd.s32 %s131, 1
    %p135 = scmp.eq.s32.totalorder %s13, 1
    %p136 = scmp.ne.s32.totalorder %s131, %s133
    %p137 = scmp.eq.s32.totalorder %s13, 0
    %p138 = por %p136, %p137
    %p139 = scmp.ne.s32.totalorder %s131, %s133
    %p140 = scmp.eq.s32.totalorder %s18, 1
    %p141 = por %p139, %p140
    %p142 = scmp.ne.s32.totalorder %s133, %s134
    %p143 = scmp.eq.s32.totalorder %s18, 0
    %p144 = por %p142, %p143
    %p145 = scmp.ne.s32.totalorder %s133, %s134
    %p146 = scmp.eq.s32.totalorder %s19, 1
    %p147 = por %p145, %p146
    %p149 = scmp.ne.s32.totalorder %s134, %s148
    %p150 = scmp.eq.s32.totalorder %s19, 0
    %p151 = por %p149, %p150
    %s153 = sadd.s32 %s152, 1
    %p156 = scmp.eq.s32.totalorder %s13, 1
    %p157 = scmp.ne.s32.totalorder %s152, %s154
    %p158 = scmp.eq.s32.totalorder %s13, 0
    %p159 = por %p157, %p158
    %p160 = scmp.ne.s32.totalorder %s152, %s154
    %p161 = scmp.eq.s32.totalorder %s18, 1
    %p162 = por %p160, %p161
    %p163 = scmp.ne.s32.totalorder %s154, %s155
    %p164 = scmp.eq.s32.totalorder %s18, 0
    %p165 = por %p163, %p164
    %p166 = scmp.ne.s32.totalorder %s154, %s155
    %p167 = scmp.eq.s32.totalorder %s19, 1
    %p168 = por %p166, %p167
    %p170 = scmp.ne.s32.totalorder %s155, %s169
    %p171 = scmp.eq.s32.totalorder %s19, 0
    %p172 = por %p170, %p171
    %s173 = ssub.s32 %s13, %s20
    %p174 = scmp.eq.s32.totalorder %s173, 0
    %s176 = sadd.s32 %s175, 1
    %s177 = scalar_select %p174, %s175, %s176
    %p180 = pneg %p174
    %p181 = scmp.eq.s32.totalorder %s13, 1
    %p182 = por %p180, %p181
    %p183 = scmp.ne.s32.totalorder %s175, %s178
    %p184 = scmp.eq.s32.totalorder %s13, 0
    %p185 = por %p183, %p184
    %p186 = scmp.ne.s32.totalorder %s175, %s178
    %p187 = scmp.eq.s32.totalorder %s18, 1
    %p188 = por %p186, %p187
    %p189 = scmp.ne.s32.totalorder %s178, %s179
    %p190 = scmp.eq.s32.totalorder %s18, 0
    %p191 = por %p189, %p190
    %p192 = scmp.ne.s32.totalorder %s178, %s179
    %p193 = scmp.eq.s32.totalorder %s19, 1
    %p194 = por %p192, %p193
    %p196 = scmp.ne.s32.totalorder %s179, %s195
    %p197 = scmp.eq.s32.totalorder %s19, 0
    %p198 = por %p196, %p197
    %p199 = scmp.le.s32.totalorder 1, %s13
    %p200 = scmp.lt.s32.totalorder %s13, 3
    %p201 = pnand %p199, %p200
    %p202 = pneg %p201
    // Predicated region
    $region9: #{ocr_transformer_forward.13} parent=5 // pred_check
      _
    $region10: #{ocr_transformer_forward.13} parent=5 // pred_check_branch
      %204 = sbr.rel (%p201) target = $region12
    $region11: #{ocr_transformer_forward.13} parent=5 // pred_region
      %s205 = ssub.s32 %s13, 1
      // Predicated region
      $region13: #{ocr_transformer_forward.13} parent=11 // pred_check
        %p206 = pneg %p60
      $region14: #{ocr_transformer_forward.13} parent=11 // pred_check_branch
        %208 = sbr.rel (%p206) target = $region16
      $region15: #{ocr_transformer_forward.13} parent=11 // pred_region
        _
      $region16: #{ocr_transformer_forward.13} parent=11 // pred_fallthru
        _
      // Predicated region
      $region17: #{ocr_transformer_forward.13} parent=11 // pred_check
        %p209 = pneg %p81
      $region18: #{ocr_transformer_forward.13} parent=11 // pred_check_branch
        %211 = sbr.rel (%p209) target = $region20
      $region19: #{ocr_transformer_forward.13} parent=11 // pred_region
        _
      $region20: #{ocr_transformer_forward.13} parent=11 // pred_fallthru
        _
      // Predicated region
      $region21: #{ocr_transformer_forward.13} parent=11 // pred_check
        %p212 = pneg %p102
      $region22: #{ocr_transformer_forward.13} parent=11 // pred_check_branch
        %214 = sbr.rel (%p212) target = $region24
      $region23: #{ocr_transformer_forward.13} parent=11 // pred_region
        _
      $region24: #{ocr_transformer_forward.13} parent=11 // pred_fallthru
        _
      // Predicated region
      $region25: #{ocr_transformer_forward.13} parent=11 // pred_check
        %p215 = pneg %p123
      $region26: #{ocr_transformer_forward.13} parent=11 // pred_check_branch
        %217 = sbr.rel (%p215) target = $region28
      $region27: #{ocr_transformer_forward.13} parent=11 // pred_region
        _
      $region28: #{ocr_transformer_forward.13} parent=11 // pred_fallthru
        _
      // Predicated region
      $region29: #{ocr_transformer_forward.13} parent=11 // pred_check
        %p218 = pneg %p144
      $region30: #{ocr_transformer_forward.13} parent=11 // pred_check_branch
        %220 = sbr.rel (%p218) target = $region32
      $region31: #{ocr_transformer_forward.13} parent=11 // pred_region
        _
      $region32: #{ocr_transformer_forward.13} parent=11 // pred_fallthru
        _
      // Predicated region
      $region33: #{ocr_transformer_forward.13} parent=11 // pred_check
        %p221 = pneg %p165
      $region34: #{ocr_transformer_forward.13} parent=11 // pred_check_branch
        %223 = sbr.rel (%p221) target = $region36
      $region35: #{ocr_transformer_forward.13} parent=11 // pred_region
        _
      $region36: #{ocr_transformer_forward.13} parent=11 // pred_fallthru
        _
    $region12: #{ocr_transformer_forward.13} parent=5 // pred_fallthru
      _
    %p224 = scmp.lt.s32.totalorder %s13, 2
    // Predicated region
    $region37: #{ocr_transformer_forward.13} parent=5 // pred_check
      %p225 = pneg %p224
    $region38: #{ocr_transformer_forward.13} parent=5 // pred_check_branch
      %227 = sbr.rel (%p225) target = $region40
    $region39: #{ocr_transformer_forward.13} parent=5 // pred_region
      // Predicated region
      $region41: #{ocr_transformer_forward.13} parent=39 // pred_check
        %p228 = pneg %p33
      $region42: #{ocr_transformer_forward.13} parent=39 // pred_check_branch
        %230 = sbr.rel (%p228) target = $region44
      $region43: #{ocr_transformer_forward.13} parent=39 // pred_region
        %p231 = scmp.lt.s32.totalorder %s13, 1
        %s232 = scalar_select %p231, %s13, 1
        %s233 = smul.addr %s232, 4
        %s234 = scalar_lea.vmem %s0, %s233
      $region44: #{ocr_transformer_forward.13} parent=39 // pred_fallthru
        _
    $region40: #{ocr_transformer_forward.13} parent=5 // pred_fallthru
      _
    %p235 = scmp.le.s32.totalorder 1, %s13
    %p236 = scmp.lt.s32.totalorder %s13, 3
    %p237 = pnand %p235, %p236
    %p238 = pneg %p237
    // Predicated region
    $region45: #{ocr_transformer_forward.13} parent=5 // pred_check
      _
    $region46: #{ocr_transformer_forward.13} parent=5 // pred_check_branch
      %240 = sbr.rel (%p237) target = $region48
    $region47: #{ocr_transformer_forward.13} parent=5 // pred_region
      %s241 = ssub.s32 %s13, 1
      %p242 = scmp.lt.s32.totalorder %s18, 1
      %s243 = scalar_select %p242, %s18, 1
      %s244 = smul.addr %s243, 4
      %s245 = scalar_lea.vmem %s0, %s244
      %p246 = pneg %p39
      %p247 = pneg %p36
      %p248 = pneg %p60
      %p249 = pneg %p57
      %p250 = pneg %p81
      %p251 = pneg %p78
      %p252 = pneg %p102
      %p253 = pneg %p99
      %p254 = pneg %p123
      %p255 = pneg %p120
      %p256 = pneg %p144
      %p257 = pneg %p141
      %p258 = pneg %p165
      %p259 = pneg %p162
      %p260 = pneg %p191
      %p261 = pneg %p188
      %p262 = scmp.lt.s32.totalorder %s18, 1
      %s263 = scalar_select %p262, %s18, 1
      %s264 = smul.addr %s263, 4
      %s265 = scalar_lea.vmem %s7, %s264
      %p266 = scmp.lt.s32.totalorder %s18, 1
      %s267 = scalar_select %p266, %s18, 1
      %s268 = smul.addr %s267, 4
      %s269 = scalar_lea.vmem %s0, %s268
      %p270 = scmp.lt.s32.totalorder %s18, 1
      %s271 = scalar_select %p270, %s18, 1
      %s272 = smul.addr %s271, 4
      %s273 = scalar_lea.vmem %s7, %s272
      %v275 = vld [vmem:[%s269] sm:$0xf]
      %v276 = vld [vmem:[%s1] sm:$0xf]
      %v277 = vld [vmem:[%s1 + $0x4] sm:$0xf]
      %v278 = vld [vmem:[%s1 + $0x8] sm:$0xf]
      %v279 = vld [vmem:[%s1 + $0xc] sm:$0xf]
      %v280 = vld [vmem:[%s2] sm:$0x1]
      %v282 = vperm.slane %v280, 0
      %v288 = vunpack.c.l.b16 %v276
      %v289 = vunpack.c.l.b16 %v277
      %v290 = vunpack.c.l.b16 %v278
      %v291 = vunpack.c.l.b16 %v279
      %v292 = vpack.c.b16 %v289, %v288
      %v293 = vpack.c.b16 %v291, %v290
      %vm296 = vcmask 261120
      %v298 = vsel %vm296, %v275, 0
      %300 = vmatpush.bf16.msra.mxu0 0
      %301 = vmatpush.bf16.msra.mxu0 0
      %302 = vmatpush.bf16.msra.mxu0 0
      %303 = vmatpush.bf16.msra.mxu0 0
      %304 = vmatpush.bf16.msra.mxu0 0
      %305 = vmatpush.bf16.msra.mxu0 0
      %306 = vmatpush.bf16.msra.mxu0 %v293
      %307 = vmatpush.bf16.msra.mxu0 %v292
      %308 = vmatmul.bf16.gmra.mxu0 %v298
      %v309 = vpop.f32.mrf.mxu0
      %v310 = vadd.f32 %v282, %v309
      %v311 = vpop.f32.mrf.mxu0
      %312 = vdwg.mxu0
      %v313 = vpack.c.bf16 %v310, %v310
      %v315 = vunpack.c.l.b16 %v313
      %v316 = vpack.c.b16 %v315, %v315
      %317 = vrot.lane.b32.xlu0 %v316, 96
      %v318 = vpop.permute.xlu0 %317
      %vm319 = vcmask 64512
      %v321 = vsel %vm319, %v313, 0
      %v324 = vsel %vm319, %v318, 0
      %326 = vmatpush.bf16.xpose.msra.mxu0 0
      %327 = vmatpush.bf16.xpose.msra.mxu0 0
      %328 = vmatpush.bf16.xpose.msra.mxu0 0
      %329 = vmatpush.bf16.xpose.msra.mxu0 0
      %330 = vmatpush.bf16.xpose.msra.mxu0 0
      %331 = vmatpush.bf16.xpose.msra.mxu0 0
      %332 = vmatpush.bf16.xpose.msra.mxu0 0
      %333 = vmatpush.bf16.xpose.msra.mxu0 %v324
      %334 = vmatmul.bf16.gmra.mxu0 %v321
      %v335 = vpop.f32.mrf.mxu0
      %v336 = vadd.f32 0.0, %v335
      %v337 = vpop.f32.mrf.mxu0
      %338 = vdwg.mxu0
      %v339 = vmul.f32 %v336, 0.35355338
      %v340 = vsel %vm319, %v339, -inf
      %341 = vmax.xlane.f32.xlu0 %v340
      %v342 = vpop.xlane.xlu0 %341
      %v343 = vsub.f32 %v339, %v342
      %v344 = vmul.f32 %v343, 1.442695
      %v345 = vpow.pop %v344
      %v346 = vsel %vm319, %v345, 0.0
      %347 = vadd.xlane.f32.xlu0 %v346
      %v348 = vpop.xlane.xlu0 %347
      %v349 = vrcp.pop %v348
      %v350 = vmul.f32 %v345, %v349
      %v351 = vpack.c.bf16 %v350, %v350
      %352 = vrot.lane.b32.xlu0 %v316, 64
      %v353 = vpop.permute.xlu0 %352
      %v355 = vsel %vm319, %v351, 0
      %vm357 = vcmask 1043456
      %v359 = vsel %vm357, %v353, 0
      %361 = vmatpush.bf16.msra.mxu0 0
      %362 = vmatpush.bf16.msra.mxu0 0
      %363 = vmatpush.bf16.msra.mxu0 0
      %364 = vmatpush.bf16.msra.mxu0 0
      %365 = vmatpush.bf16.msra.mxu0 0
      %366 = vmatpush.bf16.msra.mxu0 0
      %367 = vmatpush.bf16.msra.mxu0 0
      %368 = vmatpush.bf16.msra.mxu0 %v359
      %369 = vmatmul.bf16.gmra.mxu0 %v355
      %v370 = vpop.f32.mrf.mxu0
      %v371 = vadd.f32 0.0, %v370
      %v372 = vpop.f32.mrf.mxu0
      %373 = vdwg.mxu0
      %v374 = vpack.c.bf16 %v371, %v371
      %vm375 = vcmask 60416
      %376 = vst.msk [vmem:[#allocation2] sm:$0xf] %vm375, %v374
      %377 = vrot.lane.b32.xlu0 %v316, 120
      %v378 = vpop.permute.xlu0 %377
      %379 = vrot.lane.b32.xlu0 %v316, 88
      %v380 = vpop.permute.xlu0 %379
      %v382 = vsel %vm319, %v378, 0
      %v385 = vsel %vm319, %v380, 0
      %387 = vmatpush.bf16.xpose.msra.mxu0 0
      %388 = vmatpush.bf16.xpose.msra.mxu0 0
      %389 = vmatpush.bf16.xpose.msra.mxu0 0
      %390 = vmatpush.bf16.xpose.msra.mxu0 0
      %391 = vmatpush.bf16.xpose.msra.mxu0 0
      %392 = vmatpush.bf16.xpose.msra.mxu0 0
      %393 = vmatpush.bf16.xpose.msra.mxu0 0
      %394 = vmatpush.bf16.xpose.msra.mxu0 %v385
      %395 = vmatmul.bf16.gmra.mxu0 %v382
      %v396 = vpop.f32.mrf.mxu0
      %v397 = vadd.f32 0.0, %v396
      %v398 = vpop.f32.mrf.mxu0
      %399 = vdwg.mxu0
      %v400 = vmul.f32 %v397, 0.35355338
      %v401 = vsel %vm319, %v400, -inf
      %402 = vmax.xlane.f32.xlu0 %v401
      %v403 = vpop.xlane.xlu0 %402
      %v404 = vsub.f32 %v400, %v403
      %v405 = vmul.f32 %v404, 1.442695
      %v406 = vpow.pop %v405
      %v407 = vsel %vm319, %v406, 0.0
      %408 = vadd.xlane.f32.xlu0 %v407
      %v409 = vpop.xlane.xlu0 %408
      %v410 = vrcp.pop %v409
      %v411 = vmul.f32 %v406, %v410
      %v412 = vpack.c.bf16 %v411, %v411
      %413 = vrot.lane.b32.xlu0 %v316, 56
      %v414 = vpop.permute.xlu0 %413
      %v416 = vsel %vm319, %v412, 0
      %v419 = vsel %vm357, %v414, 0
      %421 = vmatpush.bf16.msra.mxu0 0
      %422 = vmatpush.bf16.msra.mxu0 0
      %423 = vmatpush.bf16.msra.mxu0 0
      %424 = vmatpush.bf16.msra.mxu0 0
      %425 = vmatpush.bf16.msra.mxu0 0
      %426 = vmatpush.bf16.msra.mxu0 0
      %427 = vmatpush.bf16.msra.mxu0 0
      %428 = vmatpush.bf16.msra.mxu0 %v419
      %429 = vmatmul.bf16.gmra.mxu0 %v416
      %v430 = vpop.f32.mrf.mxu0
      %v431 = vadd.f32 0.0, %v430
      %v432 = vpop.f32.mrf.mxu0
      %433 = vdwg.mxu0
      %v434 = vpack.c.bf16 %v431, %v431
      %436 = vrot.lane.b32.xlu0 %v434, 8
      %v437 = vpop.permute.xlu0 %436
      %vm439 = vcmask 126016
      %440 = vst.msk [vmem:[#allocation2] sm:$0xf] %vm439, %v437
      %441 = vrot.lane.b32.xlu0 %v316, 112
      %v442 = vpop.permute.xlu0 %441
      %443 = vrot.lane.b32.xlu0 %v316, 80
      %v444 = vpop.permute.xlu0 %443
      %v446 = vsel %vm319, %v442, 0
      %v449 = vsel %vm319, %v444, 0
      %451 = vmatpush.bf16.xpose.msra.mxu0 0
      %452 = vmatpush.bf16.xpose.msra.mxu0 0
      %453 = vmatpush.bf16.xpose.msra.mxu0 0
      %454 = vmatpush.bf16.xpose.msra.mxu0 0
      %455 = vmatpush.bf16.xpose.msra.mxu0 0
      %456 = vmatpush.bf16.xpose.msra.mxu0 0
      %457 = vmatpush.bf16.xpose.msra.mxu0 0
      %458 = vmatpush.bf16.xpose.msra.mxu0 %v449
      %459 = vmatmul.bf16.gmra.mxu0 %v446
      %v460 = vpop.f32.mrf.mxu0
      %v461 = vadd.f32 0.0, %v460
      %v462 = vpop.f32.mrf.mxu0
      %463 = vdwg.mxu0
      %v464 = vmul.f32 %v461, 0.35355338
      %v465 = vsel %vm319, %v464, -inf
      %466 = vmax.xlane.f32.xlu0 %v465
      %v467 = vpop.xlane.xlu0 %466
      %v468 = vsub.f32 %v464, %v467
      %v469 = vmul.f32 %v468, 1.442695
      %v470 = vpow.pop %v469
      %v471 = vsel %vm319, %v470, 0.0
      %472 = vadd.xlane.f32.xlu0 %v471
      %v473 = vpop.xlane.xlu0 %472
      %v474 = vrcp.pop %v473
      %v475 = vmul.f32 %v470, %v474
      %v476 = vpack.c.bf16 %v475, %v475
      %477 = vrot.lane.b32.xlu0 %v316, 48
      %v478 = vpop.permute.xlu0 %477
      %v480 = vsel %vm319, %v476, 0
      %v483 = vsel %vm357, %v478, 0
      %485 = vmatpush.bf16.msra.mxu0 0
      %486 = vmatpush.bf16.msra.mxu0 0
      %487 = vmatpush.bf16.msra.mxu0 0
      %488 = vmatpush.bf16.msra.mxu0 0
      %489 = vmatpush.bf16.msra.mxu0 0
      %490 = vmatpush.bf16.msra.mxu0 0
      %491 = vmatpush.bf16.msra.mxu0 0
      %492 = vmatpush.bf16.msra.mxu0 %v483
      %493 = vmatmul.bf16.gmra.mxu0 %v480
      %v494 = vpop.f32.mrf.mxu0
      %v495 = vadd.f32 0.0, %v494
      %v496 = vpop.f32.mrf.mxu0
      %497 = vdwg.mxu0
      %v498 = vpack.c.bf16 %v495, %v495
      %500 = vrot.lane.b32.xlu0 %v498, 16
      %v501 = vpop.permute.xlu0 %500
      %vm503 = vcmask 191616
      %504 = vst.msk [vmem:[#allocation2] sm:$0xf] %vm503, %v501
      %505 = vrot.lane.b32.xlu0 %v316, 104
      %v506 = vpop.permute.xlu0 %505
      %507 = vrot.lane.b32.xlu0 %v316, 72
      %v508 = vpop.permute.xlu0 %507
      %v510 = vsel %vm319, %v506, 0
      %v513 = vsel %vm319, %v508, 0
      %515 = vmatpush.bf16.xpose.msra.mxu0 0
      %516 = vmatpush.bf16.xpose.msra.mxu0 0
      %517 = vmatpush.bf16.xpose.msra.mxu0 0
      %518 = vmatpush.bf16.xpose.msra.mxu0 0
      %519 = vmatpush.bf16.xpose.msra.mxu0 0
      %520 = vmatpush.bf16.xpose.msra.mxu0 0
      %521 = vmatpush.bf16.xpose.msra.mxu0 0
      %522 = vmatpush.bf16.xpose.msra.mxu0 %v513
      %523 = vmatmul.bf16.gmra.mxu0 %v510
      %v524 = vpop.f32.mrf.mxu0
      %v525 = vadd.f32 0.0, %v524
      %v526 = vpop.f32.mrf.mxu0
      %527 = vdwg.mxu0
      %v528 = vmul.f32 %v525, 0.35355338
      %v529 = vsel %vm319, %v528, -inf
      %530 = vmax.xlane.f32.xlu0 %v529
      %v531 = vpop.xlane.xlu0 %530
      %v532 = vsub.f32 %v528, %v531
      %v533 = vmul.f32 %v532, 1.442695
      %v534 = vpow.pop %v533
      %v535 = vsel %vm319, %v534, 0.0
      %536 = vadd.xlane.f32.xlu0 %v535
      %v537 = vpop.xlane.xlu0 %536
      %v538 = vrcp.pop %v537
      %v539 = vmul.f32 %v534, %v538
      %v540 = vpack.c.bf16 %v539, %v539
      %541 = vrot.lane.b32.xlu0 %v316, 40
      %v542 = vpop.permute.xlu0 %541
      %v544 = vsel %vm319, %v540, 0
      %v547 = vsel %vm357, %v542, 0
      %549 = vmatpush.bf16.msra.mxu0 0
      %550 = vmatpush.bf16.msra.mxu0 0
      %551 = vmatpush.bf16.msra.mxu0 0
      %552 = vmatpush.bf16.msra.mxu0 0
      %553 = vmatpush.bf16.msra.mxu0 0
      %554 = vmatpush.bf16.msra.mxu0 0
      %555 = vmatpush.bf16.msra.mxu0 0
      %556 = vmatpush.bf16.msra.mxu0 %v547
      %557 = vmatmul.bf16.gmra.mxu0 %v544
      %v558 = vpop.f32.mrf.mxu0
      %v559 = vadd.f32 0.0, %v558
      %v560 = vpop.f32.mrf.mxu0
      %561 = vdwg.mxu0
      %v562 = vpack.c.bf16 %v559, %v559
      %564 = vrot.lane.b32.xlu0 %v562, 24
      %v565 = vpop.permute.xlu0 %564
      %vm567 = vcmask 257216
      %568 = vst.msk [vmem:[#allocation2] sm:$0xf] %vm567, %v565
      %v569 = vld [vmem:[#allocation2] sm:$0xf]
      %v570 = vld [vmem:[%s3] sm:$0xf]
      %v571 = vld [vmem:[%s3 + $0x4] sm:$0xf]
      %v572 = vld [vmem:[%s3 + $0x8] sm:$0xf]
      %v573 = vld [vmem:[%s3 + $0xc] sm:$0xf]
      %v574 = vld [vmem:[%s4] sm:$0x1]
      %v576 = vperm.slane %v574, 0
      %v582 = vunpack.c.l.b16 %v570
      %v583 = vunpack.c.l.b16 %v571
      %v584 = vunpack.c.l.b16 %v572
      %v585 = vunpack.c.l.b16 %v573
      %v586 = vpack.c.b16 %v583, %v582
      %v587 = vpack.c.b16 %v585, %v584
      %v591 = vsel %vm296, %v569, 0
      %593 = vmatpush.bf16.msra.mxu0 0
      %594 = vmatpush.bf16.msra.mxu0 0
      %595 = vmatpush.bf16.msra.mxu0 0
      %596 = vmatpush.bf16.msra.mxu0 0
      %597 = vmatpush.bf16.msra.mxu0 0
      %598 = vmatpush.bf16.msra.mxu0 0
      %599 = vmatpush.bf16.msra.mxu0 %v587
      %600 = vmatpush.bf16.msra.mxu0 %v586
      %601 = vmatmul.bf16.gmra.mxu0 %v591
      %v602 = vpop.f32.mrf.mxu0
      %v603 = vadd.f32 %v576, %v602
      %v604 = vpop.f32.mrf.mxu0
      %605 = vdwg.mxu0
      %v606 = vunpack.c.l.bf16 %v275
      %v607 = vadd.f32 %v603, %v606
      %v608 = vld [vmem:[%s5] sm:$0x1]
      %v609 = vld [vmem:[%s6] sm:$0x1]
      %v610 = vsel %vm296, %v607, 0.0
      %611 = vadd.xlane.f32.xlu0 %v610
      %v612 = vpop.xlane.xlu0 %611
      %v613 = vrcp.pop 32.0
      %v614 = vmul.f32 32.0, %v613
      %v615 = vsub.f32 1.0, %v614
      %v616 = vmul.f32 %v613, %v615
      %v617 = vadd.f32 %v613, %v616
      %vm618 = vweird.f32 %v613
      %v619 = vsel %vm618, %v613, %v617
      %v620 = vmul.f32 %v612, %v619
      %v621 = vsub.f32 %v607, %v620
      %v622 = vmul.f32 %v621, %v621
      %v623 = vsel %vm296, %v622, 0.0
      %624 = vadd.xlane.f32.xlu0 %v623
      %v625 = vpop.xlane.xlu0 %624
      %v626 = vmul.f32 %v625, %v619
      %v627 = vadd.f32 %v626, 1e-05
      %v628 = vrsqrt.pop %v627
      %v629 = vmul.f32 %v628, %v627
      %v630 = vmul.f32 %v629, %v628
      %v631 = vmul.f32 0.5, %v630
      %v632 = vsub.f32 1.5, %v631
      %v633 = vmul.f32 %v628, %v632
      %vm634 = vweird.f32 %v627
      %vm635 = vweird.f32 %v628
      %vm636 = vmor %vm634, %vm635
      %v637 = vsel %vm636, %v628, %v633
      %v638 = vmul.f32 %v621, %v637
      %v640 = vperm.slane %v608, 0
      %v642 = vmul.f32 %v638, %v640
      %v644 = vperm.slane %v609, 0
      %v646 = vadd.f32 %v642, %v644
      %v647 = vpack.c.bf16 %v646, %v646
      %vm648 = vcmask 257024
      %649 = vst.msk [vmem:[%s273] sm:$0xf] %vm648, %v647
      %p650 = scmp.lt.s32.totalorder %s18, 1
      %s651 = scalar_select %p650, %s18, 1
      %s652 = smul.addr %s651, 4
      %s653 = scalar_lea.vmem %s7, %s652
      // Predicated region
      $region49: #{ocr_transformer_forward.13} parent=47 // pred_check
        %p654 = pneg %p188
      $region50: #{ocr_transformer_forward.13} parent=47 // pred_check_branch
        %656 = sbr.rel (%p654) target = $region52
      $region51: #{ocr_transformer_forward.13} parent=47 // pred_region
        _
      $region52: #{ocr_transformer_forward.13} parent=47 // pred_fallthru
        _
    $region48: #{ocr_transformer_forward.13} parent=5 // pred_fallthru
      _
    %p657 = scmp.le.s32.totalorder 2, %s13
    // Predicated region
    $region53: #{ocr_transformer_forward.13} parent=5 // pred_check
      %p658 = pneg %p657
    $region54: #{ocr_transformer_forward.13} parent=5 // pred_check_branch
      %660 = sbr.rel (%p658) target = $region56
    $region55: #{ocr_transformer_forward.13} parent=5 // pred_region
      %s661 = ssub.s32 %s13, 2
      // Predicated region
      $region57: #{ocr_transformer_forward.13} parent=55 // pred_check
        %p662 = pneg %p194
      $region58: #{ocr_transformer_forward.13} parent=55 // pred_check_branch
        %664 = sbr.rel (%p662) target = $region60
      $region59: #{ocr_transformer_forward.13} parent=55 // pred_region
        %p665 = scmp.lt.s32.totalorder %s19, 1
        %s666 = scalar_select %p665, %s19, 1
        %s667 = smul.addr %s666, 4
        %s668 = scalar_lea.vmem %s7, %s667
      $region60: #{ocr_transformer_forward.13} parent=55 // pred_fallthru
        _
    $region56: #{ocr_transformer_forward.13} parent=5 // pred_fallthru
      _
  $region6: #{ocr_transformer_forward.13} parent=0 // loop_footer
    %s17 = sadd.s32 1, %s13
  $region7: #{ocr_transformer_forward.13} parent=0 // loop_footer_branch
    %12 = sbr.rel target = $region3
  $region8: #{ocr_transformer_forward.13} parent=0 // loop_exit
    _

// kernel: ocr_transformer_forward.17
$region0: #{ocr_transformer_forward.17}
  #allocation0 [shape = 'u32[]', space=smem, size = 0x4, offset = 0x4, fixed_abs, tag = 'smem constant byte address 0x4 - core index']
  #allocation1 [shape = 'u32[72,128]{1,0:T(1,128)}', space=vmem, size = 0x9000, scoped, tag = 'internal scratch']
  #allocation2 [shape = 'bf16[8,32]{1,0:T(8,128)(2,1)}', space=vmem, size = 0x800, scoped, tag = 'scratch operand']
  %s0 = inlined_call_operand.vmem [shape: bf16[2,8,32], index: 0, kind: input, shape index: {}]
  %s1 = inlined_call_operand.vmem [shape: bf16[32,96], index: 1, kind: input, shape index: {}]
  %s2 = inlined_call_operand.vmem [shape: f32[1,96], index: 2, kind: input, shape index: {}]
  %s3 = inlined_call_operand.vmem [shape: bf16[32,32], index: 3, kind: input, shape index: {}]
  %s4 = inlined_call_operand.vmem [shape: f32[1,32], index: 4, kind: input, shape index: {}]
  %s5 = inlined_call_operand.vmem [shape: f32[1,32], index: 5, kind: input, shape index: {}]
  %s6 = inlined_call_operand.vmem [shape: f32[1,32], index: 6, kind: input, shape index: {}]
  %s7 = inlined_call_operand.vmem [shape: bf16[2,8,32], index: 7, kind: output, shape index: {}]
  %s8 = sld [smem:[#allocation0]]
  $region61: #{ocr_transformer_forward.17} parent=0
    _
  %s10 = ssub.s32 1, %s8
  %s11 = scalar_select 0, %s10, %s8
  loop: start=0, step=1, limit=4
  $region2: #{ocr_transformer_forward.17} parent=0 // loop_pre_header
    _
  $region3: #{ocr_transformer_forward.17} parent=0 // loop_header
    %s13 = sphi 0, %s17
    %p14 = scmp.ge.s32.totalorder %s13, 4
    %s23 = sphi 0, %s25
    %s26 = sphi 0, %s23
    %s27 = sphi 0, %s26
    %s43 = sphi 0, %s27
    %s47 = sphi 0, %s47
    %s49 = sphi 0, %s47
    %s50 = sphi 0, %s49
    %s64 = sphi 0, %s50
    %s68 = sphi 0, %s68
    %s70 = sphi 0, %s68
    %s71 = sphi 0, %s70
    %s85 = sphi 0, %s71
    %s89 = sphi 0, %s89
    %s91 = sphi 0, %s89
    %s92 = sphi 0, %s91
    %s106 = sphi 0, %s92
    %s110 = sphi 0, %s110
    %s112 = sphi 0, %s110
    %s113 = sphi 0, %s112
    %s127 = sphi 0, %s113
    %s131 = sphi 0, %s131
    %s133 = sphi 0, %s131
    %s134 = sphi 0, %s133
    %s148 = sphi 0, %s134
    %s152 = sphi 0, %s152
    %s154 = sphi 0, %s152
    %s155 = sphi 0, %s154
    %s169 = sphi 0, %s155
    %s175 = sphi 0, %s177
    %s178 = sphi 0, %s175
    %s179 = sphi 0, %s178
    %s195 = sphi 0, %s179
  $region4: #{ocr_transformer_forward.17} parent=0 // loop_header_branch
    %16 = sbr.rel (%p14) target = $region8
  $region5: #{ocr_transformer_forward.17} parent=0 // loop_body
    %s18 = ssub.s32 %s13, 1
    %s19 = ssub.s32 %s13, 2
    %s20 = sadd.s32 %s13, 1
    %s21 = ssub.s32 %s13, %s20
    %p22 = scmp.eq.s32.totalorder %s21, 0
    %s24 = sadd.s32 %s23, 1
    %s25 = scalar_select %p22, %s23, %s24
    %p28 = pneg %p22
    %p29 = scmp.eq.s32.totalorder %s13, 1
    %p30 = por %p28, %p29
    %p31 = scmp.ne.s32.totalorder %s23, %s26
    %p32 = scmp.eq.s32.totalorder %s13, 0
    %p33 = por %p31, %p32
    %p34 = scmp.ne.s32.totalorder %s23, %s26
    %p35 = scmp.eq.s32.totalorder %s18, 1
    %p36 = por %p34, %p35
    %p37 = scmp.ne.s32.totalorder %s26, %s27
    %p38 = scmp.eq.s32.totalorder %s18, 0
    %p39 = por %p37, %p38
    %p40 = scmp.ne.s32.totalorder %s26, %s27
    %p41 = scmp.eq.s32.totalorder %s19, 1
    %p42 = por %p40, %p41
    %p44 = scmp.ne.s32.totalorder %s27, %s43
    %p45 = scmp.eq.s32.totalorder %s19, 0
    %p46 = por %p44, %p45
    %s48 = sadd.s32 %s47, 1
    %p51 = scmp.eq.s32.totalorder %s13, 1
    %p52 = scmp.ne.s32.totalorder %s47, %s49
    %p53 = scmp.eq.s32.totalorder %s13, 0
    %p54 = por %p52, %p53
    %p55 = scmp.ne.s32.totalorder %s47, %s49
    %p56 = scmp.eq.s32.totalorder %s18, 1
    %p57 = por %p55, %p56
    %p58 = scmp.ne.s32.totalorder %s49, %s50
    %p59 = scmp.eq.s32.totalorder %s18, 0
    %p60 = por %p58, %p59
    %p61 = scmp.ne.s32.totalorder %s49, %s50
    %p62 = scmp.eq.s32.totalorder %s19, 1
    %p63 = por %p61, %p62
    %p65 = scmp.ne.s32.totalorder %s50, %s64
    %p66 = scmp.eq.s32.totalorder %s19, 0
    %p67 = por %p65, %p66
    %s69 = sadd.s32 %s68, 1
    %p72 = scmp.eq.s32.totalorder %s13, 1
    %p73 = scmp.ne.s32.totalorder %s68, %s70
    %p74 = scmp.eq.s32.totalorder %s13, 0
    %p75 = por %p73, %p74
    %p76 = scmp.ne.s32.totalorder %s68, %s70
    %p77 = scmp.eq.s32.totalorder %s18, 1
    %p78 = por %p76, %p77
    %p79 = scmp.ne.s32.totalorder %s70, %s71
    %p80 = scmp.eq.s32.totalorder %s18, 0
    %p81 = por %p79, %p80
    %p82 = scmp.ne.s32.totalorder %s70, %s71
    %p83 = scmp.eq.s32.totalorder %s19, 1
    %p84 = por %p82, %p83
    %p86 = scmp.ne.s32.totalorder %s71, %s85
    %p87 = scmp.eq.s32.totalorder %s19, 0
    %p88 = por %p86, %p87
    %s90 = sadd.s32 %s89, 1
    %p93 = scmp.eq.s32.totalorder %s13, 1
    %p94 = scmp.ne.s32.totalorder %s89, %s91
    %p95 = scmp.eq.s32.totalorder %s13, 0
    %p96 = por %p94, %p95
    %p97 = scmp.ne.s32.totalorder %s89, %s91
    %p98 = scmp.eq.s32.totalorder %s18, 1
    %p99 = por %p97, %p98
    %p100 = scmp.ne.s32.totalorder %s91, %s92
    %p101 = scmp.eq.s32.totalorder %s18, 0
    %p102 = por %p100, %p101
    %p103 = scmp.ne.s32.totalorder %s91, %s92
    %p104 = scmp.eq.s32.totalorder %s19, 1
    %p105 = por %p103, %p104
    %p107 = scmp.ne.s32.totalorder %s92, %s106
    %p108 = scmp.eq.s32.totalorder %s19, 0
    %p109 = por %p107, %p108
    %s111 = sadd.s32 %s110, 1
    %p114 = scmp.eq.s32.totalorder %s13, 1
    %p115 = scmp.ne.s32.totalorder %s110, %s112
    %p116 = scmp.eq.s32.totalorder %s13, 0
    %p117 = por %p115, %p116
    %p118 = scmp.ne.s32.totalorder %s110, %s112
    %p119 = scmp.eq.s32.totalorder %s18, 1
    %p120 = por %p118, %p119
    %p121 = scmp.ne.s32.totalorder %s112, %s113
    %p122 = scmp.eq.s32.totalorder %s18, 0
    %p123 = por %p121, %p122
    %p124 = scmp.ne.s32.totalorder %s112, %s113
    %p125 = scmp.eq.s32.totalorder %s19, 1
    %p126 = por %p124, %p125
    %p128 = scmp.ne.s32.totalorder %s113, %s127
    %p129 = scmp.eq.s32.totalorder %s19, 0
    %p130 = por %p128, %p129
    %s132 = sadd.s32 %s131, 1
    %p135 = scmp.eq.s32.totalorder %s13, 1
    %p136 = scmp.ne.s32.totalorder %s131, %s133
    %p137 = scmp.eq.s32.totalorder %s13, 0
    %p138 = por %p136, %p137
    %p139 = scmp.ne.s32.totalorder %s131, %s133
    %p140 = scmp.eq.s32.totalorder %s18, 1
    %p141 = por %p139, %p140
    %p142 = scmp.ne.s32.totalorder %s133, %s134
    %p143 = scmp.eq.s32.totalorder %s18, 0
    %p144 = por %p142, %p143
    %p145 = scmp.ne.s32.totalorder %s133, %s134
    %p146 = scmp.eq.s32.totalorder %s19, 1
    %p147 = por %p145, %p146
    %p149 = scmp.ne.s32.totalorder %s134, %s148
    %p150 = scmp.eq.s32.totalorder %s19, 0
    %p151 = por %p149, %p150
    %s153 = sadd.s32 %s152, 1
    %p156 = scmp.eq.s32.totalorder %s13, 1
    %p157 = scmp.ne.s32.totalorder %s152, %s154
    %p158 = scmp.eq.s32.totalorder %s13, 0
    %p159 = por %p157, %p158
    %p160 = scmp.ne.s32.totalorder %s152, %s154
    %p161 = scmp.eq.s32.totalorder %s18, 1
    %p162 = por %p160, %p161
    %p163 = scmp.ne.s32.totalorder %s154, %s155
    %p164 = scmp.eq.s32.totalorder %s18, 0
    %p165 = por %p163, %p164
    %p166 = scmp.ne.s32.totalorder %s154, %s155
    %p167 = scmp.eq.s32.totalorder %s19, 1
    %p168 = por %p166, %p167
    %p170 = scmp.ne.s32.totalorder %s155, %s169
    %p171 = scmp.eq.s32.totalorder %s19, 0
    %p172 = por %p170, %p171
    %s173 = ssub.s32 %s13, %s20
    %p174 = scmp.eq.s32.totalorder %s173, 0
    %s176 = sadd.s32 %s175, 1
    %s177 = scalar_select %p174, %s175, %s176
    %p180 = pneg %p174
    %p181 = scmp.eq.s32.totalorder %s13, 1
    %p182 = por %p180, %p181
    %p183 = scmp.ne.s32.totalorder %s175, %s178
    %p184 = scmp.eq.s32.totalorder %s13, 0
    %p185 = por %p183, %p184
    %p186 = scmp.ne.s32.totalorder %s175, %s178
    %p187 = scmp.eq.s32.totalorder %s18, 1
    %p188 = por %p186, %p187
    %p189 = scmp.ne.s32.totalorder %s178, %s179
    %p190 = scmp.eq.s32.totalorder %s18, 0
    %p191 = por %p189, %p190
    %p192 = scmp.ne.s32.totalorder %s178, %s179
    %p193 = scmp.eq.s32.totalorder %s19, 1
    %p194 = por %p192, %p193
    %p196 = scmp.ne.s32.totalorder %s179, %s195
    %p197 = scmp.eq.s32.totalorder %s19, 0
    %p198 = por %p196, %p197
    %p199 = scmp.le.s32.totalorder 1, %s13
    %p200 = scmp.lt.s32.totalorder %s13, 3
    %p201 = pnand %p199, %p200
    %p202 = pneg %p201
    // Predicated region
    $region9: #{ocr_transformer_forward.17} parent=5 // pred_check
      _
    $region10: #{ocr_transformer_forward.17} parent=5 // pred_check_branch
      %204 = sbr.rel (%p201) target = $region12
    $region11: #{ocr_transformer_forward.17} parent=5 // pred_region
      %s205 = ssub.s32 %s13, 1
      // Predicated region
      $region13: #{ocr_transformer_forward.17} parent=11 // pred_check
        %p206 = pneg %p60
      $region14: #{ocr_transformer_forward.17} parent=11 // pred_check_branch
        %208 = sbr.rel (%p206) target = $region16
      $region15: #{ocr_transformer_forward.17} parent=11 // pred_region
        _
      $region16: #{ocr_transformer_forward.17} parent=11 // pred_fallthru
        _
      // Predicated region
      $region17: #{ocr_transformer_forward.17} parent=11 // pred_check
        %p209 = pneg %p81
      $region18: #{ocr_transformer_forward.17} parent=11 // pred_check_branch
        %211 = sbr.rel (%p209) target = $region20
      $region19: #{ocr_transformer_forward.17} parent=11 // pred_region
        _
      $region20: #{ocr_transformer_forward.17} parent=11 // pred_fallthru
        _
      // Predicated region
      $region21: #{ocr_transformer_forward.17} parent=11 // pred_check
        %p212 = pneg %p102
      $region22: #{ocr_transformer_forward.17} parent=11 // pred_check_branch
        %214 = sbr.rel (%p212) target = $region24
      $region23: #{ocr_transformer_forward.17} parent=11 // pred_region
        _
      $region24: #{ocr_transformer_forward.17} parent=11 // pred_fallthru
        _
      // Predicated region
      $region25: #{ocr_transformer_forward.17} parent=11 // pred_check
        %p215 = pneg %p123
      $region26: #{ocr_transformer_forward.17} parent=11 // pred_check_branch
        %217 = sbr.rel (%p215) target = $region28
      $region27: #{ocr_transformer_forward.17} parent=11 // pred_region
        _
      $region28: #{ocr_transformer_forward.17} parent=11 // pred_fallthru
        _
      // Predicated region
      $region29: #{ocr_transformer_forward.17} parent=11 // pred_check
        %p218 = pneg %p144
      $region30: #{ocr_transformer_forward.17} parent=11 // pred_check_branch
        %220 = sbr.rel (%p218) target = $region32
      $region31: #{ocr_transformer_forward.17} parent=11 // pred_region
        _
      $region32: #{ocr_transformer_forward.17} parent=11 // pred_fallthru
        _
      // Predicated region
      $region33: #{ocr_transformer_forward.17} parent=11 // pred_check
        %p221 = pneg %p165
      $region34: #{ocr_transformer_forward.17} parent=11 // pred_check_branch
        %223 = sbr.rel (%p221) target = $region36
      $region35: #{ocr_transformer_forward.17} parent=11 // pred_region
        _
      $region36: #{ocr_transformer_forward.17} parent=11 // pred_fallthru
        _
    $region12: #{ocr_transformer_forward.17} parent=5 // pred_fallthru
      _
    %p224 = scmp.lt.s32.totalorder %s13, 2
    // Predicated region
    $region37: #{ocr_transformer_forward.17} parent=5 // pred_check
      %p225 = pneg %p224
    $region38: #{ocr_transformer_forward.17} parent=5 // pred_check_branch
      %227 = sbr.rel (%p225) target = $region40
    $region39: #{ocr_transformer_forward.17} parent=5 // pred_region
      // Predicated region
      $region41: #{ocr_transformer_forward.17} parent=39 // pred_check
        %p228 = pneg %p33
      $region42: #{ocr_transformer_forward.17} parent=39 // pred_check_branch
        %230 = sbr.rel (%p228) target = $region44
      $region43: #{ocr_transformer_forward.17} parent=39 // pred_region
        %p231 = scmp.lt.s32.totalorder %s13, 1
        %s232 = scalar_select %p231, %s13, 1
        %s233 = smul.addr %s232, 4
        %s234 = scalar_lea.vmem %s0, %s233
      $region44: #{ocr_transformer_forward.17} parent=39 // pred_fallthru
        _
    $region40: #{ocr_transformer_forward.17} parent=5 // pred_fallthru
      _
    %p235 = scmp.le.s32.totalorder 1, %s13
    %p236 = scmp.lt.s32.totalorder %s13, 3
    %p237 = pnand %p235, %p236
    %p238 = pneg %p237
    // Predicated region
    $region45: #{ocr_transformer_forward.17} parent=5 // pred_check
      _
    $region46: #{ocr_transformer_forward.17} parent=5 // pred_check_branch
      %240 = sbr.rel (%p237) target = $region48
    $region47: #{ocr_transformer_forward.17} parent=5 // pred_region
      %s241 = ssub.s32 %s13, 1
      %p242 = scmp.lt.s32.totalorder %s18, 1
      %s243 = scalar_select %p242, %s18, 1
      %s244 = smul.addr %s243, 4
      %s245 = scalar_lea.vmem %s0, %s244
      %p246 = pneg %p39
      %p247 = pneg %p36
      %p248 = pneg %p60
      %p249 = pneg %p57
      %p250 = pneg %p81
      %p251 = pneg %p78
      %p252 = pneg %p102
      %p253 = pneg %p99
      %p254 = pneg %p123
      %p255 = pneg %p120
      %p256 = pneg %p144
      %p257 = pneg %p141
      %p258 = pneg %p165
      %p259 = pneg %p162
      %p260 = pneg %p191
      %p261 = pneg %p188
      %p262 = scmp.lt.s32.totalorder %s18, 1
      %s263 = scalar_select %p262, %s18, 1
      %s264 = smul.addr %s263, 4
      %s265 = scalar_lea.vmem %s7, %s264
      %p266 = scmp.lt.s32.totalorder %s18, 1
      %s267 = scalar_select %p266, %s18, 1
      %s268 = smul.addr %s267, 4
      %s269 = scalar_lea.vmem %s0, %s268
      %p270 = scmp.lt.s32.totalorder %s18, 1
      %s271 = scalar_select %p270, %s18, 1
      %s272 = smul.addr %s271, 4
      %s273 = scalar_lea.vmem %s7, %s272
      %v275 = vld [vmem:[%s269] sm:$0xf]
      %v276 = vld [vmem:[%s1] sm:$0xf]
      %v277 = vld [vmem:[%s1 + $0x4] sm:$0xf]
      %v278 = vld [vmem:[%s1 + $0x8] sm:$0xf]
      %v279 = vld [vmem:[%s1 + $0xc] sm:$0xf]
      %v280 = vld [vmem:[%s2] sm:$0x1]
      %v282 = vperm.slane %v280, 0
      %v288 = vunpack.c.l.b16 %v276
      %v289 = vunpack.c.l.b16 %v277
      %v290 = vunpack.c.l.b16 %v278
      %v291 = vunpack.c.l.b16 %v279
      %v292 = vpack.c.b16 %v289, %v288
      %v293 = vpack.c.b16 %v291, %v290
      %vm296 = vcmask 261120
      %v298 = vsel %vm296, %v275, 0
      %300 = vmatpush.bf16.msra.mxu0 0
      %301 = vmatpush.bf16.msra.mxu0 0
      %302 = vmatpush.bf16.msra.mxu0 0
      %303 = vmatpush.bf16.msra.mxu0 0
      %304 = vmatpush.bf16.msra.mxu0 0
      %305 = vmatpush.bf16.msra.mxu0 0
      %306 = vmatpush.bf16.msra.mxu0 %v293
      %307 = vmatpush.bf16.msra.mxu0 %v292
      %308 = vmatmul.bf16.gmra.mxu0 %v298
      %v309 = vpop.f32.mrf.mxu0
      %v310 = vadd.f32 %v282, %v309
      %v311 = vpop.f32.mrf.mxu0
      %312 = vdwg.mxu0
      %v313 = vpack.c.bf16 %v310, %v310
      %v314 = vlaneseq
      %v315 = vshrl.u32 %v314, 7
      %v316 = vlaneseq
      %v317 = vand.u32 %v316, 127
      %vm318 = vcmp.le.s32.totalorder %v317, %v315
      %v320 = vunpack.c.l.b16 %v313
      %v321 = vpack.c.b16 %v320, %v320
      %322 = vrot.lane.b32.xlu0 %v321, 96
      %v323 = vpop.permute.xlu0 %322
      %vm324 = vcmask 64512
      %v326 = vsel %vm324, %v313, 0
      %v329 = vsel %vm324, %v323, 0
      %331 = vmatpush.bf16.xpose.msra.mxu0 0
      %332 = vmatpush.bf16.xpose.msra.mxu0 0
      %333 = vmatpush.bf16.xpose.msra.mxu0 0
      %334 = vmatpush.bf16.xpose.msra.mxu0 0
      %335 = vmatpush.bf16.xpose.msra.mxu0 0
      %336 = vmatpush.bf16.xpose.msra.mxu0 0
      %337 = vmatpush.bf16.xpose.msra.mxu0 0
      %338 = vmatpush.bf16.xpose.msra.mxu0 %v329
      %339 = vmatmul.bf16.gmra.mxu0 %v326
      %v340 = vpop.f32.mrf.mxu0
      %v341 = vadd.f32 0.0, %v340
      %v342 = vpop.f32.mrf.mxu0
      %343 = vdwg.mxu0
      %v344 = vmul.f32 %v341, 0.35355338
      %v345 = vsel %vm318, %v344, -1e+30
      %v346 = vsel %vm324, %v345, -inf
      %347 = vmax.xlane.f32.xlu0 %v346
      %v348 = vpop.xlane.xlu0 %347
      %v349 = vsub.f32 %v345, %v348
      %v350 = vmul.f32 %v349, 1.442695
      %v351 = vpow.pop %v350
      %v352 = vsel %vm324, %v351, 0.0
      %353 = vadd.xlane.f32.xlu0 %v352
      %v354 = vpop.xlane.xlu0 %353
      %v355 = vrcp.pop %v354
      %v356 = vmul.f32 %v351, %v355
      %v357 = vpack.c.bf16 %v356, %v356
      %358 = vrot.lane.b32.xlu0 %v321, 64
      %v359 = vpop.permute.xlu0 %358
      %v361 = vsel %vm324, %v357, 0
      %vm363 = vcmask 1043456
      %v365 = vsel %vm363, %v359, 0
      %367 = vmatpush.bf16.msra.mxu0 0
      %368 = vmatpush.bf16.msra.mxu0 0
      %369 = vmatpush.bf16.msra.mxu0 0
      %370 = vmatpush.bf16.msra.mxu0 0
      %371 = vmatpush.bf16.msra.mxu0 0
      %372 = vmatpush.bf16.msra.mxu0 0
      %373 = vmatpush.bf16.msra.mxu0 0
      %374 = vmatpush.bf16.msra.mxu0 %v365
      %375 = vmatmul.bf16.gmra.mxu0 %v361
      %v376 = vpop.f32.mrf.mxu0
      %v377 = vadd.f32 0.0, %v376
      %v378 = vpop.f32.mrf.mxu0
      %379 = vdwg.mxu0
      %v380 = vpack.c.bf16 %v377, %v377
      %vm381 = vcmask 60416
      %382 = vst.msk [vmem:[#allocation2] sm:$0xf] %vm381, %v380
      %383 = vrot.lane.b32.xlu0 %v321, 120
      %v384 = vpop.permute.xlu0 %383
      %385 = vrot.lane.b32.xlu0 %v321, 88
      %v386 = vpop.permute.xlu0 %385
      %v388 = vsel %vm324, %v384, 0
      %v391 = vsel %vm324, %v386, 0
      %393 = vmatpush.bf16.xpose.msra.mxu0 0
      %394 = vmatpush.bf16.xpose.msra.mxu0 0
      %395 = vmatpush.bf16.xpose.msra.mxu0 0
      %396 = vmatpush.bf16.xpose.msra.mxu0 0
      %397 = vmatpush.bf16.xpose.msra.mxu0 0
      %398 = vmatpush.bf16.xpose.msra.mxu0 0
      %399 = vmatpush.bf16.xpose.msra.mxu0 0
      %400 = vmatpush.bf16.xpose.msra.mxu0 %v391
      %401 = vmatmul.bf16.gmra.mxu0 %v388
      %v402 = vpop.f32.mrf.mxu0
      %v403 = vadd.f32 0.0, %v402
      %v404 = vpop.f32.mrf.mxu0
      %405 = vdwg.mxu0
      %v406 = vmul.f32 %v403, 0.35355338
      %v407 = vsel %vm318, %v406, -1e+30
      %v408 = vsel %vm324, %v407, -inf
      %409 = vmax.xlane.f32.xlu0 %v408
      %v410 = vpop.xlane.xlu0 %409
      %v411 = vsub.f32 %v407, %v410
      %v412 = vmul.f32 %v411, 1.442695
      %v413 = vpow.pop %v412
      %v414 = vsel %vm324, %v413, 0.0
      %415 = vadd.xlane.f32.xlu0 %v414
      %v416 = vpop.xlane.xlu0 %415
      %v417 = vrcp.pop %v416
      %v418 = vmul.f32 %v413, %v417
      %v419 = vpack.c.bf16 %v418, %v418
      %420 = vrot.lane.b32.xlu0 %v321, 56
      %v421 = vpop.permute.xlu0 %420
      %v423 = vsel %vm324, %v419, 0
      %v426 = vsel %vm363, %v421, 0
      %428 = vmatpush.bf16.msra.mxu0 0
      %429 = vmatpush.bf16.msra.mxu0 0
      %430 = vmatpush.bf16.msra.mxu0 0
      %431 = vmatpush.bf16.msra.mxu0 0
      %432 = vmatpush.bf16.msra.mxu0 0
      %433 = vmatpush.bf16.msra.mxu0 0
      %434 = vmatpush.bf16.msra.mxu0 0
      %435 = vmatpush.bf16.msra.mxu0 %v426
      %436 = vmatmul.bf16.gmra.mxu0 %v423
      %v437 = vpop.f32.mrf.mxu0
      %v438 = vadd.f32 0.0, %v437
      %v439 = vpop.f32.mrf.mxu0
      %440 = vdwg.mxu0
      %v441 = vpack.c.bf16 %v438, %v438
      %443 = vrot.lane.b32.xlu0 %v441, 8
      %v444 = vpop.permute.xlu0 %443
      %vm446 = vcmask 126016
      %447 = vst.msk [vmem:[#allocation2] sm:$0xf] %vm446, %v444
      %448 = vrot.lane.b32.xlu0 %v321, 112
      %v449 = vpop.permute.xlu0 %448
      %450 = vrot.lane.b32.xlu0 %v321, 80
      %v451 = vpop.permute.xlu0 %450
      %v453 = vsel %vm324, %v449, 0
      %v456 = vsel %vm324, %v451, 0
      %458 = vmatpush.bf16.xpose.msra.mxu0 0
      %459 = vmatpush.bf16.xpose.msra.mxu0 0
      %460 = vmatpush.bf16.xpose.msra.mxu0 0
      %461 = vmatpush.bf16.xpose.msra.mxu0 0
      %462 = vmatpush.bf16.xpose.msra.mxu0 0
      %463 = vmatpush.bf16.xpose.msra.mxu0 0
      %464 = vmatpush.bf16.xpose.msra.mxu0 0
      %465 = vmatpush.bf16.xpose.msra.mxu0 %v456
      %466 = vmatmul.bf16.gmra.mxu0 %v453
      %v467 = vpop.f32.mrf.mxu0
      %v468 = vadd.f32 0.0, %v467
      %v469 = vpop.f32.mrf.mxu0
      %470 = vdwg.mxu0
      %v471 = vmul.f32 %v468, 0.35355338
      %v472 = vsel %vm318, %v471, -1e+30
      %v473 = vsel %vm324, %v472, -inf
      %474 = vmax.xlane.f32.xlu0 %v473
      %v475 = vpop.xlane.xlu0 %474
      %v476 = vsub.f32 %v472, %v475
      %v477 = vmul.f32 %v476, 1.442695
      %v478 = vpow.pop %v477
      %v479 = vsel %vm324, %v478, 0.0
      %480 = vadd.xlane.f32.xlu0 %v479
      %v481 = vpop.xlane.xlu0 %480
      %v482 = vrcp.pop %v481
      %v483 = vmul.f32 %v478, %v482
      %v484 = vpack.c.bf16 %v483, %v483
      %485 = vrot.lane.b32.xlu0 %v321, 48
      %v486 = vpop.permute.xlu0 %485
      %v488 = vsel %vm324, %v484, 0
      %v491 = vsel %vm363, %v486, 0
      %493 = vmatpush.bf16.msra.mxu0 0
      %494 = vmatpush.bf16.msra.mxu0 0
      %495 = vmatpush.bf16.msra.mxu0 0
      %496 = vmatpush.bf16.msra.mxu0 0
      %497 = vmatpush.bf16.msra.mxu0 0
      %498 = vmatpush.bf16.msra.mxu0 0
      %499 = vmatpush.bf16.msra.mxu0 0
      %500 = vmatpush.bf16.msra.mxu0 %v491
      %501 = vmatmul.bf16.gmra.mxu0 %v488
      %v502 = vpop.f32.mrf.mxu0
      %v503 = vadd.f32 0.0, %v502
      %v504 = vpop.f32.mrf.mxu0
      %505 = vdwg.mxu0
      %v506 = vpack.c.bf16 %v503, %v503
      %508 = vrot.lane.b32.xlu0 %v506, 16
      %v509 = vpop.permute.xlu0 %508
      %vm511 = vcmask 191616
      %512 = vst.msk [vmem:[#allocation2] sm:$0xf] %vm511, %v509
      %513 = vrot.lane.b32.xlu0 %v321, 104
      %v514 = vpop.permute.xlu0 %513
      %515 = vrot.lane.b32.xlu0 %v321, 72
      %v516 = vpop.permute.xlu0 %515
      %v518 = vsel %vm324, %v514, 0
      %v521 = vsel %vm324, %v516, 0
      %523 = vmatpush.bf16.xpose.msra.mxu0 0
      %524 = vmatpush.bf16.xpose.msra.mxu0 0
      %525 = vmatpush.bf16.xpose.msra.mxu0 0
      %526 = vmatpush.bf16.xpose.msra.mxu0 0
      %527 = vmatpush.bf16.xpose.msra.mxu0 0
      %528 = vmatpush.bf16.xpose.msra.mxu0 0
      %529 = vmatpush.bf16.xpose.msra.mxu0 0
      %530 = vmatpush.bf16.xpose.msra.mxu0 %v521
      %531 = vmatmul.bf16.gmra.mxu0 %v518
      %v532 = vpop.f32.mrf.mxu0
      %v533 = vadd.f32 0.0, %v532
      %v534 = vpop.f32.mrf.mxu0
      %535 = vdwg.mxu0
      %v536 = vmul.f32 %v533, 0.35355338
      %v537 = vsel %vm318, %v536, -1e+30
      %v538 = vsel %vm324, %v537, -inf
      %539 = vmax.xlane.f32.xlu0 %v538
      %v540 = vpop.xlane.xlu0 %539
      %v541 = vsub.f32 %v537, %v540
      %v542 = vmul.f32 %v541, 1.442695
      %v543 = vpow.pop %v542
      %v544 = vsel %vm324, %v543, 0.0
      %545 = vadd.xlane.f32.xlu0 %v544
      %v546 = vpop.xlane.xlu0 %545
      %v547 = vrcp.pop %v546
      %v548 = vmul.f32 %v543, %v547
      %v549 = vpack.c.bf16 %v548, %v548
      %550 = vrot.lane.b32.xlu0 %v321, 40
      %v551 = vpop.permute.xlu0 %550
      %v553 = vsel %vm324, %v549, 0
      %v556 = vsel %vm363, %v551, 0
      %558 = vmatpush.bf16.msra.mxu0 0
      %559 = vmatpush.bf16.msra.mxu0 0
      %560 = vmatpush.bf16.msra.mxu0 0
      %561 = vmatpush.bf16.msra.mxu0 0
      %562 = vmatpush.bf16.msra.mxu0 0
      %563 = vmatpush.bf16.msra.mxu0 0
      %564 = vmatpush.bf16.msra.mxu0 0
      %565 = vmatpush.bf16.msra.mxu0 %v556
      %566 = vmatmul.bf16.gmra.mxu0 %v553
      %v567 = vpop.f32.mrf.mxu0
      %v568 = vadd.f32 0.0, %v567
      %v569 = vpop.f32.mrf.mxu0
      %570 = vdwg.mxu0
      %v571 = vpack.c.bf16 %v568, %v568
      %573 = vrot.lane.b32.xlu0 %v571, 24
      %v574 = vpop.permute.xlu0 %573
      %vm576 = vcmask 257216
      %577 = vst.msk [vmem:[#allocation2] sm:$0xf] %vm576, %v574
      %v578 = vld [vmem:[#allocation2] sm:$0xf]
      %v579 = vld [vmem:[%s3] sm:$0xf]
      %v580 = vld [vmem:[%s3 + $0x4] sm:$0xf]
      %v581 = vld [vmem:[%s3 + $0x8] sm:$0xf]
      %v582 = vld [vmem:[%s3 + $0xc] sm:$0xf]
      %v583 = vld [vmem:[%s4] sm:$0x1]
      %v585 = vperm.slane %v583, 0
      %v591 = vunpack.c.l.b16 %v579
      %v592 = vunpack.c.l.b16 %v580
      %v593 = vunpack.c.l.b16 %v581
      %v594 = vunpack.c.l.b16 %v582
      %v595 = vpack.c.b16 %v592, %v591
      %v596 = vpack.c.b16 %v594, %v593
      %v600 = vsel %vm296, %v578, 0
      %602 = vmatpush.bf16.msra.mxu0 0
      %603 = vmatpush.bf16.msra.mxu0 0
      %604 = vmatpush.bf16.msra.mxu0 0
      %605 = vmatpush.bf16.msra.mxu0 0
      %606 = vmatpush.bf16.msra.mxu0 0
      %607 = vmatpush.bf16.msra.mxu0 0
      %608 = vmatpush.bf16.msra.mxu0 %v596
      %609 = vmatpush.bf16.msra.mxu0 %v595
      %610 = vmatmul.bf16.gmra.mxu0 %v600
      %v611 = vpop.f32.mrf.mxu0
      %v612 = vadd.f32 %v585, %v611
      %v613 = vpop.f32.mrf.mxu0
      %614 = vdwg.mxu0
      %v615 = vunpack.c.l.bf16 %v275
      %v616 = vadd.f32 %v612, %v615
      %v617 = vld [vmem:[%s5] sm:$0x1]
      %v618 = vld [vmem:[%s6] sm:$0x1]
      %v619 = vsel %vm296, %v616, 0.0
      %620 = vadd.xlane.f32.xlu0 %v619
      %v621 = vpop.xlane.xlu0 %620
      %v622 = vrcp.pop 32.0
      %v623 = vmul.f32 32.0, %v622
      %v624 = vsub.f32 1.0, %v623
      %v625 = vmul.f32 %v622, %v624
      %v626 = vadd.f32 %v622, %v625
      %vm627 = vweird.f32 %v622
      %v628 = vsel %vm627, %v622, %v626
      %v629 = vmul.f32 %v621, %v628
      %v630 = vsub.f32 %v616, %v629
      %v631 = vmul.f32 %v630, %v630
      %v632 = vsel %vm296, %v631, 0.0
      %633 = vadd.xlane.f32.xlu0 %v632
      %v634 = vpop.xlane.xlu0 %633
      %v635 = vmul.f32 %v634, %v628
      %v636 = vadd.f32 %v635, 1e-05
      %v637 = vrsqrt.pop %v636
      %v638 = vmul.f32 %v637, %v636
      %v639 = vmul.f32 %v638, %v637
      %v640 = vmul.f32 0.5, %v639
      %v641 = vsub.f32 1.5, %v640
      %v642 = vmul.f32 %v637, %v641
      %vm643 = vweird.f32 %v636
      %vm644 = vweird.f32 %v637
      %vm645 = vmor %vm643, %vm644
      %v646 = vsel %vm645, %v637, %v642
      %v647 = vmul.f32 %v630, %v646
      %v649 = vperm.slane %v617, 0
      %v651 = vmul.f32 %v647, %v649
      %v653 = vperm.slane %v618, 0
      %v655 = vadd.f32 %v651, %v653
      %v656 = vpack.c.bf16 %v655, %v655
      %vm657 = vcmask 257024
      %658 = vst.msk [vmem:[%s273] sm:$0xf] %vm657, %v656
      %p659 = scmp.lt.s32.totalorder %s18, 1
      %s660 = scalar_select %p659, %s18, 1
      %s661 = smul.addr %s660, 4
      %s662 = scalar_lea.vmem %s7, %s661
      // Predicated region
      $region49: #{ocr_transformer_forward.17} parent=47 // pred_check
        %p663 = pneg %p188
      $region50: #{ocr_transformer_forward.17} parent=47 // pred_check_branch
        %665 = sbr.rel (%p663) target = $region52
      $region51: #{ocr_transformer_forward.17} parent=47 // pred_region
        _
      $region52: #{ocr_transformer_forward.17} parent=47 // pred_fallthru
        _
    $region48: #{ocr_transformer_forward.17} parent=5 // pred_fallthru
      _
    %p666 = scmp.le.s32.totalorder 2, %s13
    // Predicated region
    $region53: #{ocr_transformer_forward.17} parent=5 // pred_check
      %p667 = pneg %p666
    $region54: #{ocr_transformer_forward.17} parent=5 // pred_check_branch
      %669 = sbr.rel (%p667) target = $region56
    $region55: #{ocr_transformer_forward.17} parent=5 // pred_region
      %s670 = ssub.s32 %s13, 2
      // Predicated region
      $region57: #{ocr_transformer_forward.17} parent=55 // pred_check
        %p671 = pneg %p194
      $region58: #{ocr_transformer_forward.17} parent=55 // pred_check_branch
        %673 = sbr.rel (%p671) target = $region60
      $region59: #{ocr_transformer_forward.17} parent=55 // pred_region
        %p674 = scmp.lt.s32.totalorder %s19, 1
        %s675 = scalar_select %p674, %s19, 1
        %s676 = smul.addr %s675, 4
        %s677 = scalar_lea.vmem %s7, %s676
      $region60: #{ocr_transformer_forward.17} parent=55 // pred_fallthru
        _
    $region56: #{ocr_transformer_forward.17} parent=5 // pred_fallthru
      _
  $region6: #{ocr_transformer_forward.17} parent=0 // loop_footer
    %s17 = sadd.s32 1, %s13
  $region7: #{ocr_transformer_forward.17} parent=0 // loop_footer_branch
    %12 = sbr.rel target = $region3
  $region8: #{ocr_transformer_forward.17} parent=0 // loop_exit
    _

// kernel: ocr_transformer_forward.14
$region0: #{ocr_transformer_forward.14}
  #allocation0 [shape = 'u32[]', space=smem, size = 0x4, offset = 0x4, fixed_abs, tag = 'smem constant byte address 0x4 - core index']
  #allocation1 [shape = 'u32[72,128]{1,0:T(1,128)}', space=vmem, size = 0x9000, scoped, tag = 'internal scratch']
  %s0 = inlined_call_operand.vmem [shape: bf16[16,32], index: 0, kind: input, shape index: {}]
  %s1 = inlined_call_operand.vmem [shape: bf16[32,128], index: 1, kind: input, shape index: {}]
  %s2 = inlined_call_operand.vmem [shape: f32[1,128], index: 2, kind: input, shape index: {}]
  %s3 = inlined_call_operand.vmem [shape: bf16[128,32], index: 3, kind: input, shape index: {}]
  %s4 = inlined_call_operand.vmem [shape: f32[1,32], index: 4, kind: input, shape index: {}]
  %s5 = inlined_call_operand.vmem [shape: f32[1,32], index: 5, kind: input, shape index: {}]
  %s6 = inlined_call_operand.vmem [shape: f32[1,32], index: 6, kind: input, shape index: {}]
  %s7 = inlined_call_operand.vmem [shape: bf16[16,32], index: 7, kind: output, shape index: {}]
  %s8 = sld [smem:[#allocation0]]
  $region38: #{ocr_transformer_forward.14} parent=0
    _
  %s10 = ssub.s32 1, %s8
  %s11 = scalar_select 0, %s10, %s8
  // Predicated region
  $region2: #{ocr_transformer_forward.14} parent=0 // pred_check
    _
  $region3: #{ocr_transformer_forward.14} parent=0 // pred_check_branch
    %13 = sbr.rel (0) target = $region5
  $region4: #{ocr_transformer_forward.14} parent=0 // pred_region
    _
  $region5: #{ocr_transformer_forward.14} parent=0 // pred_fallthru
    _
  // Predicated region
  $region6: #{ocr_transformer_forward.14} parent=0 // pred_check
    _
  $region7: #{ocr_transformer_forward.14} parent=0 // pred_check_branch
    %15 = sbr.rel (0) target = $region9
  $region8: #{ocr_transformer_forward.14} parent=0 // pred_region
    _
  $region9: #{ocr_transformer_forward.14} parent=0 // pred_fallthru
    _
  // Predicated region
  $region10: #{ocr_transformer_forward.14} parent=0 // pred_check
    _
  $region11: #{ocr_transformer_forward.14} parent=0 // pred_check_branch
    %17 = sbr.rel (0) target = $region13
  $region12: #{ocr_transformer_forward.14} parent=0 // pred_region
    _
  $region13: #{ocr_transformer_forward.14} parent=0 // pred_fallthru
    _
  // Predicated region
  $region14: #{ocr_transformer_forward.14} parent=0 // pred_check
    _
  $region15: #{ocr_transformer_forward.14} parent=0 // pred_check_branch
    %19 = sbr.rel (0) target = $region17
  $region16: #{ocr_transformer_forward.14} parent=0 // pred_region
    _
  $region17: #{ocr_transformer_forward.14} parent=0 // pred_fallthru
    _
  // Predicated region
  $region18: #{ocr_transformer_forward.14} parent=0 // pred_check
    _
  $region19: #{ocr_transformer_forward.14} parent=0 // pred_check_branch
    %21 = sbr.rel (0) target = $region21
  $region20: #{ocr_transformer_forward.14} parent=0 // pred_region
    _
  $region21: #{ocr_transformer_forward.14} parent=0 // pred_fallthru
    _
  // Predicated region
  $region22: #{ocr_transformer_forward.14} parent=0 // pred_check
    _
  $region23: #{ocr_transformer_forward.14} parent=0 // pred_check_branch
    %23 = sbr.rel (0) target = $region25
  $region24: #{ocr_transformer_forward.14} parent=0 // pred_region
    _
  $region25: #{ocr_transformer_forward.14} parent=0 // pred_fallthru
    _
  // Predicated region
  $region26: #{ocr_transformer_forward.14} parent=0 // pred_check
    _
  $region27: #{ocr_transformer_forward.14} parent=0 // pred_check_branch
    %25 = sbr.rel (0) target = $region29
  $region28: #{ocr_transformer_forward.14} parent=0 // pred_region
    _
  $region29: #{ocr_transformer_forward.14} parent=0 // pred_fallthru
    _
  %v27 = vld [vmem:[%s0] sm:$0xf]
  %v28 = vld [vmem:[%s0 + $0x4] sm:$0xf]
  %v29 = vld [vmem:[%s1] sm:$0xf]
  %v30 = vld [vmem:[%s1 + $0x4] sm:$0xf]
  %v31 = vld [vmem:[%s1 + $0x8] sm:$0xf]
  %v32 = vld [vmem:[%s1 + $0xc] sm:$0xf]
  %v33 = vld [vmem:[%s2] sm:$0x1]
  %v35 = vperm.slane %v33, 0
  %v39 = vunpack.c.l.b16 %v27
  %v40 = vunpack.c.l.b16 %v28
  %v41 = vpack.c.b16 %v40, %v39
  %v46 = vunpack.c.l.b16 %v29
  %v47 = vunpack.c.l.b16 %v30
  %v48 = vunpack.c.l.b16 %v31
  %v49 = vunpack.c.l.b16 %v32
  %v50 = vpack.c.b16 %v47, %v46
  %v51 = vpack.c.b16 %v49, %v48
  %vm54 = vcmask 261120
  %v56 = vsel %vm54, %v41, 0
  %58 = vmatpush.bf16.msra.mxu0 0
  %59 = vmatpush.bf16.msra.mxu0 0
  %60 = vmatpush.bf16.msra.mxu0 0
  %61 = vmatpush.bf16.msra.mxu0 0
  %62 = vmatpush.bf16.msra.mxu0 0
  %63 = vmatpush.bf16.msra.mxu0 0
  %64 = vmatpush.bf16.msra.mxu0 %v51
  %65 = vmatpush.bf16.msra.mxu0 %v50
  %66 = vmatmul.bf16.gmra.mxu0 %v56
  %v67 = vpop.f32.mrf.mxu0
  %v68 = vadd.f32 %v35, %v67
  %v69 = vpop.f32.mrf.mxu0
  %v70 = vadd.f32 %v35, %v69
  %71 = vdwg.mxu0
  %v72 = vmax.f32 %v68, 0.0
  %v73 = vmax.f32 %v70, 0.0
  %v74 = vpack.c.bf16 %v73, %v72
  %v75 = vld [vmem:[%s3] sm:$0xf]
  %v76 = vld [vmem:[%s3 + $0x4] sm:$0xf]
  %v77 = vld [vmem:[%s3 + $0x8] sm:$0xf]
  %v78 = vld [vmem:[%s3 + $0xc] sm:$0xf]
  %v79 = vld [vmem:[%s3 + $0x10] sm:$0xf]
  %v80 = vld [vmem:[%s3 + $0x14] sm:$0xf]
  %v81 = vld [vmem:[%s3 + $0x18] sm:$0xf]
  %v82 = vld [vmem:[%s3 + $0x1c] sm:$0xf]
  %v83 = vld [vmem:[%s3 + $0x20] sm:$0xf]
  %v84 = vld [vmem:[%s3 + $0x24] sm:$0xf]
  %v85 = vld [vmem:[%s3 + $0x28] sm:$0xf]
  %v86 = vld [vmem:[%s3 + $0x2c] sm:$0xf]
  %v87 = vld [vmem:[%s3 + $0x30] sm:$0xf]
  %v88 = vld [vmem:[%s3 + $0x34] sm:$0xf]
  %v89 = vld [vmem:[%s3 + $0x38] sm:$0xf]
  %v90 = vld [vmem:[%s3 + $0x3c] sm:$0xf]
  %v91 = vld [vmem:[%s4] sm:$0x1]
  %v93 = vperm.slane %v91, 0
  %v111 = vunpack.c.l.b16 %v75
  %v112 = vunpack.c.l.b16 %v76
  %v113 = vunpack.c.l.b16 %v77
  %v114 = vunpack.c.l.b16 %v78
  %v115 = vunpack.c.l.b16 %v79
  %v116 = vunpack.c.l.b16 %v80
  %v117 = vunpack.c.l.b16 %v81
  %v118 = vunpack.c.l.b16 %v82
  %v119 = vunpack.c.l.b16 %v83
  %v120 = vunpack.c.l.b16 %v84
  %v121 = vunpack.c.l.b16 %v85
  %v122 = vunpack.c.l.b16 %v86
  %v123 = vunpack.c.l.b16 %v87
  %v124 = vunpack.c.l.b16 %v88
  %v125 = vunpack.c.l.b16 %v89
  %v126 = vunpack.c.l.b16 %v90
  %v127 = vpack.c.b16 %v112, %v111
  %v128 = vpack.c.b16 %v114, %v113
  %v129 = vpack.c.b16 %v116, %v115
  %v130 = vpack.c.b16 %v118, %v117
  %v131 = vpack.c.b16 %v120, %v119
  %v132 = vpack.c.b16 %v122, %v121
  %v133 = vpack.c.b16 %v124, %v123
  %v134 = vpack.c.b16 %v126, %v125
  %143 = vmatpush.bf16.msra.mxu0 %v134
  %144 = vmatpush.bf16.msra.mxu0 %v133
  %145 = vmatpush.bf16.msra.mxu0 %v132
  %146 = vmatpush.bf16.msra.mxu0 %v131
  %147 = vmatpush.bf16.msra.mxu0 %v130
  %148 = vmatpush.bf16.msra.mxu0 %v129
  %149 = vmatpush.bf16.msra.mxu0 %v128
  %150 = vmatpush.bf16.msra.mxu0 %v127
  %151 = vmatmul.bf16.gmra.mxu0 %v74
  %v152 = vpop.f32.mrf.mxu0
  %v153 = vadd.f32 %v93, %v152
  %v154 = vpop.f32.mrf.mxu0
  %v155 = vadd.f32 %v93, %v154
  %156 = vdwg.mxu0
  %v157 = vunpack.c.l.bf16 %v27
  %v158 = vunpack.c.l.bf16 %v28
  %v159 = vadd.f32 %v153, %v157
  %v160 = vadd.f32 %v155, %v158
  %v161 = vld [vmem:[%s5] sm:$0x1]
  %v162 = vld [vmem:[%s6] sm:$0x1]
  %v163 = vsel %vm54, %v159, 0.0
  %164 = vadd.xlane.f32.xlu0 %v163
  %v165 = vpop.xlane.xlu0 %164
  %v166 = vsel %vm54, %v160, 0.0
  %167 = vadd.xlane.f32.xlu0 %v166
  %v168 = vpop.xlane.xlu0 %167
  %v169 = vrcp.pop 32.0
  %v170 = vmul.f32 32.0, %v169
  %v171 = vsub.f32 1.0, %v170
  %v172 = vmul.f32 %v169, %v171
  %v173 = vadd.f32 %v169, %v172
  %vm174 = vweird.f32 %v169
  %v175 = vsel %vm174, %v169, %v173
  %v176 = vmul.f32 %v165, %v175
  %v177 = vmul.f32 %v168, %v175
  %v178 = vsub.f32 %v159, %v176
  %v179 = vsub.f32 %v160, %v177
  %v180 = vmul.f32 %v178, %v178
  %v181 = vmul.f32 %v179, %v179
  %v182 = vsel %vm54, %v180, 0.0
  %183 = vadd.xlane.f32.xlu0 %v182
  %v184 = vpop.xlane.xlu0 %183
  %v185 = vsel %vm54, %v181, 0.0
  %186 = vadd.xlane.f32.xlu0 %v185
  %v187 = vpop.xlane.xlu0 %186
  %v188 = vmul.f32 %v184, %v175
  %v189 = vmul.f32 %v187, %v175
  %v190 = vadd.f32 %v188, 1e-05
  %v191 = vadd.f32 %v189, 1e-05
  %v192 = vrsqrt.pop %v190
  %v193 = vmul.f32 %v192, %v190
  %v194 = vmul.f32 %v193, %v192
  %v195 = vmul.f32 0.5, %v194
  %v196 = vsub.f32 1.5, %v195
  %v197 = vmul.f32 %v192, %v196
  %vm198 = vweird.f32 %v190
  %vm199 = vweird.f32 %v192
  %vm200 = vmor %vm198, %vm199
  %v201 = vsel %vm200, %v192, %v197
  %v202 = vrsqrt.pop %v191
  %v203 = vmul.f32 %v202, %v191
  %v204 = vmul.f32 %v203, %v202
  %v205 = vmul.f32 0.5, %v204
  %v206 = vsub.f32 1.5, %v205
  %v207 = vmul.f32 %v202, %v206
  %vm208 = vweird.f32 %v191
  %vm209 = vweird.f32 %v202
  %vm210 = vmor %vm208, %vm209
  %v211 = vsel %vm210, %v202, %v207
  %v212 = vmul.f32 %v178, %v201
  %v213 = vmul.f32 %v179, %v211
  %v215 = vperm.slane %v161, 0
  %v217 = vmul.f32 %v212, %v215
  %v218 = vmul.f32 %v213, %v215
  %v220 = vperm.slane %v162, 0
  %v222 = vadd.f32 %v217, %v220
  %v223 = vadd.f32 %v218, %v220
  %v224 = vpack.c.bf16 %v222, %v222
  %v225 = vpack.c.bf16 %v223, %v223
  %vm226 = vcmask 257024
  %227 = vst.msk [vmem:[%s7] sm:$0xf] %vm226, %v224
  %228 = vst.msk [vmem:[%s7 + $0x4] sm:$0xf] %vm226, %v225
  // Predicated region
  $region30: #{ocr_transformer_forward.14} parent=0 // pred_check
    _
  $region31: #{ocr_transformer_forward.14} parent=0 // pred_check_branch
    %230 = sbr.rel (0) target = $region33
  $region32: #{ocr_transformer_forward.14} parent=0 // pred_region
    _
  $region33: #{ocr_transformer_forward.14} parent=0 // pred_fallthru
    _
  // Predicated region
  $region34: #{ocr_transformer_forward.14} parent=0 // pred_check
    _
  $region35: #{ocr_transformer_forward.14} parent=0 // pred_check_branch
    %232 = sbr.rel (0) target = $region37
  $region36: #{ocr_transformer_forward.14} parent=0 // pred_region
    _
  $region37: #{ocr_transformer_forward.14} parent=0 // pred_fallthru
    _

// kernel: ocr_transformer_forward.18
$region0: #{ocr_transformer_forward.18}
  #allocation0 [shape = 'u32[]', space=smem, size = 0x4, offset = 0x4, fixed_abs, tag = 'smem constant byte address 0x4 - core index']
  #allocation1 [shape = 'u32[72,128]{1,0:T(1,128)}', space=vmem, size = 0x9000, scoped, tag = 'internal scratch']
  #allocation2 [shape = 'bf16[8,32]{1,0:T(8,128)(2,1)}', space=vmem, size = 0x800, scoped, tag = 'scratch operand']
  %s0 = inlined_call_operand.vmem [shape: bf16[2,8,32], index: 0, kind: input, shape index: {}]
  %s1 = inlined_call_operand.vmem [shape: bf16[2,8,32], index: 1, kind: input, shape index: {}]
  %s2 = inlined_call_operand.vmem [shape: bf16[32,32], index: 2, kind: input, shape index: {}]
  %s3 = inlined_call_operand.vmem [shape: f32[1,32], index: 3, kind: input, shape index: {}]
  %s4 = inlined_call_operand.vmem [shape: bf16[32,64], index: 4, kind: input, shape index: {}]
  %s5 = inlined_call_operand.vmem [shape: f32[1,64], index: 5, kind: input, shape index: {}]
  %s6 = inlined_call_operand.vmem [shape: bf16[32,32], index: 6, kind: input, shape index: {}]
  %s7 = inlined_call_operand.vmem [shape: f32[1,32], index: 7, kind: input, shape index: {}]
  %s8 = inlined_call_operand.hbm [shape: f32[1,32], index: 8, kind: input, shape index: {}]
  %s9 = inlined_call_operand.hbm [shape: f32[1,32], index: 9, kind: input, shape index: {}]
  %s10 = inlined_call_operand.vmem [shape: bf16[2,8,32], index: 10, kind: output, shape index: {}]
  %s11 = sld [smem:[#allocation0]]
  $region81: #{ocr_transformer_forward.18} parent=0
    _
  %s13 = ssub.s32 1, %s11
  %s14 = scalar_select 0, %s13, %s11
  $region1: #{ocr_transformer_forward.18} parent=0
    #allocation3 [shape = 'u8[512]{0}', space=vmem, size = 0x400, scoped, tag = 'input window, operand 8, single buffered']
    #allocation4 [shape = 's32[2]{0}', space=sflag, size = 0x8, scoped, tag = 'scoped memory for ocr_transformer_forward.18']
    #allocation5 [shape = 'u8[512]{0}', space=vmem, size = 0x400, scoped, tag = 'input window, operand 9, single buffered']
    #allocation6 [shape = 's32[1]{0}', space=sflag, size = 0x4, scoped, tag = 'scoped memory for ocr_transformer_forward.18']
    %15 = vsyncpa [#allocation4], 0
    %16 = vsyncpa [#allocation6], 0
    loop: start=0, step=1, limit=4
    $region2: #{ocr_transformer_forward.18} parent=1 // loop_pre_header
      _
    $region3: #{ocr_transformer_forward.18} parent=1 // loop_header
      %s18 = sphi 0, %s22
      %p19 = scmp.ge.s32.totalorder %s18, 4
      %s28 = sphi 0, %s30
      %s31 = sphi 0, %s28
      %s32 = sphi 0, %s31
      %s48 = sphi 0, %s32
      %s54 = sphi 0, %s56
      %s57 = sphi 0, %s54
      %s58 = sphi 0, %s57
      %s74 = sphi 0, %s58
      %s78 = sphi 0, %s78
      %s80 = sphi 0, %s78
      %s81 = sphi 0, %s80
      %s95 = sphi 0, %s81
      %s99 = sphi 0, %s99
      %s101 = sphi 0, %s99
      %s102 = sphi 0, %s101
      %s116 = sphi 0, %s102
      %s120 = sphi 0, %s120
      %s122 = sphi 0, %s120
      %s123 = sphi 0, %s122
      %s137 = sphi 0, %s123
      %s141 = sphi 0, %s141
      %s143 = sphi 0, %s141
      %s144 = sphi 0, %s143
      %s158 = sphi 0, %s144
      %s162 = sphi 0, %s162
      %s164 = sphi 0, %s162
      %s165 = sphi 0, %s164
      %s179 = sphi 0, %s165
      %s183 = sphi 0, %s183
      %s185 = sphi 0, %s183
      %s186 = sphi 0, %s185
      %s200 = sphi 0, %s186
      %s204 = sphi 0, %s204
      %s206 = sphi 0, %s204
      %s207 = sphi 0, %s206
      %s221 = sphi 0, %s207
      %s225 = sphi 0, %s225
      %s227 = sphi 0, %s225
      %s228 = sphi 0, %s227
      %s242 = sphi 0, %s228
      %s248 = sphi 0, %s250
      %s251 = sphi 0, %s248
      %s252 = sphi 0, %s251
      %s268 = sphi 0, %s252
    $region4: #{ocr_transformer_forward.18} parent=1 // loop_header_branch
      %21 = sbr.rel (%p19) target = $region8
    $region5: #{ocr_transformer_forward.18} parent=1 // loop_body
      %s23 = ssub.s32 %s18, 1
      %s24 = ssub.s32 %s18, 2
      %s25 = sadd.s32 %s18, 1
      %s26 = ssub.s32 %s18, %s25
      %p27 = scmp.eq.s32.totalorder %s26, 0
      %s29 = sadd.s32 %s28, 1
      %s30 = scalar_select %p27, %s28, %s29
      %p33 = pneg %p27
      %p34 = scmp.eq.s32.totalorder %s18, 1
      %p35 = por %p33, %p34
      %p36 = scmp.ne.s32.totalorder %s28, %s31
      %p37 = scmp.eq.s32.totalorder %s18, 0
      %p38 = por %p36, %p37
      %p39 = scmp.ne.s32.totalorder %s28, %s31
      %p40 = scmp.eq.s32.totalorder %s23, 1
      %p41 = por %p39, %p40
      %p42 = scmp.ne.s32.totalorder %s31, %s32
      %p43 = scmp.eq.s32.totalorder %s23, 0
      %p44 = por %p42, %p43
      %p45 = scmp.ne.s32.totalorder %s31, %s32
      %p46 = scmp.eq.s32.totalorder %s24, 1
      %p47 = por %p45, %p46
      %p49 = scmp.ne.s32.totalorder %s32, %s48
      %p50 = scmp.eq.s32.totalorder %s24, 0
      %p51 = por %p49, %p50
      %s52 = ssub.s32 %s18, %s25
      %p53 = scmp.eq.s32.totalorder %s52, 0
      %s55 = sadd.s32 %s54, 1
      %s56 = scalar_select %p53, %s54, %s55
      %p59 = pneg %p53
      %p60 = scmp.eq.s32.totalorder %s18, 1
      %p61 = por %p59, %p60
      %p62 = scmp.ne.s32.totalorder %s54, %s57
      %p63 = scmp.eq.s32.totalorder %s18, 0
      %p64 = por %p62, %p63
      %p65 = scmp.ne.s32.totalorder %s54, %s57
      %p66 = scmp.eq.s32.totalorder %s23, 1
      %p67 = por %p65, %p66
      %p68 = scmp.ne.s32.totalorder %s57, %s58
      %p69 = scmp.eq.s32.totalorder %s23, 0
      %p70 = por %p68, %p69
      %p71 = scmp.ne.s32.totalorder %s57, %s58
      %p72 = scmp.eq.s32.totalorder %s24, 1
      %p73 = por %p71, %p72
      %p75 = scmp.ne.s32.totalorder %s58, %s74
      %p76 = scmp.eq.s32.totalorder %s24, 0
      %p77 = por %p75, %p76
      %s79 = sadd.s32 %s78, 1
      %p82 = scmp.eq.s32.totalorder %s18, 1
      %p83 = scmp.ne.s32.totalorder %s78, %s80
      %p84 = scmp.eq.s32.totalorder %s18, 0
      %p85 = por %p83, %p84
      %p86 = scmp.ne.s32.totalorder %s78, %s80
      %p87 = scmp.eq.s32.totalorder %s23, 1
      %p88 = por %p86, %p87
      %p89 = scmp.ne.s32.totalorder %s80, %s81
      %p90 = scmp.eq.s32.totalorder %s23, 0
      %p91 = por %p89, %p90
      %p92 = scmp.ne.s32.totalorder %s80, %s81
      %p93 = scmp.eq.s32.totalorder %s24, 1
      %p94 = por %p92, %p93
      %p96 = scmp.ne.s32.totalorder %s81, %s95
      %p97 = scmp.eq.s32.totalorder %s24, 0
      %p98 = por %p96, %p97
      %s100 = sadd.s32 %s99, 1
      %p103 = scmp.eq.s32.totalorder %s18, 1
      %p104 = scmp.ne.s32.totalorder %s99, %s101
      %p105 = scmp.eq.s32.totalorder %s18, 0
      %p106 = por %p104, %p105
      %p107 = scmp.ne.s32.totalorder %s99, %s101
      %p108 = scmp.eq.s32.totalorder %s23, 1
      %p109 = por %p107, %p108
      %p110 = scmp.ne.s32.totalorder %s101, %s102
      %p111 = scmp.eq.s32.totalorder %s23, 0
      %p112 = por %p110, %p111
      %p113 = scmp.ne.s32.totalorder %s101, %s102
      %p114 = scmp.eq.s32.totalorder %s24, 1
      %p115 = por %p113, %p114
      %p117 = scmp.ne.s32.totalorder %s102, %s116
      %p118 = scmp.eq.s32.totalorder %s24, 0
      %p119 = por %p117, %p118
      %s121 = sadd.s32 %s120, 1
      %p124 = scmp.eq.s32.totalorder %s18, 1
      %p125 = scmp.ne.s32.totalorder %s120, %s122
      %p126 = scmp.eq.s32.totalorder %s18, 0
      %p127 = por %p125, %p126
      %p128 = scmp.ne.s32.totalorder %s120, %s122
      %p129 = scmp.eq.s32.totalorder %s23, 1
      %p130 = por %p128, %p129
      %p131 = scmp.ne.s32.totalorder %s122, %s123
      %p132 = scmp.eq.s32.totalorder %s23, 0
      %p133 = por %p131, %p132
      %p134 = scmp.ne.s32.totalorder %s122, %s123
      %p135 = scmp.eq.s32.totalorder %s24, 1
      %p136 = por %p134, %p135
      %p138 = scmp.ne.s32.totalorder %s123, %s137
      %p139 = scmp.eq.s32.totalorder %s24, 0
      %p140 = por %p138, %p139
      %s142 = sadd.s32 %s141, 1
      %p145 = scmp.eq.s32.totalorder %s18, 1
      %p146 = scmp.ne.s32.totalorder %s141, %s143
      %p147 = scmp.eq.s32.totalorder %s18, 0
      %p148 = por %p146, %p147
      %p149 = scmp.ne.s32.totalorder %s141, %s143
      %p150 = scmp.eq.s32.totalorder %s23, 1
      %p151 = por %p149, %p150
      %p152 = scmp.ne.s32.totalorder %s143, %s144
      %p153 = scmp.eq.s32.totalorder %s23, 0
      %p154 = por %p152, %p153
      %p155 = scmp.ne.s32.totalorder %s143, %s144
      %p156 = scmp.eq.s32.totalorder %s24, 1
      %p157 = por %p155, %p156
      %p159 = scmp.ne.s32.totalorder %s144, %s158
      %p160 = scmp.eq.s32.totalorder %s24, 0
      %p161 = por %p159, %p160
      %s163 = sadd.s32 %s162, 1
      %p166 = scmp.eq.s32.totalorder %s18, 1
      %p167 = scmp.ne.s32.totalorder %s162, %s164
      %p168 = scmp.eq.s32.totalorder %s18, 0
      %p169 = por %p167, %p168
      %p170 = scmp.ne.s32.totalorder %s162, %s164
      %p171 = scmp.eq.s32.totalorder %s23, 1
      %p172 = por %p170, %p171
      %p173 = scmp.ne.s32.totalorder %s164, %s165
      %p174 = scmp.eq.s32.totalorder %s23, 0
      %p175 = por %p173, %p174
      %p176 = scmp.ne.s32.totalorder %s164, %s165
      %p177 = scmp.eq.s32.totalorder %s24, 1
      %p178 = por %p176, %p177
      %p180 = scmp.ne.s32.totalorder %s165, %s179
      %p181 = scmp.eq.s32.totalorder %s24, 0
      %p182 = por %p180, %p181
      %s184 = sadd.s32 %s183, 1
      %p187 = scmp.eq.s32.totalorder %s18, 1
      %p188 = scmp.ne.s32.totalorder %s183, %s185
      %p189 = scmp.eq.s32.totalorder %s18, 0
      %p190 = por %p188, %p189
      %p191 = scmp.ne.s32.totalorder %s183, %s185
      %p192 = scmp.eq.s32.totalorder %s23, 1
      %p193 = por %p191, %p192
      %p194 = scmp.ne.s32.totalorder %s185, %s186
      %p195 = scmp.eq.s32.totalorder %s23, 0
      %p196 = por %p194, %p195
      %p197 = scmp.ne.s32.totalorder %s185, %s186
      %p198 = scmp.eq.s32.totalorder %s24, 1
      %p199 = por %p197, %p198
      %p201 = scmp.ne.s32.totalorder %s186, %s200
      %p202 = scmp.eq.s32.totalorder %s24, 0
      %p203 = por %p201, %p202
      %s205 = sadd.s32 %s204, 1
      %p208 = scmp.eq.s32.totalorder %s18, 1
      %p209 = scmp.ne.s32.totalorder %s204, %s206
      %p210 = scmp.eq.s32.totalorder %s18, 0
      %p211 = por %p209, %p210
      %p212 = scmp.ne.s32.totalorder %s204, %s206
      %p213 = scmp.eq.s32.totalorder %s23, 1
      %p214 = por %p212, %p213
      %p215 = scmp.ne.s32.totalorder %s206, %s207
      %p216 = scmp.eq.s32.totalorder %s23, 0
      %p217 = por %p215, %p216
      %p218 = scmp.ne.s32.totalorder %s206, %s207
      %p219 = scmp.eq.s32.totalorder %s24, 1
      %p220 = por %p218, %p219
      %p222 = scmp.ne.s32.totalorder %s207, %s221
      %p223 = scmp.eq.s32.totalorder %s24, 0
      %p224 = por %p222, %p223
      %s226 = sadd.s32 %s225, 1
      %p229 = scmp.eq.s32.totalorder %s18, 1
      %p230 = scmp.ne.s32.totalorder %s225, %s227
      %p231 = scmp.eq.s32.totalorder %s18, 0
      %p232 = por %p230, %p231
      %p233 = scmp.ne.s32.totalorder %s225, %s227
      %p234 = scmp.eq.s32.totalorder %s23, 1
      %p235 = por %p233, %p234
      %p236 = scmp.ne.s32.totalorder %s227, %s228
      %p237 = scmp.eq.s32.totalorder %s23, 0
      %p238 = por %p236, %p237
      %p239 = scmp.ne.s32.totalorder %s227, %s228
      %p240 = scmp.eq.s32.totalorder %s24, 1
      %p241 = por %p239, %p240
      %p243 = scmp.ne.s32.totalorder %s228, %s242
      %p244 = scmp.eq.s32.totalorder %s24, 0
      %p245 = por %p243, %p244
      %s246 = ssub.s32 %s18, %s25
      %p247 = scmp.eq.s32.totalorder %s246, 0
      %s249 = sadd.s32 %s248, 1
      %s250 = scalar_select %p247, %s248, %s249
      %p253 = pneg %p247
      %p254 = scmp.eq.s32.totalorder %s18, 1
      %p255 = por %p253, %p254
      %p256 = scmp.ne.s32.totalorder %s248, %s251
      %p257 = scmp.eq.s32.totalorder %s18, 0
      %p258 = por %p256, %p257
      %p259 = scmp.ne.s32.totalorder %s248, %s251
      %p260 = scmp.eq.s32.totalorder %s23, 1
      %p261 = por %p259, %p260
      %p262 = scmp.ne.s32.totalorder %s251, %s252
      %p263 = scmp.eq.s32.totalorder %s23, 0
      %p264 = por %p262, %p263
      %p265 = scmp.ne.s32.totalorder %s251, %s252
      %p266 = scmp.eq.s32.totalorder %s24, 1
      %p267 = por %p265, %p266
      %p269 = scmp.ne.s32.totalorder %s252, %s268
      %p270 = scmp.eq.s32.totalorder %s24, 0
      %p271 = por %p269, %p270
      %p272 = scmp.le.s32.totalorder 1, %s18
      %p273 = scmp.lt.s32.totalorder %s18, 3
      %p274 = pnand %p272, %p273
      %p275 = pneg %p274
      // Predicated region
      $region9: #{ocr_transformer_forward.18} parent=5 // pred_check
        _
      $region10: #{ocr_transformer_forward.18} parent=5 // pred_check_branch
        %277 = sbr.rel (%p274) target = $region12
      $region11: #{ocr_transformer_forward.18} parent=5 // pred_region
        %s278 = ssub.s32 %s18, 1
        // Predicated region
        $region13: #{ocr_transformer_forward.18} parent=11 // pred_check
          %p279 = pneg %p91
        $region14: #{ocr_transformer_forward.18} parent=11 // pred_check_branch
          %281 = sbr.rel (%p279) target = $region16
        $region15: #{ocr_transformer_forward.18} parent=11 // pred_region
          _
        $region16: #{ocr_transformer_forward.18} parent=11 // pred_fallthru
          _
        // Predicated region
        $region17: #{ocr_transformer_forward.18} parent=11 // pred_check
          %p282 = pneg %p112
        $region18: #{ocr_transformer_forward.18} parent=11 // pred_check_branch
          %284 = sbr.rel (%p282) target = $region20
        $region19: #{ocr_transformer_forward.18} parent=11 // pred_region
          _
        $region20: #{ocr_transformer_forward.18} parent=11 // pred_fallthru
          _
        // Predicated region
        $region21: #{ocr_transformer_forward.18} parent=11 // pred_check
          %p285 = pneg %p133
        $region22: #{ocr_transformer_forward.18} parent=11 // pred_check_branch
          %287 = sbr.rel (%p285) target = $region24
        $region23: #{ocr_transformer_forward.18} parent=11 // pred_region
          _
        $region24: #{ocr_transformer_forward.18} parent=11 // pred_fallthru
          _
        // Predicated region
        $region25: #{ocr_transformer_forward.18} parent=11 // pred_check
          %p288 = pneg %p154
        $region26: #{ocr_transformer_forward.18} parent=11 // pred_check_branch
          %290 = sbr.rel (%p288) target = $region28
        $region27: #{ocr_transformer_forward.18} parent=11 // pred_region
          _
        $region28: #{ocr_transformer_forward.18} parent=11 // pred_fallthru
          _
        // Predicated region
        $region29: #{ocr_transformer_forward.18} parent=11 // pred_check
          %p291 = pneg %p175
        $region30: #{ocr_transformer_forward.18} parent=11 // pred_check_branch
          %293 = sbr.rel (%p291) target = $region32
        $region31: #{ocr_transformer_forward.18} parent=11 // pred_region
          _
        $region32: #{ocr_transformer_forward.18} parent=11 // pred_fallthru
          _
        // Predicated region
        $region33: #{ocr_transformer_forward.18} parent=11 // pred_check
          %p294 = pneg %p196
        $region34: #{ocr_transformer_forward.18} parent=11 // pred_check_branch
          %296 = sbr.rel (%p294) target = $region36
        $region35: #{ocr_transformer_forward.18} parent=11 // pred_region
          _
        $region36: #{ocr_transformer_forward.18} parent=11 // pred_fallthru
          _
        // Predicated region
        $region37: #{ocr_transformer_forward.18} parent=11 // pred_check
          %p297 = pneg %p217
        $region38: #{ocr_transformer_forward.18} parent=11 // pred_check_branch
          %299 = sbr.rel (%p297) target = $region40
        $region39: #{ocr_transformer_forward.18} parent=11 // pred_region
          %301 = vsyncadd [#allocation4], 0
          %s303 = sshll.u32 %s8, 4
          %s304 = int_to_ptr.hbm [resolvable:$true] %s303
          %s305 = sshll.u32 [#allocation3], 4
          %s306 = int_to_ptr.vmem [resolvable:$true] %s305
          %308 = dma.hbm_to_vmem [thread:$0]  %s304, 16, %s306, [#allocation4]
        $region40: #{ocr_transformer_forward.18} parent=11 // pred_fallthru
          _
        // Predicated region
        $region41: #{ocr_transformer_forward.18} parent=11 // pred_check
          %p309 = pneg %p238
        $region42: #{ocr_transformer_forward.18} parent=11 // pred_check_branch
          %311 = sbr.rel (%p309) target = $region44
        $region43: #{ocr_transformer_forward.18} parent=11 // pred_region
          %313 = vsyncadd [#allocation6], 0
          %s315 = sshll.u32 %s9, 4
          %s316 = int_to_ptr.hbm [resolvable:$true] %s315
          %s317 = sshll.u32 [#allocation5], 4
          %s318 = int_to_ptr.vmem [resolvable:$true] %s317
          %320 = dma.hbm_to_vmem [thread:$0]  %s316, 16, %s318, [#allocation6]
        $region44: #{ocr_transformer_forward.18} parent=11 // pred_fallthru
          _
      $region12: #{ocr_transformer_forward.18} parent=5 // pred_fallthru
        _
      %p321 = scmp.lt.s32.totalorder %s18, 2
      // Predicated region
      $region45: #{ocr_transformer_forward.18} parent=5 // pred_check
        %p322 = pneg %p321
      $region46: #{ocr_transformer_forward.18} parent=5 // pred_check_branch
        %324 = sbr.rel (%p322) target = $region48
      $region47: #{ocr_transformer_forward.18} parent=5 // pred_region
        // Predicated region
        $region49: #{ocr_transformer_forward.18} parent=47 // pred_check
          %p325 = pneg %p38
        $region50: #{ocr_transformer_forward.18} parent=47 // pred_check_branch
          %327 = sbr.rel (%p325) target = $region52
        $region51: #{ocr_transformer_forward.18} parent=47 // pred_region
          %p328 = scmp.lt.s32.totalorder %s18, 1
          %s329 = scalar_select %p328, %s18, 1
          %s330 = smul.addr %s329, 4
          %s331 = scalar_lea.vmem %s0, %s330
        $region52: #{ocr_transformer_forward.18} parent=47 // pred_fallthru
          _
        // Predicated region
        $region53: #{ocr_transformer_forward.18} parent=47 // pred_check
          %p332 = pneg %p64
        $region54: #{ocr_transformer_forward.18} parent=47 // pred_check_branch
          %334 = sbr.rel (%p332) target = $region56
        $region55: #{ocr_transformer_forward.18} parent=47 // pred_region
          %p335 = scmp.lt.s32.totalorder %s18, 1
          %s336 = scalar_select %p335, %s18, 1
          %s337 = smul.addr %s336, 4
          %s338 = scalar_lea.vmem %s1, %s337
        $region56: #{ocr_transformer_forward.18} parent=47 // pred_fallthru
          _
      $region48: #{ocr_transformer_forward.18} parent=5 // pred_fallthru
        _
      %p339 = scmp.le.s32.totalorder 1, %s18
      %p340 = scmp.lt.s32.totalorder %s18, 3
      %p341 = pnand %p339, %p340
      %p342 = pneg %p341
      // Predicated region
      $region57: #{ocr_transformer_forward.18} parent=5 // pred_check
        _
      $region58: #{ocr_transformer_forward.18} parent=5 // pred_check_branch
        %344 = sbr.rel (%p341) target = $region60
      $region59: #{ocr_transformer_forward.18} parent=5 // pred_region
        %s345 = ssub.s32 %s18, 1
        // Predicated region
        $region61: #{ocr_transformer_forward.18} parent=59 // pred_check
          %p346 = pneg %p217
        $region62: #{ocr_transformer_forward.18} parent=59 // pred_check_branch
          %348 = sbr.rel (%p346) target = $region64
        $region63: #{ocr_transformer_forward.18} parent=59 // pred_region
          %350 = dma.done [#allocation4], 16
        $region64: #{ocr_transformer_forward.18} parent=59 // pred_fallthru
          _
        // Predicated region
        $region65: #{ocr_transformer_forward.18} parent=59 // pred_check
          %p351 = pneg %p238
        $region66: #{ocr_transformer_forward.18} parent=59 // pred_check_branch
          %353 = sbr.rel (%p351) target = $region68
        $region67: #{ocr_transformer_forward.18} parent=59 // pred_region
          %355 = dma.done [#allocation6], 16
        $region68: #{ocr_transformer_forward.18} parent=59 // pred_fallthru
          _
        %p356 = scmp.lt.s32.totalorder %s23, 1
        %s357 = scalar_select %p356, %s23, 1
        %s358 = smul.addr %s357, 4
        %s359 = scalar_lea.vmem %s0, %s358
        %p360 = pneg %p44
        %p361 = pneg %p41
        %p362 = scmp.lt.s32.totalorder %s23, 1
        %s363 = scalar_select %p362, %s23, 1
        %s364 = smul.addr %s363, 4
        %s365 = scalar_lea.vmem %s1, %s364
        %p366 = pneg %p70
        %p367 = pneg %p67
        %p368 = pneg %p91
        %p369 = pneg %p88
        %p370 = pneg %p112
        %p371 = pneg %p109
        %p372 = pneg %p133
        %p373 = pneg %p130
        %p374 = pneg %p154
        %p375 = pneg %p151
        %p376 = pneg %p175
        %p377 = pneg %p172
        %p378 = pneg %p196
        %p379 = pneg %p193
        %p380 = pneg %p217
        %p381 = pneg %p214
        %p382 = pneg %p238
        %p383 = pneg %p235
        %p384 = pneg %p264
        %p385 = pneg %p261
        %p386 = scmp.lt.s32.totalorder %s23, 1
        %s387 = scalar_select %p386, %s23, 1
        %s388 = smul.addr %s387, 4
        %s389 = scalar_lea.vmem %s10, %s388
        %p390 = scmp.lt.s32.totalorder %s23, 1
        %s391 = scalar_select %p390, %s23, 1
        %s392 = smul.addr %s391, 4
        %s393 = scalar_lea.vmem %s0, %s392
        %p394 = scmp.lt.s32.totalorder %s23, 1
        %s395 = scalar_select %p394, %s23, 1
        %s396 = smul.addr %s395, 4
        %s397 = scalar_lea.vmem %s1, %s396
        %p398 = scmp.lt.s32.totalorder %s23, 1
        %s399 = scalar_select %p398, %s23, 1
        %s400 = smul.addr %s399, 4
        %s401 = scalar_lea.vmem %s10, %s400
        %v403 = vld [vmem:[%s393] sm:$0xf]
        %v404 = vld [vmem:[%s397] sm:$0xf]
        %v405 = vld [vmem:[%s2] sm:$0xf]
        %v406 = vld [vmem:[%s2 + $0x4] sm:$0xf]
        %v407 = vld [vmem:[%s2 + $0x8] sm:$0xf]
        %v408 = vld [vmem:[%s2 + $0xc] sm:$0xf]
        %v409 = vld [vmem:[%s3] sm:$0x1]
        %v411 = vperm.slane %v409, 0
        %v417 = vunpack.c.l.b16 %v405
        %v418 = vunpack.c.l.b16 %v406
        %v419 = vunpack.c.l.b16 %v407
        %v420 = vunpack.c.l.b16 %v408
        %v421 = vpack.c.b16 %v418, %v417
        %v422 = vpack.c.b16 %v420, %v419
        %vm425 = vcmask 261120
        %v427 = vsel %vm425, %v403, 0
        %429 = vmatpush.bf16.msra.mxu0 0
        %430 = vmatpush.bf16.msra.mxu0 0
        %431 = vmatpush.bf16.msra.mxu0 0
        %432 = vmatpush.bf16.msra.mxu0 0
        %433 = vmatpush.bf16.msra.mxu0 0
        %434 = vmatpush.bf16.msra.mxu0 0
        %435 = vmatpush.bf16.msra.mxu0 %v422
        %436 = vmatpush.bf16.msra.mxu0 %v421
        %437 = vmatmul.bf16.gmra.mxu0 %v427
        %v438 = vpop.f32.mrf.mxu0
        %v439 = vadd.f32 %v411, %v438
        %v440 = vpop.f32.mrf.mxu0
        %441 = vdwg.mxu0
        %v442 = vpack.c.bf16 %v439, %v439
        %v443 = vld [vmem:[%s4] sm:$0xf]
        %v444 = vld [vmem:[%s4 + $0x4] sm:$0xf]
        %v445 = vld [vmem:[%s4 + $0x8] sm:$0xf]
        %v446 = vld [vmem:[%s4 + $0xc] sm:$0xf]
        %v447 = vld [vmem:[%s5] sm:$0x1]
        %v449 = vperm.slane %v447, 0
        %v455 = vunpack.c.l.b16 %v443
        %v456 = vunpack.c.l.b16 %v444
        %v457 = vunpack.c.l.b16 %v445
        %v458 = vunpack.c.l.b16 %v446
        %v459 = vpack.c.b16 %v456, %v455
        %v460 = vpack.c.b16 %v458, %v457
        %v464 = vsel %vm425, %v404, 0
        %466 = vmatpush.bf16.msra.mxu0 0
        %467 = vmatpush.bf16.msra.mxu0 0
        %468 = vmatpush.bf16.msra.mxu0 0
        %469 = vmatpush.bf16.msra.mxu0 0
        %470 = vmatpush.bf16.msra.mxu0 0
        %471 = vmatpush.bf16.msra.mxu0 0
        %472 = vmatpush.bf16.msra.mxu0 %v460
        %473 = vmatpush.bf16.msra.mxu0 %v459
        %474 = vmatmul.bf16.gmra.mxu0 %v464
        %v475 = vpop.f32.mrf.mxu0
        %v476 = vadd.f32 %v449, %v475
        %v477 = vpop.f32.mrf.mxu0
        %478 = vdwg.mxu0
        %v479 = vpack.c.bf16 %v476, %v476
        %vm480 = vcmask 64512
        %v482 = vsel %vm480, %v442, 0
        %v485 = vsel %vm480, %v479, 0
        %487 = vmatpush.bf16.xpose.msra.mxu0 0
        %488 = vmatpush.bf16.xpose.msra.mxu0 0
        %489 = vmatpush.bf16.xpose.msra.mxu0 0
        %490 = vmatpush.bf16.xpose.msra.mxu0 0
        %491 = vmatpush.bf16.xpose.msra.mxu0 0
        %492 = vmatpush.bf16.xpose.msra.mxu0 0
        %493 = vmatpush.bf16.xpose.msra.mxu0 0
        %494 = vmatpush.bf16.xpose.msra.mxu0 %v485
        %495 = vmatmul.bf16.gmra.mxu0 %v482
        %v496 = vpop.f32.mrf.mxu0
        %v497 = vadd.f32 0.0, %v496
        %v498 = vpop.f32.mrf.mxu0
        %499 = vdwg.mxu0
        %v500 = vmul.f32 %v497, 0.35355338
        %v501 = vsel %vm480, %v500, -inf
        %502 = vmax.xlane.f32.xlu0 %v501
        %v503 = vpop.xlane.xlu0 %502
        %v504 = vsub.f32 %v500, %v503
        %v505 = vmul.f32 %v504, 1.442695
        %v506 = vpow.pop %v505
        %v507 = vsel %vm480, %v506, 0.0
        %508 = vadd.xlane.f32.xlu0 %v507
        %v509 = vpop.xlane.xlu0 %508
        %v510 = vrcp.pop %v509
        %v511 = vmul.f32 %v506, %v510
        %v512 = vpack.c.bf16 %v511, %v511
        %v514 = vunpack.c.l.b16 %v479
        %v515 = vpack.c.b16 %v514, %v514
        %516 = vrot.lane.b32.xlu0 %v515, 96
        %v517 = vpop.permute.xlu0 %516
        %v519 = vsel %vm480, %v512, 0
        %vm521 = vcmask 1043456
        %v523 = vsel %vm521, %v517, 0
        %525 = vmatpush.bf16.msra.mxu0 0
        %526 = vmatpush.bf16.msra.mxu0 0
        %527 = vmatpush.bf16.msra.mxu0 0
        %528 = vmatpush.bf16.msra.mxu0 0
        %529 = vmatpush.bf16.msra.mxu0 0
        %530 = vmatpush.bf16.msra.mxu0 0
        %531 = vmatpush.bf16.msra.mxu0 0
        %532 = vmatpush.bf16.msra.mxu0 %v523
        %533 = vmatmul.bf16.gmra.mxu0 %v519
        %v534 = vpop.f32.mrf.mxu0
        %v535 = vadd.f32 0.0, %v534
        %v536 = vpop.f32.mrf.mxu0
        %537 = vdwg.mxu0
        %v538 = vpack.c.bf16 %v535, %v535
        %vm539 = vcmask 60416
        %540 = vst.msk [vmem:[#allocation2] sm:$0xf] %vm539, %v538
        %v542 = vunpack.c.l.b16 %v442
        %v543 = vpack.c.b16 %v542, %v542
        %544 = vrot.lane.b32.xlu0 %v543, 120
        %v545 = vpop.permute.xlu0 %544
        %546 = vrot.lane.b32.xlu0 %v515, 120
        %v547 = vpop.permute.xlu0 %546
        %v549 = vsel %vm480, %v545, 0
        %v552 = vsel %vm480, %v547, 0
        %554 = vmatpush.bf16.xpose.msra.mxu0 0
        %555 = vmatpush.bf16.xpose.msra.mxu0 0
        %556 = vmatpush.bf16.xpose.msra.mxu0 0
        %557 = vmatpush.bf16.xpose.msra.mxu0 0
        %558 = vmatpush.bf16.xpose.msra.mxu0 0
        %559 = vmatpush.bf16.xpose.msra.mxu0 0
        %560 = vmatpush.bf16.xpose.msra.mxu0 0
        %561 = vmatpush.bf16.xpose.msra.mxu0 %v552
        %562 = vmatmul.bf16.gmra.mxu0 %v549
        %v563 = vpop.f32.mrf.mxu0
        %v564 = vadd.f32 0.0, %v563
        %v565 = vpop.f32.mrf.mxu0
        %566 = vdwg.mxu0
        %v567 = vmul.f32 %v564, 0.35355338
        %v568 = vsel %vm480, %v567, -inf
        %569 = vmax.xlane.f32.xlu0 %v568
        %v570 = vpop.xlane.xlu0 %569
        %v571 = vsub.f32 %v567, %v570
        %v572 = vmul.f32 %v571, 1.442695
        %v573 = vpow.pop %v572
        %v574 = vsel %vm480, %v573, 0.0
        %575 = vadd.xlane.f32.xlu0 %v574
        %v576 = vpop.xlane.xlu0 %575
        %v577 = vrcp.pop %v576
        %v578 = vmul.f32 %v573, %v577
        %v579 = vpack.c.bf16 %v578, %v578
        %580 = vrot.lane.b32.xlu0 %v515, 88
        %v581 = vpop.permute.xlu0 %580
        %v583 = vsel %vm480, %v579, 0
        %v586 = vsel %vm521, %v581, 0
        %588 = vmatpush.bf16.msra.mxu0 0
        %589 = vmatpush.bf16.msra.mxu0 0
        %590 = vmatpush.bf16.msra.mxu0 0
        %591 = vmatpush.bf16.msra.mxu0 0
        %592 = vmatpush.bf16.msra.mxu0 0
        %593 = vmatpush.bf16.msra.mxu0 0
        %594 = vmatpush.bf16.msra.mxu0 0
        %595 = vmatpush.bf16.msra.mxu0 %v586
        %596 = vmatmul.bf16.gmra.mxu0 %v583
        %v597 = vpop.f32.mrf.mxu0
        %v598 = vadd.f32 0.0, %v597
        %v599 = vpop.f32.mrf.mxu0
        %600 = vdwg.mxu0
        %v601 = vpack.c.bf16 %v598, %v598
        %603 = vrot.lane.b32.xlu0 %v601, 8
        %v604 = vpop.permute.xlu0 %603
        %vm606 = vcmask 126016
        %607 = vst.msk [vmem:[#allocation2] sm:$0xf] %vm606, %v604
        %608 = vrot.lane.b32.xlu0 %v543, 112
        %v609 = vpop.permute.xlu0 %608
        %610 = vrot.lane.b32.xlu0 %v515, 112
        %v611 = vpop.permute.xlu0 %610
        %v613 = vsel %vm480, %v609, 0
        %v616 = vsel %vm480, %v611, 0
        %618 = vmatpush.bf16.xpose.msra.mxu0 0
        %619 = vmatpush.bf16.xpose.msra.mxu0 0
        %620 = vmatpush.bf16.xpose.msra.mxu0 0
        %621 = vmatpush.bf16.xpose.msra.mxu0 0
        %622 = vmatpush.bf16.xpose.msra.mxu0 0
        %623 = vmatpush.bf16.xpose.msra.mxu0 0
        %624 = vmatpush.bf16.xpose.msra.mxu0 0
        %625 = vmatpush.bf16.xpose.msra.mxu0 %v616
        %626 = vmatmul.bf16.gmra.mxu0 %v613
        %v627 = vpop.f32.mrf.mxu0
        %v628 = vadd.f32 0.0, %v627
        %v629 = vpop.f32.mrf.mxu0
        %630 = vdwg.mxu0
        %v631 = vmul.f32 %v628, 0.35355338
        %v632 = vsel %vm480, %v631, -inf
        %633 = vmax.xlane.f32.xlu0 %v632
        %v634 = vpop.xlane.xlu0 %633
        %v635 = vsub.f32 %v631, %v634
        %v636 = vmul.f32 %v635, 1.442695
        %v637 = vpow.pop %v636
        %v638 = vsel %vm480, %v637, 0.0
        %639 = vadd.xlane.f32.xlu0 %v638
        %v640 = vpop.xlane.xlu0 %639
        %v641 = vrcp.pop %v640
        %v642 = vmul.f32 %v637, %v641
        %v643 = vpack.c.bf16 %v642, %v642
        %644 = vrot.lane.b32.xlu0 %v515, 80
        %v645 = vpop.permute.xlu0 %644
        %v647 = vsel %vm480, %v643, 0
        %v650 = vsel %vm521, %v645, 0
        %652 = vmatpush.bf16.msra.mxu0 0
        %653 = vmatpush.bf16.msra.mxu0 0
        %654 = vmatpush.bf16.msra.mxu0 0
        %655 = vmatpush.bf16.msra.mxu0 0
        %656 = vmatpush.bf16.msra.mxu0 0
        %657 = vmatpush.bf16.msra.mxu0 0
        %658 = vmatpush.bf16.msra.mxu0 0
        %659 = vmatpush.bf16.msra.mxu0 %v650
        %660 = vmatmul.bf16.gmra.mxu0 %v647
        %v661 = vpop.f32.mrf.mxu0
        %v662 = vadd.f32 0.0, %v661
        %v663 = vpop.f32.mrf.mxu0
        %664 = vdwg.mxu0
        %v665 = vpack.c.bf16 %v662, %v662
        %667 = vrot.lane.b32.xlu0 %v665, 16
        %v668 = vpop.permute.xlu0 %667
        %vm670 = vcmask 191616
        %671 = vst.msk [vmem:[#allocation2] sm:$0xf] %vm670, %v668
        %672 = vrot.lane.b32.xlu0 %v543, 104
        %v673 = vpop.permute.xlu0 %672
        %674 = vrot.lane.b32.xlu0 %v515, 104
        %v675 = vpop.permute.xlu0 %674
        %v677 = vsel %vm480, %v673, 0
        %v680 = vsel %vm480, %v675, 0
        %682 = vmatpush.bf16.xpose.msra.mxu0 0
        %683 = vmatpush.bf16.xpose.msra.mxu0 0
        %684 = vmatpush.bf16.xpose.msra.mxu0 0
        %685 = vmatpush.bf16.xpose.msra.mxu0 0
        %686 = vmatpush.bf16.xpose.msra.mxu0 0
        %687 = vmatpush.bf16.xpose.msra.mxu0 0
        %688 = vmatpush.bf16.xpose.msra.mxu0 0
        %689 = vmatpush.bf16.xpose.msra.mxu0 %v680
        %690 = vmatmul.bf16.gmra.mxu0 %v677
        %v691 = vpop.f32.mrf.mxu0
        %v692 = vadd.f32 0.0, %v691
        %v693 = vpop.f32.mrf.mxu0
        %694 = vdwg.mxu0
        %v695 = vmul.f32 %v692, 0.35355338
        %v696 = vsel %vm480, %v695, -inf
        %697 = vmax.xlane.f32.xlu0 %v696
        %v698 = vpop.xlane.xlu0 %697
        %v699 = vsub.f32 %v695, %v698
        %v700 = vmul.f32 %v699, 1.442695
        %v701 = vpow.pop %v700
        %v702 = vsel %vm480, %v701, 0.0
        %703 = vadd.xlane.f32.xlu0 %v702
        %v704 = vpop.xlane.xlu0 %703
        %v705 = vrcp.pop %v704
        %v706 = vmul.f32 %v701, %v705
        %v707 = vpack.c.bf16 %v706, %v706
        %708 = vrot.lane.b32.xlu0 %v515, 72
        %v709 = vpop.permute.xlu0 %708
        %v711 = vsel %vm480, %v707, 0
        %v714 = vsel %vm521, %v709, 0
        %716 = vmatpush.bf16.msra.mxu0 0
        %717 = vmatpush.bf16.msra.mxu0 0
        %718 = vmatpush.bf16.msra.mxu0 0
        %719 = vmatpush.bf16.msra.mxu0 0
        %720 = vmatpush.bf16.msra.mxu0 0
        %721 = vmatpush.bf16.msra.mxu0 0
        %722 = vmatpush.bf16.msra.mxu0 0
        %723 = vmatpush.bf16.msra.mxu0 %v714
        %724 = vmatmul.bf16.gmra.mxu0 %v711
        %v725 = vpop.f32.mrf.mxu0
        %v726 = vadd.f32 0.0, %v725
        %v727 = vpop.f32.mrf.mxu0
        %728 = vdwg.mxu0
        %v729 = vpack.c.bf16 %v726, %v726
        %731 = vrot.lane.b32.xlu0 %v729, 24
        %v732 = vpop.permute.xlu0 %731
        %vm734 = vcmask 257216
        %735 = vst.msk [vmem:[#allocation2] sm:$0xf] %vm734, %v732
        %v736 = vld [vmem:[#allocation2] sm:$0xf]
        %v737 = vld [vmem:[%s6] sm:$0xf]
        %v738 = vld [vmem:[%s6 + $0x4] sm:$0xf]
        %v739 = vld [vmem:[%s6 + $0x8] sm:$0xf]
        %v740 = vld [vmem:[%s6 + $0xc] sm:$0xf]
        %v741 = vld [vmem:[%s7] sm:$0x1]
        %v743 = vperm.slane %v741, 0
        %v749 = vunpack.c.l.b16 %v737
        %v750 = vunpack.c.l.b16 %v738
        %v751 = vunpack.c.l.b16 %v739
        %v752 = vunpack.c.l.b16 %v740
        %v753 = vpack.c.b16 %v750, %v749
        %v754 = vpack.c.b16 %v752, %v751
        %v758 = vsel %vm425, %v736, 0
        %760 = vmatpush.bf16.msra.mxu0 0
        %761 = vmatpush.bf16.msra.mxu0 0
        %762 = vmatpush.bf16.msra.mxu0 0
        %763 = vmatpush.bf16.msra.mxu0 0
        %764 = vmatpush.bf16.msra.mxu0 0
        %765 = vmatpush.bf16.msra.mxu0 0
        %766 = vmatpush.bf16.msra.mxu0 %v754
        %767 = vmatpush.bf16.msra.mxu0 %v753
        %768 = vmatmul.bf16.gmra.mxu0 %v758
        %v769 = vpop.f32.mrf.mxu0
        %v770 = vadd.f32 %v743, %v769
        %v771 = vpop.f32.mrf.mxu0
        %772 = vdwg.mxu0
        %v773 = vunpack.c.l.bf16 %v403
        %v774 = vadd.f32 %v770, %v773
        %v775 = vld [vmem:[#allocation3] sm:$0x1]
        %v776 = vld [vmem:[#allocation5] sm:$0x1]
        %v777 = vsel %vm425, %v774, 0.0
        %778 = vadd.xlane.f32.xlu0 %v777
        %v779 = vpop.xlane.xlu0 %778
        %v780 = vrcp.pop 32.0
        %v781 = vmul.f32 32.0, %v780
        %v782 = vsub.f32 1.0, %v781
        %v783 = vmul.f32 %v780, %v782
        %v784 = vadd.f32 %v780, %v783
        %vm785 = vweird.f32 %v780
        %v786 = vsel %vm785, %v780, %v784
        %v787 = vmul.f32 %v779, %v786
        %v788 = vsub.f32 %v774, %v787
        %v789 = vmul.f32 %v788, %v788
        %v790 = vsel %vm425, %v789, 0.0
        %791 = vadd.xlane.f32.xlu0 %v790
        %v792 = vpop.xlane.xlu0 %791
        %v793 = vmul.f32 %v792, %v786
        %v794 = vadd.f32 %v793, 1e-05
        %v795 = vrsqrt.pop %v794
        %v796 = vmul.f32 %v795, %v794
        %v797 = vmul.f32 %v796, %v795
        %v798 = vmul.f32 0.5, %v797
        %v799 = vsub.f32 1.5, %v798
        %v800 = vmul.f32 %v795, %v799
        %vm801 = vweird.f32 %v794
        %vm802 = vweird.f32 %v795
        %vm803 = vmor %vm801, %vm802
        %v804 = vsel %vm803, %v795, %v800
        %v805 = vmul.f32 %v788, %v804
        %v807 = vperm.slane %v775, 0
        %v809 = vmul.f32 %v805, %v807
        %v811 = vperm.slane %v776, 0
        %v813 = vadd.f32 %v809, %v811
        %v814 = vpack.c.bf16 %v813, %v813
        %vm815 = vcmask 257024
        %816 = vst.msk [vmem:[%s401] sm:$0xf] %vm815, %v814
        %p817 = scmp.lt.s32.totalorder %s23, 1
        %s818 = scalar_select %p817, %s23, 1
        %s819 = smul.addr %s818, 4
        %s820 = scalar_lea.vmem %s10, %s819
        // Predicated region
        $region69: #{ocr_transformer_forward.18} parent=59 // pred_check
          %p821 = pneg %p261
        $region70: #{ocr_transformer_forward.18} parent=59 // pred_check_branch
          %823 = sbr.rel (%p821) target = $region72
        $region71: #{ocr_transformer_forward.18} parent=59 // pred_region
          _
        $region72: #{ocr_transformer_forward.18} parent=59 // pred_fallthru
          _
      $region60: #{ocr_transformer_forward.18} parent=5 // pred_fallthru
        _
      %p824 = scmp.le.s32.totalorder 2, %s18
      // Predicated region
      $region73: #{ocr_transformer_forward.18} parent=5 // pred_check
        %p825 = pneg %p824
      $region74: #{ocr_transformer_forward.18} parent=5 // pred_check_branch
        %827 = sbr.rel (%p825) target = $region76
      $region75: #{ocr_transformer_forward.18} parent=5 // pred_region
        %s828 = ssub.s32 %s18, 2
        // Predicated region
        $region77: #{ocr_transformer_forward.18} parent=75 // pred_check
          %p829 = pneg %p267
        $region78: #{ocr_transformer_forward.18} parent=75 // pred_check_branch
          %831 = sbr.rel (%p829) target = $region80
        $region79: #{ocr_transformer_forward.18} parent=75 // pred_region
          %p832 = scmp.lt.s32.totalorder %s24, 1
          %s833 = scalar_select %p832, %s24, 1
          %s834 = smul.addr %s833, 4
          %s835 = scalar_lea.vmem %s10, %s834
        $region80: #{ocr_transformer_forward.18} parent=75 // pred_fallthru
          _
      $region76: #{ocr_transformer_forward.18} parent=5 // pred_fallthru
        _
    $region6: #{ocr_transformer_forward.18} parent=1 // loop_footer
      %s22 = sadd.s32 1, %s18
    $region7: #{ocr_transformer_forward.18} parent=1 // loop_footer_branch
      %17 = sbr.rel target = $region3
    $region8: #{ocr_transformer_forward.18} parent=1 // loop_exit
      _
    %836 = vsyncpa [#allocation4], 1
    %s837 = scalar_lea.sflag [#allocation4], 1
    %838 = vsyncpa %s837, 1
    %839 = vsyncpa [#allocation6], 1

// kernel: ocr_transformer_forward.20
$region0: #{ocr_transformer_forward.20}
  #allocation0 [shape = 'u32[]', space=smem, size = 0x4, offset = 0x4, fixed_abs, tag = 'smem constant byte address 0x4 - core index']
  #allocation1 [shape = 'u32[72,128]{1,0:T(1,128)}', space=vmem, size = 0x9000, scoped, tag = 'internal scratch']
  #allocation2 [shape = 'bf16[8,32]{1,0:T(8,128)(2,1)}', space=vmem, size = 0x800, scoped, tag = 'scratch operand']
  %s0 = inlined_call_operand.vmem [shape: bf16[2,8,32], index: 0, kind: input, shape index: {}]
  %s1 = inlined_call_operand.vmem [shape: bf16[32,96], index: 1, kind: input, shape index: {}]
  %s2 = inlined_call_operand.vmem [shape: f32[1,96], index: 2, kind: input, shape index: {}]
  %s3 = inlined_call_operand.vmem [shape: bf16[32,32], index: 3, kind: input, shape index: {}]
  %s4 = inlined_call_operand.hbm [shape: f32[1,32], index: 4, kind: input, shape index: {}]
  %s5 = inlined_call_operand.hbm [shape: f32[1,32], index: 5, kind: input, shape index: {}]
  %s6 = inlined_call_operand.hbm [shape: f32[1,32], index: 6, kind: input, shape index: {}]
  %s7 = inlined_call_operand.vmem [shape: bf16[2,8,32], index: 7, kind: output, shape index: {}]
  %s8 = sld [smem:[#allocation0]]
  $region73: #{ocr_transformer_forward.20} parent=0
    _
  %s10 = ssub.s32 1, %s8
  %s11 = scalar_select 0, %s10, %s8
  $region1: #{ocr_transformer_forward.20} parent=0
    #allocation3 [shape = 'u8[512]{0}', space=vmem, size = 0x400, scoped, tag = 'input window, operand 4, single buffered']
    #allocation4 [shape = 's32[2]{0}', space=sflag, size = 0x8, scoped, tag = 'scoped memory for ocr_transformer_forward.20']
    #allocation5 [shape = 'u8[512]{0}', space=vmem, size = 0x400, scoped, tag = 'input window, operand 5, single buffered']
    #allocation6 [shape = 's32[1]{0}', space=sflag, size = 0x4, scoped, tag = 'scoped memory for ocr_transformer_forward.20']
    #allocation7 [shape = 'u8[512]{0}', space=vmem, size = 0x400, scoped, tag = 'input window, operand 6, single buffered']
    %12 = vsyncpa [#allocation4], 0
    %13 = vsyncpa [#allocation6], 0
    loop: start=0, step=1, limit=4
    $region2: #{ocr_transformer_forward.20} parent=1 // loop_pre_header
      _
    $region3: #{ocr_transformer_forward.20} parent=1 // loop_header
      %s15 = sphi 0, %s19
      %p16 = scmp.ge.s32.totalorder %s15, 4
      %s25 = sphi 0, %s27
      %s28 = sphi 0, %s25
      %s29 = sphi 0, %s28
      %s45 = sphi 0, %s29
      %s49 = sphi 0, %s49
      %s51 = sphi 0, %s49
      %s52 = sphi 0, %s51
      %s66 = sphi 0, %s52
      %s70 = sphi 0, %s70
      %s72 = sphi 0, %s70
      %s73 = sphi 0, %s72
      %s87 = sphi 0, %s73
      %s91 = sphi 0, %s91
      %s93 = sphi 0, %s91
      %s94 = sphi 0, %s93
      %s108 = sphi 0, %s94
      %s112 = sphi 0, %s112
      %s114 = sphi 0, %s112
      %s115 = sphi 0, %s114
      %s129 = sphi 0, %s115
      %s133 = sphi 0, %s133
      %s135 = sphi 0, %s133
      %s136 = sphi 0, %s135
      %s150 = sphi 0, %s136
      %s154 = sphi 0, %s154
      %s156 = sphi 0, %s154
      %s157 = sphi 0, %s156
      %s171 = sphi 0, %s157
      %s177 = sphi 0, %s179
      %s180 = sphi 0, %s177
      %s181 = sphi 0, %s180
      %s197 = sphi 0, %s181
    $region4: #{ocr_transformer_forward.20} parent=1 // loop_header_branch
      %18 = sbr.rel (%p16) target = $region8
    $region5: #{ocr_transformer_forward.20} parent=1 // loop_body
      %s20 = ssub.s32 %s15, 1
      %s21 = ssub.s32 %s15, 2
      %s22 = sadd.s32 %s15, 1
      %s23 = ssub.s32 %s15, %s22
      %p24 = scmp.eq.s32.totalorder %s23, 0
      %s26 = sadd.s32 %s25, 1
      %s27 = scalar_select %p24, %s25, %s26
      %p30 = pneg %p24
      %p31 = scmp.eq.s32.totalorder %s15, 1
      %p32 = por %p30, %p31
      %p33 = scmp.ne.s32.totalorder %s25, %s28
      %p34 = scmp.eq.s32.totalorder %s15, 0
      %p35 = por %p33, %p34
      %p36 = scmp.ne.s32.totalorder %s25, %s28
      %p37 = scmp.eq.s32.totalorder %s20, 1
      %p38 = por %p36, %p37
      %p39 = scmp.ne.s32.totalorder %s28, %s29
      %p40 = scmp.eq.s32.totalorder %s20, 0
      %p41 = por %p39, %p40
      %p42 = scmp.ne.s32.totalorder %s28, %s29
      %p43 = scmp.eq.s32.totalorder %s21, 1
      %p44 = por %p42, %p43
      %p46 = scmp.ne.s32.totalorder %s29, %s45
      %p47 = scmp.eq.s32.totalorder %s21, 0
      %p48 = por %p46, %p47
      %s50 = sadd.s32 %s49, 1
      %p53 = scmp.eq.s32.totalorder %s15, 1
      %p54 = scmp.ne.s32.totalorder %s49, %s51
      %p55 = scmp.eq.s32.totalorder %s15, 0
      %p56 = por %p54, %p55
      %p57 = scmp.ne.s32.totalorder %s49, %s51
      %p58 = scmp.eq.s32.totalorder %s20, 1
      %p59 = por %p57, %p58
      %p60 = scmp.ne.s32.totalorder %s51, %s52
      %p61 = scmp.eq.s32.totalorder %s20, 0
      %p62 = por %p60, %p61
      %p63 = scmp.ne.s32.totalorder %s51, %s52
      %p64 = scmp.eq.s32.totalorder %s21, 1
      %p65 = por %p63, %p64
      %p67 = scmp.ne.s32.totalorder %s52, %s66
      %p68 = scmp.eq.s32.totalorder %s21, 0
      %p69 = por %p67, %p68
      %s71 = sadd.s32 %s70, 1
      %p74 = scmp.eq.s32.totalorder %s15, 1
      %p75 = scmp.ne.s32.totalorder %s70, %s72
      %p76 = scmp.eq.s32.totalorder %s15, 0
      %p77 = por %p75, %p76
      %p78 = scmp.ne.s32.totalorder %s70, %s72
      %p79 = scmp.eq.s32.totalorder %s20, 1
      %p80 = por %p78, %p79
      %p81 = scmp.ne.s32.totalorder %s72, %s73
      %p82 = scmp.eq.s32.totalorder %s20, 0
      %p83 = por %p81, %p82
      %p84 = scmp.ne.s32.totalorder %s72, %s73
      %p85 = scmp.eq.s32.totalorder %s21, 1
      %p86 = por %p84, %p85
      %p88 = scmp.ne.s32.totalorder %s73, %s87
      %p89 = scmp.eq.s32.totalorder %s21, 0
      %p90 = por %p88, %p89
      %s92 = sadd.s32 %s91, 1
      %p95 = scmp.eq.s32.totalorder %s15, 1
      %p96 = scmp.ne.s32.totalorder %s91, %s93
      %p97 = scmp.eq.s32.totalorder %s15, 0
      %p98 = por %p96, %p97
      %p99 = scmp.ne.s32.totalorder %s91, %s93
      %p100 = scmp.eq.s32.totalorder %s20, 1
      %p101 = por %p99, %p100
      %p102 = scmp.ne.s32.totalorder %s93, %s94
      %p103 = scmp.eq.s32.totalorder %s20, 0
      %p104 = por %p102, %p103
      %p105 = scmp.ne.s32.totalorder %s93, %s94
      %p106 = scmp.eq.s32.totalorder %s21, 1
      %p107 = por %p105, %p106
      %p109 = scmp.ne.s32.totalorder %s94, %s108
      %p110 = scmp.eq.s32.totalorder %s21, 0
      %p111 = por %p109, %p110
      %s113 = sadd.s32 %s112, 1
      %p116 = scmp.eq.s32.totalorder %s15, 1
      %p117 = scmp.ne.s32.totalorder %s112, %s114
      %p118 = scmp.eq.s32.totalorder %s15, 0
      %p119 = por %p117, %p118
      %p120 = scmp.ne.s32.totalorder %s112, %s114
      %p121 = scmp.eq.s32.totalorder %s20, 1
      %p122 = por %p120, %p121
      %p123 = scmp.ne.s32.totalorder %s114, %s115
      %p124 = scmp.eq.s32.totalorder %s20, 0
      %p125 = por %p123, %p124
      %p126 = scmp.ne.s32.totalorder %s114, %s115
      %p127 = scmp.eq.s32.totalorder %s21, 1
      %p128 = por %p126, %p127
      %p130 = scmp.ne.s32.totalorder %s115, %s129
      %p131 = scmp.eq.s32.totalorder %s21, 0
      %p132 = por %p130, %p131
      %s134 = sadd.s32 %s133, 1
      %p137 = scmp.eq.s32.totalorder %s15, 1
      %p138 = scmp.ne.s32.totalorder %s133, %s135
      %p139 = scmp.eq.s32.totalorder %s15, 0
      %p140 = por %p138, %p139
      %p141 = scmp.ne.s32.totalorder %s133, %s135
      %p142 = scmp.eq.s32.totalorder %s20, 1
      %p143 = por %p141, %p142
      %p144 = scmp.ne.s32.totalorder %s135, %s136
      %p145 = scmp.eq.s32.totalorder %s20, 0
      %p146 = por %p144, %p145
      %p147 = scmp.ne.s32.totalorder %s135, %s136
      %p148 = scmp.eq.s32.totalorder %s21, 1
      %p149 = por %p147, %p148
      %p151 = scmp.ne.s32.totalorder %s136, %s150
      %p152 = scmp.eq.s32.totalorder %s21, 0
      %p153 = por %p151, %p152
      %s155 = sadd.s32 %s154, 1
      %p158 = scmp.eq.s32.totalorder %s15, 1
      %p159 = scmp.ne.s32.totalorder %s154, %s156
      %p160 = scmp.eq.s32.totalorder %s15, 0
      %p161 = por %p159, %p160
      %p162 = scmp.ne.s32.totalorder %s154, %s156
      %p163 = scmp.eq.s32.totalorder %s20, 1
      %p164 = por %p162, %p163
      %p165 = scmp.ne.s32.totalorder %s156, %s157
      %p166 = scmp.eq.s32.totalorder %s20, 0
      %p167 = por %p165, %p166
      %p168 = scmp.ne.s32.totalorder %s156, %s157
      %p169 = scmp.eq.s32.totalorder %s21, 1
      %p170 = por %p168, %p169
      %p172 = scmp.ne.s32.totalorder %s157, %s171
      %p173 = scmp.eq.s32.totalorder %s21, 0
      %p174 = por %p172, %p173
      %s175 = ssub.s32 %s15, %s22
      %p176 = scmp.eq.s32.totalorder %s175, 0
      %s178 = sadd.s32 %s177, 1
      %s179 = scalar_select %p176, %s177, %s178
      %p182 = pneg %p176
      %p183 = scmp.eq.s32.totalorder %s15, 1
      %p184 = por %p182, %p183
      %p185 = scmp.ne.s32.totalorder %s177, %s180
      %p186 = scmp.eq.s32.totalorder %s15, 0
      %p187 = por %p185, %p186
      %p188 = scmp.ne.s32.totalorder %s177, %s180
      %p189 = scmp.eq.s32.totalorder %s20, 1
      %p190 = por %p188, %p189
      %p191 = scmp.ne.s32.totalorder %s180, %s181
      %p192 = scmp.eq.s32.totalorder %s20, 0
      %p193 = por %p191, %p192
      %p194 = scmp.ne.s32.totalorder %s180, %s181
      %p195 = scmp.eq.s32.totalorder %s21, 1
      %p196 = por %p194, %p195
      %p198 = scmp.ne.s32.totalorder %s181, %s197
      %p199 = scmp.eq.s32.totalorder %s21, 0
      %p200 = por %p198, %p199
      %p201 = scmp.le.s32.totalorder 1, %s15
      %p202 = scmp.lt.s32.totalorder %s15, 3
      %p203 = pnand %p201, %p202
      %p204 = pneg %p203
      // Predicated region
      $region9: #{ocr_transformer_forward.20} parent=5 // pred_check
        _
      $region10: #{ocr_transformer_forward.20} parent=5 // pred_check_branch
        %206 = sbr.rel (%p203) target = $region12
      $region11: #{ocr_transformer_forward.20} parent=5 // pred_region
        %s207 = ssub.s32 %s15, 1
        // Predicated region
        $region13: #{ocr_transformer_forward.20} parent=11 // pred_check
          %p208 = pneg %p62
        $region14: #{ocr_transformer_forward.20} parent=11 // pred_check_branch
          %210 = sbr.rel (%p208) target = $region16
        $region15: #{ocr_transformer_forward.20} parent=11 // pred_region
          _
        $region16: #{ocr_transformer_forward.20} parent=11 // pred_fallthru
          _
        // Predicated region
        $region17: #{ocr_transformer_forward.20} parent=11 // pred_check
          %p211 = pneg %p83
        $region18: #{ocr_transformer_forward.20} parent=11 // pred_check_branch
          %213 = sbr.rel (%p211) target = $region20
        $region19: #{ocr_transformer_forward.20} parent=11 // pred_region
          _
        $region20: #{ocr_transformer_forward.20} parent=11 // pred_fallthru
          _
        // Predicated region
        $region21: #{ocr_transformer_forward.20} parent=11 // pred_check
          %p214 = pneg %p104
        $region22: #{ocr_transformer_forward.20} parent=11 // pred_check_branch
          %216 = sbr.rel (%p214) target = $region24
        $region23: #{ocr_transformer_forward.20} parent=11 // pred_region
          _
        $region24: #{ocr_transformer_forward.20} parent=11 // pred_fallthru
          _
        // Predicated region
        $region25: #{ocr_transformer_forward.20} parent=11 // pred_check
          %p217 = pneg %p125
        $region26: #{ocr_transformer_forward.20} parent=11 // pred_check_branch
          %219 = sbr.rel (%p217) target = $region28
        $region27: #{ocr_transformer_forward.20} parent=11 // pred_region
          %221 = vsyncadd [#allocation4], 0
          %s223 = sshll.u32 %s4, 4
          %s224 = int_to_ptr.hbm [resolvable:$true] %s223
          %s225 = sshll.u32 [#allocation3], 4
          %s226 = int_to_ptr.vmem [resolvable:$true] %s225
          %228 = dma.hbm_to_vmem [thread:$0]  %s224, 16, %s226, [#allocation4]
        $region28: #{ocr_transformer_forward.20} parent=11 // pred_fallthru
          _
        // Predicated region
        $region29: #{ocr_transformer_forward.20} parent=11 // pred_check
          %p229 = pneg %p146
        $region30: #{ocr_transformer_forward.20} parent=11 // pred_check_branch
          %231 = sbr.rel (%p229) target = $region32
        $region31: #{ocr_transformer_forward.20} parent=11 // pred_region
          %233 = vsyncadd [#allocation6], 0
          %s235 = sshll.u32 %s5, 4
          %s236 = int_to_ptr.hbm [resolvable:$true] %s235
          %s237 = sshll.u32 [#allocation5], 4
          %s238 = int_to_ptr.vmem [resolvable:$true] %s237
          %240 = dma.hbm_to_vmem [thread:$0]  %s236, 16, %s238, [#allocation6]
        $region32: #{ocr_transformer_forward.20} parent=11 // pred_fallthru
          _
        // Predicated region
        $region33: #{ocr_transformer_forward.20} parent=11 // pred_check
          %p241 = pneg %p167
        $region34: #{ocr_transformer_forward.20} parent=11 // pred_check_branch
          %243 = sbr.rel (%p241) target = $region36
        $region35: #{ocr_transformer_forward.20} parent=11 // pred_region
          %245 = vsyncadd [#allocation6], 0
          %s247 = sshll.u32 %s6, 4
          %s248 = int_to_ptr.hbm [resolvable:$true] %s247
          %s249 = sshll.u32 [#allocation7], 4
          %s250 = int_to_ptr.vmem [resolvable:$true] %s249
          %252 = dma.hbm_to_vmem [thread:$0]  %s248, 16, %s250, [#allocation6]
        $region36: #{ocr_transformer_forward.20} parent=11 // pred_fallthru
          _
      $region12: #{ocr_transformer_forward.20} parent=5 // pred_fallthru
        _
      %p253 = scmp.lt.s32.totalorder %s15, 2
      // Predicated region
      $region37: #{ocr_transformer_forward.20} parent=5 // pred_check
        %p254 = pneg %p253
      $region38: #{ocr_transformer_forward.20} parent=5 // pred_check_branch
        %256 = sbr.rel (%p254) target = $region40
      $region39: #{ocr_transformer_forward.20} parent=5 // pred_region
        // Predicated region
        $region41: #{ocr_transformer_forward.20} parent=39 // pred_check
          %p257 = pneg %p35
        $region42: #{ocr_transformer_forward.20} parent=39 // pred_check_branch
          %259 = sbr.rel (%p257) target = $region44
        $region43: #{ocr_transformer_forward.20} parent=39 // pred_region
          %p260 = scmp.lt.s32.totalorder %s15, 1
          %s261 = scalar_select %p260, %s15, 1
          %s262 = smul.addr %s261, 4
          %s263 = scalar_lea.vmem %s0, %s262
        $region44: #{ocr_transformer_forward.20} parent=39 // pred_fallthru
          _
      $region40: #{ocr_transformer_forward.20} parent=5 // pred_fallthru
        _
      %p264 = scmp.le.s32.totalorder 1, %s15
      %p265 = scmp.lt.s32.totalorder %s15, 3
      %p266 = pnand %p264, %p265
      %p267 = pneg %p266
      // Predicated region
      $region45: #{ocr_transformer_forward.20} parent=5 // pred_check
        _
      $region46: #{ocr_transformer_forward.20} parent=5 // pred_check_branch
        %269 = sbr.rel (%p266) target = $region48
      $region47: #{ocr_transformer_forward.20} parent=5 // pred_region
        %s270 = ssub.s32 %s15, 1
        // Predicated region
        $region49: #{ocr_transformer_forward.20} parent=47 // pred_check
          %p271 = pneg %p125
        $region50: #{ocr_transformer_forward.20} parent=47 // pred_check_branch
          %273 = sbr.rel (%p271) target = $region52
        $region51: #{ocr_transformer_forward.20} parent=47 // pred_region
          %275 = dma.done [#allocation4], 16
        $region52: #{ocr_transformer_forward.20} parent=47 // pred_fallthru
          _
        // Predicated region
        $region53: #{ocr_transformer_forward.20} parent=47 // pred_check
          %p276 = pneg %p146
        $region54: #{ocr_transformer_forward.20} parent=47 // pred_check_branch
          %278 = sbr.rel (%p276) target = $region56
        $region55: #{ocr_transformer_forward.20} parent=47 // pred_region
          %280 = dma.done [#allocation6], 16
        $region56: #{ocr_transformer_forward.20} parent=47 // pred_fallthru
          _
        // Predicated region
        $region57: #{ocr_transformer_forward.20} parent=47 // pred_check
          %p281 = pneg %p167
        $region58: #{ocr_transformer_forward.20} parent=47 // pred_check_branch
          %283 = sbr.rel (%p281) target = $region60
        $region59: #{ocr_transformer_forward.20} parent=47 // pred_region
          %285 = dma.done [#allocation6], 16
        $region60: #{ocr_transformer_forward.20} parent=47 // pred_fallthru
          _
        %p286 = scmp.lt.s32.totalorder %s20, 1
        %s287 = scalar_select %p286, %s20, 1
        %s288 = smul.addr %s287, 4
        %s289 = scalar_lea.vmem %s0, %s288
        %p290 = pneg %p41
        %p291 = pneg %p38
        %p292 = pneg %p62
        %p293 = pneg %p59
        %p294 = pneg %p83
        %p295 = pneg %p80
        %p296 = pneg %p104
        %p297 = pneg %p101
        %p298 = pneg %p125
        %p299 = pneg %p122
        %p300 = pneg %p146
        %p301 = pneg %p143
        %p302 = pneg %p167
        %p303 = pneg %p164
        %p304 = pneg %p193
        %p305 = pneg %p190
        %p306 = scmp.lt.s32.totalorder %s20, 1
        %s307 = scalar_select %p306, %s20, 1
        %s308 = smul.addr %s307, 4
        %s309 = scalar_lea.vmem %s7, %s308
        %p310 = scmp.lt.s32.totalorder %s20, 1
        %s311 = scalar_select %p310, %s20, 1
        %s312 = smul.addr %s311, 4
        %s313 = scalar_lea.vmem %s0, %s312
        %p314 = scmp.lt.s32.totalorder %s20, 1
        %s315 = scalar_select %p314, %s20, 1
        %s316 = smul.addr %s315, 4
        %s317 = scalar_lea.vmem %s7, %s316
        %v319 = vld [vmem:[%s313] sm:$0xf]
        %v320 = vld [vmem:[%s1] sm:$0xf]
        %v321 = vld [vmem:[%s1 + $0x4] sm:$0xf]
        %v322 = vld [vmem:[%s1 + $0x8] sm:$0xf]
        %v323 = vld [vmem:[%s1 + $0xc] sm:$0xf]
        %v324 = vld [vmem:[%s2] sm:$0x1]
        %v326 = vperm.slane %v324, 0
        %v332 = vunpack.c.l.b16 %v320
        %v333 = vunpack.c.l.b16 %v321
        %v334 = vunpack.c.l.b16 %v322
        %v335 = vunpack.c.l.b16 %v323
        %v336 = vpack.c.b16 %v333, %v332
        %v337 = vpack.c.b16 %v335, %v334
        %vm340 = vcmask 261120
        %v342 = vsel %vm340, %v319, 0
        %344 = vmatpush.bf16.msra.mxu0 0
        %345 = vmatpush.bf16.msra.mxu0 0
        %346 = vmatpush.bf16.msra.mxu0 0
        %347 = vmatpush.bf16.msra.mxu0 0
        %348 = vmatpush.bf16.msra.mxu0 0
        %349 = vmatpush.bf16.msra.mxu0 0
        %350 = vmatpush.bf16.msra.mxu0 %v337
        %351 = vmatpush.bf16.msra.mxu0 %v336
        %352 = vmatmul.bf16.gmra.mxu0 %v342
        %v353 = vpop.f32.mrf.mxu0
        %v354 = vadd.f32 %v326, %v353
        %v355 = vpop.f32.mrf.mxu0
        %356 = vdwg.mxu0
        %v357 = vpack.c.bf16 %v354, %v354
        %v358 = vlaneseq
        %v359 = vshrl.u32 %v358, 7
        %v360 = vlaneseq
        %v361 = vand.u32 %v360, 127
        %vm362 = vcmp.le.s32.totalorder %v361, %v359
        %v364 = vunpack.c.l.b16 %v357
        %v365 = vpack.c.b16 %v364, %v364
        %366 = vrot.lane.b32.xlu0 %v365, 96
        %v367 = vpop.permute.xlu0 %366
        %vm368 = vcmask 64512
        %v370 = vsel %vm368, %v357, 0
        %v373 = vsel %vm368, %v367, 0
        %375 = vmatpush.bf16.xpose.msra.mxu0 0
        %376 = vmatpush.bf16.xpose.msra.mxu0 0
        %377 = vmatpush.bf16.xpose.msra.mxu0 0
        %378 = vmatpush.bf16.xpose.msra.mxu0 0
        %379 = vmatpush.bf16.xpose.msra.mxu0 0
        %380 = vmatpush.bf16.xpose.msra.mxu0 0
        %381 = vmatpush.bf16.xpose.msra.mxu0 0
        %382 = vmatpush.bf16.xpose.msra.mxu0 %v373
        %383 = vmatmul.bf16.gmra.mxu0 %v370
        %v384 = vpop.f32.mrf.mxu0
        %v385 = vadd.f32 0.0, %v384
        %v386 = vpop.f32.mrf.mxu0
        %387 = vdwg.mxu0
        %v388 = vmul.f32 %v385, 0.35355338
        %v389 = vsel %vm362, %v388, -1e+30
        %v390 = vsel %vm368, %v389, -inf
        %391 = vmax.xlane.f32.xlu0 %v390
        %v392 = vpop.xlane.xlu0 %391
        %v393 = vsub.f32 %v389, %v392
        %v394 = vmul.f32 %v393, 1.442695
        %v395 = vpow.pop %v394
        %v396 = vsel %vm368, %v395, 0.0
        %397 = vadd.xlane.f32.xlu0 %v396
        %v398 = vpop.xlane.xlu0 %397
        %v399 = vrcp.pop %v398
        %v400 = vmul.f32 %v395, %v399
        %v401 = vpack.c.bf16 %v400, %v400
        %402 = vrot.lane.b32.xlu0 %v365, 64
        %v403 = vpop.permute.xlu0 %402
        %v405 = vsel %vm368, %v401, 0
        %vm407 = vcmask 1043456
        %v409 = vsel %vm407, %v403, 0
        %411 = vmatpush.bf16.msra.mxu0 0
        %412 = vmatpush.bf16.msra.mxu0 0
        %413 = vmatpush.bf16.msra.mxu0 0
        %414 = vmatpush.bf16.msra.mxu0 0
        %415 = vmatpush.bf16.msra.mxu0 0
        %416 = vmatpush.bf16.msra.mxu0 0
        %417 = vmatpush.bf16.msra.mxu0 0
        %418 = vmatpush.bf16.msra.mxu0 %v409
        %419 = vmatmul.bf16.gmra.mxu0 %v405
        %v420 = vpop.f32.mrf.mxu0
        %v421 = vadd.f32 0.0, %v420
        %v422 = vpop.f32.mrf.mxu0
        %423 = vdwg.mxu0
        %v424 = vpack.c.bf16 %v421, %v421
        %vm425 = vcmask 60416
        %426 = vst.msk [vmem:[#allocation2] sm:$0xf] %vm425, %v424
        %427 = vrot.lane.b32.xlu0 %v365, 120
        %v428 = vpop.permute.xlu0 %427
        %429 = vrot.lane.b32.xlu0 %v365, 88
        %v430 = vpop.permute.xlu0 %429
        %v432 = vsel %vm368, %v428, 0
        %v435 = vsel %vm368, %v430, 0
        %437 = vmatpush.bf16.xpose.msra.mxu0 0
        %438 = vmatpush.bf16.xpose.msra.mxu0 0
        %439 = vmatpush.bf16.xpose.msra.mxu0 0
        %440 = vmatpush.bf16.xpose.msra.mxu0 0
        %441 = vmatpush.bf16.xpose.msra.mxu0 0
        %442 = vmatpush.bf16.xpose.msra.mxu0 0
        %443 = vmatpush.bf16.xpose.msra.mxu0 0
        %444 = vmatpush.bf16.xpose.msra.mxu0 %v435
        %445 = vmatmul.bf16.gmra.mxu0 %v432
        %v446 = vpop.f32.mrf.mxu0
        %v447 = vadd.f32 0.0, %v446
        %v448 = vpop.f32.mrf.mxu0
        %449 = vdwg.mxu0
        %v450 = vmul.f32 %v447, 0.35355338
        %v451 = vsel %vm362, %v450, -1e+30
        %v452 = vsel %vm368, %v451, -inf
        %453 = vmax.xlane.f32.xlu0 %v452
        %v454 = vpop.xlane.xlu0 %453
        %v455 = vsub.f32 %v451, %v454
        %v456 = vmul.f32 %v455, 1.442695
        %v457 = vpow.pop %v456
        %v458 = vsel %vm368, %v457, 0.0
        %459 = vadd.xlane.f32.xlu0 %v458
        %v460 = vpop.xlane.xlu0 %459
        %v461 = vrcp.pop %v460
        %v462 = vmul.f32 %v457, %v461
        %v463 = vpack.c.bf16 %v462, %v462
        %464 = vrot.lane.b32.xlu0 %v365, 56
        %v465 = vpop.permute.xlu0 %464
        %v467 = vsel %vm368, %v463, 0
        %v470 = vsel %vm407, %v465, 0
        %472 = vmatpush.bf16.msra.mxu0 0
        %473 = vmatpush.bf16.msra.mxu0 0
        %474 = vmatpush.bf16.msra.mxu0 0
        %475 = vmatpush.bf16.msra.mxu0 0
        %476 = vmatpush.bf16.msra.mxu0 0
        %477 = vmatpush.bf16.msra.mxu0 0
        %478 = vmatpush.bf16.msra.mxu0 0
        %479 = vmatpush.bf16.msra.mxu0 %v470
        %480 = vmatmul.bf16.gmra.mxu0 %v467
        %v481 = vpop.f32.mrf.mxu0
        %v482 = vadd.f32 0.0, %v481
        %v483 = vpop.f32.mrf.mxu0
        %484 = vdwg.mxu0
        %v485 = vpack.c.bf16 %v482, %v482
        %487 = vrot.lane.b32.xlu0 %v485, 8
        %v488 = vpop.permute.xlu0 %487
        %vm490 = vcmask 126016
        %491 = vst.msk [vmem:[#allocation2] sm:$0xf] %vm490, %v488
        %492 = vrot.lane.b32.xlu0 %v365, 112
        %v493 = vpop.permute.xlu0 %492
        %494 = vrot.lane.b32.xlu0 %v365, 80
        %v495 = vpop.permute.xlu0 %494
        %v497 = vsel %vm368, %v493, 0
        %v500 = vsel %vm368, %v495, 0
        %502 = vmatpush.bf16.xpose.msra.mxu0 0
        %503 = vmatpush.bf16.xpose.msra.mxu0 0
        %504 = vmatpush.bf16.xpose.msra.mxu0 0
        %505 = vmatpush.bf16.xpose.msra.mxu0 0
        %506 = vmatpush.bf16.xpose.msra.mxu0 0
        %507 = vmatpush.bf16.xpose.msra.mxu0 0
        %508 = vmatpush.bf16.xpose.msra.mxu0 0
        %509 = vmatpush.bf16.xpose.msra.mxu0 %v500
        %510 = vmatmul.bf16.gmra.mxu0 %v497
        %v511 = vpop.f32.mrf.mxu0
        %v512 = vadd.f32 0.0, %v511
        %v513 = vpop.f32.mrf.mxu0
        %514 = vdwg.mxu0
        %v515 = vmul.f32 %v512, 0.35355338
        %v516 = vsel %vm362, %v515, -1e+30
        %v517 = vsel %vm368, %v516, -inf
        %518 = vmax.xlane.f32.xlu0 %v517
        %v519 = vpop.xlane.xlu0 %518
        %v520 = vsub.f32 %v516, %v519
        %v521 = vmul.f32 %v520, 1.442695
        %v522 = vpow.pop %v521
        %v523 = vsel %vm368, %v522, 0.0
        %524 = vadd.xlane.f32.xlu0 %v523
        %v525 = vpop.xlane.xlu0 %524
        %v526 = vrcp.pop %v525
        %v527 = vmul.f32 %v522, %v526
        %v528 = vpack.c.bf16 %v527, %v527
        %529 = vrot.lane.b32.xlu0 %v365, 48
        %v530 = vpop.permute.xlu0 %529
        %v532 = vsel %vm368, %v528, 0
        %v535 = vsel %vm407, %v530, 0
        %537 = vmatpush.bf16.msra.mxu0 0
        %538 = vmatpush.bf16.msra.mxu0 0
        %539 = vmatpush.bf16.msra.mxu0 0
        %540 = vmatpush.bf16.msra.mxu0 0
        %541 = vmatpush.bf16.msra.mxu0 0
        %542 = vmatpush.bf16.msra.mxu0 0
        %543 = vmatpush.bf16.msra.mxu0 0
        %544 = vmatpush.bf16.msra.mxu0 %v535
        %545 = vmatmul.bf16.gmra.mxu0 %v532
        %v546 = vpop.f32.mrf.mxu0
        %v547 = vadd.f32 0.0, %v546
        %v548 = vpop.f32.mrf.mxu0
        %549 = vdwg.mxu0
        %v550 = vpack.c.bf16 %v547, %v547
        %552 = vrot.lane.b32.xlu0 %v550, 16
        %v553 = vpop.permute.xlu0 %552
        %vm555 = vcmask 191616
        %556 = vst.msk [vmem:[#allocation2] sm:$0xf] %vm555, %v553
        %557 = vrot.lane.b32.xlu0 %v365, 104
        %v558 = vpop.permute.xlu0 %557
        %559 = vrot.lane.b32.xlu0 %v365, 72
        %v560 = vpop.permute.xlu0 %559
        %v562 = vsel %vm368, %v558, 0
        %v565 = vsel %vm368, %v560, 0
        %567 = vmatpush.bf16.xpose.msra.mxu0 0
        %568 = vmatpush.bf16.xpose.msra.mxu0 0
        %569 = vmatpush.bf16.xpose.msra.mxu0 0
        %570 = vmatpush.bf16.xpose.msra.mxu0 0
        %571 = vmatpush.bf16.xpose.msra.mxu0 0
        %572 = vmatpush.bf16.xpose.msra.mxu0 0
        %573 = vmatpush.bf16.xpose.msra.mxu0 0
        %574 = vmatpush.bf16.xpose.msra.mxu0 %v565
        %575 = vmatmul.bf16.gmra.mxu0 %v562
        %v576 = vpop.f32.mrf.mxu0
        %v577 = vadd.f32 0.0, %v576
        %v578 = vpop.f32.mrf.mxu0
        %579 = vdwg.mxu0
        %v580 = vmul.f32 %v577, 0.35355338
        %v581 = vsel %vm362, %v580, -1e+30
        %v582 = vsel %vm368, %v581, -inf
        %583 = vmax.xlane.f32.xlu0 %v582
        %v584 = vpop.xlane.xlu0 %583
        %v585 = vsub.f32 %v581, %v584
        %v586 = vmul.f32 %v585, 1.442695
        %v587 = vpow.pop %v586
        %v588 = vsel %vm368, %v587, 0.0
        %589 = vadd.xlane.f32.xlu0 %v588
        %v590 = vpop.xlane.xlu0 %589
        %v591 = vrcp.pop %v590
        %v592 = vmul.f32 %v587, %v591
        %v593 = vpack.c.bf16 %v592, %v592
        %594 = vrot.lane.b32.xlu0 %v365, 40
        %v595 = vpop.permute.xlu0 %594
        %v597 = vsel %vm368, %v593, 0
        %v600 = vsel %vm407, %v595, 0
        %602 = vmatpush.bf16.msra.mxu0 0
        %603 = vmatpush.bf16.msra.mxu0 0
        %604 = vmatpush.bf16.msra.mxu0 0
        %605 = vmatpush.bf16.msra.mxu0 0
        %606 = vmatpush.bf16.msra.mxu0 0
        %607 = vmatpush.bf16.msra.mxu0 0
        %608 = vmatpush.bf16.msra.mxu0 0
        %609 = vmatpush.bf16.msra.mxu0 %v600
        %610 = vmatmul.bf16.gmra.mxu0 %v597
        %v611 = vpop.f32.mrf.mxu0
        %v612 = vadd.f32 0.0, %v611
        %v613 = vpop.f32.mrf.mxu0
        %614 = vdwg.mxu0
        %v615 = vpack.c.bf16 %v612, %v612
        %617 = vrot.lane.b32.xlu0 %v615, 24
        %v618 = vpop.permute.xlu0 %617
        %vm620 = vcmask 257216
        %621 = vst.msk [vmem:[#allocation2] sm:$0xf] %vm620, %v618
        %v622 = vld [vmem:[#allocation2] sm:$0xf]
        %v623 = vld [vmem:[%s3] sm:$0xf]
        %v624 = vld [vmem:[%s3 + $0x4] sm:$0xf]
        %v625 = vld [vmem:[%s3 + $0x8] sm:$0xf]
        %v626 = vld [vmem:[%s3 + $0xc] sm:$0xf]
        %v627 = vld [vmem:[#allocation3] sm:$0x1]
        %v629 = vperm.slane %v627, 0
        %v635 = vunpack.c.l.b16 %v623
        %v636 = vunpack.c.l.b16 %v624
        %v637 = vunpack.c.l.b16 %v625
        %v638 = vunpack.c.l.b16 %v626
        %v639 = vpack.c.b16 %v636, %v635
        %v640 = vpack.c.b16 %v638, %v637
        %v644 = vsel %vm340, %v622, 0
        %646 = vmatpush.bf16.msra.mxu0 0
        %647 = vmatpush.bf16.msra.mxu0 0
        %648 = vmatpush.bf16.msra.mxu0 0
        %649 = vmatpush.bf16.msra.mxu0 0
        %650 = vmatpush.bf16.msra.mxu0 0
        %651 = vmatpush.bf16.msra.mxu0 0
        %652 = vmatpush.bf16.msra.mxu0 %v640
        %653 = vmatpush.bf16.msra.mxu0 %v639
        %654 = vmatmul.bf16.gmra.mxu0 %v644
        %v655 = vpop.f32.mrf.mxu0
        %v656 = vadd.f32 %v629, %v655
        %v657 = vpop.f32.mrf.mxu0
        %658 = vdwg.mxu0
        %v659 = vunpack.c.l.bf16 %v319
        %v660 = vadd.f32 %v656, %v659
        %v661 = vld [vmem:[#allocation5] sm:$0x1]
        %v662 = vld [vmem:[#allocation7] sm:$0x1]
        %v663 = vsel %vm340, %v660, 0.0
        %664 = vadd.xlane.f32.xlu0 %v663
        %v665 = vpop.xlane.xlu0 %664
        %v666 = vrcp.pop 32.0
        %v667 = vmul.f32 32.0, %v666
        %v668 = vsub.f32 1.0, %v667
        %v669 = vmul.f32 %v666, %v668
        %v670 = vadd.f32 %v666, %v669
        %vm671 = vweird.f32 %v666
        %v672 = vsel %vm671, %v666, %v670
        %v673 = vmul.f32 %v665, %v672
        %v674 = vsub.f32 %v660, %v673
        %v675 = vmul.f32 %v674, %v674
        %v676 = vsel %vm340, %v675, 0.0
        %677 = vadd.xlane.f32.xlu0 %v676
        %v678 = vpop.xlane.xlu0 %677
        %v679 = vmul.f32 %v678, %v672
        %v680 = vadd.f32 %v679, 1e-05
        %v681 = vrsqrt.pop %v680
        %v682 = vmul.f32 %v681, %v680
        %v683 = vmul.f32 %v682, %v681
        %v684 = vmul.f32 0.5, %v683
        %v685 = vsub.f32 1.5, %v684
        %v686 = vmul.f32 %v681, %v685
        %vm687 = vweird.f32 %v680
        %vm688 = vweird.f32 %v681
        %vm689 = vmor %vm687, %vm688
        %v690 = vsel %vm689, %v681, %v686
        %v691 = vmul.f32 %v674, %v690
        %v693 = vperm.slane %v661, 0
        %v695 = vmul.f32 %v691, %v693
        %v697 = vperm.slane %v662, 0
        %v699 = vadd.f32 %v695, %v697
        %v700 = vpack.c.bf16 %v699, %v699
        %vm701 = vcmask 257024
        %702 = vst.msk [vmem:[%s317] sm:$0xf] %vm701, %v700
        %p703 = scmp.lt.s32.totalorder %s20, 1
        %s704 = scalar_select %p703, %s20, 1
        %s705 = smul.addr %s704, 4
        %s706 = scalar_lea.vmem %s7, %s705
        // Predicated region
        $region61: #{ocr_transformer_forward.20} parent=47 // pred_check
          %p707 = pneg %p190
        $region62: #{ocr_transformer_forward.20} parent=47 // pred_check_branch
          %709 = sbr.rel (%p707) target = $region64
        $region63: #{ocr_transformer_forward.20} parent=47 // pred_region
          _
        $region64: #{ocr_transformer_forward.20} parent=47 // pred_fallthru
          _
      $region48: #{ocr_transformer_forward.20} parent=5 // pred_fallthru
        _
      %p710 = scmp.le.s32.totalorder 2, %s15
      // Predicated region
      $region65: #{ocr_transformer_forward.20} parent=5 // pred_check
        %p711 = pneg %p710
      $region66: #{ocr_transformer_forward.20} parent=5 // pred_check_branch
        %713 = sbr.rel (%p711) target = $region68
      $region67: #{ocr_transformer_forward.20} parent=5 // pred_region
        %s714 = ssub.s32 %s15, 2
        // Predicated region
        $region69: #{ocr_transformer_forward.20} parent=67 // pred_check
          %p715 = pneg %p196
        $region70: #{ocr_transformer_forward.20} parent=67 // pred_check_branch
          %717 = sbr.rel (%p715) target = $region72
        $region71: #{ocr_transformer_forward.20} parent=67 // pred_region
          %p718 = scmp.lt.s32.totalorder %s21, 1
          %s719 = scalar_select %p718, %s21, 1
          %s720 = smul.addr %s719, 4
          %s721 = scalar_lea.vmem %s7, %s720
        $region72: #{ocr_transformer_forward.20} parent=67 // pred_fallthru
          _
      $region68: #{ocr_transformer_forward.20} parent=5 // pred_fallthru
        _
    $region6: #{ocr_transformer_forward.20} parent=1 // loop_footer
      %s19 = sadd.s32 1, %s15
    $region7: #{ocr_transformer_forward.20} parent=1 // loop_footer_branch
      %14 = sbr.rel target = $region3
    $region8: #{ocr_transformer_forward.20} parent=1 // loop_exit
      _
    %722 = vsyncpa [#allocation4], 1
    %s723 = scalar_lea.sflag [#allocation4], 1
    %724 = vsyncpa %s723, 1
    %725 = vsyncpa [#allocation6], 1

// kernel: ocr_transformer_forward.23
$region0: #{ocr_transformer_forward.23}
  #allocation0 [shape = 'u32[]', space=smem, size = 0x4, offset = 0x4, fixed_abs, tag = 'smem constant byte address 0x4 - core index']
  #allocation1 [shape = 'u32[72,128]{1,0:T(1,128)}', space=vmem, size = 0x9000, scoped, tag = 'internal scratch']
  #allocation2 [shape = 'f32[16,128]{1,0:T(8,128)}', space=vmem, size = 0x2000, scoped, tag = 'scratch operand']
  %s0 = inlined_call_operand.vmem [shape: bf16[16,32], index: 0, kind: input, shape index: {}]
  %s1 = inlined_call_operand.vmem [shape: bf16[32,128], index: 1, kind: input, shape index: {}]
  %s2 = inlined_call_operand.vmem [shape: f32[1,128], index: 2, kind: input, shape index: {}]
  %s3 = inlined_call_operand.hbm [shape: f32[16,128], index: 3, kind: output, shape index: {}]
  %s4 = sld [smem:[#allocation0]]
  $region30: #{ocr_transformer_forward.23} parent=0
    _
  %s6 = ssub.s32 1, %s4
  %s7 = scalar_select 0, %s6, %s4
  $region1: #{ocr_transformer_forward.23} parent=0
    #allocation3 [shape = 'u8[8192]{0}', space=vmem, size = 0x2000, scoped, tag = 'output window, operand 0, single buffered']
    #allocation4 [shape = 's32[1]{0}', space=sflag, size = 0x4, scoped, tag = 'scoped memory for ocr_transformer_forward.23']
    %8 = vsyncpa [#allocation4], 0
    // Predicated region
    $region2: #{ocr_transformer_forward.23} parent=1 // pred_check
      _
    $region3: #{ocr_transformer_forward.23} parent=1 // pred_check_branch
      %10 = sbr.rel (0) target = $region5
    $region4: #{ocr_transformer_forward.23} parent=1 // pred_region
      _
    $region5: #{ocr_transformer_forward.23} parent=1 // pred_fallthru
      _
    // Predicated region
    $region6: #{ocr_transformer_forward.23} parent=1 // pred_check
      _
    $region7: #{ocr_transformer_forward.23} parent=1 // pred_check_branch
      %12 = sbr.rel (0) target = $region9
    $region8: #{ocr_transformer_forward.23} parent=1 // pred_region
      _
    $region9: #{ocr_transformer_forward.23} parent=1 // pred_fallthru
      _
    // Predicated region
    $region10: #{ocr_transformer_forward.23} parent=1 // pred_check
      _
    $region11: #{ocr_transformer_forward.23} parent=1 // pred_check_branch
      %14 = sbr.rel (0) target = $region13
    $region12: #{ocr_transformer_forward.23} parent=1 // pred_region
      _
    $region13: #{ocr_transformer_forward.23} parent=1 // pred_fallthru
      _
    %p16 = scmp.eq.s32.totalorder 0, 0
    // Predicated region
    $region14: #{ocr_transformer_forward.23} parent=1 // pred_check
      %p17 = pneg %p16
    $region15: #{ocr_transformer_forward.23} parent=1 // pred_check_branch
      %19 = sbr.rel (%p17) target = $region17
    $region16: #{ocr_transformer_forward.23} parent=1 // pred_region
      %20 = vst [vmem:[#allocation2] sm:$0xff] 0.0
      %21 = vst [vmem:[#allocation2 + $0x8] sm:$0xff] 0.0
    $region17: #{ocr_transformer_forward.23} parent=1 // pred_fallthru
      _
    %v22 = vld [vmem:[#allocation2] sm:$0xff]
    %v23 = vld [vmem:[#allocation2 + $0x8] sm:$0xff]
    %v24 = vld [vmem:[%s0] sm:$0xf]
    %v25 = vld [vmem:[%s0 + $0x4] sm:$0xf]
    %v26 = vld [vmem:[%s1] sm:$0xf]
    %v27 = vld [vmem:[%s1 + $0x4] sm:$0xf]
    %v28 = vld [vmem:[%s1 + $0x8] sm:$0xf]
    %v29 = vld [vmem:[%s1 + $0xc] sm:$0xf]
    %v32 = vunpack.c.l.b16 %v24
    %v33 = vunpack.c.l.b16 %v25
    %v34 = vpack.c.b16 %v33, %v32
    %v39 = vunpack.c.l.b16 %v26
    %v40 = vunpack.c.l.b16 %v27
    %v41 = vunpack.c.l.b16 %v28
    %v42 = vunpack.c.l.b16 %v29
    %v43 = vpack.c.b16 %v40, %v39
    %v44 = vpack.c.b16 %v42, %v41
    %vm47 = vcmask 261120
    %v49 = vsel %vm47, %v34, 0
    %51 = vmatpush.bf16.msra.mxu0 0
    %52 = vmatpush.bf16.msra.mxu0 0
    %53 = vmatpush.bf16.msra.mxu0 0
    %54 = vmatpush.bf16.msra.mxu0 0
    %55 = vmatpush.bf16.msra.mxu0 0
    %56 = vmatpush.bf16.msra.mxu0 0
    %57 = vmatpush.bf16.msra.mxu0 %v44
    %58 = vmatpush.bf16.msra.mxu0 %v43
    %59 = vmatmul.bf16.gmra.mxu0 %v49
    %v60 = vpop.f32.mrf.mxu0
    %v61 = vadd.f32 0.0, %v60
    %v62 = vpop.f32.mrf.mxu0
    %v63 = vadd.f32 0.0, %v62
    %64 = vdwg.mxu0
    %v65 = vadd.f32 %v22, %v61
    %v66 = vadd.f32 %v23, %v63
    %67 = vst [vmem:[#allocation2] sm:$0xff] %v65
    %68 = vst [vmem:[#allocation2 + $0x8] sm:$0xff] %v66
    // Predicated region
    $region18: #{ocr_transformer_forward.23} parent=1 // pred_check
      %p69 = pneg %p16
    $region19: #{ocr_transformer_forward.23} parent=1 // pred_check_branch
      %71 = sbr.rel (%p69) target = $region21
    $region20: #{ocr_transformer_forward.23} parent=1 // pred_region
      %v72 = vld [vmem:[#allocation2] sm:$0xff]
      %v73 = vld [vmem:[#allocation2 + $0x8] sm:$0xff]
      %v74 = vld [vmem:[%s2] sm:$0x1]
      %v76 = vperm.slane %v74, 0
      %v78 = vadd.f32 %v72, %v76
      %v79 = vadd.f32 %v73, %v76
      %80 = vst [vmem:[#allocation3] sm:$0xff] %v78
      %81 = vst [vmem:[#allocation3 + $0x8] sm:$0xff] %v79
    $region21: #{ocr_transformer_forward.23} parent=1 // pred_fallthru
      _
    // Predicated region
    $region22: #{ocr_transformer_forward.23} parent=1 // pred_check
      _
    $region23: #{ocr_transformer_forward.23} parent=1 // pred_check_branch
      %83 = sbr.rel (0) target = $region25
    $region24: #{ocr_transformer_forward.23} parent=1 // pred_region
      %85 = vsyncadd [#allocation4], 0
      %s86 = sshll.u32 [#allocation3], 4
      %s87 = int_to_ptr.vmem [resolvable:$true] %s86
      %s88 = sshll.u32 %s3, 4
      %s89 = int_to_ptr.hbm [resolvable:$true] %s88
      %94 = dma.vmem_to_hbm [thread:$0]  %s87, 256, %s89, [#allocation4], 128, 128, 8
    $region25: #{ocr_transformer_forward.23} parent=1 // pred_fallthru
      _
    // Predicated region
    $region26: #{ocr_transformer_forward.23} parent=1 // pred_check
      _
    $region27: #{ocr_transformer_forward.23} parent=1 // pred_check_branch
      %96 = sbr.rel (0) target = $region29
    $region28: #{ocr_transformer_forward.23} parent=1 // pred_region
      %98 = dma.done [#allocation4], 256
    $region29: #{ocr_transformer_forward.23} parent=1 // pred_fallthru
      _
    %99 = vsyncpa [#allocation4], 1

// kernel: ocr_transformer_forward.21
$region0: #{ocr_transformer_forward.21}
  #allocation0 [shape = 'u32[]', space=smem, size = 0x4, offset = 0x4, fixed_abs, tag = 'smem constant byte address 0x4 - core index']
  #allocation1 [shape = 'u32[72,128]{1,0:T(1,128)}', space=vmem, size = 0x9000, scoped, tag = 'internal scratch']
  #allocation2 [shape = 'bf16[8,32]{1,0:T(8,128)(2,1)}', space=vmem, size = 0x800, scoped, tag = 'scratch operand']
  %s0 = inlined_call_operand.vmem [shape: bf16[2,8,32], index: 0, kind: input, shape index: {}]
  %s1 = inlined_call_operand.vmem [shape: bf16[2,8,32], index: 1, kind: input, shape index: {}]
  %s2 = inlined_call_operand.vmem [shape: bf16[32,32], index: 2, kind: input, shape index: {}]
  %s3 = inlined_call_operand.hbm [shape: f32[1,32], index: 3, kind: input, shape index: {}]
  %s4 = inlined_call_operand.vmem [shape: bf16[32,64], index: 4, kind: input, shape index: {}]
  %s5 = inlined_call_operand.hbm [shape: f32[1,64], index: 5, kind: input, shape index: {}]
  %s6 = inlined_call_operand.vmem [shape: bf16[32,32], index: 6, kind: input, shape index: {}]
  %s7 = inlined_call_operand.hbm [shape: f32[1,32], index: 7, kind: input, shape index: {}]
  %s8 = inlined_call_operand.hbm [shape: f32[1,32], index: 8, kind: input, shape index: {}]
  %s9 = inlined_call_operand.hbm [shape: f32[1,32], index: 9, kind: input, shape index: {}]
  %s10 = inlined_call_operand.vmem [shape: bf16[2,8,32], index: 10, kind: output, shape index: {}]
  %s11 = sld [smem:[#allocation0]]
  $region93: #{ocr_transformer_forward.21} parent=0
    _
  %s13 = ssub.s32 1, %s11
  %s14 = scalar_select 0, %s13, %s11
  $region1: #{ocr_transformer_forward.21} parent=0
    #allocation3 [shape = 'u8[512]{0}', space=vmem, size = 0x400, scoped, tag = 'input window, operand 3, single buffered']
    #allocation4 [shape = 's32[2]{0}', space=sflag, size = 0x8, scoped, tag = 'scoped memory for ocr_transformer_forward.21']
    #allocation5 [shape = 'u8[512]{0}', space=vmem, size = 0x400, scoped, tag = 'input window, operand 5, single buffered']
    #allocation6 [shape = 's32[1]{0}', space=sflag, size = 0x4, scoped, tag = 'scoped memory for ocr_transformer_forward.21']
    #allocation7 [shape = 'u8[512]{0}', space=vmem, size = 0x400, scoped, tag = 'input window, operand 7, single buffered']
    #allocation8 [shape = 'u8[512]{0}', space=vmem, size = 0x400, scoped, tag = 'input window, operand 8, single buffered']
    #allocation9 [shape = 's32[1]{0}', space=sflag, size = 0x4, scoped, tag = 'scoped memory for ocr_transformer_forward.21']
    #allocation10 [shape = 'u8[512]{0}', space=vmem, size = 0x400, scoped, tag = 'input window, operand 9, single buffered']
    %15 = vsyncpa [#allocation4], 0
    %16 = vsyncpa [#allocation6], 0
    %17 = vsyncpa [#allocation9], 0
    loop: start=0, step=1, limit=4
    $region2: #{ocr_transformer_forward.21} parent=1 // loop_pre_header
      _
    $region3: #{ocr_transformer_forward.21} parent=1 // loop_header
      %s19 = sphi 0, %s23
      %p20 = scmp.ge.s32.totalorder %s19, 4
      %s29 = sphi 0, %s31
      %s32 = sphi 0, %s29
      %s33 = sphi 0, %s32
      %s49 = sphi 0, %s33
      %s55 = sphi 0, %s57
      %s58 = sphi 0, %s55
      %s59 = sphi 0, %s58
      %s75 = sphi 0, %s59
      %s79 = sphi 0, %s79
      %s81 = sphi 0, %s79
      %s82 = sphi 0, %s81
      %s96 = sphi 0, %s82
      %s100 = sphi 0, %s100
      %s102 = sphi 0, %s100
      %s103 = sphi 0, %s102
      %s117 = sphi 0, %s103
      %s121 = sphi 0, %s121
      %s123 = sphi 0, %s121
      %s124 = sphi 0, %s123
      %s138 = sphi 0, %s124
      %s142 = sphi 0, %s142
      %s144 = sphi 0, %s142
      %s145 = sphi 0, %s144
      %s159 = sphi 0, %s145
      %s163 = sphi 0, %s163
      %s165 = sphi 0, %s163
      %s166 = sphi 0, %s165
      %s180 = sphi 0, %s166
      %s184 = sphi 0, %s184
      %s186 = sphi 0, %s184
      %s187 = sphi 0, %s186
      %s201 = sphi 0, %s187
      %s205 = sphi 0, %s205
      %s207 = sphi 0, %s205
      %s208 = sphi 0, %s207
      %s222 = sphi 0, %s208
      %s226 = sphi 0, %s226
      %s228 = sphi 0, %s226
      %s229 = sphi 0, %s228
      %s243 = sphi 0, %s229
      %s249 = sphi 0, %s251
      %s252 = sphi 0, %s249
      %s253 = sphi 0, %s252
      %s269 = sphi 0, %s253
    $region4: #{ocr_transformer_forward.21} parent=1 // loop_header_branch
      %22 = sbr.rel (%p20) target = $region8
    $region5: #{ocr_transformer_forward.21} parent=1 // loop_body
      %s24 = ssub.s32 %s19, 1
      %s25 = ssub.s32 %s19, 2
      %s26 = sadd.s32 %s19, 1
      %s27 = ssub.s32 %s19, %s26
      %p28 = scmp.eq.s32.totalorder %s27, 0
      %s30 = sadd.s32 %s29, 1
      %s31 = scalar_select %p28, %s29, %s30
      %p34 = pneg %p28
      %p35 = scmp.eq.s32.totalorder %s19, 1
      %p36 = por %p34, %p35
      %p37 = scmp.ne.s32.totalorder %s29, %s32
      %p38 = scmp.eq.s32.totalorder %s19, 0
      %p39 = por %p37, %p38
      %p40 = scmp.ne.s32.totalorder %s29, %s32
      %p41 = scmp.eq.s32.totalorder %s24, 1
      %p42 = por %p40, %p41
      %p43 = scmp.ne.s32.totalorder %s32, %s33
      %p44 = scmp.eq.s32.totalorder %s24, 0
      %p45 = por %p43, %p44
      %p46 = scmp.ne.s32.totalorder %s32, %s33
      %p47 = scmp.eq.s32.totalorder %s25, 1
      %p48 = por %p46, %p47
      %p50 = scmp.ne.s32.totalorder %s33, %s49
      %p51 = scmp.eq.s32.totalorder %s25, 0
      %p52 = por %p50, %p51
      %s53 = ssub.s32 %s19, %s26
      %p54 = scmp.eq.s32.totalorder %s53, 0
      %s56 = sadd.s32 %s55, 1
      %s57 = scalar_select %p54, %s55, %s56
      %p60 = pneg %p54
      %p61 = scmp.eq.s32.totalorder %s19, 1
      %p62 = por %p60, %p61
      %p63 = scmp.ne.s32.totalorder %s55, %s58
      %p64 = scmp.eq.s32.totalorder %s19, 0
      %p65 = por %p63, %p64
      %p66 = scmp.ne.s32.totalorder %s55, %s58
      %p67 = scmp.eq.s32.totalorder %s24, 1
      %p68 = por %p66, %p67
      %p69 = scmp.ne.s32.totalorder %s58, %s59
      %p70 = scmp.eq.s32.totalorder %s24, 0
      %p71 = por %p69, %p70
      %p72 = scmp.ne.s32.totalorder %s58, %s59
      %p73 = scmp.eq.s32.totalorder %s25, 1
      %p74 = por %p72, %p73
      %p76 = scmp.ne.s32.totalorder %s59, %s75
      %p77 = scmp.eq.s32.totalorder %s25, 0
      %p78 = por %p76, %p77
      %s80 = sadd.s32 %s79, 1
      %p83 = scmp.eq.s32.totalorder %s19, 1
      %p84 = scmp.ne.s32.totalorder %s79, %s81
      %p85 = scmp.eq.s32.totalorder %s19, 0
      %p86 = por %p84, %p85
      %p87 = scmp.ne.s32.totalorder %s79, %s81
      %p88 = scmp.eq.s32.totalorder %s24, 1
      %p89 = por %p87, %p88
      %p90 = scmp.ne.s32.totalorder %s81, %s82
      %p91 = scmp.eq.s32.totalorder %s24, 0
      %p92 = por %p90, %p91
      %p93 = scmp.ne.s32.totalorder %s81, %s82
      %p94 = scmp.eq.s32.totalorder %s25, 1
      %p95 = por %p93, %p94
      %p97 = scmp.ne.s32.totalorder %s82, %s96
      %p98 = scmp.eq.s32.totalorder %s25, 0
      %p99 = por %p97, %p98
      %s101 = sadd.s32 %s100, 1
      %p104 = scmp.eq.s32.totalorder %s19, 1
      %p105 = scmp.ne.s32.totalorder %s100, %s102
      %p106 = scmp.eq.s32.totalorder %s19, 0
      %p107 = por %p105, %p106
      %p108 = scmp.ne.s32.totalorder %s100, %s102
      %p109 = scmp.eq.s32.totalorder %s24, 1
      %p110 = por %p108, %p109
      %p111 = scmp.ne.s32.totalorder %s102, %s103
      %p112 = scmp.eq.s32.totalorder %s24, 0
      %p113 = por %p111, %p112
      %p114 = scmp.ne.s32.totalorder %s102, %s103
      %p115 = scmp.eq.s32.totalorder %s25, 1
      %p116 = por %p114, %p115
      %p118 = scmp.ne.s32.totalorder %s103, %s117
      %p119 = scmp.eq.s32.totalorder %s25, 0
      %p120 = por %p118, %p119
      %s122 = sadd.s32 %s121, 1
      %p125 = scmp.eq.s32.totalorder %s19, 1
      %p126 = scmp.ne.s32.totalorder %s121, %s123
      %p127 = scmp.eq.s32.totalorder %s19, 0
      %p128 = por %p126, %p127
      %p129 = scmp.ne.s32.totalorder %s121, %s123
      %p130 = scmp.eq.s32.totalorder %s24, 1
      %p131 = por %p129, %p130
      %p132 = scmp.ne.s32.totalorder %s123, %s124
      %p133 = scmp.eq.s32.totalorder %s24, 0
      %p134 = por %p132, %p133
      %p135 = scmp.ne.s32.totalorder %s123, %s124
      %p136 = scmp.eq.s32.totalorder %s25, 1
      %p137 = por %p135, %p136
      %p139 = scmp.ne.s32.totalorder %s124, %s138
      %p140 = scmp.eq.s32.totalorder %s25, 0
      %p141 = por %p139, %p140
      %s143 = sadd.s32 %s142, 1
      %p146 = scmp.eq.s32.totalorder %s19, 1
      %p147 = scmp.ne.s32.totalorder %s142, %s144
      %p148 = scmp.eq.s32.totalorder %s19, 0
      %p149 = por %p147, %p148
      %p150 = scmp.ne.s32.totalorder %s142, %s144
      %p151 = scmp.eq.s32.totalorder %s24, 1
      %p152 = por %p150, %p151
      %p153 = scmp.ne.s32.totalorder %s144, %s145
      %p154 = scmp.eq.s32.totalorder %s24, 0
      %p155 = por %p153, %p154
      %p156 = scmp.ne.s32.totalorder %s144, %s145
      %p157 = scmp.eq.s32.totalorder %s25, 1
      %p158 = por %p156, %p157
      %p160 = scmp.ne.s32.totalorder %s145, %s159
      %p161 = scmp.eq.s32.totalorder %s25, 0
      %p162 = por %p160, %p161
      %s164 = sadd.s32 %s163, 1
      %p167 = scmp.eq.s32.totalorder %s19, 1
      %p168 = scmp.ne.s32.totalorder %s163, %s165
      %p169 = scmp.eq.s32.totalorder %s19, 0
      %p170 = por %p168, %p169
      %p171 = scmp.ne.s32.totalorder %s163, %s165
      %p172 = scmp.eq.s32.totalorder %s24, 1
      %p173 = por %p171, %p172
      %p174 = scmp.ne.s32.totalorder %s165, %s166
      %p175 = scmp.eq.s32.totalorder %s24, 0
      %p176 = por %p174, %p175
      %p177 = scmp.ne.s32.totalorder %s165, %s166
      %p178 = scmp.eq.s32.totalorder %s25, 1
      %p179 = por %p177, %p178
      %p181 = scmp.ne.s32.totalorder %s166, %s180
      %p182 = scmp.eq.s32.totalorder %s25, 0
      %p183 = por %p181, %p182
      %s185 = sadd.s32 %s184, 1
      %p188 = scmp.eq.s32.totalorder %s19, 1
      %p189 = scmp.ne.s32.totalorder %s184, %s186
      %p190 = scmp.eq.s32.totalorder %s19, 0
      %p191 = por %p189, %p190
      %p192 = scmp.ne.s32.totalorder %s184, %s186
      %p193 = scmp.eq.s32.totalorder %s24, 1
      %p194 = por %p192, %p193
      %p195 = scmp.ne.s32.totalorder %s186, %s187
      %p196 = scmp.eq.s32.totalorder %s24, 0
      %p197 = por %p195, %p196
      %p198 = scmp.ne.s32.totalorder %s186, %s187
      %p199 = scmp.eq.s32.totalorder %s25, 1
      %p200 = por %p198, %p199
      %p202 = scmp.ne.s32.totalorder %s187, %s201
      %p203 = scmp.eq.s32.totalorder %s25, 0
      %p204 = por %p202, %p203
      %s206 = sadd.s32 %s205, 1
      %p209 = scmp.eq.s32.totalorder %s19, 1
      %p210 = scmp.ne.s32.totalorder %s205, %s207
      %p211 = scmp.eq.s32.totalorder %s19, 0
      %p212 = por %p210, %p211
      %p213 = scmp.ne.s32.totalorder %s205, %s207
      %p214 = scmp.eq.s32.totalorder %s24, 1
      %p215 = por %p213, %p214
      %p216 = scmp.ne.s32.totalorder %s207, %s208
      %p217 = scmp.eq.s32.totalorder %s24, 0
      %p218 = por %p216, %p217
      %p219 = scmp.ne.s32.totalorder %s207, %s208
      %p220 = scmp.eq.s32.totalorder %s25, 1
      %p221 = por %p219, %p220
      %p223 = scmp.ne.s32.totalorder %s208, %s222
      %p224 = scmp.eq.s32.totalorder %s25, 0
      %p225 = por %p223, %p224
      %s227 = sadd.s32 %s226, 1
      %p230 = scmp.eq.s32.totalorder %s19, 1
      %p231 = scmp.ne.s32.totalorder %s226, %s228
      %p232 = scmp.eq.s32.totalorder %s19, 0
      %p233 = por %p231, %p232
      %p234 = scmp.ne.s32.totalorder %s226, %s228
      %p235 = scmp.eq.s32.totalorder %s24, 1
      %p236 = por %p234, %p235
      %p237 = scmp.ne.s32.totalorder %s228, %s229
      %p238 = scmp.eq.s32.totalorder %s24, 0
      %p239 = por %p237, %p238
      %p240 = scmp.ne.s32.totalorder %s228, %s229
      %p241 = scmp.eq.s32.totalorder %s25, 1
      %p242 = por %p240, %p241
      %p244 = scmp.ne.s32.totalorder %s229, %s243
      %p245 = scmp.eq.s32.totalorder %s25, 0
      %p246 = por %p244, %p245
      %s247 = ssub.s32 %s19, %s26
      %p248 = scmp.eq.s32.totalorder %s247, 0
      %s250 = sadd.s32 %s249, 1
      %s251 = scalar_select %p248, %s249, %s250
      %p254 = pneg %p248
      %p255 = scmp.eq.s32.totalorder %s19, 1
      %p256 = por %p254, %p255
      %p257 = scmp.ne.s32.totalorder %s249, %s252
      %p258 = scmp.eq.s32.totalorder %s19, 0
      %p259 = por %p257, %p258
      %p260 = scmp.ne.s32.totalorder %s249, %s252
      %p261 = scmp.eq.s32.totalorder %s24, 1
      %p262 = por %p260, %p261
      %p263 = scmp.ne.s32.totalorder %s252, %s253
      %p264 = scmp.eq.s32.totalorder %s24, 0
      %p265 = por %p263, %p264
      %p266 = scmp.ne.s32.totalorder %s252, %s253
      %p267 = scmp.eq.s32.totalorder %s25, 1
      %p268 = por %p266, %p267
      %p270 = scmp.ne.s32.totalorder %s253, %s269
      %p271 = scmp.eq.s32.totalorder %s25, 0
      %p272 = por %p270, %p271
      %p273 = scmp.le.s32.totalorder 1, %s19
      %p274 = scmp.lt.s32.totalorder %s19, 3
      %p275 = pnand %p273, %p274
      %p276 = pneg %p275
      // Predicated region
      $region9: #{ocr_transformer_forward.21} parent=5 // pred_check
        _
      $region10: #{ocr_transformer_forward.21} parent=5 // pred_check_branch
        %278 = sbr.rel (%p275) target = $region12
      $region11: #{ocr_transformer_forward.21} parent=5 // pred_region
        %s279 = ssub.s32 %s19, 1
        // Predicated region
        $region13: #{ocr_transformer_forward.21} parent=11 // pred_check
          %p280 = pneg %p92
        $region14: #{ocr_transformer_forward.21} parent=11 // pred_check_branch
          %282 = sbr.rel (%p280) target = $region16
        $region15: #{ocr_transformer_forward.21} parent=11 // pred_region
          _
        $region16: #{ocr_transformer_forward.21} parent=11 // pred_fallthru
          _
        // Predicated region
        $region17: #{ocr_transformer_forward.21} parent=11 // pred_check
          %p283 = pneg %p113
        $region18: #{ocr_transformer_forward.21} parent=11 // pred_check_branch
          %285 = sbr.rel (%p283) target = $region20
        $region19: #{ocr_transformer_forward.21} parent=11 // pred_region
          %287 = vsyncadd [#allocation4], 0
          %s289 = sshll.u32 %s3, 4
          %s290 = int_to_ptr.hbm [resolvable:$true] %s289
          %s291 = sshll.u32 [#allocation3], 4
          %s292 = int_to_ptr.vmem [resolvable:$true] %s291
          %294 = dma.hbm_to_vmem [thread:$0]  %s290, 16, %s292, [#allocation4]
        $region20: #{ocr_transformer_forward.21} parent=11 // pred_fallthru
          _
        // Predicated region
        $region21: #{ocr_transformer_forward.21} parent=11 // pred_check
          %p295 = pneg %p134
        $region22: #{ocr_transformer_forward.21} parent=11 // pred_check_branch
          %297 = sbr.rel (%p295) target = $region24
        $region23: #{ocr_transformer_forward.21} parent=11 // pred_region
          _
        $region24: #{ocr_transformer_forward.21} parent=11 // pred_fallthru
          _
        // Predicated region
        $region25: #{ocr_transformer_forward.21} parent=11 // pred_check
          %p298 = pneg %p155
        $region26: #{ocr_transformer_forward.21} parent=11 // pred_check_branch
          %300 = sbr.rel (%p298) target = $region28
        $region27: #{ocr_transformer_forward.21} parent=11 // pred_region
          %302 = vsyncadd [#allocation6], 0
          %s304 = sshll.u32 %s5, 4
          %s305 = int_to_ptr.hbm [resolvable:$true] %s304
          %s306 = sshll.u32 [#allocation5], 4
          %s307 = int_to_ptr.vmem [resolvable:$true] %s306
          %309 = dma.hbm_to_vmem [thread:$0]  %s305, 16, %s307, [#allocation6]
        $region28: #{ocr_transformer_forward.21} parent=11 // pred_fallthru
          _
        // Predicated region
        $region29: #{ocr_transformer_forward.21} parent=11 // pred_check
          %p310 = pneg %p176
        $region30: #{ocr_transformer_forward.21} parent=11 // pred_check_branch
          %312 = sbr.rel (%p310) target = $region32
        $region31: #{ocr_transformer_forward.21} parent=11 // pred_region
          _
        $region32: #{ocr_transformer_forward.21} parent=11 // pred_fallthru
          _
        // Predicated region
        $region33: #{ocr_transformer_forward.21} parent=11 // pred_check
          %p313 = pneg %p197
        $region34: #{ocr_transformer_forward.21} parent=11 // pred_check_branch
          %315 = sbr.rel (%p313) target = $region36
        $region35: #{ocr_transformer_forward.21} parent=11 // pred_region
          %317 = vsyncadd [#allocation6], 0
          %s319 = sshll.u32 %s7, 4
          %s320 = int_to_ptr.hbm [resolvable:$true] %s319
          %s321 = sshll.u32 [#allocation7], 4
          %s322 = int_to_ptr.vmem [resolvable:$true] %s321
          %324 = dma.hbm_to_vmem [thread:$0]  %s320, 16, %s322, [#allocation6]
        $region36: #{ocr_transformer_forward.21} parent=11 // pred_fallthru
          _
        // Predicated region
        $region37: #{ocr_transformer_forward.21} parent=11 // pred_check
          %p325 = pneg %p218
        $region38: #{ocr_transformer_forward.21} parent=11 // pred_check_branch
          %327 = sbr.rel (%p325) target = $region40
        $region39: #{ocr_transformer_forward.21} parent=11 // pred_region
          %329 = vsyncadd [#allocation9], 0
          %s331 = sshll.u32 %s8, 4
          %s332 = int_to_ptr.hbm [resolvable:$true] %s331
          %s333 = sshll.u32 [#allocation8], 4
          %s334 = int_to_ptr.vmem [resolvable:$true] %s333
          %336 = dma.hbm_to_vmem [thread:$0]  %s332, 16, %s334, [#allocation9]
        $region40: #{ocr_transformer_forward.21} parent=11 // pred_fallthru
          _
        // Predicated region
        $region41: #{ocr_transformer_forward.21} parent=11 // pred_check
          %p337 = pneg %p239
        $region42: #{ocr_transformer_forward.21} parent=11 // pred_check_branch
          %339 = sbr.rel (%p337) target = $region44
        $region43: #{ocr_transformer_forward.21} parent=11 // pred_region
          %341 = vsyncadd [#allocation9], 0
          %s343 = sshll.u32 %s9, 4
          %s344 = int_to_ptr.hbm [resolvable:$true] %s343
          %s345 = sshll.u32 [#allocation10], 4
          %s346 = int_to_ptr.vmem [resolvable:$true] %s345
          %348 = dma.hbm_to_vmem [thread:$0]  %s344, 16, %s346, [#allocation9]
        $region44: #{ocr_transformer_forward.21} parent=11 // pred_fallthru
          _
      $region12: #{ocr_transformer_forward.21} parent=5 // pred_fallthru
        _
      %p349 = scmp.lt.s32.totalorder %s19, 2
      // Predicated region
      $region45: #{ocr_transformer_forward.21} parent=5 // pred_check
        %p350 = pneg %p349
      $region46: #{ocr_transformer_forward.21} parent=5 // pred_check_branch
        %352 = sbr.rel (%p350) target = $region48
      $region47: #{ocr_transformer_forward.21} parent=5 // pred_region
        // Predicated region
        $region49: #{ocr_transformer_forward.21} parent=47 // pred_check
          %p353 = pneg %p39
        $region50: #{ocr_transformer_forward.21} parent=47 // pred_check_branch
          %355 = sbr.rel (%p353) target = $region52
        $region51: #{ocr_transformer_forward.21} parent=47 // pred_region
          %p356 = scmp.lt.s32.totalorder %s19, 1
          %s357 = scalar_select %p356, %s19, 1
          %s358 = smul.addr %s357, 4
          %s359 = scalar_lea.vmem %s0, %s358
        $region52: #{ocr_transformer_forward.21} parent=47 // pred_fallthru
          _
        // Predicated region
        $region53: #{ocr_transformer_forward.21} parent=47 // pred_check
          %p360 = pneg %p65
        $region54: #{ocr_transformer_forward.21} parent=47 // pred_check_branch
          %362 = sbr.rel (%p360) target = $region56
        $region55: #{ocr_transformer_forward.21} parent=47 // pred_region
          %p363 = scmp.lt.s32.totalorder %s19, 1
          %s364 = scalar_select %p363, %s19, 1
          %s365 = smul.addr %s364, 4
          %s366 = scalar_lea.vmem %s1, %s365
        $region56: #{ocr_transformer_forward.21} parent=47 // pred_fallthru
          _
      $region48: #{ocr_transformer_forward.21} parent=5 // pred_fallthru
        _
      %p367 = scmp.le.s32.totalorder 1, %s19
      %p368 = scmp.lt.s32.totalorder %s19, 3
      %p369 = pnand %p367, %p368
      %p370 = pneg %p369
      // Predicated region
      $region57: #{ocr_transformer_forward.21} parent=5 // pred_check
        _
      $region58: #{ocr_transformer_forward.21} parent=5 // pred_check_branch
        %372 = sbr.rel (%p369) target = $region60
      $region59: #{ocr_transformer_forward.21} parent=5 // pred_region
        %s373 = ssub.s32 %s19, 1
        // Predicated region
        $region61: #{ocr_transformer_forward.21} parent=59 // pred_check
          %p374 = pneg %p113
        $region62: #{ocr_transformer_forward.21} parent=59 // pred_check_branch
          %376 = sbr.rel (%p374) target = $region64
        $region63: #{ocr_transformer_forward.21} parent=59 // pred_region
          %378 = dma.done [#allocation4], 16
        $region64: #{ocr_transformer_forward.21} parent=59 // pred_fallthru
          _
        // Predicated region
        $region65: #{ocr_transformer_forward.21} parent=59 // pred_check
          %p379 = pneg %p155
        $region66: #{ocr_transformer_forward.21} parent=59 // pred_check_branch
          %381 = sbr.rel (%p379) target = $region68
        $region67: #{ocr_transformer_forward.21} parent=59 // pred_region
          %383 = dma.done [#allocation6], 16
        $region68: #{ocr_transformer_forward.21} parent=59 // pred_fallthru
          _
        // Predicated region
        $region69: #{ocr_transformer_forward.21} parent=59 // pred_check
          %p384 = pneg %p197
        $region70: #{ocr_transformer_forward.21} parent=59 // pred_check_branch
          %386 = sbr.rel (%p384) target = $region72
        $region71: #{ocr_transformer_forward.21} parent=59 // pred_region
          %388 = dma.done [#allocation6], 16
        $region72: #{ocr_transformer_forward.21} parent=59 // pred_fallthru
          _
        // Predicated region
        $region73: #{ocr_transformer_forward.21} parent=59 // pred_check
          %p389 = pneg %p218
        $region74: #{ocr_transformer_forward.21} parent=59 // pred_check_branch
          %391 = sbr.rel (%p389) target = $region76
        $region75: #{ocr_transformer_forward.21} parent=59 // pred_region
          %393 = dma.done [#allocation9], 16
        $region76: #{ocr_transformer_forward.21} parent=59 // pred_fallthru
          _
        // Predicated region
        $region77: #{ocr_transformer_forward.21} parent=59 // pred_check
          %p394 = pneg %p239
        $region78: #{ocr_transformer_forward.21} parent=59 // pred_check_branch
          %396 = sbr.rel (%p394) target = $region80
        $region79: #{ocr_transformer_forward.21} parent=59 // pred_region
          %398 = dma.done [#allocation9], 16
        $region80: #{ocr_transformer_forward.21} parent=59 // pred_fallthru
          _
        %p399 = scmp.lt.s32.totalorder %s24, 1
        %s400 = scalar_select %p399, %s24, 1
        %s401 = smul.addr %s400, 4
        %s402 = scalar_lea.vmem %s0, %s401
        %p403 = pneg %p45
        %p404 = pneg %p42
        %p405 = scmp.lt.s32.totalorder %s24, 1
        %s406 = scalar_select %p405, %s24, 1
        %s407 = smul.addr %s406, 4
        %s408 = scalar_lea.vmem %s1, %s407
        %p409 = pneg %p71
        %p410 = pneg %p68
        %p411 = pneg %p92
        %p412 = pneg %p89
        %p413 = pneg %p113
        %p414 = pneg %p110
        %p415 = pneg %p134
        %p416 = pneg %p131
        %p417 = pneg %p155
        %p418 = pneg %p152
        %p419 = pneg %p176
        %p420 = pneg %p173
        %p421 = pneg %p197
        %p422 = pneg %p194
        %p423 = pneg %p218
        %p424 = pneg %p215
        %p425 = pneg %p239
        %p426 = pneg %p236
        %p427 = pneg %p265
        %p428 = pneg %p262
        %p429 = scmp.lt.s32.totalorder %s24, 1
        %s430 = scalar_select %p429, %s24, 1
        %s431 = smul.addr %s430, 4
        %s432 = scalar_lea.vmem %s10, %s431
        %p433 = scmp.lt.s32.totalorder %s24, 1
        %s434 = scalar_select %p433, %s24, 1
        %s435 = smul.addr %s434, 4
        %s436 = scalar_lea.vmem %s0, %s435
        %p437 = scmp.lt.s32.totalorder %s24, 1
        %s438 = scalar_select %p437, %s24, 1
        %s439 = smul.addr %s438, 4
        %s440 = scalar_lea.vmem %s1, %s439
        %p441 = scmp.lt.s32.totalorder %s24, 1
        %s442 = scalar_select %p441, %s24, 1
        %s443 = smul.addr %s442, 4
        %s444 = scalar_lea.vmem %s10, %s443
        %v446 = vld [vmem:[%s436] sm:$0xf]
        %v447 = vld [vmem:[%s440] sm:$0xf]
        %v448 = vld [vmem:[%s2] sm:$0xf]
        %v449 = vld [vmem:[%s2 + $0x4] sm:$0xf]
        %v450 = vld [vmem:[%s2 + $0x8] sm:$0xf]
        %v451 = vld [vmem:[%s2 + $0xc] sm:$0xf]
        %v452 = vld [vmem:[#allocation3] sm:$0x1]
        %v454 = vperm.slane %v452, 0
        %v460 = vunpack.c.l.b16 %v448
        %v461 = vunpack.c.l.b16 %v449
        %v462 = vunpack.c.l.b16 %v450
        %v463 = vunpack.c.l.b16 %v451
        %v464 = vpack.c.b16 %v461, %v460
        %v465 = vpack.c.b16 %v463, %v462
        %vm468 = vcmask 261120
        %v470 = vsel %vm468, %v446, 0
        %472 = vmatpush.bf16.msra.mxu0 0
        %473 = vmatpush.bf16.msra.mxu0 0
        %474 = vmatpush.bf16.msra.mxu0 0
        %475 = vmatpush.bf16.msra.mxu0 0
        %476 = vmatpush.bf16.msra.mxu0 0
        %477 = vmatpush.bf16.msra.mxu0 0
        %478 = vmatpush.bf16.msra.mxu0 %v465
        %479 = vmatpush.bf16.msra.mxu0 %v464
        %480 = vmatmul.bf16.gmra.mxu0 %v470
        %v481 = vpop.f32.mrf.mxu0
        %v482 = vadd.f32 %v454, %v481
        %v483 = vpop.f32.mrf.mxu0
        %484 = vdwg.mxu0
        %v485 = vpack.c.bf16 %v482, %v482
        %v486 = vld [vmem:[%s4] sm:$0xf]
        %v487 = vld [vmem:[%s4 + $0x4] sm:$0xf]
        %v488 = vld [vmem:[%s4 + $0x8] sm:$0xf]
        %v489 = vld [vmem:[%s4 + $0xc] sm:$0xf]
        %v490 = vld [vmem:[#allocation5] sm:$0x1]
        %v492 = vperm.slane %v490, 0
        %v498 = vunpack.c.l.b16 %v486
        %v499 = vunpack.c.l.b16 %v487
        %v500 = vunpack.c.l.b16 %v488
        %v501 = vunpack.c.l.b16 %v489
        %v502 = vpack.c.b16 %v499, %v498
        %v503 = vpack.c.b16 %v501, %v500
        %v507 = vsel %vm468, %v447, 0
        %509 = vmatpush.bf16.msra.mxu0 0
        %510 = vmatpush.bf16.msra.mxu0 0
        %511 = vmatpush.bf16.msra.mxu0 0
        %512 = vmatpush.bf16.msra.mxu0 0
        %513 = vmatpush.bf16.msra.mxu0 0
        %514 = vmatpush.bf16.msra.mxu0 0
        %515 = vmatpush.bf16.msra.mxu0 %v503
        %516 = vmatpush.bf16.msra.mxu0 %v502
        %517 = vmatmul.bf16.gmra.mxu0 %v507
        %v518 = vpop.f32.mrf.mxu0
        %v519 = vadd.f32 %v492, %v518
        %v520 = vpop.f32.mrf.mxu0
        %521 = vdwg.mxu0
        %v522 = vpack.c.bf16 %v519, %v519
        %vm523 = vcmask 64512
        %v525 = vsel %vm523, %v485, 0
        %v528 = vsel %vm523, %v522, 0
        %530 = vmatpush.bf16.xpose.msra.mxu0 0
        %531 = vmatpush.bf16.xpose.msra.mxu0 0
        %532 = vmatpush.bf16.xpose.msra.mxu0 0
        %533 = vmatpush.bf16.xpose.msra.mxu0 0
        %534 = vmatpush.bf16.xpose.msra.mxu0 0
        %535 = vmatpush.bf16.xpose.msra.mxu0 0
        %536 = vmatpush.bf16.xpose.msra.mxu0 0
        %537 = vmatpush.bf16.xpose.msra.mxu0 %v528
        %538 = vmatmul.bf16.gmra.mxu0 %v525
        %v539 = vpop.f32.mrf.mxu0
        %v540 = vadd.f32 0.0, %v539
        %v541 = vpop.f32.mrf.mxu0
        %542 = vdwg.mxu0
        %v543 = vmul.f32 %v540, 0.35355338
        %v544 = vsel %vm523, %v543, -inf
        %545 = vmax.xlane.f32.xlu0 %v544
        %v546 = vpop.xlane.xlu0 %545
        %v547 = vsub.f32 %v543, %v546
        %v548 = vmul.f32 %v547, 1.442695
        %v549 = vpow.pop %v548
        %v550 = vsel %vm523, %v549, 0.0
        %551 = vadd.xlane.f32.xlu0 %v550
        %v552 = vpop.xlane.xlu0 %551
        %v553 = vrcp.pop %v552
        %v554 = vmul.f32 %v549, %v553
        %v555 = vpack.c.bf16 %v554, %v554
        %v557 = vunpack.c.l.b16 %v522
        %v558 = vpack.c.b16 %v557, %v557
        %559 = vrot.lane.b32.xlu0 %v558, 96
        %v560 = vpop.permute.xlu0 %559
        %v562 = vsel %vm523, %v555, 0
        %vm564 = vcmask 1043456
        %v566 = vsel %vm564, %v560, 0
        %568 = vmatpush.bf16.msra.mxu0 0
        %569 = vmatpush.bf16.msra.mxu0 0
        %570 = vmatpush.bf16.msra.mxu0 0
        %571 = vmatpush.bf16.msra.mxu0 0
        %572 = vmatpush.bf16.msra.mxu0 0
        %573 = vmatpush.bf16.msra.mxu0 0
        %574 = vmatpush.bf16.msra.mxu0 0
        %575 = vmatpush.bf16.msra.mxu0 %v566
        %576 = vmatmul.bf16.gmra.mxu0 %v562
        %v577 = vpop.f32.mrf.mxu0
        %v578 = vadd.f32 0.0, %v577
        %v579 = vpop.f32.mrf.mxu0
        %580 = vdwg.mxu0
        %v581 = vpack.c.bf16 %v578, %v578
        %vm582 = vcmask 60416
        %583 = vst.msk [vmem:[#allocation2] sm:$0xf] %vm582, %v581
        %v585 = vunpack.c.l.b16 %v485
        %v586 = vpack.c.b16 %v585, %v585
        %587 = vrot.lane.b32.xlu0 %v586, 120
        %v588 = vpop.permute.xlu0 %587
        %589 = vrot.lane.b32.xlu0 %v558, 120
        %v590 = vpop.permute.xlu0 %589
        %v592 = vsel %vm523, %v588, 0
        %v595 = vsel %vm523, %v590, 0
        %597 = vmatpush.bf16.xpose.msra.mxu0 0
        %598 = vmatpush.bf16.xpose.msra.mxu0 0
        %599 = vmatpush.bf16.xpose.msra.mxu0 0
        %600 = vmatpush.bf16.xpose.msra.mxu0 0
        %601 = vmatpush.bf16.xpose.msra.mxu0 0
        %602 = vmatpush.bf16.xpose.msra.mxu0 0
        %603 = vmatpush.bf16.xpose.msra.mxu0 0
        %604 = vmatpush.bf16.xpose.msra.mxu0 %v595
        %605 = vmatmul.bf16.gmra.mxu0 %v592
        %v606 = vpop.f32.mrf.mxu0
        %v607 = vadd.f32 0.0, %v606
        %v608 = vpop.f32.mrf.mxu0
        %609 = vdwg.mxu0
        %v610 = vmul.f32 %v607, 0.35355338
        %v611 = vsel %vm523, %v610, -inf
        %612 = vmax.xlane.f32.xlu0 %v611
        %v613 = vpop.xlane.xlu0 %612
        %v614 = vsub.f32 %v610, %v613
        %v615 = vmul.f32 %v614, 1.442695
        %v616 = vpow.pop %v615
        %v617 = vsel %vm523, %v616, 0.0
        %618 = vadd.xlane.f32.xlu0 %v617
        %v619 = vpop.xlane.xlu0 %618
        %v620 = vrcp.pop %v619
        %v621 = vmul.f32 %v616, %v620
        %v622 = vpack.c.bf16 %v621, %v621
        %623 = vrot.lane.b32.xlu0 %v558, 88
        %v624 = vpop.permute.xlu0 %623
        %v626 = vsel %vm523, %v622, 0
        %v629 = vsel %vm564, %v624, 0
        %631 = vmatpush.bf16.msra.mxu0 0
        %632 = vmatpush.bf16.msra.mxu0 0
        %633 = vmatpush.bf16.msra.mxu0 0
        %634 = vmatpush.bf16.msra.mxu0 0
        %635 = vmatpush.bf16.msra.mxu0 0
        %636 = vmatpush.bf16.msra.mxu0 0
        %637 = vmatpush.bf16.msra.mxu0 0
        %638 = vmatpush.bf16.msra.mxu0 %v629
        %639 = vmatmul.bf16.gmra.mxu0 %v626
        %v640 = vpop.f32.mrf.mxu0
        %v641 = vadd.f32 0.0, %v640
        %v642 = vpop.f32.mrf.mxu0
        %643 = vdwg.mxu0
        %v644 = vpack.c.bf16 %v641, %v641
        %646 = vrot.lane.b32.xlu0 %v644, 8
        %v647 = vpop.permute.xlu0 %646
        %vm649 = vcmask 126016
        %650 = vst.msk [vmem:[#allocation2] sm:$0xf] %vm649, %v647
        %651 = vrot.lane.b32.xlu0 %v586, 112
        %v652 = vpop.permute.xlu0 %651
        %653 = vrot.lane.b32.xlu0 %v558, 112
        %v654 = vpop.permute.xlu0 %653
        %v656 = vsel %vm523, %v652, 0
        %v659 = vsel %vm523, %v654, 0
        %661 = vmatpush.bf16.xpose.msra.mxu0 0
        %662 = vmatpush.bf16.xpose.msra.mxu0 0
        %663 = vmatpush.bf16.xpose.msra.mxu0 0
        %664 = vmatpush.bf16.xpose.msra.mxu0 0
        %665 = vmatpush.bf16.xpose.msra.mxu0 0
        %666 = vmatpush.bf16.xpose.msra.mxu0 0
        %667 = vmatpush.bf16.xpose.msra.mxu0 0
        %668 = vmatpush.bf16.xpose.msra.mxu0 %v659
        %669 = vmatmul.bf16.gmra.mxu0 %v656
        %v670 = vpop.f32.mrf.mxu0
        %v671 = vadd.f32 0.0, %v670
        %v672 = vpop.f32.mrf.mxu0
        %673 = vdwg.mxu0
        %v674 = vmul.f32 %v671, 0.35355338
        %v675 = vsel %vm523, %v674, -inf
        %676 = vmax.xlane.f32.xlu0 %v675
        %v677 = vpop.xlane.xlu0 %676
        %v678 = vsub.f32 %v674, %v677
        %v679 = vmul.f32 %v678, 1.442695
        %v680 = vpow.pop %v679
        %v681 = vsel %vm523, %v680, 0.0
        %682 = vadd.xlane.f32.xlu0 %v681
        %v683 = vpop.xlane.xlu0 %682
        %v684 = vrcp.pop %v683
        %v685 = vmul.f32 %v680, %v684
        %v686 = vpack.c.bf16 %v685, %v685
        %687 = vrot.lane.b32.xlu0 %v558, 80
        %v688 = vpop.permute.xlu0 %687
        %v690 = vsel %vm523, %v686, 0
        %v693 = vsel %vm564, %v688, 0
        %695 = vmatpush.bf16.msra.mxu0 0
        %696 = vmatpush.bf16.msra.mxu0 0
        %697 = vmatpush.bf16.msra.mxu0 0
        %698 = vmatpush.bf16.msra.mxu0 0
        %699 = vmatpush.bf16.msra.mxu0 0
        %700 = vmatpush.bf16.msra.mxu0 0
        %701 = vmatpush.bf16.msra.mxu0 0
        %702 = vmatpush.bf16.msra.mxu0 %v693
        %703 = vmatmul.bf16.gmra.mxu0 %v690
        %v704 = vpop.f32.mrf.mxu0
        %v705 = vadd.f32 0.0, %v704
        %v706 = vpop.f32.mrf.mxu0
        %707 = vdwg.mxu0
        %v708 = vpack.c.bf16 %v705, %v705
        %710 = vrot.lane.b32.xlu0 %v708, 16
        %v711 = vpop.permute.xlu0 %710
        %vm713 = vcmask 191616
        %714 = vst.msk [vmem:[#allocation2] sm:$0xf] %vm713, %v711
        %715 = vrot.lane.b32.xlu0 %v586, 104
        %v716 = vpop.permute.xlu0 %715
        %717 = vrot.lane.b32.xlu0 %v558, 104
        %v718 = vpop.permute.xlu0 %717
        %v720 = vsel %vm523, %v716, 0
        %v723 = vsel %vm523, %v718, 0
        %725 = vmatpush.bf16.xpose.msra.mxu0 0
        %726 = vmatpush.bf16.xpose.msra.mxu0 0
        %727 = vmatpush.bf16.xpose.msra.mxu0 0
        %728 = vmatpush.bf16.xpose.msra.mxu0 0
        %729 = vmatpush.bf16.xpose.msra.mxu0 0
        %730 = vmatpush.bf16.xpose.msra.mxu0 0
        %731 = vmatpush.bf16.xpose.msra.mxu0 0
        %732 = vmatpush.bf16.xpose.msra.mxu0 %v723
        %733 = vmatmul.bf16.gmra.mxu0 %v720
        %v734 = vpop.f32.mrf.mxu0
        %v735 = vadd.f32 0.0, %v734
        %v736 = vpop.f32.mrf.mxu0
        %737 = vdwg.mxu0
        %v738 = vmul.f32 %v735, 0.35355338
        %v739 = vsel %vm523, %v738, -inf
        %740 = vmax.xlane.f32.xlu0 %v739
        %v741 = vpop.xlane.xlu0 %740
        %v742 = vsub.f32 %v738, %v741
        %v743 = vmul.f32 %v742, 1.442695
        %v744 = vpow.pop %v743
        %v745 = vsel %vm523, %v744, 0.0
        %746 = vadd.xlane.f32.xlu0 %v745
        %v747 = vpop.xlane.xlu0 %746
        %v748 = vrcp.pop %v747
        %v749 = vmul.f32 %v744, %v748
        %v750 = vpack.c.bf16 %v749, %v749
        %751 = vrot.lane.b32.xlu0 %v558, 72
        %v752 = vpop.permute.xlu0 %751
        %v754 = vsel %vm523, %v750, 0
        %v757 = vsel %vm564, %v752, 0
        %759 = vmatpush.bf16.msra.mxu0 0
        %760 = vmatpush.bf16.msra.mxu0 0
        %761 = vmatpush.bf16.msra.mxu0 0
        %762 = vmatpush.bf16.msra.mxu0 0
        %763 = vmatpush.bf16.msra.mxu0 0
        %764 = vmatpush.bf16.msra.mxu0 0
        %765 = vmatpush.bf16.msra.mxu0 0
        %766 = vmatpush.bf16.msra.mxu0 %v757
        %767 = vmatmul.bf16.gmra.mxu0 %v754
        %v768 = vpop.f32.mrf.mxu0
        %v769 = vadd.f32 0.0, %v768
        %v770 = vpop.f32.mrf.mxu0
        %771 = vdwg.mxu0
        %v772 = vpack.c.bf16 %v769, %v769
        %774 = vrot.lane.b32.xlu0 %v772, 24
        %v775 = vpop.permute.xlu0 %774
        %vm777 = vcmask 257216
        %778 = vst.msk [vmem:[#allocation2] sm:$0xf] %vm777, %v775
        %v779 = vld [vmem:[#allocation2] sm:$0xf]
        %v780 = vld [vmem:[%s6] sm:$0xf]
        %v781 = vld [vmem:[%s6 + $0x4] sm:$0xf]
        %v782 = vld [vmem:[%s6 + $0x8] sm:$0xf]
        %v783 = vld [vmem:[%s6 + $0xc] sm:$0xf]
        %v784 = vld [vmem:[#allocation7] sm:$0x1]
        %v786 = vperm.slane %v784, 0
        %v792 = vunpack.c.l.b16 %v780
        %v793 = vunpack.c.l.b16 %v781
        %v794 = vunpack.c.l.b16 %v782
        %v795 = vunpack.c.l.b16 %v783
        %v796 = vpack.c.b16 %v793, %v792
        %v797 = vpack.c.b16 %v795, %v794
        %v801 = vsel %vm468, %v779, 0
        %803 = vmatpush.bf16.msra.mxu0 0
        %804 = vmatpush.bf16.msra.mxu0 0
        %805 = vmatpush.bf16.msra.mxu0 0
        %806 = vmatpush.bf16.msra.mxu0 0
        %807 = vmatpush.bf16.msra.mxu0 0
        %808 = vmatpush.bf16.msra.mxu0 0
        %809 = vmatpush.bf16.msra.mxu0 %v797
        %810 = vmatpush.bf16.msra.mxu0 %v796
        %811 = vmatmul.bf16.gmra.mxu0 %v801
        %v812 = vpop.f32.mrf.mxu0
        %v813 = vadd.f32 %v786, %v812
        %v814 = vpop.f32.mrf.mxu0
        %815 = vdwg.mxu0
        %v816 = vunpack.c.l.bf16 %v446
        %v817 = vadd.f32 %v813, %v816
        %v818 = vld [vmem:[#allocation8] sm:$0x1]
        %v819 = vld [vmem:[#allocation10] sm:$0x1]
        %v820 = vsel %vm468, %v817, 0.0
        %821 = vadd.xlane.f32.xlu0 %v820
        %v822 = vpop.xlane.xlu0 %821
        %v823 = vrcp.pop 32.0
        %v824 = vmul.f32 32.0, %v823
        %v825 = vsub.f32 1.0, %v824
        %v826 = vmul.f32 %v823, %v825
        %v827 = vadd.f32 %v823, %v826
        %vm828 = vweird.f32 %v823
        %v829 = vsel %vm828, %v823, %v827
        %v830 = vmul.f32 %v822, %v829
        %v831 = vsub.f32 %v817, %v830
        %v832 = vmul.f32 %v831, %v831
        %v833 = vsel %vm468, %v832, 0.0
        %834 = vadd.xlane.f32.xlu0 %v833
        %v835 = vpop.xlane.xlu0 %834
        %v836 = vmul.f32 %v835, %v829
        %v837 = vadd.f32 %v836, 1e-05
        %v838 = vrsqrt.pop %v837
        %v839 = vmul.f32 %v838, %v837
        %v840 = vmul.f32 %v839, %v838
        %v841 = vmul.f32 0.5, %v840
        %v842 = vsub.f32 1.5, %v841
        %v843 = vmul.f32 %v838, %v842
        %vm844 = vweird.f32 %v837
        %vm845 = vweird.f32 %v838
        %vm846 = vmor %vm844, %vm845
        %v847 = vsel %vm846, %v838, %v843
        %v848 = vmul.f32 %v831, %v847
        %v850 = vperm.slane %v818, 0
        %v852 = vmul.f32 %v848, %v850
        %v854 = vperm.slane %v819, 0
        %v856 = vadd.f32 %v852, %v854
        %v857 = vpack.c.bf16 %v856, %v856
        %vm858 = vcmask 257024
        %859 = vst.msk [vmem:[%s444] sm:$0xf] %vm858, %v857
        %p860 = scmp.lt.s32.totalorder %s24, 1
        %s861 = scalar_select %p860, %s24, 1
        %s862 = smul.addr %s861, 4
        %s863 = scalar_lea.vmem %s10, %s862
        // Predicated region
        $region81: #{ocr_transformer_forward.21} parent=59 // pred_check
          %p864 = pneg %p262
        $region82: #{ocr_transformer_forward.21} parent=59 // pred_check_branch
          %866 = sbr.rel (%p864) target = $region84
        $region83: #{ocr_transformer_forward.21} parent=59 // pred_region
          _
        $region84: #{ocr_transformer_forward.21} parent=59 // pred_fallthru
          _
      $region60: #{ocr_transformer_forward.21} parent=5 // pred_fallthru
        _
      %p867 = scmp.le.s32.totalorder 2, %s19
      // Predicated region
      $region85: #{ocr_transformer_forward.21} parent=5 // pred_check
        %p868 = pneg %p867
      $region86: #{ocr_transformer_forward.21} parent=5 // pred_check_branch
        %870 = sbr.rel (%p868) target = $region88
      $region87: #{ocr_transformer_forward.21} parent=5 // pred_region
        %s871 = ssub.s32 %s19, 2
        // Predicated region
        $region89: #{ocr_transformer_forward.21} parent=87 // pred_check
          %p872 = pneg %p268
        $region90: #{ocr_transformer_forward.21} parent=87 // pred_check_branch
          %874 = sbr.rel (%p872) target = $region92
        $region91: #{ocr_transformer_forward.21} parent=87 // pred_region
          %p875 = scmp.lt.s32.totalorder %s25, 1
          %s876 = scalar_select %p875, %s25, 1
          %s877 = smul.addr %s876, 4
          %s878 = scalar_lea.vmem %s10, %s877
        $region92: #{ocr_transformer_forward.21} parent=87 // pred_fallthru
          _
      $region88: #{ocr_transformer_forward.21} parent=5 // pred_fallthru
        _
    $region6: #{ocr_transformer_forward.21} parent=1 // loop_footer
      %s23 = sadd.s32 1, %s19
    $region7: #{ocr_transformer_forward.21} parent=1 // loop_footer_branch
      %18 = sbr.rel target = $region3
    $region8: #{ocr_transformer_forward.21} parent=1 // loop_exit
      _
    %879 = vsyncpa [#allocation4], 1
    %s880 = scalar_lea.sflag [#allocation4], 1
    %881 = vsyncpa %s880, 1
    %882 = vsyncpa [#allocation6], 1
    %883 = vsyncpa [#allocation9], 1

</llo_original>
